<compile_context>
chip_gen: v7x
topology: tpu7x:2x2x1
jax: 0.10.0
libtpu: 0.0.40
codegen_flags: <defaults>
</compile_context>

<pallas_src>
import functools

import jax
import jax.numpy as jnp
import numpy as np
from jax.experimental import pallas as pl
from jax.experimental.pallas import tpu as pltpu

H1 = 2048
H2 = 1024
LANES = 128
NEG_BIG = -1e30  # bias for padded (fake) classes -> exp(...) == 0 in softmax


def _round_up(x, m):
    return ((x + m - 1) // m) * m


def _batch_tiling(B):
    """Pick (batch_tile, padded_B). Tile is a multiple of 8, capped at 256 rows,
    and we keep >= 2 grid steps when the batch allows it (v7x has 2 TCs)."""
    bp8 = _round_up(B, 8)
    n_tiles = max(1, -(-bp8 // 256))          # ceil(bp8 / 256)
    if n_tiles == 1 and bp8 >= 16:
        n_tiles = 2                           # split so both TensorCores work
    tile = _round_up(-(-bp8 // n_tiles), 8)   # ceil(bp8 / n_tiles), sublane-aligned
    return tile, tile * n_tiles


def _vmem_limit_bytes():
    """Generation-aware scoped-VMEM limit: ~75% of physical capacity.
    (96 MiB on v5e/v6e's 128 MiB, 48 MiB on v7x's 64 MiB.)"""
    try:
        cap = int(pltpu.get_tpu_info().vmem_capacity_bytes)
    except Exception:
        cap = 64 * 1024 * 1024                # conservative fallback (fits v7x)
    return min((cap * 3) // 4, 96 * 1024 * 1024)


def _cls_head_kernel(x_ref, w1_ref, b1_ref, w2_ref, b2_ref, w3_ref, b3_ref,
                     out_ref):
    # Cast activations to bf16 for the MXU; accumulate in f32.
    x = x_ref[...].astype(jnp.bfloat16)

    # Layer 1: Linear + ReLU
    h1 = jnp.dot(x, w1_ref[...], preferred_element_type=jnp.float32) + b1_ref[...]
    h1 = jnp.maximum(h1, 0.0).astype(jnp.bfloat16)

    # Layer 2: Linear + ReLU
    h2 = jnp.dot(h1, w2_ref[...], preferred_element_type=jnp.float32) + b2_ref[...]
    h2 = jnp.maximum(h2, 0.0).astype(jnp.bfloat16)

    # Layer 3: Linear -> logits (class axis is lane-dense: padded to 128*k,
    # padded classes carry a -1e30 bias so they vanish in the softmax).
    logits = jnp.dot(h2, w3_ref[...], preferred_element_type=jnp.float32) + b3_ref[...]

    # Numerically stable softmax over the class axis.
    m = jnp.max(logits, axis=-1, keepdims=True)
    e = jnp.exp(logits - m)
    s = jnp.sum(e, axis=-1, keepdims=True)
    out_ref[...] = (e * pl.reciprocal(s, approx=True)).astype(out_ref.dtype)


@jax.jit
def classification_head(features, params):
    """features: (B, in_dims) f32. Returns (B, n_classes) softmax probs (f32)."""
    w1, b1, w2, b2, w3, b3 = params
    B, in_dims = features.shape
    n_classes = w3.shape[1]

    # Weights in bf16 (halved HBM traffic & VMEM), biases in f32.
    w1 = w1.astype(jnp.bfloat16)
    w2 = w2.astype(jnp.bfloat16)
    w3 = w3.astype(jnp.bfloat16)
    b1 = b1.astype(jnp.float32)
    b2 = b2.astype(jnp.float32)
    b3 = b3.astype(jnp.float32)

    # Pad the class axis to a lane-dense multiple of 128.
    C = _round_up(max(n_classes, LANES), LANES)
    if C != n_classes:
        w3 = jnp.pad(w3, ((0, 0), (0, C - n_classes)))
        b3 = jnp.pad(b3, ((0, 0), (0, C - n_classes)), constant_values=NEG_BIG)

    # Batch tiling (pad rows up to a multiple of the tile; sliced off below).
    tile, Bp = _batch_tiling(B)
    if Bp != B:
        features = jnp.pad(features, ((0, Bp - B), (0, 0)))
    grid = (Bp // tile,)

    def _const_spec(shape):
        # Grid-invariant block: single-buffered (no wasted 2nd VMEM copy).
        return pl.BlockSpec(shape, lambda i: (0, 0), pipeline_mode=pl.Buffered(1))

    out = pl.pallas_call(
        _cls_head_kernel,
        out_shape=jax.ShapeDtypeStruct((Bp, C), jnp.float32),
        grid_spec=pltpu.PrefetchScalarGridSpec(
            num_scalar_prefetch=0,
            grid=grid,
            in_specs=[
                pl.BlockSpec((tile, in_dims), lambda i: (i, 0)),  # x
                _const_spec((in_dims, H1)),                       # W1
                _const_spec((1, H1)),                             # b1
                _const_spec((H1, H2)),                            # W2
                _const_spec((1, H2)),                             # b2
                _const_spec((H2, C)),                             # W3 (padded)
                _const_spec((1, C)),                              # b3 (padded)
            ],
            out_specs=pl.BlockSpec((tile, C), lambda i: (i, 0)),
        ),
        compiler_params=pltpu.CompilerParams(
            dimension_semantics=("parallel",),
            vmem_limit_bytes=_vmem_limit_bytes(),
        ),
    )(features, w1, b1, w2, b2, w3, b3)

    return out[:B, :n_classes]


def init_params(key, in_dims, n_classes):
    """Deterministic PyTorch-style (uniform fan-in) init; weights bf16, biases (1,d) f32."""
    def linear_init(k, fan_in, fan_out):
        kw, kb = jax.random.split(k)
        bound = 1.0 / np.sqrt(fan_in)
        w = jax.random.uniform(kw, (fan_in, fan_out), jnp.float32, -bound, bound)
        b = jax.random.uniform(kb, (1, fan_out), jnp.float32, -bound, bound)
        return w.astype(jnp.bfloat16), b

    k1, k2, k3 = jax.random.split(key, 3)
    w1, b1 = linear_init(k1, in_dims, H1)
    w2, b2 = linear_init(k2, H1, H2)
    w3, b3 = linear_init(k3, H2, n_classes)
    return (w1, b1, w2, b2, w3, b3)


def reference(features, params):
    """Pure-JAX reference mirroring the kernel's bf16 inputs / f32 accumulation."""
    w1, b1, w2, b2, w3, b3 = params
    bf = lambda t: t.astype(jnp.bfloat16).astype(jnp.float32)
    x = bf(features)
    h = jnp.maximum(x @ bf(w1) + b1, 0.0)
    h = bf(h)
    h = jnp.maximum(h @ bf(w2) + b2, 0.0)
    h = bf(h)
    logits = h @ bf(w3) + b3
    return jax.nn.softmax(logits, axis=1)


if __name__ == "__main__":
    key = jax.random.PRNGKey(0)
    k_x, k_p = jax.random.split(key)

    B, in_dims, n_classes = 2, 32, 10
    x = jax.random.normal(k_x, (B, in_dims), dtype=jnp.float32)
    params = init_params(k_p, in_dims, n_classes)

    out = classification_head(x, params)
    out = jax.block_until_ready(out)

    ref = reference(x, params)
    np.testing.assert_allclose(np.asarray(out), np.asarray(ref),
                               rtol=3e-3, atol=3e-3)
    assert out.shape == (B, n_classes)
    np.testing.assert_allclose(np.asarray(out).sum(axis=1),
                               np.ones(B, np.float32), rtol=3e-3, atol=3e-3)

    print("KERNEL_OK")
</pallas_src>

<mosaic_0001>
module attributes {stable_mosaic.version = 11 : i64} {
  func.func @_cls_head_kernel(%arg0: i32, %arg1: memref<8x32xf32, #tpu.memory_space<vmem>>, %arg2: memref<32x2048xbf16, #tpu.memory_space<vmem>>, %arg3: memref<1x2048xf32, #tpu.memory_space<vmem>>, %arg4: memref<2048x1024xbf16, #tpu.memory_space<vmem>>, %arg5: memref<1x1024xf32, #tpu.memory_space<vmem>>, %arg6: memref<1024x128xbf16, #tpu.memory_space<vmem>>, %arg7: memref<1x128xf32, #tpu.memory_space<vmem>>, %arg8: memref<8x128xf32, #tpu.memory_space<vmem>>) attributes {dimension_semantics = [#tpu.dimension_semantics<parallel>], iteration_bounds = array<i64: 1>, scalar_prefetch = 0 : i64, scratch_operands = 0 : i64, tpu.core_type = #tpu.core_type<tc>, window_params = [{transform_indices = @transform_0, window_bounds = array<i64: 8, 32>}, {pipeline_mode = #tpu.pipeline_mode<synchronous>, transform_indices = @transform_1, window_bounds = array<i64: 32, 2048>}, {pipeline_mode = #tpu.pipeline_mode<synchronous>, transform_indices = @transform_2, window_bounds = array<i64: 1, 2048>}, {pipeline_mode = #tpu.pipeline_mode<synchronous>, transform_indices = @transform_3, window_bounds = array<i64: 2048, 1024>}, {pipeline_mode = #tpu.pipeline_mode<synchronous>, transform_indices = @transform_4, window_bounds = array<i64: 1, 1024>}, {pipeline_mode = #tpu.pipeline_mode<synchronous>, transform_indices = @transform_5, window_bounds = array<i64: 1024, 128>}, {pipeline_mode = #tpu.pipeline_mode<synchronous>, transform_indices = @transform_6, window_bounds = array<i64: 1, 128>}, {transform_indices = @transform_7, window_bounds = array<i64: 8, 128>}]} {
    %c0 = arith.constant 0 : index
    %c0_0 = arith.constant 0 : index
    %0 = vector.load %arg1[%c0, %c0_0] : memref<8x32xf32, #tpu.memory_space<vmem>>, vector<8x32xf32>
    %1 = arith.truncf %0 : vector<8x32xf32> to vector<8x32xbf16>
    %c0_1 = arith.constant 0 : index
    %c0_2 = arith.constant 0 : index
    %2 = vector.load %arg2[%c0_1, %c0_2] : memref<32x2048xbf16, #tpu.memory_space<vmem>>, vector<32x2048xbf16>
    %cst = arith.constant dense<0.000000e+00> : vector<8x2048xf32>
    %3 = tpu.matmul %1, %2, %cst {dimension_numbers = #tpu.dot_dimension_numbers<[1], [0], [0], [1], [0, 0, 1, 1], [], []>} : vector<8x32xbf16>, vector<32x2048xbf16>, vector<8x2048xf32> -> vector<8x2048xf32>
    %c0_3 = arith.constant 0 : index
    %c0_4 = arith.constant 0 : index
    %4 = vector.load %arg3[%c0_3, %c0_4] : memref<1x2048xf32, #tpu.memory_space<vmem>>, vector<1x2048xf32>
    %5 = vector.broadcast %4 : vector<1x2048xf32> to vector<8x2048xf32>
    %6 = arith.addf %3, %5 : vector<8x2048xf32>
    %cst_5 = arith.constant 0.000000e+00 : f32
    %7 = vector.broadcast %cst_5 : f32 to vector<8x2048xf32>
    %8 = arith.maximumf %6, %7 : vector<8x2048xf32>
    %9 = arith.truncf %8 : vector<8x2048xf32> to vector<8x2048xbf16>
    %c0_6 = arith.constant 0 : index
    %c0_7 = arith.constant 0 : index
    %10 = vector.load %arg4[%c0_6, %c0_7] : memref<2048x1024xbf16, #tpu.memory_space<vmem>>, vector<2048x1024xbf16>
    %cst_8 = arith.constant dense<0.000000e+00> : vector<8x1024xf32>
    %11 = tpu.matmul %9, %10, %cst_8 {dimension_numbers = #tpu.dot_dimension_numbers<[1], [0], [0], [1], [0, 0, 1, 1], [], []>} : vector<8x2048xbf16>, vector<2048x1024xbf16>, vector<8x1024xf32> -> vector<8x1024xf32>
    %c0_9 = arith.constant 0 : index
    %c0_10 = arith.constant 0 : index
    %12 = vector.load %arg5[%c0_9, %c0_10] : memref<1x1024xf32, #tpu.memory_space<vmem>>, vector<1x1024xf32>
    %13 = vector.broadcast %12 : vector<1x1024xf32> to vector<8x1024xf32>
    %14 = arith.addf %11, %13 : vector<8x1024xf32>
    %cst_11 = arith.constant 0.000000e+00 : f32
    %15 = vector.broadcast %cst_11 : f32 to vector<8x1024xf32>
    %16 = arith.maximumf %14, %15 : vector<8x1024xf32>
    %17 = arith.truncf %16 : vector<8x1024xf32> to vector<8x1024xbf16>
    %c0_12 = arith.constant 0 : index
    %c0_13 = arith.constant 0 : index
    %18 = vector.load %arg6[%c0_12, %c0_13] : memref<1024x128xbf16, #tpu.memory_space<vmem>>, vector<1024x128xbf16>
    %cst_14 = arith.constant dense<0.000000e+00> : vector<8x128xf32>
    %19 = tpu.matmul %17, %18, %cst_14 {dimension_numbers = #tpu.dot_dimension_numbers<[1], [0], [0], [1], [0, 0, 1, 1], [], []>} : vector<8x1024xbf16>, vector<1024x128xbf16>, vector<8x128xf32> -> vector<8x128xf32>
    %c0_15 = arith.constant 0 : index
    %c0_16 = arith.constant 0 : index
    %20 = vector.load %arg7[%c0_15, %c0_16] : memref<1x128xf32, #tpu.memory_space<vmem>>, vector<1x128xf32>
    %21 = vector.broadcast %20 : vector<1x128xf32> to vector<8x128xf32>
    %22 = arith.addf %19, %21 : vector<8x128xf32>
    %cst_17 = arith.constant dense<0xFF800000> : vector<8xf32>
    %23 = vector.multi_reduction <maximumf>, %22, %cst_17 [1] : vector<8x128xf32> to vector<8xf32>
    %24 = vector.shape_cast %23 : vector<8xf32> to vector<8x1xf32>
    %25 = vector.broadcast %24 : vector<8x1xf32> to vector<8x128xf32>
    %26 = arith.subf %22, %25 : vector<8x128xf32>
    %27 = math.exp %26 : vector<8x128xf32>
    %cst_18 = arith.constant dense<0.000000e+00> : vector<8xf32>
    %28 = vector.multi_reduction <add>, %27, %cst_18 [1] : vector<8x128xf32> to vector<8xf32>
    %29 = vector.shape_cast %28 : vector<8xf32> to vector<8x1xf32>
    %30 = tpu.reciprocal %29 {approx = true} : vector<8x1xf32> -> vector<8x1xf32>
    %31 = vector.broadcast %30 : vector<8x1xf32> to vector<8x128xf32>
    %32 = arith.mulf %27, %31 : vector<8x128xf32>
    %c0_19 = arith.constant 0 : index
    %c0_20 = arith.constant 0 : index
    %33 = vector.load %arg8[%c0_19, %c0_20] : memref<8x128xf32, #tpu.memory_space<vmem>>, vector<8x128xf32>
    tpu.vector_store %arg8[%c0_19, %c0_20], %32 {strides = array<i32>} : memref<8x128xf32, #tpu.memory_space<vmem>>, vector<8x128xf32>,
    return
  }
  func.func @transform_0(%arg0: i32) -> (i32, i32) {
    %c0_i32 = arith.constant 0 : i32
    %c0_i32_0 = arith.constant 0 : i32
    return %arg0, %c0_i32 : i32, i32
  }
  func.func @transform_1(%arg0: i32) -> (i32, i32) {
    %c0_i32 = arith.constant 0 : i32
    %c0_i32_0 = arith.constant 0 : i32
    %c0_i32_1 = arith.constant 0 : i32
    return %c0_i32, %c0_i32_0 : i32, i32
  }
  func.func @transform_2(%arg0: i32) -> (i32, i32) {
    %c0_i32 = arith.constant 0 : i32
    %c0_i32_0 = arith.constant 0 : i32
    %c0_i32_1 = arith.constant 0 : i32
    return %c0_i32, %c0_i32_0 : i32, i32
  }
  func.func @transform_3(%arg0: i32) -> (i32, i32) {
    %c0_i32 = arith.constant 0 : i32
    %c0_i32_0 = arith.constant 0 : i32
    %c0_i32_1 = arith.constant 0 : i32
    return %c0_i32, %c0_i32_0 : i32, i32
  }
  func.func @transform_4(%arg0: i32) -> (i32, i32) {
    %c0_i32 = arith.constant 0 : i32
    %c0_i32_0 = arith.constant 0 : i32
    %c0_i32_1 = arith.constant 0 : i32
    return %c0_i32, %c0_i32_0 : i32, i32
  }
  func.func @transform_5(%arg0: i32) -> (i32, i32) {
    %c0_i32 = arith.constant 0 : i32
    %c0_i32_0 = arith.constant 0 : i32
    %c0_i32_1 = arith.constant 0 : i32
    return %c0_i32, %c0_i32_0 : i32, i32
  }
  func.func @transform_6(%arg0: i32) -> (i32, i32) {
    %c0_i32 = arith.constant 0 : i32
    %c0_i32_0 = arith.constant 0 : i32
    %c0_i32_1 = arith.constant 0 : i32
    return %c0_i32, %c0_i32_0 : i32, i32
  }
  func.func @transform_7(%arg0: i32) -> (i32, i32) {
    %c0_i32 = arith.constant 0 : i32
    %c0_i32_0 = arith.constant 0 : i32
    return %arg0, %c0_i32 : i32, i32
  }
}

</mosaic_0001>

<llo_original>
// kernel: classification_head.1
$region0: #{classification_head.1}
  #allocation0 [shape = 'u32[]', space=smem, size = 0x4, offset = 0x4, fixed_abs, tag = 'smem constant byte address 0x4 - core index']
  #allocation1 [shape = 'u32[144,128]{1,0:T(1,128)}', space=vmem, size = 0x12000, scoped, tag = 'internal scratch']
  %s0 = inlined_call_operand.vmem [shape: f32[8,32], index: 0, kind: input, shape index: {}]
  %s1 = inlined_call_operand.hbm [shape: bf16[32,2048], index: 1, kind: input, shape index: {}]
  %s2 = inlined_call_operand.hbm [shape: f32[1,2048], index: 2, kind: input, shape index: {}]
  %s3 = inlined_call_operand.hbm [shape: bf16[2048,1024], index: 3, kind: input, shape index: {}]
  %s4 = inlined_call_operand.hbm [shape: f32[1,1024], index: 4, kind: input, shape index: {}]
  %s5 = inlined_call_operand.vmem [shape: bf16[1024,128], index: 5, kind: input, shape index: {}]
  %s6 = inlined_call_operand.vmem [shape: f32[1,128], index: 6, kind: input, shape index: {}]
  %s7 = inlined_call_operand.vmem [shape: f32[8,128], index: 7, kind: output, shape index: {}]
  %s8 = sld [smem:[#allocation0]]
  $region54: #{classification_head.1} parent=0
    _
  %s10 = ssub.s32 1, %s8
  %s11 = scalar_select 0, %s10, %s8
  $region1: #{classification_head.1} parent=0
    #allocation2 [shape = 'u8[131072]{0}', space=vmem, size = 0x20000, scoped, tag = 'input window, operand 1, single buffered']
    #allocation3 [shape = 's32[1]{0}', space=sflag, size = 0x4, scoped, tag = 'scoped memory for classification_head.1']
    #allocation4 [shape = 'u8[8192]{0}', space=vmem, size = 0x2000, scoped, tag = 'input window, operand 2, single buffered']
    #allocation5 [shape = 's32[1]{0}', space=sflag, size = 0x4, scoped, tag = 'scoped memory for classification_head.1']
    #allocation6 [shape = 'u8[4194304]{0}', space=vmem, size = 0x400000, scoped, tag = 'input window, operand 3, single buffered']
    #allocation7 [shape = 'u8[4096]{0}', space=vmem, size = 0x1000, scoped, tag = 'input window, operand 4, single buffered']
    #allocation8 [shape = 's32[1]{0}', space=sflag, size = 0x4, scoped, tag = 'scoped memory for classification_head.1']
    %12 = vsyncpa [#allocation3], 0
    %13 = vsyncpa [#allocation5], 0
    %14 = vsyncpa [#allocation8], 0
    // Predicated region
    $region2: #{classification_head.1} parent=1 // pred_check
      _
    $region3: #{classification_head.1} parent=1 // pred_check_branch
      %16 = sbr.rel (0) target = $region5
    $region4: #{classification_head.1} parent=1 // pred_region
      _
    $region5: #{classification_head.1} parent=1 // pred_fallthru
      _
    // Predicated region
    $region6: #{classification_head.1} parent=1 // pred_check
      _
    $region7: #{classification_head.1} parent=1 // pred_check_branch
      %18 = sbr.rel (0) target = $region9
    $region8: #{classification_head.1} parent=1 // pred_region
      %s20 = ssub.s32 4096, 4096
      %21 = vsyncadd [#allocation3], %s20
      %s22 = sshll.u32 [#allocation2], 4
      %s23 = int_to_ptr.vmem [resolvable:$true] %s22
      %28 = dma.hbm_to_vmem [thread:$0]  %s1, 4096, %s23, [#allocation3], 1024, 1024, 64
    $region9: #{classification_head.1} parent=1 // pred_fallthru
      _
    // Predicated region
    $region10: #{classification_head.1} parent=1 // pred_check
      _
    $region11: #{classification_head.1} parent=1 // pred_check_branch
      %30 = sbr.rel (0) target = $region13
    $region12: #{classification_head.1} parent=1 // pred_region
      %s32 = ssub.s32 256, 256
      %33 = vsyncadd [#allocation5], %s32
      %s35 = sshll.u32 [#allocation4], 4
      %s36 = int_to_ptr.vmem [resolvable:$true] %s35
      %38 = dma.hbm_to_vmem [thread:$0]  %s2, 256, %s36, [#allocation5]
    $region13: #{classification_head.1} parent=1 // pred_fallthru
      _
    // Predicated region
    $region14: #{classification_head.1} parent=1 // pred_check
      _
    $region15: #{classification_head.1} parent=1 // pred_check_branch
      %40 = sbr.rel (0) target = $region17
    $region16: #{classification_head.1} parent=1 // pred_region
      %s42 = ssub.s32 131072, 131072
      %43 = vsyncadd [#allocation5], %s42
      %s44 = sshll.u32 [#allocation6], 4
      %s45 = int_to_ptr.vmem [resolvable:$true] %s44
      %50 = dma.hbm_to_vmem [thread:$0]  %s3, 131072, %s45, [#allocation5], 512, 512, 32
    $region17: #{classification_head.1} parent=1 // pred_fallthru
      _
    // Predicated region
    $region18: #{classification_head.1} parent=1 // pred_check
      _
    $region19: #{classification_head.1} parent=1 // pred_check_branch
      %52 = sbr.rel (0) target = $region21
    $region20: #{classification_head.1} parent=1 // pred_region
      %s54 = ssub.s32 128, 128
      %55 = vsyncadd [#allocation8], %s54
      %s57 = sshll.u32 [#allocation7], 4
      %s58 = int_to_ptr.vmem [resolvable:$true] %s57
      %60 = dma.hbm_to_vmem [thread:$0]  %s4, 128, %s58, [#allocation8]
    $region21: #{classification_head.1} parent=1 // pred_fallthru
      _
    // Predicated region
    $region22: #{classification_head.1} parent=1 // pred_check
      _
    $region23: #{classification_head.1} parent=1 // pred_check_branch
      %62 = sbr.rel (0) target = $region25
    $region24: #{classification_head.1} parent=1 // pred_region
      _
    $region25: #{classification_head.1} parent=1 // pred_fallthru
      _
    // Predicated region
    $region26: #{classification_head.1} parent=1 // pred_check
      _
    $region27: #{classification_head.1} parent=1 // pred_check_branch
      %64 = sbr.rel (0) target = $region29
    $region28: #{classification_head.1} parent=1 // pred_region
      _
    $region29: #{classification_head.1} parent=1 // pred_fallthru
      _
    // Predicated region
    $region30: #{classification_head.1} parent=1 // pred_check
      _
    $region31: #{classification_head.1} parent=1 // pred_check_branch
      %66 = sbr.rel (0) target = $region33
    $region32: #{classification_head.1} parent=1 // pred_region
      %67 = dma.done [#allocation3], 4096
    $region33: #{classification_head.1} parent=1 // pred_fallthru
      _
    // Predicated region
    $region34: #{classification_head.1} parent=1 // pred_check
      _
    $region35: #{classification_head.1} parent=1 // pred_check_branch
      %69 = sbr.rel (0) target = $region37
    $region36: #{classification_head.1} parent=1 // pred_region
      %70 = dma.done [#allocation5], 256
    $region37: #{classification_head.1} parent=1 // pred_fallthru
      _
    // Predicated region
    $region38: #{classification_head.1} parent=1 // pred_check
      _
    $region39: #{classification_head.1} parent=1 // pred_check_branch
      %72 = sbr.rel (0) target = $region41
    $region40: #{classification_head.1} parent=1 // pred_region
      %73 = dma.done [#allocation5], 131072
    $region41: #{classification_head.1} parent=1 // pred_fallthru
      _
    // Predicated region
    $region42: #{classification_head.1} parent=1 // pred_check
      _
    $region43: #{classification_head.1} parent=1 // pred_check_branch
      %75 = sbr.rel (0) target = $region45
    $region44: #{classification_head.1} parent=1 // pred_region
      %76 = dma.done [#allocation8], 128
    $region45: #{classification_head.1} parent=1 // pred_fallthru
      _
    %v78 = vld [vmem:[%s0] sm:$0xff]
    %v79 = vpack.c.bf16 %v78, %v78
    %v80 = vld [vmem:[#allocation2] sm:$0xff]
    %v81 = vld [vmem:[#allocation2 + $0x8] sm:$0xff]
    %v82 = vld [vmem:[#allocation2 + $0x10] sm:$0xff]
    %v83 = vld [vmem:[#allocation2 + $0x18] sm:$0xff]
    %v84 = vld [vmem:[#allocation2 + $0x20] sm:$0xff]
    %v85 = vld [vmem:[#allocation2 + $0x28] sm:$0xff]
    %v86 = vld [vmem:[#allocation2 + $0x30] sm:$0xff]
    %v87 = vld [vmem:[#allocation2 + $0x38] sm:$0xff]
    %v88 = vld [vmem:[#allocation2 + $0x40] sm:$0xff]
    %v89 = vld [vmem:[#allocation2 + $0x48] sm:$0xff]
    %v90 = vld [vmem:[#allocation2 + $0x50] sm:$0xff]
    %v91 = vld [vmem:[#allocation2 + $0x58] sm:$0xff]
    %v92 = vld [vmem:[#allocation2 + $0x60] sm:$0xff]
    %v93 = vld [vmem:[#allocation2 + $0x68] sm:$0xff]
    %v94 = vld [vmem:[#allocation2 + $0x70] sm:$0xff]
    %v95 = vld [vmem:[#allocation2 + $0x78] sm:$0xff]
    %v96 = vld [vmem:[#allocation2 + $0x80] sm:$0xff]
    %v97 = vld [vmem:[#allocation2 + $0x88] sm:$0xff]
    %v98 = vld [vmem:[#allocation2 + $0x90] sm:$0xff]
    %v99 = vld [vmem:[#allocation2 + $0x98] sm:$0xff]
    %v100 = vld [vmem:[#allocation2 + $0xa0] sm:$0xff]
    %v101 = vld [vmem:[#allocation2 + $0xa8] sm:$0xff]
    %v102 = vld [vmem:[#allocation2 + $0xb0] sm:$0xff]
    %v103 = vld [vmem:[#allocation2 + $0xb8] sm:$0xff]
    %v104 = vld [vmem:[#allocation2 + $0xc0] sm:$0xff]
    %v105 = vld [vmem:[#allocation2 + $0xc8] sm:$0xff]
    %v106 = vld [vmem:[#allocation2 + $0xd0] sm:$0xff]
    %v107 = vld [vmem:[#allocation2 + $0xd8] sm:$0xff]
    %v108 = vld [vmem:[#allocation2 + $0xe0] sm:$0xff]
    %v109 = vld [vmem:[#allocation2 + $0xe8] sm:$0xff]
    %v110 = vld [vmem:[#allocation2 + $0xf0] sm:$0xff]
    %v111 = vld [vmem:[#allocation2 + $0xf8] sm:$0xff]
    %v112 = vld [vmem:[#allocation4] sm:$0xff]
    %v113 = vld [vmem:[#allocation4 + $0x8] sm:$0xff]
    %v116 = vlaneseq
    %v117 = vshrl.u32 %v116, 7
    %v118 = vsub.s32 0, %v117
    %v119 = vrot.slane %v112, %v118
    %v120 = vlaneseq
    %v121 = vshrl.u32 %v120, 7
    %v122 = vsub.s32 1, %v121
    %v123 = vrot.slane %v112, %v122
    %v124 = vlaneseq
    %v125 = vshrl.u32 %v124, 7
    %v126 = vsub.s32 2, %v125
    %v127 = vrot.slane %v112, %v126
    %v128 = vlaneseq
    %v129 = vshrl.u32 %v128, 7
    %v130 = vsub.s32 3, %v129
    %v131 = vrot.slane %v112, %v130
    %v132 = vlaneseq
    %v133 = vshrl.u32 %v132, 7
    %v134 = vsub.s32 4, %v133
    %v135 = vrot.slane %v112, %v134
    %v136 = vlaneseq
    %v137 = vshrl.u32 %v136, 7
    %v138 = vsub.s32 5, %v137
    %v139 = vrot.slane %v112, %v138
    %v140 = vlaneseq
    %v141 = vshrl.u32 %v140, 7
    %v142 = vsub.s32 6, %v141
    %v143 = vrot.slane %v112, %v142
    %v144 = vlaneseq
    %v145 = vshrl.u32 %v144, 7
    %v146 = vsub.s32 7, %v145
    %v147 = vrot.slane %v112, %v146
    %v148 = vlaneseq
    %v149 = vshrl.u32 %v148, 7
    %v150 = vsub.s32 0, %v149
    %v151 = vrot.slane %v113, %v150
    %v152 = vlaneseq
    %v153 = vshrl.u32 %v152, 7
    %v154 = vsub.s32 1, %v153
    %v155 = vrot.slane %v113, %v154
    %v156 = vlaneseq
    %v157 = vshrl.u32 %v156, 7
    %v158 = vsub.s32 2, %v157
    %v159 = vrot.slane %v113, %v158
    %v160 = vlaneseq
    %v161 = vshrl.u32 %v160, 7
    %v162 = vsub.s32 3, %v161
    %v163 = vrot.slane %v113, %v162
    %v164 = vlaneseq
    %v165 = vshrl.u32 %v164, 7
    %v166 = vsub.s32 4, %v165
    %v167 = vrot.slane %v113, %v166
    %v168 = vlaneseq
    %v169 = vshrl.u32 %v168, 7
    %v170 = vsub.s32 5, %v169
    %v171 = vrot.slane %v113, %v170
    %v172 = vlaneseq
    %v173 = vshrl.u32 %v172, 7
    %v174 = vsub.s32 6, %v173
    %v175 = vrot.slane %v113, %v174
    %v176 = vlaneseq
    %v177 = vshrl.u32 %v176, 7
    %v178 = vsub.s32 7, %v177
    %v179 = vrot.slane %v113, %v178
    %v228 = vunpack.c.l.b16 %v80
    %v229 = vunpack.c.h.b16 %v80
    %v230 = vunpack.c.l.b16 %v81
    %v231 = vunpack.c.h.b16 %v81
    %v232 = vunpack.c.l.b16 %v82
    %v233 = vunpack.c.h.b16 %v82
    %v234 = vunpack.c.l.b16 %v83
    %v235 = vunpack.c.h.b16 %v83
    %v236 = vunpack.c.l.b16 %v84
    %v237 = vunpack.c.h.b16 %v84
    %v238 = vunpack.c.l.b16 %v85
    %v239 = vunpack.c.h.b16 %v85
    %v240 = vunpack.c.l.b16 %v86
    %v241 = vunpack.c.h.b16 %v86
    %v242 = vunpack.c.l.b16 %v87
    %v243 = vunpack.c.h.b16 %v87
    %v244 = vunpack.c.l.b16 %v88
    %v245 = vunpack.c.h.b16 %v88
    %v246 = vunpack.c.l.b16 %v89
    %v247 = vunpack.c.h.b16 %v89
    %v248 = vunpack.c.l.b16 %v90
    %v249 = vunpack.c.h.b16 %v90
    %v250 = vunpack.c.l.b16 %v91
    %v251 = vunpack.c.h.b16 %v91
    %v252 = vunpack.c.l.b16 %v92
    %v253 = vunpack.c.h.b16 %v92
    %v254 = vunpack.c.l.b16 %v93
    %v255 = vunpack.c.h.b16 %v93
    %v256 = vunpack.c.l.b16 %v94
    %v257 = vunpack.c.h.b16 %v94
    %v258 = vunpack.c.l.b16 %v95
    %v259 = vunpack.c.h.b16 %v95
    %v260 = vunpack.c.l.b16 %v96
    %v261 = vunpack.c.h.b16 %v96
    %v262 = vunpack.c.l.b16 %v97
    %v263 = vunpack.c.h.b16 %v97
    %v264 = vunpack.c.l.b16 %v98
    %v265 = vunpack.c.h.b16 %v98
    %v266 = vunpack.c.l.b16 %v99
    %v267 = vunpack.c.h.b16 %v99
    %v268 = vunpack.c.l.b16 %v100
    %v269 = vunpack.c.h.b16 %v100
    %v270 = vunpack.c.l.b16 %v101
    %v271 = vunpack.c.h.b16 %v101
    %v272 = vunpack.c.l.b16 %v102
    %v273 = vunpack.c.h.b16 %v102
    %v274 = vunpack.c.l.b16 %v103
    %v275 = vunpack.c.h.b16 %v103
    %v276 = vunpack.c.l.b16 %v104
    %v277 = vunpack.c.h.b16 %v104
    %v278 = vunpack.c.l.b16 %v105
    %v279 = vunpack.c.h.b16 %v105
    %v280 = vunpack.c.l.b16 %v106
    %v281 = vunpack.c.h.b16 %v106
    %v282 = vunpack.c.l.b16 %v107
    %v283 = vunpack.c.h.b16 %v107
    %v284 = vunpack.c.l.b16 %v108
    %v285 = vunpack.c.h.b16 %v108
    %v286 = vunpack.c.l.b16 %v109
    %v287 = vunpack.c.h.b16 %v109
    %v288 = vunpack.c.l.b16 %v110
    %v289 = vunpack.c.h.b16 %v110
    %v290 = vunpack.c.l.b16 %v111
    %v291 = vunpack.c.h.b16 %v111
    %v292 = vpack.c.b16 %v244, %v228
    %v293 = vpack.c.b16 %v245, %v229
    %v294 = vpack.c.b16 %v246, %v230
    %v295 = vpack.c.b16 %v247, %v231
    %v296 = vpack.c.b16 %v248, %v232
    %v297 = vpack.c.b16 %v249, %v233
    %v298 = vpack.c.b16 %v250, %v234
    %v299 = vpack.c.b16 %v251, %v235
    %v300 = vpack.c.b16 %v252, %v236
    %v301 = vpack.c.b16 %v253, %v237
    %v302 = vpack.c.b16 %v254, %v238
    %v303 = vpack.c.b16 %v255, %v239
    %v304 = vpack.c.b16 %v256, %v240
    %v305 = vpack.c.b16 %v257, %v241
    %v306 = vpack.c.b16 %v258, %v242
    %v307 = vpack.c.b16 %v259, %v243
    %v308 = vpack.c.b16 %v276, %v260
    %v309 = vpack.c.b16 %v277, %v261
    %v310 = vpack.c.b16 %v278, %v262
    %v311 = vpack.c.b16 %v279, %v263
    %v312 = vpack.c.b16 %v280, %v264
    %v313 = vpack.c.b16 %v281, %v265
    %v314 = vpack.c.b16 %v282, %v266
    %v315 = vpack.c.b16 %v283, %v267
    %v316 = vpack.c.b16 %v284, %v268
    %v317 = vpack.c.b16 %v285, %v269
    %v318 = vpack.c.b16 %v286, %v270
    %v319 = vpack.c.b16 %v287, %v271
    %v320 = vpack.c.b16 %v288, %v272
    %v321 = vpack.c.b16 %v289, %v273
    %v322 = vpack.c.b16 %v290, %v274
    %v323 = vpack.c.b16 %v291, %v275
    %vm356 = vcmask 261120
    %v358 = vsel %vm356, %v79, 0
    %360 = vmatprep.subr.bf16.mxu0 %v293
    %361 = vmatpush1.bf16.msra.mxu0 %v292
    %362 = vmatprep.subr.bf16.mxu0 %v309
    %363 = vmatpush1.bf16.msra.mxu0 %v308
    %364 = vmatprep.subr.bf16.mxu0 0
    %365 = vmatpush1.bf16.msra.mxu0 0
    %366 = vmatprep.subr.bf16.mxu0 0
    %367 = vmatpush1.bf16.msra.mxu0 0
    %368 = vmatprep.subr.bf16.mxu0 0
    %369 = vmatpush1.bf16.msra.mxu0 0
    %370 = vmatprep.subr.bf16.mxu0 0
    %371 = vmatpush1.bf16.msra.mxu0 0
    %372 = vmatprep.subr.bf16.mxu0 0
    %373 = vmatpush1.bf16.msra.mxu0 0
    %374 = vmatprep.subr.bf16.mxu0 0
    %375 = vmatpush1.bf16.msra.mxu0 0
    %376 = vmatprep.subr.bf16.mxu0 0
    %377 = vmatpush1.bf16.msra.mxu0 0
    %378 = vmatprep.subr.bf16.mxu0 0
    %379 = vmatpush1.bf16.msra.mxu0 0
    %380 = vmatprep.subr.bf16.mxu0 0
    %381 = vmatpush1.bf16.msra.mxu0 0
    %382 = vmatprep.subr.bf16.mxu0 0
    %383 = vmatpush1.bf16.msra.mxu0 0
    %384 = vmatprep.subr.bf16.mxu0 0
    %385 = vmatpush1.bf16.msra.mxu0 0
    %386 = vmatprep.subr.bf16.mxu0 0
    %387 = vmatpush1.bf16.msra.mxu0 0
    %388 = vmatprep.subr.bf16.mxu0 0
    %389 = vmatpush1.bf16.msra.mxu0 0
    %390 = vmatprep.subr.bf16.mxu0 0
    %391 = vmatpush1.bf16.msra.mxu0 0
    %392 = vmatprep.mubr.bf16.mxu0 0
    %393 = vmatmul.mubr.bf16.gmra.mrb[0].mxu0 %v358
    %v394 = vpop.f32.mrb[0].mxu0
    %v395 = vadd.f32 %v119, %v394
    %v396 = vpop.f32.mrb[0].mxu0
    %v397 = vadd.f32 %v123, %v396
    %v398 = vpop.f32.mrb[0].mxu0
    %v399 = vpop.f32.mrb[0].mxu0
    %400 = vdwg.mxu0
    %401 = vmatprep.subr.bf16.mxu0 %v295
    %402 = vmatpush1.bf16.msra.mxu0 %v294
    %403 = vmatprep.subr.bf16.mxu0 %v311
    %404 = vmatpush1.bf16.msra.mxu0 %v310
    %405 = vmatprep.subr.bf16.mxu0 0
    %406 = vmatpush1.bf16.msra.mxu0 0
    %407 = vmatprep.subr.bf16.mxu0 0
    %408 = vmatpush1.bf16.msra.mxu0 0
    %409 = vmatprep.subr.bf16.mxu0 0
    %410 = vmatpush1.bf16.msra.mxu0 0
    %411 = vmatprep.subr.bf16.mxu0 0
    %412 = vmatpush1.bf16.msra.mxu0 0
    %413 = vmatprep.subr.bf16.mxu0 0
    %414 = vmatpush1.bf16.msra.mxu0 0
    %415 = vmatprep.subr.bf16.mxu0 0
    %416 = vmatpush1.bf16.msra.mxu0 0
    %417 = vmatprep.subr.bf16.mxu0 0
    %418 = vmatpush1.bf16.msra.mxu0 0
    %419 = vmatprep.subr.bf16.mxu0 0
    %420 = vmatpush1.bf16.msra.mxu0 0
    %421 = vmatprep.subr.bf16.mxu0 0
    %422 = vmatpush1.bf16.msra.mxu0 0
    %423 = vmatprep.subr.bf16.mxu0 0
    %424 = vmatpush1.bf16.msra.mxu0 0
    %425 = vmatprep.subr.bf16.mxu0 0
    %426 = vmatpush1.bf16.msra.mxu0 0
    %427 = vmatprep.subr.bf16.mxu0 0
    %428 = vmatpush1.bf16.msra.mxu0 0
    %429 = vmatprep.subr.bf16.mxu0 0
    %430 = vmatpush1.bf16.msra.mxu0 0
    %431 = vmatprep.subr.bf16.mxu0 0
    %432 = vmatpush1.bf16.msra.mxu0 0
    %433 = vmatprep.mubr.bf16.mxu0 0
    %434 = vmatmul.mubr.bf16.gmra.mrb[0].mxu0 %v358
    %v435 = vpop.f32.mrb[0].mxu0
    %v436 = vadd.f32 %v127, %v435
    %v437 = vpop.f32.mrb[0].mxu0
    %v438 = vadd.f32 %v131, %v437
    %v439 = vpop.f32.mrb[0].mxu0
    %v440 = vpop.f32.mrb[0].mxu0
    %441 = vdwg.mxu0
    %442 = vmatprep.subr.bf16.mxu0 %v297
    %443 = vmatpush1.bf16.msra.mxu0 %v296
    %444 = vmatprep.subr.bf16.mxu0 %v313
    %445 = vmatpush1.bf16.msra.mxu0 %v312
    %446 = vmatprep.subr.bf16.mxu0 0
    %447 = vmatpush1.bf16.msra.mxu0 0
    %448 = vmatprep.subr.bf16.mxu0 0
    %449 = vmatpush1.bf16.msra.mxu0 0
    %450 = vmatprep.subr.bf16.mxu0 0
    %451 = vmatpush1.bf16.msra.mxu0 0
    %452 = vmatprep.subr.bf16.mxu0 0
    %453 = vmatpush1.bf16.msra.mxu0 0
    %454 = vmatprep.subr.bf16.mxu0 0
    %455 = vmatpush1.bf16.msra.mxu0 0
    %456 = vmatprep.subr.bf16.mxu0 0
    %457 = vmatpush1.bf16.msra.mxu0 0
    %458 = vmatprep.subr.bf16.mxu0 0
    %459 = vmatpush1.bf16.msra.mxu0 0
    %460 = vmatprep.subr.bf16.mxu0 0
    %461 = vmatpush1.bf16.msra.mxu0 0
    %462 = vmatprep.subr.bf16.mxu0 0
    %463 = vmatpush1.bf16.msra.mxu0 0
    %464 = vmatprep.subr.bf16.mxu0 0
    %465 = vmatpush1.bf16.msra.mxu0 0
    %466 = vmatprep.subr.bf16.mxu0 0
    %467 = vmatpush1.bf16.msra.mxu0 0
    %468 = vmatprep.subr.bf16.mxu0 0
    %469 = vmatpush1.bf16.msra.mxu0 0
    %470 = vmatprep.subr.bf16.mxu0 0
    %471 = vmatpush1.bf16.msra.mxu0 0
    %472 = vmatprep.subr.bf16.mxu0 0
    %473 = vmatpush1.bf16.msra.mxu0 0
    %474 = vmatprep.mubr.bf16.mxu0 0
    %475 = vmatmul.mubr.bf16.gmra.mrb[0].mxu0 %v358
    %v476 = vpop.f32.mrb[0].mxu0
    %v477 = vadd.f32 %v135, %v476
    %v478 = vpop.f32.mrb[0].mxu0
    %v479 = vadd.f32 %v139, %v478
    %v480 = vpop.f32.mrb[0].mxu0
    %v481 = vpop.f32.mrb[0].mxu0
    %482 = vdwg.mxu0
    %483 = vmatprep.subr.bf16.mxu0 %v299
    %484 = vmatpush1.bf16.msra.mxu0 %v298
    %485 = vmatprep.subr.bf16.mxu0 %v315
    %486 = vmatpush1.bf16.msra.mxu0 %v314
    %487 = vmatprep.subr.bf16.mxu0 0
    %488 = vmatpush1.bf16.msra.mxu0 0
    %489 = vmatprep.subr.bf16.mxu0 0
    %490 = vmatpush1.bf16.msra.mxu0 0
    %491 = vmatprep.subr.bf16.mxu0 0
    %492 = vmatpush1.bf16.msra.mxu0 0
    %493 = vmatprep.subr.bf16.mxu0 0
    %494 = vmatpush1.bf16.msra.mxu0 0
    %495 = vmatprep.subr.bf16.mxu0 0
    %496 = vmatpush1.bf16.msra.mxu0 0
    %497 = vmatprep.subr.bf16.mxu0 0
    %498 = vmatpush1.bf16.msra.mxu0 0
    %499 = vmatprep.subr.bf16.mxu0 0
    %500 = vmatpush1.bf16.msra.mxu0 0
    %501 = vmatprep.subr.bf16.mxu0 0
    %502 = vmatpush1.bf16.msra.mxu0 0
    %503 = vmatprep.subr.bf16.mxu0 0
    %504 = vmatpush1.bf16.msra.mxu0 0
    %505 = vmatprep.subr.bf16.mxu0 0
    %506 = vmatpush1.bf16.msra.mxu0 0
    %507 = vmatprep.subr.bf16.mxu0 0
    %508 = vmatpush1.bf16.msra.mxu0 0
    %509 = vmatprep.subr.bf16.mxu0 0
    %510 = vmatpush1.bf16.msra.mxu0 0
    %511 = vmatprep.subr.bf16.mxu0 0
    %512 = vmatpush1.bf16.msra.mxu0 0
    %513 = vmatprep.subr.bf16.mxu0 0
    %514 = vmatpush1.bf16.msra.mxu0 0
    %515 = vmatprep.mubr.bf16.mxu0 0
    %516 = vmatmul.mubr.bf16.gmra.mrb[0].mxu0 %v358
    %v517 = vpop.f32.mrb[0].mxu0
    %v518 = vadd.f32 %v143, %v517
    %v519 = vpop.f32.mrb[0].mxu0
    %v520 = vadd.f32 %v147, %v519
    %v521 = vpop.f32.mrb[0].mxu0
    %v522 = vpop.f32.mrb[0].mxu0
    %523 = vdwg.mxu0
    %524 = vmatprep.subr.bf16.mxu0 %v301
    %525 = vmatpush1.bf16.msra.mxu0 %v300
    %526 = vmatprep.subr.bf16.mxu0 %v317
    %527 = vmatpush1.bf16.msra.mxu0 %v316
    %528 = vmatprep.subr.bf16.mxu0 0
    %529 = vmatpush1.bf16.msra.mxu0 0
    %530 = vmatprep.subr.bf16.mxu0 0
    %531 = vmatpush1.bf16.msra.mxu0 0
    %532 = vmatprep.subr.bf16.mxu0 0
    %533 = vmatpush1.bf16.msra.mxu0 0
    %534 = vmatprep.subr.bf16.mxu0 0
    %535 = vmatpush1.bf16.msra.mxu0 0
    %536 = vmatprep.subr.bf16.mxu0 0
    %537 = vmatpush1.bf16.msra.mxu0 0
    %538 = vmatprep.subr.bf16.mxu0 0
    %539 = vmatpush1.bf16.msra.mxu0 0
    %540 = vmatprep.subr.bf16.mxu0 0
    %541 = vmatpush1.bf16.msra.mxu0 0
    %542 = vmatprep.subr.bf16.mxu0 0
    %543 = vmatpush1.bf16.msra.mxu0 0
    %544 = vmatprep.subr.bf16.mxu0 0
    %545 = vmatpush1.bf16.msra.mxu0 0
    %546 = vmatprep.subr.bf16.mxu0 0
    %547 = vmatpush1.bf16.msra.mxu0 0
    %548 = vmatprep.subr.bf16.mxu0 0
    %549 = vmatpush1.bf16.msra.mxu0 0
    %550 = vmatprep.subr.bf16.mxu0 0
    %551 = vmatpush1.bf16.msra.mxu0 0
    %552 = vmatprep.subr.bf16.mxu0 0
    %553 = vmatpush1.bf16.msra.mxu0 0
    %554 = vmatprep.subr.bf16.mxu0 0
    %555 = vmatpush1.bf16.msra.mxu0 0
    %556 = vmatprep.mubr.bf16.mxu0 0
    %557 = vmatmul.mubr.bf16.gmra.mrb[0].mxu0 %v358
    %v558 = vpop.f32.mrb[0].mxu0
    %v559 = vadd.f32 %v151, %v558
    %v560 = vpop.f32.mrb[0].mxu0
    %v561 = vadd.f32 %v155, %v560
    %v562 = vpop.f32.mrb[0].mxu0
    %v563 = vpop.f32.mrb[0].mxu0
    %564 = vdwg.mxu0
    %565 = vmatprep.subr.bf16.mxu0 %v303
    %566 = vmatpush1.bf16.msra.mxu0 %v302
    %567 = vmatprep.subr.bf16.mxu0 %v319
    %568 = vmatpush1.bf16.msra.mxu0 %v318
    %569 = vmatprep.subr.bf16.mxu0 0
    %570 = vmatpush1.bf16.msra.mxu0 0
    %571 = vmatprep.subr.bf16.mxu0 0
    %572 = vmatpush1.bf16.msra.mxu0 0
    %573 = vmatprep.subr.bf16.mxu0 0
    %574 = vmatpush1.bf16.msra.mxu0 0
    %575 = vmatprep.subr.bf16.mxu0 0
    %576 = vmatpush1.bf16.msra.mxu0 0
    %577 = vmatprep.subr.bf16.mxu0 0
    %578 = vmatpush1.bf16.msra.mxu0 0
    %579 = vmatprep.subr.bf16.mxu0 0
    %580 = vmatpush1.bf16.msra.mxu0 0
    %581 = vmatprep.subr.bf16.mxu0 0
    %582 = vmatpush1.bf16.msra.mxu0 0
    %583 = vmatprep.subr.bf16.mxu0 0
    %584 = vmatpush1.bf16.msra.mxu0 0
    %585 = vmatprep.subr.bf16.mxu0 0
    %586 = vmatpush1.bf16.msra.mxu0 0
    %587 = vmatprep.subr.bf16.mxu0 0
    %588 = vmatpush1.bf16.msra.mxu0 0
    %589 = vmatprep.subr.bf16.mxu0 0
    %590 = vmatpush1.bf16.msra.mxu0 0
    %591 = vmatprep.subr.bf16.mxu0 0
    %592 = vmatpush1.bf16.msra.mxu0 0
    %593 = vmatprep.subr.bf16.mxu0 0
    %594 = vmatpush1.bf16.msra.mxu0 0
    %595 = vmatprep.subr.bf16.mxu0 0
    %596 = vmatpush1.bf16.msra.mxu0 0
    %597 = vmatprep.mubr.bf16.mxu0 0
    %598 = vmatmul.mubr.bf16.gmra.mrb[0].mxu0 %v358
    %v599 = vpop.f32.mrb[0].mxu0
    %v600 = vadd.f32 %v159, %v599
    %v601 = vpop.f32.mrb[0].mxu0
    %v602 = vadd.f32 %v163, %v601
    %v603 = vpop.f32.mrb[0].mxu0
    %v604 = vpop.f32.mrb[0].mxu0
    %605 = vdwg.mxu0
    %606 = vmatprep.subr.bf16.mxu0 %v305
    %607 = vmatpush1.bf16.msra.mxu0 %v304
    %608 = vmatprep.subr.bf16.mxu0 %v321
    %609 = vmatpush1.bf16.msra.mxu0 %v320
    %610 = vmatprep.subr.bf16.mxu0 0
    %611 = vmatpush1.bf16.msra.mxu0 0
    %612 = vmatprep.subr.bf16.mxu0 0
    %613 = vmatpush1.bf16.msra.mxu0 0
    %614 = vmatprep.subr.bf16.mxu0 0
    %615 = vmatpush1.bf16.msra.mxu0 0
    %616 = vmatprep.subr.bf16.mxu0 0
    %617 = vmatpush1.bf16.msra.mxu0 0
    %618 = vmatprep.subr.bf16.mxu0 0
    %619 = vmatpush1.bf16.msra.mxu0 0
    %620 = vmatprep.subr.bf16.mxu0 0
    %621 = vmatpush1.bf16.msra.mxu0 0
    %622 = vmatprep.subr.bf16.mxu0 0
    %623 = vmatpush1.bf16.msra.mxu0 0
    %624 = vmatprep.subr.bf16.mxu0 0
    %625 = vmatpush1.bf16.msra.mxu0 0
    %626 = vmatprep.subr.bf16.mxu0 0
    %627 = vmatpush1.bf16.msra.mxu0 0
    %628 = vmatprep.subr.bf16.mxu0 0
    %629 = vmatpush1.bf16.msra.mxu0 0
    %630 = vmatprep.subr.bf16.mxu0 0
    %631 = vmatpush1.bf16.msra.mxu0 0
    %632 = vmatprep.subr.bf16.mxu0 0
    %633 = vmatpush1.bf16.msra.mxu0 0
    %634 = vmatprep.subr.bf16.mxu0 0
    %635 = vmatpush1.bf16.msra.mxu0 0
    %636 = vmatprep.subr.bf16.mxu0 0
    %637 = vmatpush1.bf16.msra.mxu0 0
    %638 = vmatprep.mubr.bf16.mxu0 0
    %639 = vmatmul.mubr.bf16.gmra.mrb[0].mxu0 %v358
    %v640 = vpop.f32.mrb[0].mxu0
    %v641 = vadd.f32 %v167, %v640
    %v642 = vpop.f32.mrb[0].mxu0
    %v643 = vadd.f32 %v171, %v642
    %v644 = vpop.f32.mrb[0].mxu0
    %v645 = vpop.f32.mrb[0].mxu0
    %646 = vdwg.mxu0
    %647 = vmatprep.subr.bf16.mxu0 %v307
    %648 = vmatpush1.bf16.msra.mxu0 %v306
    %649 = vmatprep.subr.bf16.mxu0 %v323
    %650 = vmatpush1.bf16.msra.mxu0 %v322
    %651 = vmatprep.subr.bf16.mxu0 0
    %652 = vmatpush1.bf16.msra.mxu0 0
    %653 = vmatprep.subr.bf16.mxu0 0
    %654 = vmatpush1.bf16.msra.mxu0 0
    %655 = vmatprep.subr.bf16.mxu0 0
    %656 = vmatpush1.bf16.msra.mxu0 0
    %657 = vmatprep.subr.bf16.mxu0 0
    %658 = vmatpush1.bf16.msra.mxu0 0
    %659 = vmatprep.subr.bf16.mxu0 0
    %660 = vmatpush1.bf16.msra.mxu0 0
    %661 = vmatprep.subr.bf16.mxu0 0
    %662 = vmatpush1.bf16.msra.mxu0 0
    %663 = vmatprep.subr.bf16.mxu0 0
    %664 = vmatpush1.bf16.msra.mxu0 0
    %665 = vmatprep.subr.bf16.mxu0 0
    %666 = vmatpush1.bf16.msra.mxu0 0
    %667 = vmatprep.subr.bf16.mxu0 0
    %668 = vmatpush1.bf16.msra.mxu0 0
    %669 = vmatprep.subr.bf16.mxu0 0
    %670 = vmatpush1.bf16.msra.mxu0 0
    %671 = vmatprep.subr.bf16.mxu0 0
    %672 = vmatpush1.bf16.msra.mxu0 0
    %673 = vmatprep.subr.bf16.mxu0 0
    %674 = vmatpush1.bf16.msra.mxu0 0
    %675 = vmatprep.subr.bf16.mxu0 0
    %676 = vmatpush1.bf16.msra.mxu0 0
    %677 = vmatprep.subr.bf16.mxu0 0
    %678 = vmatpush1.bf16.msra.mxu0 0
    %679 = vmatprep.mubr.bf16.mxu0 0
    %680 = vmatmul.mubr.bf16.gmra.mrb[0].mxu0 %v358
    %v681 = vpop.f32.mrb[0].mxu0
    %v682 = vadd.f32 %v175, %v681
    %v683 = vpop.f32.mrb[0].mxu0
    %v684 = vadd.f32 %v179, %v683
    %v685 = vpop.f32.mrb[0].mxu0
    %v686 = vpop.f32.mrb[0].mxu0
    %687 = vdwg.mxu0
    %v688 = vmax.f32 %v395, 0.0
    %v689 = vmax.f32 %v397, 0.0
    %v690 = vmax.f32 %v436, 0.0
    %v691 = vmax.f32 %v438, 0.0
    %v692 = vmax.f32 %v477, 0.0
    %v693 = vmax.f32 %v479, 0.0
    %v694 = vmax.f32 %v518, 0.0
    %v695 = vmax.f32 %v520, 0.0
    %v696 = vmax.f32 %v559, 0.0
    %v697 = vmax.f32 %v561, 0.0
    %v698 = vmax.f32 %v600, 0.0
    %v699 = vmax.f32 %v602, 0.0
    %v700 = vmax.f32 %v641, 0.0
    %v701 = vmax.f32 %v643, 0.0
    %v702 = vmax.f32 %v682, 0.0
    %v703 = vmax.f32 %v684, 0.0
    %v704 = vpack.c.bf16 %v688, %v688
    %v705 = vpack.c.bf16 %v689, %v689
    %v706 = vpack.c.bf16 %v690, %v690
    %v707 = vpack.c.bf16 %v691, %v691
    %v708 = vpack.c.bf16 %v692, %v692
    %v709 = vpack.c.bf16 %v693, %v693
    %v710 = vpack.c.bf16 %v694, %v694
    %v711 = vpack.c.bf16 %v695, %v695
    %v712 = vpack.c.bf16 %v696, %v696
    %v713 = vpack.c.bf16 %v697, %v697
    %v714 = vpack.c.bf16 %v698, %v698
    %v715 = vpack.c.bf16 %v699, %v699
    %v716 = vpack.c.bf16 %v700, %v700
    %v717 = vpack.c.bf16 %v701, %v701
    %v718 = vpack.c.bf16 %v702, %v702
    %v719 = vpack.c.bf16 %v703, %v703
    %v720 = vld [vmem:[#allocation6] sm:$0xff]
    %v721 = vld [vmem:[#allocation6 + $0x8] sm:$0xff]
    %v722 = vld [vmem:[#allocation6 + $0x10] sm:$0xff]
    %v723 = vld [vmem:[#allocation6 + $0x18] sm:$0xff]
    %v724 = vld [vmem:[#allocation6 + $0x20] sm:$0xff]
    %v725 = vld [vmem:[#allocation6 + $0x28] sm:$0xff]
    %v726 = vld [vmem:[#allocation6 + $0x30] sm:$0xff]
    %v727 = vld [vmem:[#allocation6 + $0x38] sm:$0xff]
    %v728 = vld [vmem:[#allocation6 + $0x40] sm:$0xff]
    %v729 = vld [vmem:[#allocation6 + $0x48] sm:$0xff]
    %v730 = vld [vmem:[#allocation6 + $0x50] sm:$0xff]
    %v731 = vld [vmem:[#allocation6 + $0x58] sm:$0xff]
    %v732 = vld [vmem:[#allocation6 + $0x60] sm:$0xff]
    %v733 = vld [vmem:[#allocation6 + $0x68] sm:$0xff]
    %v734 = vld [vmem:[#allocation6 + $0x70] sm:$0xff]
    %v735 = vld [vmem:[#allocation6 + $0x78] sm:$0xff]
    %v736 = vld [vmem:[#allocation6 + $0x80] sm:$0xff]
    %v737 = vld [vmem:[#allocation6 + $0x88] sm:$0xff]
    %v738 = vld [vmem:[#allocation6 + $0x90] sm:$0xff]
    %v739 = vld [vmem:[#allocation6 + $0x98] sm:$0xff]
    %v740 = vld [vmem:[#allocation6 + $0xa0] sm:$0xff]
    %v741 = vld [vmem:[#allocation6 + $0xa8] sm:$0xff]
    %v742 = vld [vmem:[#allocation6 + $0xb0] sm:$0xff]
    %v743 = vld [vmem:[#allocation6 + $0xb8] sm:$0xff]
    %v744 = vld [vmem:[#allocation6 + $0xc0] sm:$0xff]
    %v745 = vld [vmem:[#allocation6 + $0xc8] sm:$0xff]
    %v746 = vld [vmem:[#allocation6 + $0xd0] sm:$0xff]
    %v747 = vld [vmem:[#allocation6 + $0xd8] sm:$0xff]
    %v748 = vld [vmem:[#allocation6 + $0xe0] sm:$0xff]
    %v749 = vld [vmem:[#allocation6 + $0xe8] sm:$0xff]
    %v750 = vld [vmem:[#allocation6 + $0xf0] sm:$0xff]
    %v751 = vld [vmem:[#allocation6 + $0xf8] sm:$0xff]
    %v752 = vld [vmem:[#allocation6 + $0x100] sm:$0xff]
    %v753 = vld [vmem:[#allocation6 + $0x108] sm:$0xff]
    %v754 = vld [vmem:[#allocation6 + $0x110] sm:$0xff]
    %v755 = vld [vmem:[#allocation6 + $0x118] sm:$0xff]
    %v756 = vld [vmem:[#allocation6 + $0x120] sm:$0xff]
    %v757 = vld [vmem:[#allocation6 + $0x128] sm:$0xff]
    %v758 = vld [vmem:[#allocation6 + $0x130] sm:$0xff]
    %v759 = vld [vmem:[#allocation6 + $0x138] sm:$0xff]
    %v760 = vld [vmem:[#allocation6 + $0x140] sm:$0xff]
    %v761 = vld [vmem:[#allocation6 + $0x148] sm:$0xff]
    %v762 = vld [vmem:[#allocation6 + $0x150] sm:$0xff]
    %v763 = vld [vmem:[#allocation6 + $0x158] sm:$0xff]
    %v764 = vld [vmem:[#allocation6 + $0x160] sm:$0xff]
    %v765 = vld [vmem:[#allocation6 + $0x168] sm:$0xff]
    %v766 = vld [vmem:[#allocation6 + $0x170] sm:$0xff]
    %v767 = vld [vmem:[#allocation6 + $0x178] sm:$0xff]
    %v768 = vld [vmem:[#allocation6 + $0x180] sm:$0xff]
    %v769 = vld [vmem:[#allocation6 + $0x188] sm:$0xff]
    %v770 = vld [vmem:[#allocation6 + $0x190] sm:$0xff]
    %v771 = vld [vmem:[#allocation6 + $0x198] sm:$0xff]
    %v772 = vld [vmem:[#allocation6 + $0x1a0] sm:$0xff]
    %v773 = vld [vmem:[#allocation6 + $0x1a8] sm:$0xff]
    %v774 = vld [vmem:[#allocation6 + $0x1b0] sm:$0xff]
    %v775 = vld [vmem:[#allocation6 + $0x1b8] sm:$0xff]
    %v776 = vld [vmem:[#allocation6 + $0x1c0] sm:$0xff]
    %v777 = vld [vmem:[#allocation6 + $0x1c8] sm:$0xff]
    %v778 = vld [vmem:[#allocation6 + $0x1d0] sm:$0xff]
    %v779 = vld [vmem:[#allocation6 + $0x1d8] sm:$0xff]
    %v780 = vld [vmem:[#allocation6 + $0x1e0] sm:$0xff]
    %v781 = vld [vmem:[#allocation6 + $0x1e8] sm:$0xff]
    %v782 = vld [vmem:[#allocation6 + $0x1f0] sm:$0xff]
    %v783 = vld [vmem:[#allocation6 + $0x1f8] sm:$0xff]
    %v784 = vld [vmem:[#allocation6 + $0x200] sm:$0xff]
    %v785 = vld [vmem:[#allocation6 + $0x208] sm:$0xff]
    %v786 = vld [vmem:[#allocation6 + $0x210] sm:$0xff]
    %v787 = vld [vmem:[#allocation6 + $0x218] sm:$0xff]
    %v788 = vld [vmem:[#allocation6 + $0x220] sm:$0xff]
    %v789 = vld [vmem:[#allocation6 + $0x228] sm:$0xff]
    %v790 = vld [vmem:[#allocation6 + $0x230] sm:$0xff]
    %v791 = vld [vmem:[#allocation6 + $0x238] sm:$0xff]
    %v792 = vld [vmem:[#allocation6 + $0x240] sm:$0xff]
    %v793 = vld [vmem:[#allocation6 + $0x248] sm:$0xff]
    %v794 = vld [vmem:[#allocation6 + $0x250] sm:$0xff]
    %v795 = vld [vmem:[#allocation6 + $0x258] sm:$0xff]
    %v796 = vld [vmem:[#allocation6 + $0x260] sm:$0xff]
    %v797 = vld [vmem:[#allocation6 + $0x268] sm:$0xff]
    %v798 = vld [vmem:[#allocation6 + $0x270] sm:$0xff]
    %v799 = vld [vmem:[#allocation6 + $0x278] sm:$0xff]
    %v800 = vld [vmem:[#allocation6 + $0x280] sm:$0xff]
    %v801 = vld [vmem:[#allocation6 + $0x288] sm:$0xff]
    %v802 = vld [vmem:[#allocation6 + $0x290] sm:$0xff]
    %v803 = vld [vmem:[#allocation6 + $0x298] sm:$0xff]
    %v804 = vld [vmem:[#allocation6 + $0x2a0] sm:$0xff]
    %v805 = vld [vmem:[#allocation6 + $0x2a8] sm:$0xff]
    %v806 = vld [vmem:[#allocation6 + $0x2b0] sm:$0xff]
    %v807 = vld [vmem:[#allocation6 + $0x2b8] sm:$0xff]
    %v808 = vld [vmem:[#allocation6 + $0x2c0] sm:$0xff]
    %v809 = vld [vmem:[#allocation6 + $0x2c8] sm:$0xff]
    %v810 = vld [vmem:[#allocation6 + $0x2d0] sm:$0xff]
    %v811 = vld [vmem:[#allocation6 + $0x2d8] sm:$0xff]
    %v812 = vld [vmem:[#allocation6 + $0x2e0] sm:$0xff]
    %v813 = vld [vmem:[#allocation6 + $0x2e8] sm:$0xff]
    %v814 = vld [vmem:[#allocation6 + $0x2f0] sm:$0xff]
    %v815 = vld [vmem:[#allocation6 + $0x2f8] sm:$0xff]
    %v816 = vld [vmem:[#allocation6 + $0x300] sm:$0xff]
    %v817 = vld [vmem:[#allocation6 + $0x308] sm:$0xff]
    %v818 = vld [vmem:[#allocation6 + $0x310] sm:$0xff]
    %v819 = vld [vmem:[#allocation6 + $0x318] sm:$0xff]
    %v820 = vld [vmem:[#allocation6 + $0x320] sm:$0xff]
    %v821 = vld [vmem:[#allocation6 + $0x328] sm:$0xff]
    %v822 = vld [vmem:[#allocation6 + $0x330] sm:$0xff]
    %v823 = vld [vmem:[#allocation6 + $0x338] sm:$0xff]
    %v824 = vld [vmem:[#allocation6 + $0x340] sm:$0xff]
    %v825 = vld [vmem:[#allocation6 + $0x348] sm:$0xff]
    %v826 = vld [vmem:[#allocation6 + $0x350] sm:$0xff]
    %v827 = vld [vmem:[#allocation6 + $0x358] sm:$0xff]
    %v828 = vld [vmem:[#allocation6 + $0x360] sm:$0xff]
    %v829 = vld [vmem:[#allocation6 + $0x368] sm:$0xff]
    %v830 = vld [vmem:[#allocation6 + $0x370] sm:$0xff]
    %v831 = vld [vmem:[#allocation6 + $0x378] sm:$0xff]
    %v832 = vld [vmem:[#allocation6 + $0x380] sm:$0xff]
    %v833 = vld [vmem:[#allocation6 + $0x388] sm:$0xff]
    %v834 = vld [vmem:[#allocation6 + $0x390] sm:$0xff]
    %v835 = vld [vmem:[#allocation6 + $0x398] sm:$0xff]
    %v836 = vld [vmem:[#allocation6 + $0x3a0] sm:$0xff]
    %v837 = vld [vmem:[#allocation6 + $0x3a8] sm:$0xff]
    %v838 = vld [vmem:[#allocation6 + $0x3b0] sm:$0xff]
    %v839 = vld [vmem:[#allocation6 + $0x3b8] sm:$0xff]
    %v840 = vld [vmem:[#allocation6 + $0x3c0] sm:$0xff]
    %v841 = vld [vmem:[#allocation6 + $0x3c8] sm:$0xff]
    %v842 = vld [vmem:[#allocation6 + $0x3d0] sm:$0xff]
    %v843 = vld [vmem:[#allocation6 + $0x3d8] sm:$0xff]
    %v844 = vld [vmem:[#allocation6 + $0x3e0] sm:$0xff]
    %v845 = vld [vmem:[#allocation6 + $0x3e8] sm:$0xff]
    %v846 = vld [vmem:[#allocation6 + $0x3f0] sm:$0xff]
    %v847 = vld [vmem:[#allocation6 + $0x3f8] sm:$0xff]
    %v848 = vld [vmem:[#allocation6 + $0x400] sm:$0xff]
    %v849 = vld [vmem:[#allocation6 + $0x408] sm:$0xff]
    %v850 = vld [vmem:[#allocation6 + $0x410] sm:$0xff]
    %v851 = vld [vmem:[#allocation6 + $0x418] sm:$0xff]
    %v852 = vld [vmem:[#allocation6 + $0x420] sm:$0xff]
    %v853 = vld [vmem:[#allocation6 + $0x428] sm:$0xff]
    %v854 = vld [vmem:[#allocation6 + $0x430] sm:$0xff]
    %v855 = vld [vmem:[#allocation6 + $0x438] sm:$0xff]
    %v856 = vld [vmem:[#allocation6 + $0x440] sm:$0xff]
    %v857 = vld [vmem:[#allocation6 + $0x448] sm:$0xff]
    %v858 = vld [vmem:[#allocation6 + $0x450] sm:$0xff]
    %v859 = vld [vmem:[#allocation6 + $0x458] sm:$0xff]
    %v860 = vld [vmem:[#allocation6 + $0x460] sm:$0xff]
    %v861 = vld [vmem:[#allocation6 + $0x468] sm:$0xff]
    %v862 = vld [vmem:[#allocation6 + $0x470] sm:$0xff]
    %v863 = vld [vmem:[#allocation6 + $0x478] sm:$0xff]
    %v864 = vld [vmem:[#allocation6 + $0x480] sm:$0xff]
    %v865 = vld [vmem:[#allocation6 + $0x488] sm:$0xff]
    %v866 = vld [vmem:[#allocation6 + $0x490] sm:$0xff]
    %v867 = vld [vmem:[#allocation6 + $0x498] sm:$0xff]
    %v868 = vld [vmem:[#allocation6 + $0x4a0] sm:$0xff]
    %v869 = vld [vmem:[#allocation6 + $0x4a8] sm:$0xff]
    %v870 = vld [vmem:[#allocation6 + $0x4b0] sm:$0xff]
    %v871 = vld [vmem:[#allocation6 + $0x4b8] sm:$0xff]
    %v872 = vld [vmem:[#allocation6 + $0x4c0] sm:$0xff]
    %v873 = vld [vmem:[#allocation6 + $0x4c8] sm:$0xff]
    %v874 = vld [vmem:[#allocation6 + $0x4d0] sm:$0xff]
    %v875 = vld [vmem:[#allocation6 + $0x4d8] sm:$0xff]
    %v876 = vld [vmem:[#allocation6 + $0x4e0] sm:$0xff]
    %v877 = vld [vmem:[#allocation6 + $0x4e8] sm:$0xff]
    %v878 = vld [vmem:[#allocation6 + $0x4f0] sm:$0xff]
    %v879 = vld [vmem:[#allocation6 + $0x4f8] sm:$0xff]
    %v880 = vld [vmem:[#allocation6 + $0x500] sm:$0xff]
    %v881 = vld [vmem:[#allocation6 + $0x508] sm:$0xff]
    %v882 = vld [vmem:[#allocation6 + $0x510] sm:$0xff]
    %v883 = vld [vmem:[#allocation6 + $0x518] sm:$0xff]
    %v884 = vld [vmem:[#allocation6 + $0x520] sm:$0xff]
    %v885 = vld [vmem:[#allocation6 + $0x528] sm:$0xff]
    %v886 = vld [vmem:[#allocation6 + $0x530] sm:$0xff]
    %v887 = vld [vmem:[#allocation6 + $0x538] sm:$0xff]
    %v888 = vld [vmem:[#allocation6 + $0x540] sm:$0xff]
    %v889 = vld [vmem:[#allocation6 + $0x548] sm:$0xff]
    %v890 = vld [vmem:[#allocation6 + $0x550] sm:$0xff]
    %v891 = vld [vmem:[#allocation6 + $0x558] sm:$0xff]
    %v892 = vld [vmem:[#allocation6 + $0x560] sm:$0xff]
    %v893 = vld [vmem:[#allocation6 + $0x568] sm:$0xff]
    %v894 = vld [vmem:[#allocation6 + $0x570] sm:$0xff]
    %v895 = vld [vmem:[#allocation6 + $0x578] sm:$0xff]
    %v896 = vld [vmem:[#allocation6 + $0x580] sm:$0xff]
    %v897 = vld [vmem:[#allocation6 + $0x588] sm:$0xff]
    %v898 = vld [vmem:[#allocation6 + $0x590] sm:$0xff]
    %v899 = vld [vmem:[#allocation6 + $0x598] sm:$0xff]
    %v900 = vld [vmem:[#allocation6 + $0x5a0] sm:$0xff]
    %v901 = vld [vmem:[#allocation6 + $0x5a8] sm:$0xff]
    %v902 = vld [vmem:[#allocation6 + $0x5b0] sm:$0xff]
    %v903 = vld [vmem:[#allocation6 + $0x5b8] sm:$0xff]
    %v904 = vld [vmem:[#allocation6 + $0x5c0] sm:$0xff]
    %v905 = vld [vmem:[#allocation6 + $0x5c8] sm:$0xff]
    %v906 = vld [vmem:[#allocation6 + $0x5d0] sm:$0xff]
    %v907 = vld [vmem:[#allocation6 + $0x5d8] sm:$0xff]
    %v908 = vld [vmem:[#allocation6 + $0x5e0] sm:$0xff]
    %v909 = vld [vmem:[#allocation6 + $0x5e8] sm:$0xff]
    %v910 = vld [vmem:[#allocation6 + $0x5f0] sm:$0xff]
    %v911 = vld [vmem:[#allocation6 + $0x5f8] sm:$0xff]
    %v912 = vld [vmem:[#allocation6 + $0x600] sm:$0xff]
    %v913 = vld [vmem:[#allocation6 + $0x608] sm:$0xff]
    %v914 = vld [vmem:[#allocation6 + $0x610] sm:$0xff]
    %v915 = vld [vmem:[#allocation6 + $0x618] sm:$0xff]
    %v916 = vld [vmem:[#allocation6 + $0x620] sm:$0xff]
    %v917 = vld [vmem:[#allocation6 + $0x628] sm:$0xff]
    %v918 = vld [vmem:[#allocation6 + $0x630] sm:$0xff]
    %v919 = vld [vmem:[#allocation6 + $0x638] sm:$0xff]
    %v920 = vld [vmem:[#allocation6 + $0x640] sm:$0xff]
    %v921 = vld [vmem:[#allocation6 + $0x648] sm:$0xff]
    %v922 = vld [vmem:[#allocation6 + $0x650] sm:$0xff]
    %v923 = vld [vmem:[#allocation6 + $0x658] sm:$0xff]
    %v924 = vld [vmem:[#allocation6 + $0x660] sm:$0xff]
    %v925 = vld [vmem:[#allocation6 + $0x668] sm:$0xff]
    %v926 = vld [vmem:[#allocation6 + $0x670] sm:$0xff]
    %v927 = vld [vmem:[#allocation6 + $0x678] sm:$0xff]
    %v928 = vld [vmem:[#allocation6 + $0x680] sm:$0xff]
    %v929 = vld [vmem:[#allocation6 + $0x688] sm:$0xff]
    %v930 = vld [vmem:[#allocation6 + $0x690] sm:$0xff]
    %v931 = vld [vmem:[#allocation6 + $0x698] sm:$0xff]
    %v932 = vld [vmem:[#allocation6 + $0x6a0] sm:$0xff]
    %v933 = vld [vmem:[#allocation6 + $0x6a8] sm:$0xff]
    %v934 = vld [vmem:[#allocation6 + $0x6b0] sm:$0xff]
    %v935 = vld [vmem:[#allocation6 + $0x6b8] sm:$0xff]
    %v936 = vld [vmem:[#allocation6 + $0x6c0] sm:$0xff]
    %v937 = vld [vmem:[#allocation6 + $0x6c8] sm:$0xff]
    %v938 = vld [vmem:[#allocation6 + $0x6d0] sm:$0xff]
    %v939 = vld [vmem:[#allocation6 + $0x6d8] sm:$0xff]
    %v940 = vld [vmem:[#allocation6 + $0x6e0] sm:$0xff]
    %v941 = vld [vmem:[#allocation6 + $0x6e8] sm:$0xff]
    %v942 = vld [vmem:[#allocation6 + $0x6f0] sm:$0xff]
    %v943 = vld [vmem:[#allocation6 + $0x6f8] sm:$0xff]
    %v944 = vld [vmem:[#allocation6 + $0x700] sm:$0xff]
    %v945 = vld [vmem:[#allocation6 + $0x708] sm:$0xff]
    %v946 = vld [vmem:[#allocation6 + $0x710] sm:$0xff]
    %v947 = vld [vmem:[#allocation6 + $0x718] sm:$0xff]
    %v948 = vld [vmem:[#allocation6 + $0x720] sm:$0xff]
    %v949 = vld [vmem:[#allocation6 + $0x728] sm:$0xff]
    %v950 = vld [vmem:[#allocation6 + $0x730] sm:$0xff]
    %v951 = vld [vmem:[#allocation6 + $0x738] sm:$0xff]
    %v952 = vld [vmem:[#allocation6 + $0x740] sm:$0xff]
    %v953 = vld [vmem:[#allocation6 + $0x748] sm:$0xff]
    %v954 = vld [vmem:[#allocation6 + $0x750] sm:$0xff]
    %v955 = vld [vmem:[#allocation6 + $0x758] sm:$0xff]
    %v956 = vld [vmem:[#allocation6 + $0x760] sm:$0xff]
    %v957 = vld [vmem:[#allocation6 + $0x768] sm:$0xff]
    %v958 = vld [vmem:[#allocation6 + $0x770] sm:$0xff]
    %v959 = vld [vmem:[#allocation6 + $0x778] sm:$0xff]
    %v960 = vld [vmem:[#allocation6 + $0x780] sm:$0xff]
    %v961 = vld [vmem:[#allocation6 + $0x788] sm:$0xff]
    %v962 = vld [vmem:[#allocation6 + $0x790] sm:$0xff]
    %v963 = vld [vmem:[#allocation6 + $0x798] sm:$0xff]
    %v964 = vld [vmem:[#allocation6 + $0x7a0] sm:$0xff]
    %v965 = vld [vmem:[#allocation6 + $0x7a8] sm:$0xff]
    %v966 = vld [vmem:[#allocation6 + $0x7b0] sm:$0xff]
    %v967 = vld [vmem:[#allocation6 + $0x7b8] sm:$0xff]
    %v968 = vld [vmem:[#allocation6 + $0x7c0] sm:$0xff]
    %v969 = vld [vmem:[#allocation6 + $0x7c8] sm:$0xff]
    %v970 = vld [vmem:[#allocation6 + $0x7d0] sm:$0xff]
    %v971 = vld [vmem:[#allocation6 + $0x7d8] sm:$0xff]
    %v972 = vld [vmem:[#allocation6 + $0x7e0] sm:$0xff]
    %v973 = vld [vmem:[#allocation6 + $0x7e8] sm:$0xff]
    %v974 = vld [vmem:[#allocation6 + $0x7f0] sm:$0xff]
    %v975 = vld [vmem:[#allocation6 + $0x7f8] sm:$0xff]
    %v976 = vld [vmem:[#allocation6 + $0x800] sm:$0xff]
    %v977 = vld [vmem:[#allocation6 + $0x808] sm:$0xff]
    %v978 = vld [vmem:[#allocation6 + $0x810] sm:$0xff]
    %v979 = vld [vmem:[#allocation6 + $0x818] sm:$0xff]
    %v980 = vld [vmem:[#allocation6 + $0x820] sm:$0xff]
    %v981 = vld [vmem:[#allocation6 + $0x828] sm:$0xff]
    %v982 = vld [vmem:[#allocation6 + $0x830] sm:$0xff]
    %v983 = vld [vmem:[#allocation6 + $0x838] sm:$0xff]
    %v984 = vld [vmem:[#allocation6 + $0x840] sm:$0xff]
    %v985 = vld [vmem:[#allocation6 + $0x848] sm:$0xff]
    %v986 = vld [vmem:[#allocation6 + $0x850] sm:$0xff]
    %v987 = vld [vmem:[#allocation6 + $0x858] sm:$0xff]
    %v988 = vld [vmem:[#allocation6 + $0x860] sm:$0xff]
    %v989 = vld [vmem:[#allocation6 + $0x868] sm:$0xff]
    %v990 = vld [vmem:[#allocation6 + $0x870] sm:$0xff]
    %v991 = vld [vmem:[#allocation6 + $0x878] sm:$0xff]
    %v992 = vld [vmem:[#allocation6 + $0x880] sm:$0xff]
    %v993 = vld [vmem:[#allocation6 + $0x888] sm:$0xff]
    %v994 = vld [vmem:[#allocation6 + $0x890] sm:$0xff]
    %v995 = vld [vmem:[#allocation6 + $0x898] sm:$0xff]
    %v996 = vld [vmem:[#allocation6 + $0x8a0] sm:$0xff]
    %v997 = vld [vmem:[#allocation6 + $0x8a8] sm:$0xff]
    %v998 = vld [vmem:[#allocation6 + $0x8b0] sm:$0xff]
    %v999 = vld [vmem:[#allocation6 + $0x8b8] sm:$0xff]
    %v1000 = vld [vmem:[#allocation6 + $0x8c0] sm:$0xff]
    %v1001 = vld [vmem:[#allocation6 + $0x8c8] sm:$0xff]
    %v1002 = vld [vmem:[#allocation6 + $0x8d0] sm:$0xff]
    %v1003 = vld [vmem:[#allocation6 + $0x8d8] sm:$0xff]
    %v1004 = vld [vmem:[#allocation6 + $0x8e0] sm:$0xff]
    %v1005 = vld [vmem:[#allocation6 + $0x8e8] sm:$0xff]
    %v1006 = vld [vmem:[#allocation6 + $0x8f0] sm:$0xff]
    %v1007 = vld [vmem:[#allocation6 + $0x8f8] sm:$0xff]
    %v1008 = vld [vmem:[#allocation6 + $0x900] sm:$0xff]
    %v1009 = vld [vmem:[#allocation6 + $0x908] sm:$0xff]
    %v1010 = vld [vmem:[#allocation6 + $0x910] sm:$0xff]
    %v1011 = vld [vmem:[#allocation6 + $0x918] sm:$0xff]
    %v1012 = vld [vmem:[#allocation6 + $0x920] sm:$0xff]
    %v1013 = vld [vmem:[#allocation6 + $0x928] sm:$0xff]
    %v1014 = vld [vmem:[#allocation6 + $0x930] sm:$0xff]
    %v1015 = vld [vmem:[#allocation6 + $0x938] sm:$0xff]
    %v1016 = vld [vmem:[#allocation6 + $0x940] sm:$0xff]
    %v1017 = vld [vmem:[#allocation6 + $0x948] sm:$0xff]
    %v1018 = vld [vmem:[#allocation6 + $0x950] sm:$0xff]
    %v1019 = vld [vmem:[#allocation6 + $0x958] sm:$0xff]
    %v1020 = vld [vmem:[#allocation6 + $0x960] sm:$0xff]
    %v1021 = vld [vmem:[#allocation6 + $0x968] sm:$0xff]
    %v1022 = vld [vmem:[#allocation6 + $0x970] sm:$0xff]
    %v1023 = vld [vmem:[#allocation6 + $0x978] sm:$0xff]
    %v1024 = vld [vmem:[#allocation6 + $0x980] sm:$0xff]
    %v1025 = vld [vmem:[#allocation6 + $0x988] sm:$0xff]
    %v1026 = vld [vmem:[#allocation6 + $0x990] sm:$0xff]
    %v1027 = vld [vmem:[#allocation6 + $0x998] sm:$0xff]
    %v1028 = vld [vmem:[#allocation6 + $0x9a0] sm:$0xff]
    %v1029 = vld [vmem:[#allocation6 + $0x9a8] sm:$0xff]
    %v1030 = vld [vmem:[#allocation6 + $0x9b0] sm:$0xff]
    %v1031 = vld [vmem:[#allocation6 + $0x9b8] sm:$0xff]
    %v1032 = vld [vmem:[#allocation6 + $0x9c0] sm:$0xff]
    %v1033 = vld [vmem:[#allocation6 + $0x9c8] sm:$0xff]
    %v1034 = vld [vmem:[#allocation6 + $0x9d0] sm:$0xff]
    %v1035 = vld [vmem:[#allocation6 + $0x9d8] sm:$0xff]
    %v1036 = vld [vmem:[#allocation6 + $0x9e0] sm:$0xff]
    %v1037 = vld [vmem:[#allocation6 + $0x9e8] sm:$0xff]
    %v1038 = vld [vmem:[#allocation6 + $0x9f0] sm:$0xff]
    %v1039 = vld [vmem:[#allocation6 + $0x9f8] sm:$0xff]
    %v1040 = vld [vmem:[#allocation6 + $0xa00] sm:$0xff]
    %v1041 = vld [vmem:[#allocation6 + $0xa08] sm:$0xff]
    %v1042 = vld [vmem:[#allocation6 + $0xa10] sm:$0xff]
    %v1043 = vld [vmem:[#allocation6 + $0xa18] sm:$0xff]
    %v1044 = vld [vmem:[#allocation6 + $0xa20] sm:$0xff]
    %v1045 = vld [vmem:[#allocation6 + $0xa28] sm:$0xff]
    %v1046 = vld [vmem:[#allocation6 + $0xa30] sm:$0xff]
    %v1047 = vld [vmem:[#allocation6 + $0xa38] sm:$0xff]
    %v1048 = vld [vmem:[#allocation6 + $0xa40] sm:$0xff]
    %v1049 = vld [vmem:[#allocation6 + $0xa48] sm:$0xff]
    %v1050 = vld [vmem:[#allocation6 + $0xa50] sm:$0xff]
    %v1051 = vld [vmem:[#allocation6 + $0xa58] sm:$0xff]
    %v1052 = vld [vmem:[#allocation6 + $0xa60] sm:$0xff]
    %v1053 = vld [vmem:[#allocation6 + $0xa68] sm:$0xff]
    %v1054 = vld [vmem:[#allocation6 + $0xa70] sm:$0xff]
    %v1055 = vld [vmem:[#allocation6 + $0xa78] sm:$0xff]
    %v1056 = vld [vmem:[#allocation6 + $0xa80] sm:$0xff]
    %v1057 = vld [vmem:[#allocation6 + $0xa88] sm:$0xff]
    %v1058 = vld [vmem:[#allocation6 + $0xa90] sm:$0xff]
    %v1059 = vld [vmem:[#allocation6 + $0xa98] sm:$0xff]
    %v1060 = vld [vmem:[#allocation6 + $0xaa0] sm:$0xff]
    %v1061 = vld [vmem:[#allocation6 + $0xaa8] sm:$0xff]
    %v1062 = vld [vmem:[#allocation6 + $0xab0] sm:$0xff]
    %v1063 = vld [vmem:[#allocation6 + $0xab8] sm:$0xff]
    %v1064 = vld [vmem:[#allocation6 + $0xac0] sm:$0xff]
    %v1065 = vld [vmem:[#allocation6 + $0xac8] sm:$0xff]
    %v1066 = vld [vmem:[#allocation6 + $0xad0] sm:$0xff]
    %v1067 = vld [vmem:[#allocation6 + $0xad8] sm:$0xff]
    %v1068 = vld [vmem:[#allocation6 + $0xae0] sm:$0xff]
    %v1069 = vld [vmem:[#allocation6 + $0xae8] sm:$0xff]
    %v1070 = vld [vmem:[#allocation6 + $0xaf0] sm:$0xff]
    %v1071 = vld [vmem:[#allocation6 + $0xaf8] sm:$0xff]
    %v1072 = vld [vmem:[#allocation6 + $0xb00] sm:$0xff]
    %v1073 = vld [vmem:[#allocation6 + $0xb08] sm:$0xff]
    %v1074 = vld [vmem:[#allocation6 + $0xb10] sm:$0xff]
    %v1075 = vld [vmem:[#allocation6 + $0xb18] sm:$0xff]
    %v1076 = vld [vmem:[#allocation6 + $0xb20] sm:$0xff]
    %v1077 = vld [vmem:[#allocation6 + $0xb28] sm:$0xff]
    %v1078 = vld [vmem:[#allocation6 + $0xb30] sm:$0xff]
    %v1079 = vld [vmem:[#allocation6 + $0xb38] sm:$0xff]
    %v1080 = vld [vmem:[#allocation6 + $0xb40] sm:$0xff]
    %v1081 = vld [vmem:[#allocation6 + $0xb48] sm:$0xff]
    %v1082 = vld [vmem:[#allocation6 + $0xb50] sm:$0xff]
    %v1083 = vld [vmem:[#allocation6 + $0xb58] sm:$0xff]
    %v1084 = vld [vmem:[#allocation6 + $0xb60] sm:$0xff]
    %v1085 = vld [vmem:[#allocation6 + $0xb68] sm:$0xff]
    %v1086 = vld [vmem:[#allocation6 + $0xb70] sm:$0xff]
    %v1087 = vld [vmem:[#allocation6 + $0xb78] sm:$0xff]
    %v1088 = vld [vmem:[#allocation6 + $0xb80] sm:$0xff]
    %v1089 = vld [vmem:[#allocation6 + $0xb88] sm:$0xff]
    %v1090 = vld [vmem:[#allocation6 + $0xb90] sm:$0xff]
    %v1091 = vld [vmem:[#allocation6 + $0xb98] sm:$0xff]
    %v1092 = vld [vmem:[#allocation6 + $0xba0] sm:$0xff]
    %v1093 = vld [vmem:[#allocation6 + $0xba8] sm:$0xff]
    %v1094 = vld [vmem:[#allocation6 + $0xbb0] sm:$0xff]
    %v1095 = vld [vmem:[#allocation6 + $0xbb8] sm:$0xff]
    %v1096 = vld [vmem:[#allocation6 + $0xbc0] sm:$0xff]
    %v1097 = vld [vmem:[#allocation6 + $0xbc8] sm:$0xff]
    %v1098 = vld [vmem:[#allocation6 + $0xbd0] sm:$0xff]
    %v1099 = vld [vmem:[#allocation6 + $0xbd8] sm:$0xff]
    %v1100 = vld [vmem:[#allocation6 + $0xbe0] sm:$0xff]
    %v1101 = vld [vmem:[#allocation6 + $0xbe8] sm:$0xff]
    %v1102 = vld [vmem:[#allocation6 + $0xbf0] sm:$0xff]
    %v1103 = vld [vmem:[#allocation6 + $0xbf8] sm:$0xff]
    %v1104 = vld [vmem:[#allocation6 + $0xc00] sm:$0xff]
    %v1105 = vld [vmem:[#allocation6 + $0xc08] sm:$0xff]
    %v1106 = vld [vmem:[#allocation6 + $0xc10] sm:$0xff]
    %v1107 = vld [vmem:[#allocation6 + $0xc18] sm:$0xff]
    %v1108 = vld [vmem:[#allocation6 + $0xc20] sm:$0xff]
    %v1109 = vld [vmem:[#allocation6 + $0xc28] sm:$0xff]
    %v1110 = vld [vmem:[#allocation6 + $0xc30] sm:$0xff]
    %v1111 = vld [vmem:[#allocation6 + $0xc38] sm:$0xff]
    %v1112 = vld [vmem:[#allocation6 + $0xc40] sm:$0xff]
    %v1113 = vld [vmem:[#allocation6 + $0xc48] sm:$0xff]
    %v1114 = vld [vmem:[#allocation6 + $0xc50] sm:$0xff]
    %v1115 = vld [vmem:[#allocation6 + $0xc58] sm:$0xff]
    %v1116 = vld [vmem:[#allocation6 + $0xc60] sm:$0xff]
    %v1117 = vld [vmem:[#allocation6 + $0xc68] sm:$0xff]
    %v1118 = vld [vmem:[#allocation6 + $0xc70] sm:$0xff]
    %v1119 = vld [vmem:[#allocation6 + $0xc78] sm:$0xff]
    %v1120 = vld [vmem:[#allocation6 + $0xc80] sm:$0xff]
    %v1121 = vld [vmem:[#allocation6 + $0xc88] sm:$0xff]
    %v1122 = vld [vmem:[#allocation6 + $0xc90] sm:$0xff]
    %v1123 = vld [vmem:[#allocation6 + $0xc98] sm:$0xff]
    %v1124 = vld [vmem:[#allocation6 + $0xca0] sm:$0xff]
    %v1125 = vld [vmem:[#allocation6 + $0xca8] sm:$0xff]
    %v1126 = vld [vmem:[#allocation6 + $0xcb0] sm:$0xff]
    %v1127 = vld [vmem:[#allocation6 + $0xcb8] sm:$0xff]
    %v1128 = vld [vmem:[#allocation6 + $0xcc0] sm:$0xff]
    %v1129 = vld [vmem:[#allocation6 + $0xcc8] sm:$0xff]
    %v1130 = vld [vmem:[#allocation6 + $0xcd0] sm:$0xff]
    %v1131 = vld [vmem:[#allocation6 + $0xcd8] sm:$0xff]
    %v1132 = vld [vmem:[#allocation6 + $0xce0] sm:$0xff]
    %v1133 = vld [vmem:[#allocation6 + $0xce8] sm:$0xff]
    %v1134 = vld [vmem:[#allocation6 + $0xcf0] sm:$0xff]
    %v1135 = vld [vmem:[#allocation6 + $0xcf8] sm:$0xff]
    %v1136 = vld [vmem:[#allocation6 + $0xd00] sm:$0xff]
    %v1137 = vld [vmem:[#allocation6 + $0xd08] sm:$0xff]
    %v1138 = vld [vmem:[#allocation6 + $0xd10] sm:$0xff]
    %v1139 = vld [vmem:[#allocation6 + $0xd18] sm:$0xff]
    %v1140 = vld [vmem:[#allocation6 + $0xd20] sm:$0xff]
    %v1141 = vld [vmem:[#allocation6 + $0xd28] sm:$0xff]
    %v1142 = vld [vmem:[#allocation6 + $0xd30] sm:$0xff]
    %v1143 = vld [vmem:[#allocation6 + $0xd38] sm:$0xff]
    %v1144 = vld [vmem:[#allocation6 + $0xd40] sm:$0xff]
    %v1145 = vld [vmem:[#allocation6 + $0xd48] sm:$0xff]
    %v1146 = vld [vmem:[#allocation6 + $0xd50] sm:$0xff]
    %v1147 = vld [vmem:[#allocation6 + $0xd58] sm:$0xff]
    %v1148 = vld [vmem:[#allocation6 + $0xd60] sm:$0xff]
    %v1149 = vld [vmem:[#allocation6 + $0xd68] sm:$0xff]
    %v1150 = vld [vmem:[#allocation6 + $0xd70] sm:$0xff]
    %v1151 = vld [vmem:[#allocation6 + $0xd78] sm:$0xff]
    %v1152 = vld [vmem:[#allocation6 + $0xd80] sm:$0xff]
    %v1153 = vld [vmem:[#allocation6 + $0xd88] sm:$0xff]
    %v1154 = vld [vmem:[#allocation6 + $0xd90] sm:$0xff]
    %v1155 = vld [vmem:[#allocation6 + $0xd98] sm:$0xff]
    %v1156 = vld [vmem:[#allocation6 + $0xda0] sm:$0xff]
    %v1157 = vld [vmem:[#allocation6 + $0xda8] sm:$0xff]
    %v1158 = vld [vmem:[#allocation6 + $0xdb0] sm:$0xff]
    %v1159 = vld [vmem:[#allocation6 + $0xdb8] sm:$0xff]
    %v1160 = vld [vmem:[#allocation6 + $0xdc0] sm:$0xff]
    %v1161 = vld [vmem:[#allocation6 + $0xdc8] sm:$0xff]
    %v1162 = vld [vmem:[#allocation6 + $0xdd0] sm:$0xff]
    %v1163 = vld [vmem:[#allocation6 + $0xdd8] sm:$0xff]
    %v1164 = vld [vmem:[#allocation6 + $0xde0] sm:$0xff]
    %v1165 = vld [vmem:[#allocation6 + $0xde8] sm:$0xff]
    %v1166 = vld [vmem:[#allocation6 + $0xdf0] sm:$0xff]
    %v1167 = vld [vmem:[#allocation6 + $0xdf8] sm:$0xff]
    %v1168 = vld [vmem:[#allocation6 + $0xe00] sm:$0xff]
    %v1169 = vld [vmem:[#allocation6 + $0xe08] sm:$0xff]
    %v1170 = vld [vmem:[#allocation6 + $0xe10] sm:$0xff]
    %v1171 = vld [vmem:[#allocation6 + $0xe18] sm:$0xff]
    %v1172 = vld [vmem:[#allocation6 + $0xe20] sm:$0xff]
    %v1173 = vld [vmem:[#allocation6 + $0xe28] sm:$0xff]
    %v1174 = vld [vmem:[#allocation6 + $0xe30] sm:$0xff]
    %v1175 = vld [vmem:[#allocation6 + $0xe38] sm:$0xff]
    %v1176 = vld [vmem:[#allocation6 + $0xe40] sm:$0xff]
    %v1177 = vld [vmem:[#allocation6 + $0xe48] sm:$0xff]
    %v1178 = vld [vmem:[#allocation6 + $0xe50] sm:$0xff]
    %v1179 = vld [vmem:[#allocation6 + $0xe58] sm:$0xff]
    %v1180 = vld [vmem:[#allocation6 + $0xe60] sm:$0xff]
    %v1181 = vld [vmem:[#allocation6 + $0xe68] sm:$0xff]
    %v1182 = vld [vmem:[#allocation6 + $0xe70] sm:$0xff]
    %v1183 = vld [vmem:[#allocation6 + $0xe78] sm:$0xff]
    %v1184 = vld [vmem:[#allocation6 + $0xe80] sm:$0xff]
    %v1185 = vld [vmem:[#allocation6 + $0xe88] sm:$0xff]
    %v1186 = vld [vmem:[#allocation6 + $0xe90] sm:$0xff]
    %v1187 = vld [vmem:[#allocation6 + $0xe98] sm:$0xff]
    %v1188 = vld [vmem:[#allocation6 + $0xea0] sm:$0xff]
    %v1189 = vld [vmem:[#allocation6 + $0xea8] sm:$0xff]
    %v1190 = vld [vmem:[#allocation6 + $0xeb0] sm:$0xff]
    %v1191 = vld [vmem:[#allocation6 + $0xeb8] sm:$0xff]
    %v1192 = vld [vmem:[#allocation6 + $0xec0] sm:$0xff]
    %v1193 = vld [vmem:[#allocation6 + $0xec8] sm:$0xff]
    %v1194 = vld [vmem:[#allocation6 + $0xed0] sm:$0xff]
    %v1195 = vld [vmem:[#allocation6 + $0xed8] sm:$0xff]
    %v1196 = vld [vmem:[#allocation6 + $0xee0] sm:$0xff]
    %v1197 = vld [vmem:[#allocation6 + $0xee8] sm:$0xff]
    %v1198 = vld [vmem:[#allocation6 + $0xef0] sm:$0xff]
    %v1199 = vld [vmem:[#allocation6 + $0xef8] sm:$0xff]
    %v1200 = vld [vmem:[#allocation6 + $0xf00] sm:$0xff]
    %v1201 = vld [vmem:[#allocation6 + $0xf08] sm:$0xff]
    %v1202 = vld [vmem:[#allocation6 + $0xf10] sm:$0xff]
    %v1203 = vld [vmem:[#allocation6 + $0xf18] sm:$0xff]
    %v1204 = vld [vmem:[#allocation6 + $0xf20] sm:$0xff]
    %v1205 = vld [vmem:[#allocation6 + $0xf28] sm:$0xff]
    %v1206 = vld [vmem:[#allocation6 + $0xf30] sm:$0xff]
    %v1207 = vld [vmem:[#allocation6 + $0xf38] sm:$0xff]
    %v1208 = vld [vmem:[#allocation6 + $0xf40] sm:$0xff]
    %v1209 = vld [vmem:[#allocation6 + $0xf48] sm:$0xff]
    %v1210 = vld [vmem:[#allocation6 + $0xf50] sm:$0xff]
    %v1211 = vld [vmem:[#allocation6 + $0xf58] sm:$0xff]
    %v1212 = vld [vmem:[#allocation6 + $0xf60] sm:$0xff]
    %v1213 = vld [vmem:[#allocation6 + $0xf68] sm:$0xff]
    %v1214 = vld [vmem:[#allocation6 + $0xf70] sm:$0xff]
    %v1215 = vld [vmem:[#allocation6 + $0xf78] sm:$0xff]
    %v1216 = vld [vmem:[#allocation6 + $0xf80] sm:$0xff]
    %v1217 = vld [vmem:[#allocation6 + $0xf88] sm:$0xff]
    %v1218 = vld [vmem:[#allocation6 + $0xf90] sm:$0xff]
    %v1219 = vld [vmem:[#allocation6 + $0xf98] sm:$0xff]
    %v1220 = vld [vmem:[#allocation6 + $0xfa0] sm:$0xff]
    %v1221 = vld [vmem:[#allocation6 + $0xfa8] sm:$0xff]
    %v1222 = vld [vmem:[#allocation6 + $0xfb0] sm:$0xff]
    %v1223 = vld [vmem:[#allocation6 + $0xfb8] sm:$0xff]
    %v1224 = vld [vmem:[#allocation6 + $0xfc0] sm:$0xff]
    %v1225 = vld [vmem:[#allocation6 + $0xfc8] sm:$0xff]
    %v1226 = vld [vmem:[#allocation6 + $0xfd0] sm:$0xff]
    %v1227 = vld [vmem:[#allocation6 + $0xfd8] sm:$0xff]
    %v1228 = vld [vmem:[#allocation6 + $0xfe0] sm:$0xff]
    %v1229 = vld [vmem:[#allocation6 + $0xfe8] sm:$0xff]
    %v1230 = vld [vmem:[#allocation6 + $0xff0] sm:$0xff]
    %v1231 = vld [vmem:[#allocation6 + $0xff8] sm:$0xff]
    %v1232 = vld [vmem:[#allocation6 + $0x1000] sm:$0xff]
    %v1233 = vld [vmem:[#allocation6 + $0x1008] sm:$0xff]
    %v1234 = vld [vmem:[#allocation6 + $0x1010] sm:$0xff]
    %v1235 = vld [vmem:[#allocation6 + $0x1018] sm:$0xff]
    %v1236 = vld [vmem:[#allocation6 + $0x1020] sm:$0xff]
    %v1237 = vld [vmem:[#allocation6 + $0x1028] sm:$0xff]
    %v1238 = vld [vmem:[#allocation6 + $0x1030] sm:$0xff]
    %v1239 = vld [vmem:[#allocation6 + $0x1038] sm:$0xff]
    %v1240 = vld [vmem:[#allocation6 + $0x1040] sm:$0xff]
    %v1241 = vld [vmem:[#allocation6 + $0x1048] sm:$0xff]
    %v1242 = vld [vmem:[#allocation6 + $0x1050] sm:$0xff]
    %v1243 = vld [vmem:[#allocation6 + $0x1058] sm:$0xff]
    %v1244 = vld [vmem:[#allocation6 + $0x1060] sm:$0xff]
    %v1245 = vld [vmem:[#allocation6 + $0x1068] sm:$0xff]
    %v1246 = vld [vmem:[#allocation6 + $0x1070] sm:$0xff]
    %v1247 = vld [vmem:[#allocation6 + $0x1078] sm:$0xff]
    %v1248 = vld [vmem:[#allocation6 + $0x1080] sm:$0xff]
    %v1249 = vld [vmem:[#allocation6 + $0x1088] sm:$0xff]
    %v1250 = vld [vmem:[#allocation6 + $0x1090] sm:$0xff]
    %v1251 = vld [vmem:[#allocation6 + $0x1098] sm:$0xff]
    %v1252 = vld [vmem:[#allocation6 + $0x10a0] sm:$0xff]
    %v1253 = vld [vmem:[#allocation6 + $0x10a8] sm:$0xff]
    %v1254 = vld [vmem:[#allocation6 + $0x10b0] sm:$0xff]
    %v1255 = vld [vmem:[#allocation6 + $0x10b8] sm:$0xff]
    %v1256 = vld [vmem:[#allocation6 + $0x10c0] sm:$0xff]
    %v1257 = vld [vmem:[#allocation6 + $0x10c8] sm:$0xff]
    %v1258 = vld [vmem:[#allocation6 + $0x10d0] sm:$0xff]
    %v1259 = vld [vmem:[#allocation6 + $0x10d8] sm:$0xff]
    %v1260 = vld [vmem:[#allocation6 + $0x10e0] sm:$0xff]
    %v1261 = vld [vmem:[#allocation6 + $0x10e8] sm:$0xff]
    %v1262 = vld [vmem:[#allocation6 + $0x10f0] sm:$0xff]
    %v1263 = vld [vmem:[#allocation6 + $0x10f8] sm:$0xff]
    %v1264 = vld [vmem:[#allocation6 + $0x1100] sm:$0xff]
    %v1265 = vld [vmem:[#allocation6 + $0x1108] sm:$0xff]
    %v1266 = vld [vmem:[#allocation6 + $0x1110] sm:$0xff]
    %v1267 = vld [vmem:[#allocation6 + $0x1118] sm:$0xff]
    %v1268 = vld [vmem:[#allocation6 + $0x1120] sm:$0xff]
    %v1269 = vld [vmem:[#allocation6 + $0x1128] sm:$0xff]
    %v1270 = vld [vmem:[#allocation6 + $0x1130] sm:$0xff]
    %v1271 = vld [vmem:[#allocation6 + $0x1138] sm:$0xff]
    %v1272 = vld [vmem:[#allocation6 + $0x1140] sm:$0xff]
    %v1273 = vld [vmem:[#allocation6 + $0x1148] sm:$0xff]
    %v1274 = vld [vmem:[#allocation6 + $0x1150] sm:$0xff]
    %v1275 = vld [vmem:[#allocation6 + $0x1158] sm:$0xff]
    %v1276 = vld [vmem:[#allocation6 + $0x1160] sm:$0xff]
    %v1277 = vld [vmem:[#allocation6 + $0x1168] sm:$0xff]
    %v1278 = vld [vmem:[#allocation6 + $0x1170] sm:$0xff]
    %v1279 = vld [vmem:[#allocation6 + $0x1178] sm:$0xff]
    %v1280 = vld [vmem:[#allocation6 + $0x1180] sm:$0xff]
    %v1281 = vld [vmem:[#allocation6 + $0x1188] sm:$0xff]
    %v1282 = vld [vmem:[#allocation6 + $0x1190] sm:$0xff]
    %v1283 = vld [vmem:[#allocation6 + $0x1198] sm:$0xff]
    %v1284 = vld [vmem:[#allocation6 + $0x11a0] sm:$0xff]
    %v1285 = vld [vmem:[#allocation6 + $0x11a8] sm:$0xff]
    %v1286 = vld [vmem:[#allocation6 + $0x11b0] sm:$0xff]
    %v1287 = vld [vmem:[#allocation6 + $0x11b8] sm:$0xff]
    %v1288 = vld [vmem:[#allocation6 + $0x11c0] sm:$0xff]
    %v1289 = vld [vmem:[#allocation6 + $0x11c8] sm:$0xff]
    %v1290 = vld [vmem:[#allocation6 + $0x11d0] sm:$0xff]
    %v1291 = vld [vmem:[#allocation6 + $0x11d8] sm:$0xff]
    %v1292 = vld [vmem:[#allocation6 + $0x11e0] sm:$0xff]
    %v1293 = vld [vmem:[#allocation6 + $0x11e8] sm:$0xff]
    %v1294 = vld [vmem:[#allocation6 + $0x11f0] sm:$0xff]
    %v1295 = vld [vmem:[#allocation6 + $0x11f8] sm:$0xff]
    %v1296 = vld [vmem:[#allocation6 + $0x1200] sm:$0xff]
    %v1297 = vld [vmem:[#allocation6 + $0x1208] sm:$0xff]
    %v1298 = vld [vmem:[#allocation6 + $0x1210] sm:$0xff]
    %v1299 = vld [vmem:[#allocation6 + $0x1218] sm:$0xff]
    %v1300 = vld [vmem:[#allocation6 + $0x1220] sm:$0xff]
    %v1301 = vld [vmem:[#allocation6 + $0x1228] sm:$0xff]
    %v1302 = vld [vmem:[#allocation6 + $0x1230] sm:$0xff]
    %v1303 = vld [vmem:[#allocation6 + $0x1238] sm:$0xff]
    %v1304 = vld [vmem:[#allocation6 + $0x1240] sm:$0xff]
    %v1305 = vld [vmem:[#allocation6 + $0x1248] sm:$0xff]
    %v1306 = vld [vmem:[#allocation6 + $0x1250] sm:$0xff]
    %v1307 = vld [vmem:[#allocation6 + $0x1258] sm:$0xff]
    %v1308 = vld [vmem:[#allocation6 + $0x1260] sm:$0xff]
    %v1309 = vld [vmem:[#allocation6 + $0x1268] sm:$0xff]
    %v1310 = vld [vmem:[#allocation6 + $0x1270] sm:$0xff]
    %v1311 = vld [vmem:[#allocation6 + $0x1278] sm:$0xff]
    %v1312 = vld [vmem:[#allocation6 + $0x1280] sm:$0xff]
    %v1313 = vld [vmem:[#allocation6 + $0x1288] sm:$0xff]
    %v1314 = vld [vmem:[#allocation6 + $0x1290] sm:$0xff]
    %v1315 = vld [vmem:[#allocation6 + $0x1298] sm:$0xff]
    %v1316 = vld [vmem:[#allocation6 + $0x12a0] sm:$0xff]
    %v1317 = vld [vmem:[#allocation6 + $0x12a8] sm:$0xff]
    %v1318 = vld [vmem:[#allocation6 + $0x12b0] sm:$0xff]
    %v1319 = vld [vmem:[#allocation6 + $0x12b8] sm:$0xff]
    %v1320 = vld [vmem:[#allocation6 + $0x12c0] sm:$0xff]
    %v1321 = vld [vmem:[#allocation6 + $0x12c8] sm:$0xff]
    %v1322 = vld [vmem:[#allocation6 + $0x12d0] sm:$0xff]
    %v1323 = vld [vmem:[#allocation6 + $0x12d8] sm:$0xff]
    %v1324 = vld [vmem:[#allocation6 + $0x12e0] sm:$0xff]
    %v1325 = vld [vmem:[#allocation6 + $0x12e8] sm:$0xff]
    %v1326 = vld [vmem:[#allocation6 + $0x12f0] sm:$0xff]
    %v1327 = vld [vmem:[#allocation6 + $0x12f8] sm:$0xff]
    %v1328 = vld [vmem:[#allocation6 + $0x1300] sm:$0xff]
    %v1329 = vld [vmem:[#allocation6 + $0x1308] sm:$0xff]
    %v1330 = vld [vmem:[#allocation6 + $0x1310] sm:$0xff]
    %v1331 = vld [vmem:[#allocation6 + $0x1318] sm:$0xff]
    %v1332 = vld [vmem:[#allocation6 + $0x1320] sm:$0xff]
    %v1333 = vld [vmem:[#allocation6 + $0x1328] sm:$0xff]
    %v1334 = vld [vmem:[#allocation6 + $0x1330] sm:$0xff]
    %v1335 = vld [vmem:[#allocation6 + $0x1338] sm:$0xff]
    %v1336 = vld [vmem:[#allocation6 + $0x1340] sm:$0xff]
    %v1337 = vld [vmem:[#allocation6 + $0x1348] sm:$0xff]
    %v1338 = vld [vmem:[#allocation6 + $0x1350] sm:$0xff]
    %v1339 = vld [vmem:[#allocation6 + $0x1358] sm:$0xff]
    %v1340 = vld [vmem:[#allocation6 + $0x1360] sm:$0xff]
    %v1341 = vld [vmem:[#allocation6 + $0x1368] sm:$0xff]
    %v1342 = vld [vmem:[#allocation6 + $0x1370] sm:$0xff]
    %v1343 = vld [vmem:[#allocation6 + $0x1378] sm:$0xff]
    %v1344 = vld [vmem:[#allocation6 + $0x1380] sm:$0xff]
    %v1345 = vld [vmem:[#allocation6 + $0x1388] sm:$0xff]
    %v1346 = vld [vmem:[#allocation6 + $0x1390] sm:$0xff]
    %v1347 = vld [vmem:[#allocation6 + $0x1398] sm:$0xff]
    %v1348 = vld [vmem:[#allocation6 + $0x13a0] sm:$0xff]
    %v1349 = vld [vmem:[#allocation6 + $0x13a8] sm:$0xff]
    %v1350 = vld [vmem:[#allocation6 + $0x13b0] sm:$0xff]
    %v1351 = vld [vmem:[#allocation6 + $0x13b8] sm:$0xff]
    %v1352 = vld [vmem:[#allocation6 + $0x13c0] sm:$0xff]
    %v1353 = vld [vmem:[#allocation6 + $0x13c8] sm:$0xff]
    %v1354 = vld [vmem:[#allocation6 + $0x13d0] sm:$0xff]
    %v1355 = vld [vmem:[#allocation6 + $0x13d8] sm:$0xff]
    %v1356 = vld [vmem:[#allocation6 + $0x13e0] sm:$0xff]
    %v1357 = vld [vmem:[#allocation6 + $0x13e8] sm:$0xff]
    %v1358 = vld [vmem:[#allocation6 + $0x13f0] sm:$0xff]
    %v1359 = vld [vmem:[#allocation6 + $0x13f8] sm:$0xff]
    %v1360 = vld [vmem:[#allocation6 + $0x1400] sm:$0xff]
    %v1361 = vld [vmem:[#allocation6 + $0x1408] sm:$0xff]
    %v1362 = vld [vmem:[#allocation6 + $0x1410] sm:$0xff]
    %v1363 = vld [vmem:[#allocation6 + $0x1418] sm:$0xff]
    %v1364 = vld [vmem:[#allocation6 + $0x1420] sm:$0xff]
    %v1365 = vld [vmem:[#allocation6 + $0x1428] sm:$0xff]
    %v1366 = vld [vmem:[#allocation6 + $0x1430] sm:$0xff]
    %v1367 = vld [vmem:[#allocation6 + $0x1438] sm:$0xff]
    %v1368 = vld [vmem:[#allocation6 + $0x1440] sm:$0xff]
    %v1369 = vld [vmem:[#allocation6 + $0x1448] sm:$0xff]
    %v1370 = vld [vmem:[#allocation6 + $0x1450] sm:$0xff]
    %v1371 = vld [vmem:[#allocation6 + $0x1458] sm:$0xff]
    %v1372 = vld [vmem:[#allocation6 + $0x1460] sm:$0xff]
    %v1373 = vld [vmem:[#allocation6 + $0x1468] sm:$0xff]
    %v1374 = vld [vmem:[#allocation6 + $0x1470] sm:$0xff]
    %v1375 = vld [vmem:[#allocation6 + $0x1478] sm:$0xff]
    %v1376 = vld [vmem:[#allocation6 + $0x1480] sm:$0xff]
    %v1377 = vld [vmem:[#allocation6 + $0x1488] sm:$0xff]
    %v1378 = vld [vmem:[#allocation6 + $0x1490] sm:$0xff]
    %v1379 = vld [vmem:[#allocation6 + $0x1498] sm:$0xff]
    %v1380 = vld [vmem:[#allocation6 + $0x14a0] sm:$0xff]
    %v1381 = vld [vmem:[#allocation6 + $0x14a8] sm:$0xff]
    %v1382 = vld [vmem:[#allocation6 + $0x14b0] sm:$0xff]
    %v1383 = vld [vmem:[#allocation6 + $0x14b8] sm:$0xff]
    %v1384 = vld [vmem:[#allocation6 + $0x14c0] sm:$0xff]
    %v1385 = vld [vmem:[#allocation6 + $0x14c8] sm:$0xff]
    %v1386 = vld [vmem:[#allocation6 + $0x14d0] sm:$0xff]
    %v1387 = vld [vmem:[#allocation6 + $0x14d8] sm:$0xff]
    %v1388 = vld [vmem:[#allocation6 + $0x14e0] sm:$0xff]
    %v1389 = vld [vmem:[#allocation6 + $0x14e8] sm:$0xff]
    %v1390 = vld [vmem:[#allocation6 + $0x14f0] sm:$0xff]
    %v1391 = vld [vmem:[#allocation6 + $0x14f8] sm:$0xff]
    %v1392 = vld [vmem:[#allocation6 + $0x1500] sm:$0xff]
    %v1393 = vld [vmem:[#allocation6 + $0x1508] sm:$0xff]
    %v1394 = vld [vmem:[#allocation6 + $0x1510] sm:$0xff]
    %v1395 = vld [vmem:[#allocation6 + $0x1518] sm:$0xff]
    %v1396 = vld [vmem:[#allocation6 + $0x1520] sm:$0xff]
    %v1397 = vld [vmem:[#allocation6 + $0x1528] sm:$0xff]
    %v1398 = vld [vmem:[#allocation6 + $0x1530] sm:$0xff]
    %v1399 = vld [vmem:[#allocation6 + $0x1538] sm:$0xff]
    %v1400 = vld [vmem:[#allocation6 + $0x1540] sm:$0xff]
    %v1401 = vld [vmem:[#allocation6 + $0x1548] sm:$0xff]
    %v1402 = vld [vmem:[#allocation6 + $0x1550] sm:$0xff]
    %v1403 = vld [vmem:[#allocation6 + $0x1558] sm:$0xff]
    %v1404 = vld [vmem:[#allocation6 + $0x1560] sm:$0xff]
    %v1405 = vld [vmem:[#allocation6 + $0x1568] sm:$0xff]
    %v1406 = vld [vmem:[#allocation6 + $0x1570] sm:$0xff]
    %v1407 = vld [vmem:[#allocation6 + $0x1578] sm:$0xff]
    %v1408 = vld [vmem:[#allocation6 + $0x1580] sm:$0xff]
    %v1409 = vld [vmem:[#allocation6 + $0x1588] sm:$0xff]
    %v1410 = vld [vmem:[#allocation6 + $0x1590] sm:$0xff]
    %v1411 = vld [vmem:[#allocation6 + $0x1598] sm:$0xff]
    %v1412 = vld [vmem:[#allocation6 + $0x15a0] sm:$0xff]
    %v1413 = vld [vmem:[#allocation6 + $0x15a8] sm:$0xff]
    %v1414 = vld [vmem:[#allocation6 + $0x15b0] sm:$0xff]
    %v1415 = vld [vmem:[#allocation6 + $0x15b8] sm:$0xff]
    %v1416 = vld [vmem:[#allocation6 + $0x15c0] sm:$0xff]
    %v1417 = vld [vmem:[#allocation6 + $0x15c8] sm:$0xff]
    %v1418 = vld [vmem:[#allocation6 + $0x15d0] sm:$0xff]
    %v1419 = vld [vmem:[#allocation6 + $0x15d8] sm:$0xff]
    %v1420 = vld [vmem:[#allocation6 + $0x15e0] sm:$0xff]
    %v1421 = vld [vmem:[#allocation6 + $0x15e8] sm:$0xff]
    %v1422 = vld [vmem:[#allocation6 + $0x15f0] sm:$0xff]
    %v1423 = vld [vmem:[#allocation6 + $0x15f8] sm:$0xff]
    %v1424 = vld [vmem:[#allocation6 + $0x1600] sm:$0xff]
    %v1425 = vld [vmem:[#allocation6 + $0x1608] sm:$0xff]
    %v1426 = vld [vmem:[#allocation6 + $0x1610] sm:$0xff]
    %v1427 = vld [vmem:[#allocation6 + $0x1618] sm:$0xff]
    %v1428 = vld [vmem:[#allocation6 + $0x1620] sm:$0xff]
    %v1429 = vld [vmem:[#allocation6 + $0x1628] sm:$0xff]
    %v1430 = vld [vmem:[#allocation6 + $0x1630] sm:$0xff]
    %v1431 = vld [vmem:[#allocation6 + $0x1638] sm:$0xff]
    %v1432 = vld [vmem:[#allocation6 + $0x1640] sm:$0xff]
    %v1433 = vld [vmem:[#allocation6 + $0x1648] sm:$0xff]
    %v1434 = vld [vmem:[#allocation6 + $0x1650] sm:$0xff]
    %v1435 = vld [vmem:[#allocation6 + $0x1658] sm:$0xff]
    %v1436 = vld [vmem:[#allocation6 + $0x1660] sm:$0xff]
    %v1437 = vld [vmem:[#allocation6 + $0x1668] sm:$0xff]
    %v1438 = vld [vmem:[#allocation6 + $0x1670] sm:$0xff]
    %v1439 = vld [vmem:[#allocation6 + $0x1678] sm:$0xff]
    %v1440 = vld [vmem:[#allocation6 + $0x1680] sm:$0xff]
    %v1441 = vld [vmem:[#allocation6 + $0x1688] sm:$0xff]
    %v1442 = vld [vmem:[#allocation6 + $0x1690] sm:$0xff]
    %v1443 = vld [vmem:[#allocation6 + $0x1698] sm:$0xff]
    %v1444 = vld [vmem:[#allocation6 + $0x16a0] sm:$0xff]
    %v1445 = vld [vmem:[#allocation6 + $0x16a8] sm:$0xff]
    %v1446 = vld [vmem:[#allocation6 + $0x16b0] sm:$0xff]
    %v1447 = vld [vmem:[#allocation6 + $0x16b8] sm:$0xff]
    %v1448 = vld [vmem:[#allocation6 + $0x16c0] sm:$0xff]
    %v1449 = vld [vmem:[#allocation6 + $0x16c8] sm:$0xff]
    %v1450 = vld [vmem:[#allocation6 + $0x16d0] sm:$0xff]
    %v1451 = vld [vmem:[#allocation6 + $0x16d8] sm:$0xff]
    %v1452 = vld [vmem:[#allocation6 + $0x16e0] sm:$0xff]
    %v1453 = vld [vmem:[#allocation6 + $0x16e8] sm:$0xff]
    %v1454 = vld [vmem:[#allocation6 + $0x16f0] sm:$0xff]
    %v1455 = vld [vmem:[#allocation6 + $0x16f8] sm:$0xff]
    %v1456 = vld [vmem:[#allocation6 + $0x1700] sm:$0xff]
    %v1457 = vld [vmem:[#allocation6 + $0x1708] sm:$0xff]
    %v1458 = vld [vmem:[#allocation6 + $0x1710] sm:$0xff]
    %v1459 = vld [vmem:[#allocation6 + $0x1718] sm:$0xff]
    %v1460 = vld [vmem:[#allocation6 + $0x1720] sm:$0xff]
    %v1461 = vld [vmem:[#allocation6 + $0x1728] sm:$0xff]
    %v1462 = vld [vmem:[#allocation6 + $0x1730] sm:$0xff]
    %v1463 = vld [vmem:[#allocation6 + $0x1738] sm:$0xff]
    %v1464 = vld [vmem:[#allocation6 + $0x1740] sm:$0xff]
    %v1465 = vld [vmem:[#allocation6 + $0x1748] sm:$0xff]
    %v1466 = vld [vmem:[#allocation6 + $0x1750] sm:$0xff]
    %v1467 = vld [vmem:[#allocation6 + $0x1758] sm:$0xff]
    %v1468 = vld [vmem:[#allocation6 + $0x1760] sm:$0xff]
    %v1469 = vld [vmem:[#allocation6 + $0x1768] sm:$0xff]
    %v1470 = vld [vmem:[#allocation6 + $0x1770] sm:$0xff]
    %v1471 = vld [vmem:[#allocation6 + $0x1778] sm:$0xff]
    %v1472 = vld [vmem:[#allocation6 + $0x1780] sm:$0xff]
    %v1473 = vld [vmem:[#allocation6 + $0x1788] sm:$0xff]
    %v1474 = vld [vmem:[#allocation6 + $0x1790] sm:$0xff]
    %v1475 = vld [vmem:[#allocation6 + $0x1798] sm:$0xff]
    %v1476 = vld [vmem:[#allocation6 + $0x17a0] sm:$0xff]
    %v1477 = vld [vmem:[#allocation6 + $0x17a8] sm:$0xff]
    %v1478 = vld [vmem:[#allocation6 + $0x17b0] sm:$0xff]
    %v1479 = vld [vmem:[#allocation6 + $0x17b8] sm:$0xff]
    %v1480 = vld [vmem:[#allocation6 + $0x17c0] sm:$0xff]
    %v1481 = vld [vmem:[#allocation6 + $0x17c8] sm:$0xff]
    %v1482 = vld [vmem:[#allocation6 + $0x17d0] sm:$0xff]
    %v1483 = vld [vmem:[#allocation6 + $0x17d8] sm:$0xff]
    %v1484 = vld [vmem:[#allocation6 + $0x17e0] sm:$0xff]
    %v1485 = vld [vmem:[#allocation6 + $0x17e8] sm:$0xff]
    %v1486 = vld [vmem:[#allocation6 + $0x17f0] sm:$0xff]
    %v1487 = vld [vmem:[#allocation6 + $0x17f8] sm:$0xff]
    %v1488 = vld [vmem:[#allocation6 + $0x1800] sm:$0xff]
    %v1489 = vld [vmem:[#allocation6 + $0x1808] sm:$0xff]
    %v1490 = vld [vmem:[#allocation6 + $0x1810] sm:$0xff]
    %v1491 = vld [vmem:[#allocation6 + $0x1818] sm:$0xff]
    %v1492 = vld [vmem:[#allocation6 + $0x1820] sm:$0xff]
    %v1493 = vld [vmem:[#allocation6 + $0x1828] sm:$0xff]
    %v1494 = vld [vmem:[#allocation6 + $0x1830] sm:$0xff]
    %v1495 = vld [vmem:[#allocation6 + $0x1838] sm:$0xff]
    %v1496 = vld [vmem:[#allocation6 + $0x1840] sm:$0xff]
    %v1497 = vld [vmem:[#allocation6 + $0x1848] sm:$0xff]
    %v1498 = vld [vmem:[#allocation6 + $0x1850] sm:$0xff]
    %v1499 = vld [vmem:[#allocation6 + $0x1858] sm:$0xff]
    %v1500 = vld [vmem:[#allocation6 + $0x1860] sm:$0xff]
    %v1501 = vld [vmem:[#allocation6 + $0x1868] sm:$0xff]
    %v1502 = vld [vmem:[#allocation6 + $0x1870] sm:$0xff]
    %v1503 = vld [vmem:[#allocation6 + $0x1878] sm:$0xff]
    %v1504 = vld [vmem:[#allocation6 + $0x1880] sm:$0xff]
    %v1505 = vld [vmem:[#allocation6 + $0x1888] sm:$0xff]
    %v1506 = vld [vmem:[#allocation6 + $0x1890] sm:$0xff]
    %v1507 = vld [vmem:[#allocation6 + $0x1898] sm:$0xff]
    %v1508 = vld [vmem:[#allocation6 + $0x18a0] sm:$0xff]
    %v1509 = vld [vmem:[#allocation6 + $0x18a8] sm:$0xff]
    %v1510 = vld [vmem:[#allocation6 + $0x18b0] sm:$0xff]
    %v1511 = vld [vmem:[#allocation6 + $0x18b8] sm:$0xff]
    %v1512 = vld [vmem:[#allocation6 + $0x18c0] sm:$0xff]
    %v1513 = vld [vmem:[#allocation6 + $0x18c8] sm:$0xff]
    %v1514 = vld [vmem:[#allocation6 + $0x18d0] sm:$0xff]
    %v1515 = vld [vmem:[#allocation6 + $0x18d8] sm:$0xff]
    %v1516 = vld [vmem:[#allocation6 + $0x18e0] sm:$0xff]
    %v1517 = vld [vmem:[#allocation6 + $0x18e8] sm:$0xff]
    %v1518 = vld [vmem:[#allocation6 + $0x18f0] sm:$0xff]
    %v1519 = vld [vmem:[#allocation6 + $0x18f8] sm:$0xff]
    %v1520 = vld [vmem:[#allocation6 + $0x1900] sm:$0xff]
    %v1521 = vld [vmem:[#allocation6 + $0x1908] sm:$0xff]
    %v1522 = vld [vmem:[#allocation6 + $0x1910] sm:$0xff]
    %v1523 = vld [vmem:[#allocation6 + $0x1918] sm:$0xff]
    %v1524 = vld [vmem:[#allocation6 + $0x1920] sm:$0xff]
    %v1525 = vld [vmem:[#allocation6 + $0x1928] sm:$0xff]
    %v1526 = vld [vmem:[#allocation6 + $0x1930] sm:$0xff]
    %v1527 = vld [vmem:[#allocation6 + $0x1938] sm:$0xff]
    %v1528 = vld [vmem:[#allocation6 + $0x1940] sm:$0xff]
    %v1529 = vld [vmem:[#allocation6 + $0x1948] sm:$0xff]
    %v1530 = vld [vmem:[#allocation6 + $0x1950] sm:$0xff]
    %v1531 = vld [vmem:[#allocation6 + $0x1958] sm:$0xff]
    %v1532 = vld [vmem:[#allocation6 + $0x1960] sm:$0xff]
    %v1533 = vld [vmem:[#allocation6 + $0x1968] sm:$0xff]
    %v1534 = vld [vmem:[#allocation6 + $0x1970] sm:$0xff]
    %v1535 = vld [vmem:[#allocation6 + $0x1978] sm:$0xff]
    %v1536 = vld [vmem:[#allocation6 + $0x1980] sm:$0xff]
    %v1537 = vld [vmem:[#allocation6 + $0x1988] sm:$0xff]
    %v1538 = vld [vmem:[#allocation6 + $0x1990] sm:$0xff]
    %v1539 = vld [vmem:[#allocation6 + $0x1998] sm:$0xff]
    %v1540 = vld [vmem:[#allocation6 + $0x19a0] sm:$0xff]
    %v1541 = vld [vmem:[#allocation6 + $0x19a8] sm:$0xff]
    %v1542 = vld [vmem:[#allocation6 + $0x19b0] sm:$0xff]
    %v1543 = vld [vmem:[#allocation6 + $0x19b8] sm:$0xff]
    %v1544 = vld [vmem:[#allocation6 + $0x19c0] sm:$0xff]
    %v1545 = vld [vmem:[#allocation6 + $0x19c8] sm:$0xff]
    %v1546 = vld [vmem:[#allocation6 + $0x19d0] sm:$0xff]
    %v1547 = vld [vmem:[#allocation6 + $0x19d8] sm:$0xff]
    %v1548 = vld [vmem:[#allocation6 + $0x19e0] sm:$0xff]
    %v1549 = vld [vmem:[#allocation6 + $0x19e8] sm:$0xff]
    %v1550 = vld [vmem:[#allocation6 + $0x19f0] sm:$0xff]
    %v1551 = vld [vmem:[#allocation6 + $0x19f8] sm:$0xff]
    %v1552 = vld [vmem:[#allocation6 + $0x1a00] sm:$0xff]
    %v1553 = vld [vmem:[#allocation6 + $0x1a08] sm:$0xff]
    %v1554 = vld [vmem:[#allocation6 + $0x1a10] sm:$0xff]
    %v1555 = vld [vmem:[#allocation6 + $0x1a18] sm:$0xff]
    %v1556 = vld [vmem:[#allocation6 + $0x1a20] sm:$0xff]
    %v1557 = vld [vmem:[#allocation6 + $0x1a28] sm:$0xff]
    %v1558 = vld [vmem:[#allocation6 + $0x1a30] sm:$0xff]
    %v1559 = vld [vmem:[#allocation6 + $0x1a38] sm:$0xff]
    %v1560 = vld [vmem:[#allocation6 + $0x1a40] sm:$0xff]
    %v1561 = vld [vmem:[#allocation6 + $0x1a48] sm:$0xff]
    %v1562 = vld [vmem:[#allocation6 + $0x1a50] sm:$0xff]
    %v1563 = vld [vmem:[#allocation6 + $0x1a58] sm:$0xff]
    %v1564 = vld [vmem:[#allocation6 + $0x1a60] sm:$0xff]
    %v1565 = vld [vmem:[#allocation6 + $0x1a68] sm:$0xff]
    %v1566 = vld [vmem:[#allocation6 + $0x1a70] sm:$0xff]
    %v1567 = vld [vmem:[#allocation6 + $0x1a78] sm:$0xff]
    %v1568 = vld [vmem:[#allocation6 + $0x1a80] sm:$0xff]
    %v1569 = vld [vmem:[#allocation6 + $0x1a88] sm:$0xff]
    %v1570 = vld [vmem:[#allocation6 + $0x1a90] sm:$0xff]
    %v1571 = vld [vmem:[#allocation6 + $0x1a98] sm:$0xff]
    %v1572 = vld [vmem:[#allocation6 + $0x1aa0] sm:$0xff]
    %v1573 = vld [vmem:[#allocation6 + $0x1aa8] sm:$0xff]
    %v1574 = vld [vmem:[#allocation6 + $0x1ab0] sm:$0xff]
    %v1575 = vld [vmem:[#allocation6 + $0x1ab8] sm:$0xff]
    %v1576 = vld [vmem:[#allocation6 + $0x1ac0] sm:$0xff]
    %v1577 = vld [vmem:[#allocation6 + $0x1ac8] sm:$0xff]
    %v1578 = vld [vmem:[#allocation6 + $0x1ad0] sm:$0xff]
    %v1579 = vld [vmem:[#allocation6 + $0x1ad8] sm:$0xff]
    %v1580 = vld [vmem:[#allocation6 + $0x1ae0] sm:$0xff]
    %v1581 = vld [vmem:[#allocation6 + $0x1ae8] sm:$0xff]
    %v1582 = vld [vmem:[#allocation6 + $0x1af0] sm:$0xff]
    %v1583 = vld [vmem:[#allocation6 + $0x1af8] sm:$0xff]
    %v1584 = vld [vmem:[#allocation6 + $0x1b00] sm:$0xff]
    %v1585 = vld [vmem:[#allocation6 + $0x1b08] sm:$0xff]
    %v1586 = vld [vmem:[#allocation6 + $0x1b10] sm:$0xff]
    %v1587 = vld [vmem:[#allocation6 + $0x1b18] sm:$0xff]
    %v1588 = vld [vmem:[#allocation6 + $0x1b20] sm:$0xff]
    %v1589 = vld [vmem:[#allocation6 + $0x1b28] sm:$0xff]
    %v1590 = vld [vmem:[#allocation6 + $0x1b30] sm:$0xff]
    %v1591 = vld [vmem:[#allocation6 + $0x1b38] sm:$0xff]
    %v1592 = vld [vmem:[#allocation6 + $0x1b40] sm:$0xff]
    %v1593 = vld [vmem:[#allocation6 + $0x1b48] sm:$0xff]
    %v1594 = vld [vmem:[#allocation6 + $0x1b50] sm:$0xff]
    %v1595 = vld [vmem:[#allocation6 + $0x1b58] sm:$0xff]
    %v1596 = vld [vmem:[#allocation6 + $0x1b60] sm:$0xff]
    %v1597 = vld [vmem:[#allocation6 + $0x1b68] sm:$0xff]
    %v1598 = vld [vmem:[#allocation6 + $0x1b70] sm:$0xff]
    %v1599 = vld [vmem:[#allocation6 + $0x1b78] sm:$0xff]
    %v1600 = vld [vmem:[#allocation6 + $0x1b80] sm:$0xff]
    %v1601 = vld [vmem:[#allocation6 + $0x1b88] sm:$0xff]
    %v1602 = vld [vmem:[#allocation6 + $0x1b90] sm:$0xff]
    %v1603 = vld [vmem:[#allocation6 + $0x1b98] sm:$0xff]
    %v1604 = vld [vmem:[#allocation6 + $0x1ba0] sm:$0xff]
    %v1605 = vld [vmem:[#allocation6 + $0x1ba8] sm:$0xff]
    %v1606 = vld [vmem:[#allocation6 + $0x1bb0] sm:$0xff]
    %v1607 = vld [vmem:[#allocation6 + $0x1bb8] sm:$0xff]
    %v1608 = vld [vmem:[#allocation6 + $0x1bc0] sm:$0xff]
    %v1609 = vld [vmem:[#allocation6 + $0x1bc8] sm:$0xff]
    %v1610 = vld [vmem:[#allocation6 + $0x1bd0] sm:$0xff]
    %v1611 = vld [vmem:[#allocation6 + $0x1bd8] sm:$0xff]
    %v1612 = vld [vmem:[#allocation6 + $0x1be0] sm:$0xff]
    %v1613 = vld [vmem:[#allocation6 + $0x1be8] sm:$0xff]
    %v1614 = vld [vmem:[#allocation6 + $0x1bf0] sm:$0xff]
    %v1615 = vld [vmem:[#allocation6 + $0x1bf8] sm:$0xff]
    %v1616 = vld [vmem:[#allocation6 + $0x1c00] sm:$0xff]
    %v1617 = vld [vmem:[#allocation6 + $0x1c08] sm:$0xff]
    %v1618 = vld [vmem:[#allocation6 + $0x1c10] sm:$0xff]
    %v1619 = vld [vmem:[#allocation6 + $0x1c18] sm:$0xff]
    %v1620 = vld [vmem:[#allocation6 + $0x1c20] sm:$0xff]
    %v1621 = vld [vmem:[#allocation6 + $0x1c28] sm:$0xff]
    %v1622 = vld [vmem:[#allocation6 + $0x1c30] sm:$0xff]
    %v1623 = vld [vmem:[#allocation6 + $0x1c38] sm:$0xff]
    %v1624 = vld [vmem:[#allocation6 + $0x1c40] sm:$0xff]
    %v1625 = vld [vmem:[#allocation6 + $0x1c48] sm:$0xff]
    %v1626 = vld [vmem:[#allocation6 + $0x1c50] sm:$0xff]
    %v1627 = vld [vmem:[#allocation6 + $0x1c58] sm:$0xff]
    %v1628 = vld [vmem:[#allocation6 + $0x1c60] sm:$0xff]
    %v1629 = vld [vmem:[#allocation6 + $0x1c68] sm:$0xff]
    %v1630 = vld [vmem:[#allocation6 + $0x1c70] sm:$0xff]
    %v1631 = vld [vmem:[#allocation6 + $0x1c78] sm:$0xff]
    %v1632 = vld [vmem:[#allocation6 + $0x1c80] sm:$0xff]
    %v1633 = vld [vmem:[#allocation6 + $0x1c88] sm:$0xff]
    %v1634 = vld [vmem:[#allocation6 + $0x1c90] sm:$0xff]
    %v1635 = vld [vmem:[#allocation6 + $0x1c98] sm:$0xff]
    %v1636 = vld [vmem:[#allocation6 + $0x1ca0] sm:$0xff]
    %v1637 = vld [vmem:[#allocation6 + $0x1ca8] sm:$0xff]
    %v1638 = vld [vmem:[#allocation6 + $0x1cb0] sm:$0xff]
    %v1639 = vld [vmem:[#allocation6 + $0x1cb8] sm:$0xff]
    %v1640 = vld [vmem:[#allocation6 + $0x1cc0] sm:$0xff]
    %v1641 = vld [vmem:[#allocation6 + $0x1cc8] sm:$0xff]
    %v1642 = vld [vmem:[#allocation6 + $0x1cd0] sm:$0xff]
    %v1643 = vld [vmem:[#allocation6 + $0x1cd8] sm:$0xff]
    %v1644 = vld [vmem:[#allocation6 + $0x1ce0] sm:$0xff]
    %v1645 = vld [vmem:[#allocation6 + $0x1ce8] sm:$0xff]
    %v1646 = vld [vmem:[#allocation6 + $0x1cf0] sm:$0xff]
    %v1647 = vld [vmem:[#allocation6 + $0x1cf8] sm:$0xff]
    %v1648 = vld [vmem:[#allocation6 + $0x1d00] sm:$0xff]
    %v1649 = vld [vmem:[#allocation6 + $0x1d08] sm:$0xff]
    %v1650 = vld [vmem:[#allocation6 + $0x1d10] sm:$0xff]
    %v1651 = vld [vmem:[#allocation6 + $0x1d18] sm:$0xff]
    %v1652 = vld [vmem:[#allocation6 + $0x1d20] sm:$0xff]
    %v1653 = vld [vmem:[#allocation6 + $0x1d28] sm:$0xff]
    %v1654 = vld [vmem:[#allocation6 + $0x1d30] sm:$0xff]
    %v1655 = vld [vmem:[#allocation6 + $0x1d38] sm:$0xff]
    %v1656 = vld [vmem:[#allocation6 + $0x1d40] sm:$0xff]
    %v1657 = vld [vmem:[#allocation6 + $0x1d48] sm:$0xff]
    %v1658 = vld [vmem:[#allocation6 + $0x1d50] sm:$0xff]
    %v1659 = vld [vmem:[#allocation6 + $0x1d58] sm:$0xff]
    %v1660 = vld [vmem:[#allocation6 + $0x1d60] sm:$0xff]
    %v1661 = vld [vmem:[#allocation6 + $0x1d68] sm:$0xff]
    %v1662 = vld [vmem:[#allocation6 + $0x1d70] sm:$0xff]
    %v1663 = vld [vmem:[#allocation6 + $0x1d78] sm:$0xff]
    %v1664 = vld [vmem:[#allocation6 + $0x1d80] sm:$0xff]
    %v1665 = vld [vmem:[#allocation6 + $0x1d88] sm:$0xff]
    %v1666 = vld [vmem:[#allocation6 + $0x1d90] sm:$0xff]
    %v1667 = vld [vmem:[#allocation6 + $0x1d98] sm:$0xff]
    %v1668 = vld [vmem:[#allocation6 + $0x1da0] sm:$0xff]
    %v1669 = vld [vmem:[#allocation6 + $0x1da8] sm:$0xff]
    %v1670 = vld [vmem:[#allocation6 + $0x1db0] sm:$0xff]
    %v1671 = vld [vmem:[#allocation6 + $0x1db8] sm:$0xff]
    %v1672 = vld [vmem:[#allocation6 + $0x1dc0] sm:$0xff]
    %v1673 = vld [vmem:[#allocation6 + $0x1dc8] sm:$0xff]
    %v1674 = vld [vmem:[#allocation6 + $0x1dd0] sm:$0xff]
    %v1675 = vld [vmem:[#allocation6 + $0x1dd8] sm:$0xff]
    %v1676 = vld [vmem:[#allocation6 + $0x1de0] sm:$0xff]
    %v1677 = vld [vmem:[#allocation6 + $0x1de8] sm:$0xff]
    %v1678 = vld [vmem:[#allocation6 + $0x1df0] sm:$0xff]
    %v1679 = vld [vmem:[#allocation6 + $0x1df8] sm:$0xff]
    %v1680 = vld [vmem:[#allocation6 + $0x1e00] sm:$0xff]
    %v1681 = vld [vmem:[#allocation6 + $0x1e08] sm:$0xff]
    %v1682 = vld [vmem:[#allocation6 + $0x1e10] sm:$0xff]
    %v1683 = vld [vmem:[#allocation6 + $0x1e18] sm:$0xff]
    %v1684 = vld [vmem:[#allocation6 + $0x1e20] sm:$0xff]
    %v1685 = vld [vmem:[#allocation6 + $0x1e28] sm:$0xff]
    %v1686 = vld [vmem:[#allocation6 + $0x1e30] sm:$0xff]
    %v1687 = vld [vmem:[#allocation6 + $0x1e38] sm:$0xff]
    %v1688 = vld [vmem:[#allocation6 + $0x1e40] sm:$0xff]
    %v1689 = vld [vmem:[#allocation6 + $0x1e48] sm:$0xff]
    %v1690 = vld [vmem:[#allocation6 + $0x1e50] sm:$0xff]
    %v1691 = vld [vmem:[#allocation6 + $0x1e58] sm:$0xff]
    %v1692 = vld [vmem:[#allocation6 + $0x1e60] sm:$0xff]
    %v1693 = vld [vmem:[#allocation6 + $0x1e68] sm:$0xff]
    %v1694 = vld [vmem:[#allocation6 + $0x1e70] sm:$0xff]
    %v1695 = vld [vmem:[#allocation6 + $0x1e78] sm:$0xff]
    %v1696 = vld [vmem:[#allocation6 + $0x1e80] sm:$0xff]
    %v1697 = vld [vmem:[#allocation6 + $0x1e88] sm:$0xff]
    %v1698 = vld [vmem:[#allocation6 + $0x1e90] sm:$0xff]
    %v1699 = vld [vmem:[#allocation6 + $0x1e98] sm:$0xff]
    %v1700 = vld [vmem:[#allocation6 + $0x1ea0] sm:$0xff]
    %v1701 = vld [vmem:[#allocation6 + $0x1ea8] sm:$0xff]
    %v1702 = vld [vmem:[#allocation6 + $0x1eb0] sm:$0xff]
    %v1703 = vld [vmem:[#allocation6 + $0x1eb8] sm:$0xff]
    %v1704 = vld [vmem:[#allocation6 + $0x1ec0] sm:$0xff]
    %v1705 = vld [vmem:[#allocation6 + $0x1ec8] sm:$0xff]
    %v1706 = vld [vmem:[#allocation6 + $0x1ed0] sm:$0xff]
    %v1707 = vld [vmem:[#allocation6 + $0x1ed8] sm:$0xff]
    %v1708 = vld [vmem:[#allocation6 + $0x1ee0] sm:$0xff]
    %v1709 = vld [vmem:[#allocation6 + $0x1ee8] sm:$0xff]
    %v1710 = vld [vmem:[#allocation6 + $0x1ef0] sm:$0xff]
    %v1711 = vld [vmem:[#allocation6 + $0x1ef8] sm:$0xff]
    %v1712 = vld [vmem:[#allocation6 + $0x1f00] sm:$0xff]
    %v1713 = vld [vmem:[#allocation6 + $0x1f08] sm:$0xff]
    %v1714 = vld [vmem:[#allocation6 + $0x1f10] sm:$0xff]
    %v1715 = vld [vmem:[#allocation6 + $0x1f18] sm:$0xff]
    %v1716 = vld [vmem:[#allocation6 + $0x1f20] sm:$0xff]
    %v1717 = vld [vmem:[#allocation6 + $0x1f28] sm:$0xff]
    %v1718 = vld [vmem:[#allocation6 + $0x1f30] sm:$0xff]
    %v1719 = vld [vmem:[#allocation6 + $0x1f38] sm:$0xff]
    %v1720 = vld [vmem:[#allocation6 + $0x1f40] sm:$0xff]
    %v1721 = vld [vmem:[#allocation6 + $0x1f48] sm:$0xff]
    %v1722 = vld [vmem:[#allocation6 + $0x1f50] sm:$0xff]
    %v1723 = vld [vmem:[#allocation6 + $0x1f58] sm:$0xff]
    %v1724 = vld [vmem:[#allocation6 + $0x1f60] sm:$0xff]
    %v1725 = vld [vmem:[#allocation6 + $0x1f68] sm:$0xff]
    %v1726 = vld [vmem:[#allocation6 + $0x1f70] sm:$0xff]
    %v1727 = vld [vmem:[#allocation6 + $0x1f78] sm:$0xff]
    %v1728 = vld [vmem:[#allocation6 + $0x1f80] sm:$0xff]
    %v1729 = vld [vmem:[#allocation6 + $0x1f88] sm:$0xff]
    %v1730 = vld [vmem:[#allocation6 + $0x1f90] sm:$0xff]
    %v1731 = vld [vmem:[#allocation6 + $0x1f98] sm:$0xff]
    %v1732 = vld [vmem:[#allocation6 + $0x1fa0] sm:$0xff]
    %v1733 = vld [vmem:[#allocation6 + $0x1fa8] sm:$0xff]
    %v1734 = vld [vmem:[#allocation6 + $0x1fb0] sm:$0xff]
    %v1735 = vld [vmem:[#allocation6 + $0x1fb8] sm:$0xff]
    %v1736 = vld [vmem:[#allocation6 + $0x1fc0] sm:$0xff]
    %v1737 = vld [vmem:[#allocation6 + $0x1fc8] sm:$0xff]
    %v1738 = vld [vmem:[#allocation6 + $0x1fd0] sm:$0xff]
    %v1739 = vld [vmem:[#allocation6 + $0x1fd8] sm:$0xff]
    %v1740 = vld [vmem:[#allocation6 + $0x1fe0] sm:$0xff]
    %v1741 = vld [vmem:[#allocation6 + $0x1fe8] sm:$0xff]
    %v1742 = vld [vmem:[#allocation6 + $0x1ff0] sm:$0xff]
    %v1743 = vld [vmem:[#allocation6 + $0x1ff8] sm:$0xff]
    %v1744 = vld [vmem:[#allocation7] sm:$0xff]
    %v1746 = vlaneseq
    %v1747 = vshrl.u32 %v1746, 7
    %v1748 = vsub.s32 0, %v1747
    %v1749 = vrot.slane %v1744, %v1748
    %v1750 = vlaneseq
    %v1751 = vshrl.u32 %v1750, 7
    %v1752 = vsub.s32 1, %v1751
    %v1753 = vrot.slane %v1744, %v1752
    %v1754 = vlaneseq
    %v1755 = vshrl.u32 %v1754, 7
    %v1756 = vsub.s32 2, %v1755
    %v1757 = vrot.slane %v1744, %v1756
    %v1758 = vlaneseq
    %v1759 = vshrl.u32 %v1758, 7
    %v1760 = vsub.s32 3, %v1759
    %v1761 = vrot.slane %v1744, %v1760
    %v1762 = vlaneseq
    %v1763 = vshrl.u32 %v1762, 7
    %v1764 = vsub.s32 4, %v1763
    %v1765 = vrot.slane %v1744, %v1764
    %v1766 = vlaneseq
    %v1767 = vshrl.u32 %v1766, 7
    %v1768 = vsub.s32 5, %v1767
    %v1769 = vrot.slane %v1744, %v1768
    %v1770 = vlaneseq
    %v1771 = vshrl.u32 %v1770, 7
    %v1772 = vsub.s32 6, %v1771
    %v1773 = vrot.slane %v1744, %v1772
    %v1774 = vlaneseq
    %v1775 = vshrl.u32 %v1774, 7
    %v1776 = vsub.s32 7, %v1775
    %v1777 = vrot.slane %v1744, %v1776
    %v2810 = vunpack.c.l.b16 %v720
    %v2811 = vunpack.c.h.b16 %v720
    %v2812 = vunpack.c.l.b16 %v721
    %v2813 = vunpack.c.h.b16 %v721
    %v2814 = vunpack.c.l.b16 %v722
    %v2815 = vunpack.c.h.b16 %v722
    %v2816 = vunpack.c.l.b16 %v723
    %v2817 = vunpack.c.h.b16 %v723
    %v2818 = vunpack.c.l.b16 %v724
    %v2819 = vunpack.c.h.b16 %v724
    %v2820 = vunpack.c.l.b16 %v725
    %v2821 = vunpack.c.h.b16 %v725
    %v2822 = vunpack.c.l.b16 %v726
    %v2823 = vunpack.c.h.b16 %v726
    %v2824 = vunpack.c.l.b16 %v727
    %v2825 = vunpack.c.h.b16 %v727
    %v2826 = vunpack.c.l.b16 %v728
    %v2827 = vunpack.c.h.b16 %v728
    %v2828 = vunpack.c.l.b16 %v729
    %v2829 = vunpack.c.h.b16 %v729
    %v2830 = vunpack.c.l.b16 %v730
    %v2831 = vunpack.c.h.b16 %v730
    %v2832 = vunpack.c.l.b16 %v731
    %v2833 = vunpack.c.h.b16 %v731
    %v2834 = vunpack.c.l.b16 %v732
    %v2835 = vunpack.c.h.b16 %v732
    %v2836 = vunpack.c.l.b16 %v733
    %v2837 = vunpack.c.h.b16 %v733
    %v2838 = vunpack.c.l.b16 %v734
    %v2839 = vunpack.c.h.b16 %v734
    %v2840 = vunpack.c.l.b16 %v735
    %v2841 = vunpack.c.h.b16 %v735
    %v2842 = vunpack.c.l.b16 %v736
    %v2843 = vunpack.c.h.b16 %v736
    %v2844 = vunpack.c.l.b16 %v737
    %v2845 = vunpack.c.h.b16 %v737
    %v2846 = vunpack.c.l.b16 %v738
    %v2847 = vunpack.c.h.b16 %v738
    %v2848 = vunpack.c.l.b16 %v739
    %v2849 = vunpack.c.h.b16 %v739
    %v2850 = vunpack.c.l.b16 %v740
    %v2851 = vunpack.c.h.b16 %v740
    %v2852 = vunpack.c.l.b16 %v741
    %v2853 = vunpack.c.h.b16 %v741
    %v2854 = vunpack.c.l.b16 %v742
    %v2855 = vunpack.c.h.b16 %v742
    %v2856 = vunpack.c.l.b16 %v743
    %v2857 = vunpack.c.h.b16 %v743
    %v2858 = vunpack.c.l.b16 %v744
    %v2859 = vunpack.c.h.b16 %v744
    %v2860 = vunpack.c.l.b16 %v745
    %v2861 = vunpack.c.h.b16 %v745
    %v2862 = vunpack.c.l.b16 %v746
    %v2863 = vunpack.c.h.b16 %v746
    %v2864 = vunpack.c.l.b16 %v747
    %v2865 = vunpack.c.h.b16 %v747
    %v2866 = vunpack.c.l.b16 %v748
    %v2867 = vunpack.c.h.b16 %v748
    %v2868 = vunpack.c.l.b16 %v749
    %v2869 = vunpack.c.h.b16 %v749
    %v2870 = vunpack.c.l.b16 %v750
    %v2871 = vunpack.c.h.b16 %v750
    %v2872 = vunpack.c.l.b16 %v751
    %v2873 = vunpack.c.h.b16 %v751
    %v2874 = vunpack.c.l.b16 %v752
    %v2875 = vunpack.c.h.b16 %v752
    %v2876 = vunpack.c.l.b16 %v753
    %v2877 = vunpack.c.h.b16 %v753
    %v2878 = vunpack.c.l.b16 %v754
    %v2879 = vunpack.c.h.b16 %v754
    %v2880 = vunpack.c.l.b16 %v755
    %v2881 = vunpack.c.h.b16 %v755
    %v2882 = vunpack.c.l.b16 %v756
    %v2883 = vunpack.c.h.b16 %v756
    %v2884 = vunpack.c.l.b16 %v757
    %v2885 = vunpack.c.h.b16 %v757
    %v2886 = vunpack.c.l.b16 %v758
    %v2887 = vunpack.c.h.b16 %v758
    %v2888 = vunpack.c.l.b16 %v759
    %v2889 = vunpack.c.h.b16 %v759
    %v2890 = vunpack.c.l.b16 %v760
    %v2891 = vunpack.c.h.b16 %v760
    %v2892 = vunpack.c.l.b16 %v761
    %v2893 = vunpack.c.h.b16 %v761
    %v2894 = vunpack.c.l.b16 %v762
    %v2895 = vunpack.c.h.b16 %v762
    %v2896 = vunpack.c.l.b16 %v763
    %v2897 = vunpack.c.h.b16 %v763
    %v2898 = vunpack.c.l.b16 %v764
    %v2899 = vunpack.c.h.b16 %v764
    %v2900 = vunpack.c.l.b16 %v765
    %v2901 = vunpack.c.h.b16 %v765
    %v2902 = vunpack.c.l.b16 %v766
    %v2903 = vunpack.c.h.b16 %v766
    %v2904 = vunpack.c.l.b16 %v767
    %v2905 = vunpack.c.h.b16 %v767
    %v2906 = vunpack.c.l.b16 %v768
    %v2907 = vunpack.c.h.b16 %v768
    %v2908 = vunpack.c.l.b16 %v769
    %v2909 = vunpack.c.h.b16 %v769
    %v2910 = vunpack.c.l.b16 %v770
    %v2911 = vunpack.c.h.b16 %v770
    %v2912 = vunpack.c.l.b16 %v771
    %v2913 = vunpack.c.h.b16 %v771
    %v2914 = vunpack.c.l.b16 %v772
    %v2915 = vunpack.c.h.b16 %v772
    %v2916 = vunpack.c.l.b16 %v773
    %v2917 = vunpack.c.h.b16 %v773
    %v2918 = vunpack.c.l.b16 %v774
    %v2919 = vunpack.c.h.b16 %v774
    %v2920 = vunpack.c.l.b16 %v775
    %v2921 = vunpack.c.h.b16 %v775
    %v2922 = vunpack.c.l.b16 %v776
    %v2923 = vunpack.c.h.b16 %v776
    %v2924 = vunpack.c.l.b16 %v777
    %v2925 = vunpack.c.h.b16 %v777
    %v2926 = vunpack.c.l.b16 %v778
    %v2927 = vunpack.c.h.b16 %v778
    %v2928 = vunpack.c.l.b16 %v779
    %v2929 = vunpack.c.h.b16 %v779
    %v2930 = vunpack.c.l.b16 %v780
    %v2931 = vunpack.c.h.b16 %v780
    %v2932 = vunpack.c.l.b16 %v781
    %v2933 = vunpack.c.h.b16 %v781
    %v2934 = vunpack.c.l.b16 %v782
    %v2935 = vunpack.c.h.b16 %v782
    %v2936 = vunpack.c.l.b16 %v783
    %v2937 = vunpack.c.h.b16 %v783
    %v2938 = vunpack.c.l.b16 %v784
    %v2939 = vunpack.c.h.b16 %v784
    %v2940 = vunpack.c.l.b16 %v785
    %v2941 = vunpack.c.h.b16 %v785
    %v2942 = vunpack.c.l.b16 %v786
    %v2943 = vunpack.c.h.b16 %v786
    %v2944 = vunpack.c.l.b16 %v787
    %v2945 = vunpack.c.h.b16 %v787
    %v2946 = vunpack.c.l.b16 %v788
    %v2947 = vunpack.c.h.b16 %v788
    %v2948 = vunpack.c.l.b16 %v789
    %v2949 = vunpack.c.h.b16 %v789
    %v2950 = vunpack.c.l.b16 %v790
    %v2951 = vunpack.c.h.b16 %v790
    %v2952 = vunpack.c.l.b16 %v791
    %v2953 = vunpack.c.h.b16 %v791
    %v2954 = vunpack.c.l.b16 %v792
    %v2955 = vunpack.c.h.b16 %v792
    %v2956 = vunpack.c.l.b16 %v793
    %v2957 = vunpack.c.h.b16 %v793
    %v2958 = vunpack.c.l.b16 %v794
    %v2959 = vunpack.c.h.b16 %v794
    %v2960 = vunpack.c.l.b16 %v795
    %v2961 = vunpack.c.h.b16 %v795
    %v2962 = vunpack.c.l.b16 %v796
    %v2963 = vunpack.c.h.b16 %v796
    %v2964 = vunpack.c.l.b16 %v797
    %v2965 = vunpack.c.h.b16 %v797
    %v2966 = vunpack.c.l.b16 %v798
    %v2967 = vunpack.c.h.b16 %v798
    %v2968 = vunpack.c.l.b16 %v799
    %v2969 = vunpack.c.h.b16 %v799
    %v2970 = vunpack.c.l.b16 %v800
    %v2971 = vunpack.c.h.b16 %v800
    %v2972 = vunpack.c.l.b16 %v801
    %v2973 = vunpack.c.h.b16 %v801
    %v2974 = vunpack.c.l.b16 %v802
    %v2975 = vunpack.c.h.b16 %v802
    %v2976 = vunpack.c.l.b16 %v803
    %v2977 = vunpack.c.h.b16 %v803
    %v2978 = vunpack.c.l.b16 %v804
    %v2979 = vunpack.c.h.b16 %v804
    %v2980 = vunpack.c.l.b16 %v805
    %v2981 = vunpack.c.h.b16 %v805
    %v2982 = vunpack.c.l.b16 %v806
    %v2983 = vunpack.c.h.b16 %v806
    %v2984 = vunpack.c.l.b16 %v807
    %v2985 = vunpack.c.h.b16 %v807
    %v2986 = vunpack.c.l.b16 %v808
    %v2987 = vunpack.c.h.b16 %v808
    %v2988 = vunpack.c.l.b16 %v809
    %v2989 = vunpack.c.h.b16 %v809
    %v2990 = vunpack.c.l.b16 %v810
    %v2991 = vunpack.c.h.b16 %v810
    %v2992 = vunpack.c.l.b16 %v811
    %v2993 = vunpack.c.h.b16 %v811
    %v2994 = vunpack.c.l.b16 %v812
    %v2995 = vunpack.c.h.b16 %v812
    %v2996 = vunpack.c.l.b16 %v813
    %v2997 = vunpack.c.h.b16 %v813
    %v2998 = vunpack.c.l.b16 %v814
    %v2999 = vunpack.c.h.b16 %v814
    %v3000 = vunpack.c.l.b16 %v815
    %v3001 = vunpack.c.h.b16 %v815
    %v3002 = vunpack.c.l.b16 %v816
    %v3003 = vunpack.c.h.b16 %v816
    %v3004 = vunpack.c.l.b16 %v817
    %v3005 = vunpack.c.h.b16 %v817
    %v3006 = vunpack.c.l.b16 %v818
    %v3007 = vunpack.c.h.b16 %v818
    %v3008 = vunpack.c.l.b16 %v819
    %v3009 = vunpack.c.h.b16 %v819
    %v3010 = vunpack.c.l.b16 %v820
    %v3011 = vunpack.c.h.b16 %v820
    %v3012 = vunpack.c.l.b16 %v821
    %v3013 = vunpack.c.h.b16 %v821
    %v3014 = vunpack.c.l.b16 %v822
    %v3015 = vunpack.c.h.b16 %v822
    %v3016 = vunpack.c.l.b16 %v823
    %v3017 = vunpack.c.h.b16 %v823
    %v3018 = vunpack.c.l.b16 %v824
    %v3019 = vunpack.c.h.b16 %v824
    %v3020 = vunpack.c.l.b16 %v825
    %v3021 = vunpack.c.h.b16 %v825
    %v3022 = vunpack.c.l.b16 %v826
    %v3023 = vunpack.c.h.b16 %v826
    %v3024 = vunpack.c.l.b16 %v827
    %v3025 = vunpack.c.h.b16 %v827
    %v3026 = vunpack.c.l.b16 %v828
    %v3027 = vunpack.c.h.b16 %v828
    %v3028 = vunpack.c.l.b16 %v829
    %v3029 = vunpack.c.h.b16 %v829
    %v3030 = vunpack.c.l.b16 %v830
    %v3031 = vunpack.c.h.b16 %v830
    %v3032 = vunpack.c.l.b16 %v831
    %v3033 = vunpack.c.h.b16 %v831
    %v3034 = vunpack.c.l.b16 %v832
    %v3035 = vunpack.c.h.b16 %v832
    %v3036 = vunpack.c.l.b16 %v833
    %v3037 = vunpack.c.h.b16 %v833
    %v3038 = vunpack.c.l.b16 %v834
    %v3039 = vunpack.c.h.b16 %v834
    %v3040 = vunpack.c.l.b16 %v835
    %v3041 = vunpack.c.h.b16 %v835
    %v3042 = vunpack.c.l.b16 %v836
    %v3043 = vunpack.c.h.b16 %v836
    %v3044 = vunpack.c.l.b16 %v837
    %v3045 = vunpack.c.h.b16 %v837
    %v3046 = vunpack.c.l.b16 %v838
    %v3047 = vunpack.c.h.b16 %v838
    %v3048 = vunpack.c.l.b16 %v839
    %v3049 = vunpack.c.h.b16 %v839
    %v3050 = vunpack.c.l.b16 %v840
    %v3051 = vunpack.c.h.b16 %v840
    %v3052 = vunpack.c.l.b16 %v841
    %v3053 = vunpack.c.h.b16 %v841
    %v3054 = vunpack.c.l.b16 %v842
    %v3055 = vunpack.c.h.b16 %v842
    %v3056 = vunpack.c.l.b16 %v843
    %v3057 = vunpack.c.h.b16 %v843
    %v3058 = vunpack.c.l.b16 %v844
    %v3059 = vunpack.c.h.b16 %v844
    %v3060 = vunpack.c.l.b16 %v845
    %v3061 = vunpack.c.h.b16 %v845
    %v3062 = vunpack.c.l.b16 %v846
    %v3063 = vunpack.c.h.b16 %v846
    %v3064 = vunpack.c.l.b16 %v847
    %v3065 = vunpack.c.h.b16 %v847
    %v3066 = vunpack.c.l.b16 %v848
    %v3067 = vunpack.c.h.b16 %v848
    %v3068 = vunpack.c.l.b16 %v849
    %v3069 = vunpack.c.h.b16 %v849
    %v3070 = vunpack.c.l.b16 %v850
    %v3071 = vunpack.c.h.b16 %v850
    %v3072 = vunpack.c.l.b16 %v851
    %v3073 = vunpack.c.h.b16 %v851
    %v3074 = vunpack.c.l.b16 %v852
    %v3075 = vunpack.c.h.b16 %v852
    %v3076 = vunpack.c.l.b16 %v853
    %v3077 = vunpack.c.h.b16 %v853
    %v3078 = vunpack.c.l.b16 %v854
    %v3079 = vunpack.c.h.b16 %v854
    %v3080 = vunpack.c.l.b16 %v855
    %v3081 = vunpack.c.h.b16 %v855
    %v3082 = vunpack.c.l.b16 %v856
    %v3083 = vunpack.c.h.b16 %v856
    %v3084 = vunpack.c.l.b16 %v857
    %v3085 = vunpack.c.h.b16 %v857
    %v3086 = vunpack.c.l.b16 %v858
    %v3087 = vunpack.c.h.b16 %v858
    %v3088 = vunpack.c.l.b16 %v859
    %v3089 = vunpack.c.h.b16 %v859
    %v3090 = vunpack.c.l.b16 %v860
    %v3091 = vunpack.c.h.b16 %v860
    %v3092 = vunpack.c.l.b16 %v861
    %v3093 = vunpack.c.h.b16 %v861
    %v3094 = vunpack.c.l.b16 %v862
    %v3095 = vunpack.c.h.b16 %v862
    %v3096 = vunpack.c.l.b16 %v863
    %v3097 = vunpack.c.h.b16 %v863
    %v3098 = vunpack.c.l.b16 %v864
    %v3099 = vunpack.c.h.b16 %v864
    %v3100 = vunpack.c.l.b16 %v865
    %v3101 = vunpack.c.h.b16 %v865
    %v3102 = vunpack.c.l.b16 %v866
    %v3103 = vunpack.c.h.b16 %v866
    %v3104 = vunpack.c.l.b16 %v867
    %v3105 = vunpack.c.h.b16 %v867
    %v3106 = vunpack.c.l.b16 %v868
    %v3107 = vunpack.c.h.b16 %v868
    %v3108 = vunpack.c.l.b16 %v869
    %v3109 = vunpack.c.h.b16 %v869
    %v3110 = vunpack.c.l.b16 %v870
    %v3111 = vunpack.c.h.b16 %v870
    %v3112 = vunpack.c.l.b16 %v871
    %v3113 = vunpack.c.h.b16 %v871
    %v3114 = vunpack.c.l.b16 %v872
    %v3115 = vunpack.c.h.b16 %v872
    %v3116 = vunpack.c.l.b16 %v873
    %v3117 = vunpack.c.h.b16 %v873
    %v3118 = vunpack.c.l.b16 %v874
    %v3119 = vunpack.c.h.b16 %v874
    %v3120 = vunpack.c.l.b16 %v875
    %v3121 = vunpack.c.h.b16 %v875
    %v3122 = vunpack.c.l.b16 %v876
    %v3123 = vunpack.c.h.b16 %v876
    %v3124 = vunpack.c.l.b16 %v877
    %v3125 = vunpack.c.h.b16 %v877
    %v3126 = vunpack.c.l.b16 %v878
    %v3127 = vunpack.c.h.b16 %v878
    %v3128 = vunpack.c.l.b16 %v879
    %v3129 = vunpack.c.h.b16 %v879
    %v3130 = vunpack.c.l.b16 %v880
    %v3131 = vunpack.c.h.b16 %v880
    %v3132 = vunpack.c.l.b16 %v881
    %v3133 = vunpack.c.h.b16 %v881
    %v3134 = vunpack.c.l.b16 %v882
    %v3135 = vunpack.c.h.b16 %v882
    %v3136 = vunpack.c.l.b16 %v883
    %v3137 = vunpack.c.h.b16 %v883
    %v3138 = vunpack.c.l.b16 %v884
    %v3139 = vunpack.c.h.b16 %v884
    %v3140 = vunpack.c.l.b16 %v885
    %v3141 = vunpack.c.h.b16 %v885
    %v3142 = vunpack.c.l.b16 %v886
    %v3143 = vunpack.c.h.b16 %v886
    %v3144 = vunpack.c.l.b16 %v887
    %v3145 = vunpack.c.h.b16 %v887
    %v3146 = vunpack.c.l.b16 %v888
    %v3147 = vunpack.c.h.b16 %v888
    %v3148 = vunpack.c.l.b16 %v889
    %v3149 = vunpack.c.h.b16 %v889
    %v3150 = vunpack.c.l.b16 %v890
    %v3151 = vunpack.c.h.b16 %v890
    %v3152 = vunpack.c.l.b16 %v891
    %v3153 = vunpack.c.h.b16 %v891
    %v3154 = vunpack.c.l.b16 %v892
    %v3155 = vunpack.c.h.b16 %v892
    %v3156 = vunpack.c.l.b16 %v893
    %v3157 = vunpack.c.h.b16 %v893
    %v3158 = vunpack.c.l.b16 %v894
    %v3159 = vunpack.c.h.b16 %v894
    %v3160 = vunpack.c.l.b16 %v895
    %v3161 = vunpack.c.h.b16 %v895
    %v3162 = vunpack.c.l.b16 %v896
    %v3163 = vunpack.c.h.b16 %v896
    %v3164 = vunpack.c.l.b16 %v897
    %v3165 = vunpack.c.h.b16 %v897
    %v3166 = vunpack.c.l.b16 %v898
    %v3167 = vunpack.c.h.b16 %v898
    %v3168 = vunpack.c.l.b16 %v899
    %v3169 = vunpack.c.h.b16 %v899
    %v3170 = vunpack.c.l.b16 %v900
    %v3171 = vunpack.c.h.b16 %v900
    %v3172 = vunpack.c.l.b16 %v901
    %v3173 = vunpack.c.h.b16 %v901
    %v3174 = vunpack.c.l.b16 %v902
    %v3175 = vunpack.c.h.b16 %v902
    %v3176 = vunpack.c.l.b16 %v903
    %v3177 = vunpack.c.h.b16 %v903
    %v3178 = vunpack.c.l.b16 %v904
    %v3179 = vunpack.c.h.b16 %v904
    %v3180 = vunpack.c.l.b16 %v905
    %v3181 = vunpack.c.h.b16 %v905
    %v3182 = vunpack.c.l.b16 %v906
    %v3183 = vunpack.c.h.b16 %v906
    %v3184 = vunpack.c.l.b16 %v907
    %v3185 = vunpack.c.h.b16 %v907
    %v3186 = vunpack.c.l.b16 %v908
    %v3187 = vunpack.c.h.b16 %v908
    %v3188 = vunpack.c.l.b16 %v909
    %v3189 = vunpack.c.h.b16 %v909
    %v3190 = vunpack.c.l.b16 %v910
    %v3191 = vunpack.c.h.b16 %v910
    %v3192 = vunpack.c.l.b16 %v911
    %v3193 = vunpack.c.h.b16 %v911
    %v3194 = vunpack.c.l.b16 %v912
    %v3195 = vunpack.c.h.b16 %v912
    %v3196 = vunpack.c.l.b16 %v913
    %v3197 = vunpack.c.h.b16 %v913
    %v3198 = vunpack.c.l.b16 %v914
    %v3199 = vunpack.c.h.b16 %v914
    %v3200 = vunpack.c.l.b16 %v915
    %v3201 = vunpack.c.h.b16 %v915
    %v3202 = vunpack.c.l.b16 %v916
    %v3203 = vunpack.c.h.b16 %v916
    %v3204 = vunpack.c.l.b16 %v917
    %v3205 = vunpack.c.h.b16 %v917
    %v3206 = vunpack.c.l.b16 %v918
    %v3207 = vunpack.c.h.b16 %v918
    %v3208 = vunpack.c.l.b16 %v919
    %v3209 = vunpack.c.h.b16 %v919
    %v3210 = vunpack.c.l.b16 %v920
    %v3211 = vunpack.c.h.b16 %v920
    %v3212 = vunpack.c.l.b16 %v921
    %v3213 = vunpack.c.h.b16 %v921
    %v3214 = vunpack.c.l.b16 %v922
    %v3215 = vunpack.c.h.b16 %v922
    %v3216 = vunpack.c.l.b16 %v923
    %v3217 = vunpack.c.h.b16 %v923
    %v3218 = vunpack.c.l.b16 %v924
    %v3219 = vunpack.c.h.b16 %v924
    %v3220 = vunpack.c.l.b16 %v925
    %v3221 = vunpack.c.h.b16 %v925
    %v3222 = vunpack.c.l.b16 %v926
    %v3223 = vunpack.c.h.b16 %v926
    %v3224 = vunpack.c.l.b16 %v927
    %v3225 = vunpack.c.h.b16 %v927
    %v3226 = vunpack.c.l.b16 %v928
    %v3227 = vunpack.c.h.b16 %v928
    %v3228 = vunpack.c.l.b16 %v929
    %v3229 = vunpack.c.h.b16 %v929
    %v3230 = vunpack.c.l.b16 %v930
    %v3231 = vunpack.c.h.b16 %v930
    %v3232 = vunpack.c.l.b16 %v931
    %v3233 = vunpack.c.h.b16 %v931
    %v3234 = vunpack.c.l.b16 %v932
    %v3235 = vunpack.c.h.b16 %v932
    %v3236 = vunpack.c.l.b16 %v933
    %v3237 = vunpack.c.h.b16 %v933
    %v3238 = vunpack.c.l.b16 %v934
    %v3239 = vunpack.c.h.b16 %v934
    %v3240 = vunpack.c.l.b16 %v935
    %v3241 = vunpack.c.h.b16 %v935
    %v3242 = vunpack.c.l.b16 %v936
    %v3243 = vunpack.c.h.b16 %v936
    %v3244 = vunpack.c.l.b16 %v937
    %v3245 = vunpack.c.h.b16 %v937
    %v3246 = vunpack.c.l.b16 %v938
    %v3247 = vunpack.c.h.b16 %v938
    %v3248 = vunpack.c.l.b16 %v939
    %v3249 = vunpack.c.h.b16 %v939
    %v3250 = vunpack.c.l.b16 %v940
    %v3251 = vunpack.c.h.b16 %v940
    %v3252 = vunpack.c.l.b16 %v941
    %v3253 = vunpack.c.h.b16 %v941
    %v3254 = vunpack.c.l.b16 %v942
    %v3255 = vunpack.c.h.b16 %v942
    %v3256 = vunpack.c.l.b16 %v943
    %v3257 = vunpack.c.h.b16 %v943
    %v3258 = vunpack.c.l.b16 %v944
    %v3259 = vunpack.c.h.b16 %v944
    %v3260 = vunpack.c.l.b16 %v945
    %v3261 = vunpack.c.h.b16 %v945
    %v3262 = vunpack.c.l.b16 %v946
    %v3263 = vunpack.c.h.b16 %v946
    %v3264 = vunpack.c.l.b16 %v947
    %v3265 = vunpack.c.h.b16 %v947
    %v3266 = vunpack.c.l.b16 %v948
    %v3267 = vunpack.c.h.b16 %v948
    %v3268 = vunpack.c.l.b16 %v949
    %v3269 = vunpack.c.h.b16 %v949
    %v3270 = vunpack.c.l.b16 %v950
    %v3271 = vunpack.c.h.b16 %v950
    %v3272 = vunpack.c.l.b16 %v951
    %v3273 = vunpack.c.h.b16 %v951
    %v3274 = vunpack.c.l.b16 %v952
    %v3275 = vunpack.c.h.b16 %v952
    %v3276 = vunpack.c.l.b16 %v953
    %v3277 = vunpack.c.h.b16 %v953
    %v3278 = vunpack.c.l.b16 %v954
    %v3279 = vunpack.c.h.b16 %v954
    %v3280 = vunpack.c.l.b16 %v955
    %v3281 = vunpack.c.h.b16 %v955
    %v3282 = vunpack.c.l.b16 %v956
    %v3283 = vunpack.c.h.b16 %v956
    %v3284 = vunpack.c.l.b16 %v957
    %v3285 = vunpack.c.h.b16 %v957
    %v3286 = vunpack.c.l.b16 %v958
    %v3287 = vunpack.c.h.b16 %v958
    %v3288 = vunpack.c.l.b16 %v959
    %v3289 = vunpack.c.h.b16 %v959
    %v3290 = vunpack.c.l.b16 %v960
    %v3291 = vunpack.c.h.b16 %v960
    %v3292 = vunpack.c.l.b16 %v961
    %v3293 = vunpack.c.h.b16 %v961
    %v3294 = vunpack.c.l.b16 %v962
    %v3295 = vunpack.c.h.b16 %v962
    %v3296 = vunpack.c.l.b16 %v963
    %v3297 = vunpack.c.h.b16 %v963
    %v3298 = vunpack.c.l.b16 %v964
    %v3299 = vunpack.c.h.b16 %v964
    %v3300 = vunpack.c.l.b16 %v965
    %v3301 = vunpack.c.h.b16 %v965
    %v3302 = vunpack.c.l.b16 %v966
    %v3303 = vunpack.c.h.b16 %v966
    %v3304 = vunpack.c.l.b16 %v967
    %v3305 = vunpack.c.h.b16 %v967
    %v3306 = vunpack.c.l.b16 %v968
    %v3307 = vunpack.c.h.b16 %v968
    %v3308 = vunpack.c.l.b16 %v969
    %v3309 = vunpack.c.h.b16 %v969
    %v3310 = vunpack.c.l.b16 %v970
    %v3311 = vunpack.c.h.b16 %v970
    %v3312 = vunpack.c.l.b16 %v971
    %v3313 = vunpack.c.h.b16 %v971
    %v3314 = vunpack.c.l.b16 %v972
    %v3315 = vunpack.c.h.b16 %v972
    %v3316 = vunpack.c.l.b16 %v973
    %v3317 = vunpack.c.h.b16 %v973
    %v3318 = vunpack.c.l.b16 %v974
    %v3319 = vunpack.c.h.b16 %v974
    %v3320 = vunpack.c.l.b16 %v975
    %v3321 = vunpack.c.h.b16 %v975
    %v3322 = vunpack.c.l.b16 %v976
    %v3323 = vunpack.c.h.b16 %v976
    %v3324 = vunpack.c.l.b16 %v977
    %v3325 = vunpack.c.h.b16 %v977
    %v3326 = vunpack.c.l.b16 %v978
    %v3327 = vunpack.c.h.b16 %v978
    %v3328 = vunpack.c.l.b16 %v979
    %v3329 = vunpack.c.h.b16 %v979
    %v3330 = vunpack.c.l.b16 %v980
    %v3331 = vunpack.c.h.b16 %v980
    %v3332 = vunpack.c.l.b16 %v981
    %v3333 = vunpack.c.h.b16 %v981
    %v3334 = vunpack.c.l.b16 %v982
    %v3335 = vunpack.c.h.b16 %v982
    %v3336 = vunpack.c.l.b16 %v983
    %v3337 = vunpack.c.h.b16 %v983
    %v3338 = vunpack.c.l.b16 %v984
    %v3339 = vunpack.c.h.b16 %v984
    %v3340 = vunpack.c.l.b16 %v985
    %v3341 = vunpack.c.h.b16 %v985
    %v3342 = vunpack.c.l.b16 %v986
    %v3343 = vunpack.c.h.b16 %v986
    %v3344 = vunpack.c.l.b16 %v987
    %v3345 = vunpack.c.h.b16 %v987
    %v3346 = vunpack.c.l.b16 %v988
    %v3347 = vunpack.c.h.b16 %v988
    %v3348 = vunpack.c.l.b16 %v989
    %v3349 = vunpack.c.h.b16 %v989
    %v3350 = vunpack.c.l.b16 %v990
    %v3351 = vunpack.c.h.b16 %v990
    %v3352 = vunpack.c.l.b16 %v991
    %v3353 = vunpack.c.h.b16 %v991
    %v3354 = vunpack.c.l.b16 %v992
    %v3355 = vunpack.c.h.b16 %v992
    %v3356 = vunpack.c.l.b16 %v993
    %v3357 = vunpack.c.h.b16 %v993
    %v3358 = vunpack.c.l.b16 %v994
    %v3359 = vunpack.c.h.b16 %v994
    %v3360 = vunpack.c.l.b16 %v995
    %v3361 = vunpack.c.h.b16 %v995
    %v3362 = vunpack.c.l.b16 %v996
    %v3363 = vunpack.c.h.b16 %v996
    %v3364 = vunpack.c.l.b16 %v997
    %v3365 = vunpack.c.h.b16 %v997
    %v3366 = vunpack.c.l.b16 %v998
    %v3367 = vunpack.c.h.b16 %v998
    %v3368 = vunpack.c.l.b16 %v999
    %v3369 = vunpack.c.h.b16 %v999
    %v3370 = vunpack.c.l.b16 %v1000
    %v3371 = vunpack.c.h.b16 %v1000
    %v3372 = vunpack.c.l.b16 %v1001
    %v3373 = vunpack.c.h.b16 %v1001
    %v3374 = vunpack.c.l.b16 %v1002
    %v3375 = vunpack.c.h.b16 %v1002
    %v3376 = vunpack.c.l.b16 %v1003
    %v3377 = vunpack.c.h.b16 %v1003
    %v3378 = vunpack.c.l.b16 %v1004
    %v3379 = vunpack.c.h.b16 %v1004
    %v3380 = vunpack.c.l.b16 %v1005
    %v3381 = vunpack.c.h.b16 %v1005
    %v3382 = vunpack.c.l.b16 %v1006
    %v3383 = vunpack.c.h.b16 %v1006
    %v3384 = vunpack.c.l.b16 %v1007
    %v3385 = vunpack.c.h.b16 %v1007
    %v3386 = vunpack.c.l.b16 %v1008
    %v3387 = vunpack.c.h.b16 %v1008
    %v3388 = vunpack.c.l.b16 %v1009
    %v3389 = vunpack.c.h.b16 %v1009
    %v3390 = vunpack.c.l.b16 %v1010
    %v3391 = vunpack.c.h.b16 %v1010
    %v3392 = vunpack.c.l.b16 %v1011
    %v3393 = vunpack.c.h.b16 %v1011
    %v3394 = vunpack.c.l.b16 %v1012
    %v3395 = vunpack.c.h.b16 %v1012
    %v3396 = vunpack.c.l.b16 %v1013
    %v3397 = vunpack.c.h.b16 %v1013
    %v3398 = vunpack.c.l.b16 %v1014
    %v3399 = vunpack.c.h.b16 %v1014
    %v3400 = vunpack.c.l.b16 %v1015
    %v3401 = vunpack.c.h.b16 %v1015
    %v3402 = vunpack.c.l.b16 %v1016
    %v3403 = vunpack.c.h.b16 %v1016
    %v3404 = vunpack.c.l.b16 %v1017
    %v3405 = vunpack.c.h.b16 %v1017
    %v3406 = vunpack.c.l.b16 %v1018
    %v3407 = vunpack.c.h.b16 %v1018
    %v3408 = vunpack.c.l.b16 %v1019
    %v3409 = vunpack.c.h.b16 %v1019
    %v3410 = vunpack.c.l.b16 %v1020
    %v3411 = vunpack.c.h.b16 %v1020
    %v3412 = vunpack.c.l.b16 %v1021
    %v3413 = vunpack.c.h.b16 %v1021
    %v3414 = vunpack.c.l.b16 %v1022
    %v3415 = vunpack.c.h.b16 %v1022
    %v3416 = vunpack.c.l.b16 %v1023
    %v3417 = vunpack.c.h.b16 %v1023
    %v3418 = vunpack.c.l.b16 %v1024
    %v3419 = vunpack.c.h.b16 %v1024
    %v3420 = vunpack.c.l.b16 %v1025
    %v3421 = vunpack.c.h.b16 %v1025
    %v3422 = vunpack.c.l.b16 %v1026
    %v3423 = vunpack.c.h.b16 %v1026
    %v3424 = vunpack.c.l.b16 %v1027
    %v3425 = vunpack.c.h.b16 %v1027
    %v3426 = vunpack.c.l.b16 %v1028
    %v3427 = vunpack.c.h.b16 %v1028
    %v3428 = vunpack.c.l.b16 %v1029
    %v3429 = vunpack.c.h.b16 %v1029
    %v3430 = vunpack.c.l.b16 %v1030
    %v3431 = vunpack.c.h.b16 %v1030
    %v3432 = vunpack.c.l.b16 %v1031
    %v3433 = vunpack.c.h.b16 %v1031
    %v3434 = vunpack.c.l.b16 %v1032
    %v3435 = vunpack.c.h.b16 %v1032
    %v3436 = vunpack.c.l.b16 %v1033
    %v3437 = vunpack.c.h.b16 %v1033
    %v3438 = vunpack.c.l.b16 %v1034
    %v3439 = vunpack.c.h.b16 %v1034
    %v3440 = vunpack.c.l.b16 %v1035
    %v3441 = vunpack.c.h.b16 %v1035
    %v3442 = vunpack.c.l.b16 %v1036
    %v3443 = vunpack.c.h.b16 %v1036
    %v3444 = vunpack.c.l.b16 %v1037
    %v3445 = vunpack.c.h.b16 %v1037
    %v3446 = vunpack.c.l.b16 %v1038
    %v3447 = vunpack.c.h.b16 %v1038
    %v3448 = vunpack.c.l.b16 %v1039
    %v3449 = vunpack.c.h.b16 %v1039
    %v3450 = vunpack.c.l.b16 %v1040
    %v3451 = vunpack.c.h.b16 %v1040
    %v3452 = vunpack.c.l.b16 %v1041
    %v3453 = vunpack.c.h.b16 %v1041
    %v3454 = vunpack.c.l.b16 %v1042
    %v3455 = vunpack.c.h.b16 %v1042
    %v3456 = vunpack.c.l.b16 %v1043
    %v3457 = vunpack.c.h.b16 %v1043
    %v3458 = vunpack.c.l.b16 %v1044
    %v3459 = vunpack.c.h.b16 %v1044
    %v3460 = vunpack.c.l.b16 %v1045
    %v3461 = vunpack.c.h.b16 %v1045
    %v3462 = vunpack.c.l.b16 %v1046
    %v3463 = vunpack.c.h.b16 %v1046
    %v3464 = vunpack.c.l.b16 %v1047
    %v3465 = vunpack.c.h.b16 %v1047
    %v3466 = vunpack.c.l.b16 %v1048
    %v3467 = vunpack.c.h.b16 %v1048
    %v3468 = vunpack.c.l.b16 %v1049
    %v3469 = vunpack.c.h.b16 %v1049
    %v3470 = vunpack.c.l.b16 %v1050
    %v3471 = vunpack.c.h.b16 %v1050
    %v3472 = vunpack.c.l.b16 %v1051
    %v3473 = vunpack.c.h.b16 %v1051
    %v3474 = vunpack.c.l.b16 %v1052
    %v3475 = vunpack.c.h.b16 %v1052
    %v3476 = vunpack.c.l.b16 %v1053
    %v3477 = vunpack.c.h.b16 %v1053
    %v3478 = vunpack.c.l.b16 %v1054
    %v3479 = vunpack.c.h.b16 %v1054
    %v3480 = vunpack.c.l.b16 %v1055
    %v3481 = vunpack.c.h.b16 %v1055
    %v3482 = vunpack.c.l.b16 %v1056
    %v3483 = vunpack.c.h.b16 %v1056
    %v3484 = vunpack.c.l.b16 %v1057
    %v3485 = vunpack.c.h.b16 %v1057
    %v3486 = vunpack.c.l.b16 %v1058
    %v3487 = vunpack.c.h.b16 %v1058
    %v3488 = vunpack.c.l.b16 %v1059
    %v3489 = vunpack.c.h.b16 %v1059
    %v3490 = vunpack.c.l.b16 %v1060
    %v3491 = vunpack.c.h.b16 %v1060
    %v3492 = vunpack.c.l.b16 %v1061
    %v3493 = vunpack.c.h.b16 %v1061
    %v3494 = vunpack.c.l.b16 %v1062
    %v3495 = vunpack.c.h.b16 %v1062
    %v3496 = vunpack.c.l.b16 %v1063
    %v3497 = vunpack.c.h.b16 %v1063
    %v3498 = vunpack.c.l.b16 %v1064
    %v3499 = vunpack.c.h.b16 %v1064
    %v3500 = vunpack.c.l.b16 %v1065
    %v3501 = vunpack.c.h.b16 %v1065
    %v3502 = vunpack.c.l.b16 %v1066
    %v3503 = vunpack.c.h.b16 %v1066
    %v3504 = vunpack.c.l.b16 %v1067
    %v3505 = vunpack.c.h.b16 %v1067
    %v3506 = vunpack.c.l.b16 %v1068
    %v3507 = vunpack.c.h.b16 %v1068
    %v3508 = vunpack.c.l.b16 %v1069
    %v3509 = vunpack.c.h.b16 %v1069
    %v3510 = vunpack.c.l.b16 %v1070
    %v3511 = vunpack.c.h.b16 %v1070
    %v3512 = vunpack.c.l.b16 %v1071
    %v3513 = vunpack.c.h.b16 %v1071
    %v3514 = vunpack.c.l.b16 %v1072
    %v3515 = vunpack.c.h.b16 %v1072
    %v3516 = vunpack.c.l.b16 %v1073
    %v3517 = vunpack.c.h.b16 %v1073
    %v3518 = vunpack.c.l.b16 %v1074
    %v3519 = vunpack.c.h.b16 %v1074
    %v3520 = vunpack.c.l.b16 %v1075
    %v3521 = vunpack.c.h.b16 %v1075
    %v3522 = vunpack.c.l.b16 %v1076
    %v3523 = vunpack.c.h.b16 %v1076
    %v3524 = vunpack.c.l.b16 %v1077
    %v3525 = vunpack.c.h.b16 %v1077
    %v3526 = vunpack.c.l.b16 %v1078
    %v3527 = vunpack.c.h.b16 %v1078
    %v3528 = vunpack.c.l.b16 %v1079
    %v3529 = vunpack.c.h.b16 %v1079
    %v3530 = vunpack.c.l.b16 %v1080
    %v3531 = vunpack.c.h.b16 %v1080
    %v3532 = vunpack.c.l.b16 %v1081
    %v3533 = vunpack.c.h.b16 %v1081
    %v3534 = vunpack.c.l.b16 %v1082
    %v3535 = vunpack.c.h.b16 %v1082
    %v3536 = vunpack.c.l.b16 %v1083
    %v3537 = vunpack.c.h.b16 %v1083
    %v3538 = vunpack.c.l.b16 %v1084
    %v3539 = vunpack.c.h.b16 %v1084
    %v3540 = vunpack.c.l.b16 %v1085
    %v3541 = vunpack.c.h.b16 %v1085
    %v3542 = vunpack.c.l.b16 %v1086
    %v3543 = vunpack.c.h.b16 %v1086
    %v3544 = vunpack.c.l.b16 %v1087
    %v3545 = vunpack.c.h.b16 %v1087
    %v3546 = vunpack.c.l.b16 %v1088
    %v3547 = vunpack.c.h.b16 %v1088
    %v3548 = vunpack.c.l.b16 %v1089
    %v3549 = vunpack.c.h.b16 %v1089
    %v3550 = vunpack.c.l.b16 %v1090
    %v3551 = vunpack.c.h.b16 %v1090
    %v3552 = vunpack.c.l.b16 %v1091
    %v3553 = vunpack.c.h.b16 %v1091
    %v3554 = vunpack.c.l.b16 %v1092
    %v3555 = vunpack.c.h.b16 %v1092
    %v3556 = vunpack.c.l.b16 %v1093
    %v3557 = vunpack.c.h.b16 %v1093
    %v3558 = vunpack.c.l.b16 %v1094
    %v3559 = vunpack.c.h.b16 %v1094
    %v3560 = vunpack.c.l.b16 %v1095
    %v3561 = vunpack.c.h.b16 %v1095
    %v3562 = vunpack.c.l.b16 %v1096
    %v3563 = vunpack.c.h.b16 %v1096
    %v3564 = vunpack.c.l.b16 %v1097
    %v3565 = vunpack.c.h.b16 %v1097
    %v3566 = vunpack.c.l.b16 %v1098
    %v3567 = vunpack.c.h.b16 %v1098
    %v3568 = vunpack.c.l.b16 %v1099
    %v3569 = vunpack.c.h.b16 %v1099
    %v3570 = vunpack.c.l.b16 %v1100
    %v3571 = vunpack.c.h.b16 %v1100
    %v3572 = vunpack.c.l.b16 %v1101
    %v3573 = vunpack.c.h.b16 %v1101
    %v3574 = vunpack.c.l.b16 %v1102
    %v3575 = vunpack.c.h.b16 %v1102
    %v3576 = vunpack.c.l.b16 %v1103
    %v3577 = vunpack.c.h.b16 %v1103
    %v3578 = vunpack.c.l.b16 %v1104
    %v3579 = vunpack.c.h.b16 %v1104
    %v3580 = vunpack.c.l.b16 %v1105
    %v3581 = vunpack.c.h.b16 %v1105
    %v3582 = vunpack.c.l.b16 %v1106
    %v3583 = vunpack.c.h.b16 %v1106
    %v3584 = vunpack.c.l.b16 %v1107
    %v3585 = vunpack.c.h.b16 %v1107
    %v3586 = vunpack.c.l.b16 %v1108
    %v3587 = vunpack.c.h.b16 %v1108
    %v3588 = vunpack.c.l.b16 %v1109
    %v3589 = vunpack.c.h.b16 %v1109
    %v3590 = vunpack.c.l.b16 %v1110
    %v3591 = vunpack.c.h.b16 %v1110
    %v3592 = vunpack.c.l.b16 %v1111
    %v3593 = vunpack.c.h.b16 %v1111
    %v3594 = vunpack.c.l.b16 %v1112
    %v3595 = vunpack.c.h.b16 %v1112
    %v3596 = vunpack.c.l.b16 %v1113
    %v3597 = vunpack.c.h.b16 %v1113
    %v3598 = vunpack.c.l.b16 %v1114
    %v3599 = vunpack.c.h.b16 %v1114
    %v3600 = vunpack.c.l.b16 %v1115
    %v3601 = vunpack.c.h.b16 %v1115
    %v3602 = vunpack.c.l.b16 %v1116
    %v3603 = vunpack.c.h.b16 %v1116
    %v3604 = vunpack.c.l.b16 %v1117
    %v3605 = vunpack.c.h.b16 %v1117
    %v3606 = vunpack.c.l.b16 %v1118
    %v3607 = vunpack.c.h.b16 %v1118
    %v3608 = vunpack.c.l.b16 %v1119
    %v3609 = vunpack.c.h.b16 %v1119
    %v3610 = vunpack.c.l.b16 %v1120
    %v3611 = vunpack.c.h.b16 %v1120
    %v3612 = vunpack.c.l.b16 %v1121
    %v3613 = vunpack.c.h.b16 %v1121
    %v3614 = vunpack.c.l.b16 %v1122
    %v3615 = vunpack.c.h.b16 %v1122
    %v3616 = vunpack.c.l.b16 %v1123
    %v3617 = vunpack.c.h.b16 %v1123
    %v3618 = vunpack.c.l.b16 %v1124
    %v3619 = vunpack.c.h.b16 %v1124
    %v3620 = vunpack.c.l.b16 %v1125
    %v3621 = vunpack.c.h.b16 %v1125
    %v3622 = vunpack.c.l.b16 %v1126
    %v3623 = vunpack.c.h.b16 %v1126
    %v3624 = vunpack.c.l.b16 %v1127
    %v3625 = vunpack.c.h.b16 %v1127
    %v3626 = vunpack.c.l.b16 %v1128
    %v3627 = vunpack.c.h.b16 %v1128
    %v3628 = vunpack.c.l.b16 %v1129
    %v3629 = vunpack.c.h.b16 %v1129
    %v3630 = vunpack.c.l.b16 %v1130
    %v3631 = vunpack.c.h.b16 %v1130
    %v3632 = vunpack.c.l.b16 %v1131
    %v3633 = vunpack.c.h.b16 %v1131
    %v3634 = vunpack.c.l.b16 %v1132
    %v3635 = vunpack.c.h.b16 %v1132
    %v3636 = vunpack.c.l.b16 %v1133
    %v3637 = vunpack.c.h.b16 %v1133
    %v3638 = vunpack.c.l.b16 %v1134
    %v3639 = vunpack.c.h.b16 %v1134
    %v3640 = vunpack.c.l.b16 %v1135
    %v3641 = vunpack.c.h.b16 %v1135
    %v3642 = vunpack.c.l.b16 %v1136
    %v3643 = vunpack.c.h.b16 %v1136
    %v3644 = vunpack.c.l.b16 %v1137
    %v3645 = vunpack.c.h.b16 %v1137
    %v3646 = vunpack.c.l.b16 %v1138
    %v3647 = vunpack.c.h.b16 %v1138
    %v3648 = vunpack.c.l.b16 %v1139
    %v3649 = vunpack.c.h.b16 %v1139
    %v3650 = vunpack.c.l.b16 %v1140
    %v3651 = vunpack.c.h.b16 %v1140
    %v3652 = vunpack.c.l.b16 %v1141
    %v3653 = vunpack.c.h.b16 %v1141
    %v3654 = vunpack.c.l.b16 %v1142
    %v3655 = vunpack.c.h.b16 %v1142
    %v3656 = vunpack.c.l.b16 %v1143
    %v3657 = vunpack.c.h.b16 %v1143
    %v3658 = vunpack.c.l.b16 %v1144
    %v3659 = vunpack.c.h.b16 %v1144
    %v3660 = vunpack.c.l.b16 %v1145
    %v3661 = vunpack.c.h.b16 %v1145
    %v3662 = vunpack.c.l.b16 %v1146
    %v3663 = vunpack.c.h.b16 %v1146
    %v3664 = vunpack.c.l.b16 %v1147
    %v3665 = vunpack.c.h.b16 %v1147
    %v3666 = vunpack.c.l.b16 %v1148
    %v3667 = vunpack.c.h.b16 %v1148
    %v3668 = vunpack.c.l.b16 %v1149
    %v3669 = vunpack.c.h.b16 %v1149
    %v3670 = vunpack.c.l.b16 %v1150
    %v3671 = vunpack.c.h.b16 %v1150
    %v3672 = vunpack.c.l.b16 %v1151
    %v3673 = vunpack.c.h.b16 %v1151
    %v3674 = vunpack.c.l.b16 %v1152
    %v3675 = vunpack.c.h.b16 %v1152
    %v3676 = vunpack.c.l.b16 %v1153
    %v3677 = vunpack.c.h.b16 %v1153
    %v3678 = vunpack.c.l.b16 %v1154
    %v3679 = vunpack.c.h.b16 %v1154
    %v3680 = vunpack.c.l.b16 %v1155
    %v3681 = vunpack.c.h.b16 %v1155
    %v3682 = vunpack.c.l.b16 %v1156
    %v3683 = vunpack.c.h.b16 %v1156
    %v3684 = vunpack.c.l.b16 %v1157
    %v3685 = vunpack.c.h.b16 %v1157
    %v3686 = vunpack.c.l.b16 %v1158
    %v3687 = vunpack.c.h.b16 %v1158
    %v3688 = vunpack.c.l.b16 %v1159
    %v3689 = vunpack.c.h.b16 %v1159
    %v3690 = vunpack.c.l.b16 %v1160
    %v3691 = vunpack.c.h.b16 %v1160
    %v3692 = vunpack.c.l.b16 %v1161
    %v3693 = vunpack.c.h.b16 %v1161
    %v3694 = vunpack.c.l.b16 %v1162
    %v3695 = vunpack.c.h.b16 %v1162
    %v3696 = vunpack.c.l.b16 %v1163
    %v3697 = vunpack.c.h.b16 %v1163
    %v3698 = vunpack.c.l.b16 %v1164
    %v3699 = vunpack.c.h.b16 %v1164
    %v3700 = vunpack.c.l.b16 %v1165
    %v3701 = vunpack.c.h.b16 %v1165
    %v3702 = vunpack.c.l.b16 %v1166
    %v3703 = vunpack.c.h.b16 %v1166
    %v3704 = vunpack.c.l.b16 %v1167
    %v3705 = vunpack.c.h.b16 %v1167
    %v3706 = vunpack.c.l.b16 %v1168
    %v3707 = vunpack.c.h.b16 %v1168
    %v3708 = vunpack.c.l.b16 %v1169
    %v3709 = vunpack.c.h.b16 %v1169
    %v3710 = vunpack.c.l.b16 %v1170
    %v3711 = vunpack.c.h.b16 %v1170
    %v3712 = vunpack.c.l.b16 %v1171
    %v3713 = vunpack.c.h.b16 %v1171
    %v3714 = vunpack.c.l.b16 %v1172
    %v3715 = vunpack.c.h.b16 %v1172
    %v3716 = vunpack.c.l.b16 %v1173
    %v3717 = vunpack.c.h.b16 %v1173
    %v3718 = vunpack.c.l.b16 %v1174
    %v3719 = vunpack.c.h.b16 %v1174
    %v3720 = vunpack.c.l.b16 %v1175
    %v3721 = vunpack.c.h.b16 %v1175
    %v3722 = vunpack.c.l.b16 %v1176
    %v3723 = vunpack.c.h.b16 %v1176
    %v3724 = vunpack.c.l.b16 %v1177
    %v3725 = vunpack.c.h.b16 %v1177
    %v3726 = vunpack.c.l.b16 %v1178
    %v3727 = vunpack.c.h.b16 %v1178
    %v3728 = vunpack.c.l.b16 %v1179
    %v3729 = vunpack.c.h.b16 %v1179
    %v3730 = vunpack.c.l.b16 %v1180
    %v3731 = vunpack.c.h.b16 %v1180
    %v3732 = vunpack.c.l.b16 %v1181
    %v3733 = vunpack.c.h.b16 %v1181
    %v3734 = vunpack.c.l.b16 %v1182
    %v3735 = vunpack.c.h.b16 %v1182
    %v3736 = vunpack.c.l.b16 %v1183
    %v3737 = vunpack.c.h.b16 %v1183
    %v3738 = vunpack.c.l.b16 %v1184
    %v3739 = vunpack.c.h.b16 %v1184
    %v3740 = vunpack.c.l.b16 %v1185
    %v3741 = vunpack.c.h.b16 %v1185
    %v3742 = vunpack.c.l.b16 %v1186
    %v3743 = vunpack.c.h.b16 %v1186
    %v3744 = vunpack.c.l.b16 %v1187
    %v3745 = vunpack.c.h.b16 %v1187
    %v3746 = vunpack.c.l.b16 %v1188
    %v3747 = vunpack.c.h.b16 %v1188
    %v3748 = vunpack.c.l.b16 %v1189
    %v3749 = vunpack.c.h.b16 %v1189
    %v3750 = vunpack.c.l.b16 %v1190
    %v3751 = vunpack.c.h.b16 %v1190
    %v3752 = vunpack.c.l.b16 %v1191
    %v3753 = vunpack.c.h.b16 %v1191
    %v3754 = vunpack.c.l.b16 %v1192
    %v3755 = vunpack.c.h.b16 %v1192
    %v3756 = vunpack.c.l.b16 %v1193
    %v3757 = vunpack.c.h.b16 %v1193
    %v3758 = vunpack.c.l.b16 %v1194
    %v3759 = vunpack.c.h.b16 %v1194
    %v3760 = vunpack.c.l.b16 %v1195
    %v3761 = vunpack.c.h.b16 %v1195
    %v3762 = vunpack.c.l.b16 %v1196
    %v3763 = vunpack.c.h.b16 %v1196
    %v3764 = vunpack.c.l.b16 %v1197
    %v3765 = vunpack.c.h.b16 %v1197
    %v3766 = vunpack.c.l.b16 %v1198
    %v3767 = vunpack.c.h.b16 %v1198
    %v3768 = vunpack.c.l.b16 %v1199
    %v3769 = vunpack.c.h.b16 %v1199
    %v3770 = vunpack.c.l.b16 %v1200
    %v3771 = vunpack.c.h.b16 %v1200
    %v3772 = vunpack.c.l.b16 %v1201
    %v3773 = vunpack.c.h.b16 %v1201
    %v3774 = vunpack.c.l.b16 %v1202
    %v3775 = vunpack.c.h.b16 %v1202
    %v3776 = vunpack.c.l.b16 %v1203
    %v3777 = vunpack.c.h.b16 %v1203
    %v3778 = vunpack.c.l.b16 %v1204
    %v3779 = vunpack.c.h.b16 %v1204
    %v3780 = vunpack.c.l.b16 %v1205
    %v3781 = vunpack.c.h.b16 %v1205
    %v3782 = vunpack.c.l.b16 %v1206
    %v3783 = vunpack.c.h.b16 %v1206
    %v3784 = vunpack.c.l.b16 %v1207
    %v3785 = vunpack.c.h.b16 %v1207
    %v3786 = vunpack.c.l.b16 %v1208
    %v3787 = vunpack.c.h.b16 %v1208
    %v3788 = vunpack.c.l.b16 %v1209
    %v3789 = vunpack.c.h.b16 %v1209
    %v3790 = vunpack.c.l.b16 %v1210
    %v3791 = vunpack.c.h.b16 %v1210
    %v3792 = vunpack.c.l.b16 %v1211
    %v3793 = vunpack.c.h.b16 %v1211
    %v3794 = vunpack.c.l.b16 %v1212
    %v3795 = vunpack.c.h.b16 %v1212
    %v3796 = vunpack.c.l.b16 %v1213
    %v3797 = vunpack.c.h.b16 %v1213
    %v3798 = vunpack.c.l.b16 %v1214
    %v3799 = vunpack.c.h.b16 %v1214
    %v3800 = vunpack.c.l.b16 %v1215
    %v3801 = vunpack.c.h.b16 %v1215
    %v3802 = vunpack.c.l.b16 %v1216
    %v3803 = vunpack.c.h.b16 %v1216
    %v3804 = vunpack.c.l.b16 %v1217
    %v3805 = vunpack.c.h.b16 %v1217
    %v3806 = vunpack.c.l.b16 %v1218
    %v3807 = vunpack.c.h.b16 %v1218
    %v3808 = vunpack.c.l.b16 %v1219
    %v3809 = vunpack.c.h.b16 %v1219
    %v3810 = vunpack.c.l.b16 %v1220
    %v3811 = vunpack.c.h.b16 %v1220
    %v3812 = vunpack.c.l.b16 %v1221
    %v3813 = vunpack.c.h.b16 %v1221
    %v3814 = vunpack.c.l.b16 %v1222
    %v3815 = vunpack.c.h.b16 %v1222
    %v3816 = vunpack.c.l.b16 %v1223
    %v3817 = vunpack.c.h.b16 %v1223
    %v3818 = vunpack.c.l.b16 %v1224
    %v3819 = vunpack.c.h.b16 %v1224
    %v3820 = vunpack.c.l.b16 %v1225
    %v3821 = vunpack.c.h.b16 %v1225
    %v3822 = vunpack.c.l.b16 %v1226
    %v3823 = vunpack.c.h.b16 %v1226
    %v3824 = vunpack.c.l.b16 %v1227
    %v3825 = vunpack.c.h.b16 %v1227
    %v3826 = vunpack.c.l.b16 %v1228
    %v3827 = vunpack.c.h.b16 %v1228
    %v3828 = vunpack.c.l.b16 %v1229
    %v3829 = vunpack.c.h.b16 %v1229
    %v3830 = vunpack.c.l.b16 %v1230
    %v3831 = vunpack.c.h.b16 %v1230
    %v3832 = vunpack.c.l.b16 %v1231
    %v3833 = vunpack.c.h.b16 %v1231
    %v3834 = vunpack.c.l.b16 %v1232
    %v3835 = vunpack.c.h.b16 %v1232
    %v3836 = vunpack.c.l.b16 %v1233
    %v3837 = vunpack.c.h.b16 %v1233
    %v3838 = vunpack.c.l.b16 %v1234
    %v3839 = vunpack.c.h.b16 %v1234
    %v3840 = vunpack.c.l.b16 %v1235
    %v3841 = vunpack.c.h.b16 %v1235
    %v3842 = vunpack.c.l.b16 %v1236
    %v3843 = vunpack.c.h.b16 %v1236
    %v3844 = vunpack.c.l.b16 %v1237
    %v3845 = vunpack.c.h.b16 %v1237
    %v3846 = vunpack.c.l.b16 %v1238
    %v3847 = vunpack.c.h.b16 %v1238
    %v3848 = vunpack.c.l.b16 %v1239
    %v3849 = vunpack.c.h.b16 %v1239
    %v3850 = vunpack.c.l.b16 %v1240
    %v3851 = vunpack.c.h.b16 %v1240
    %v3852 = vunpack.c.l.b16 %v1241
    %v3853 = vunpack.c.h.b16 %v1241
    %v3854 = vunpack.c.l.b16 %v1242
    %v3855 = vunpack.c.h.b16 %v1242
    %v3856 = vunpack.c.l.b16 %v1243
    %v3857 = vunpack.c.h.b16 %v1243
    %v3858 = vunpack.c.l.b16 %v1244
    %v3859 = vunpack.c.h.b16 %v1244
    %v3860 = vunpack.c.l.b16 %v1245
    %v3861 = vunpack.c.h.b16 %v1245
    %v3862 = vunpack.c.l.b16 %v1246
    %v3863 = vunpack.c.h.b16 %v1246
    %v3864 = vunpack.c.l.b16 %v1247
    %v3865 = vunpack.c.h.b16 %v1247
    %v3866 = vunpack.c.l.b16 %v1248
    %v3867 = vunpack.c.h.b16 %v1248
    %v3868 = vunpack.c.l.b16 %v1249
    %v3869 = vunpack.c.h.b16 %v1249
    %v3870 = vunpack.c.l.b16 %v1250
    %v3871 = vunpack.c.h.b16 %v1250
    %v3872 = vunpack.c.l.b16 %v1251
    %v3873 = vunpack.c.h.b16 %v1251
    %v3874 = vunpack.c.l.b16 %v1252
    %v3875 = vunpack.c.h.b16 %v1252
    %v3876 = vunpack.c.l.b16 %v1253
    %v3877 = vunpack.c.h.b16 %v1253
    %v3878 = vunpack.c.l.b16 %v1254
    %v3879 = vunpack.c.h.b16 %v1254
    %v3880 = vunpack.c.l.b16 %v1255
    %v3881 = vunpack.c.h.b16 %v1255
    %v3882 = vunpack.c.l.b16 %v1256
    %v3883 = vunpack.c.h.b16 %v1256
    %v3884 = vunpack.c.l.b16 %v1257
    %v3885 = vunpack.c.h.b16 %v1257
    %v3886 = vunpack.c.l.b16 %v1258
    %v3887 = vunpack.c.h.b16 %v1258
    %v3888 = vunpack.c.l.b16 %v1259
    %v3889 = vunpack.c.h.b16 %v1259
    %v3890 = vunpack.c.l.b16 %v1260
    %v3891 = vunpack.c.h.b16 %v1260
    %v3892 = vunpack.c.l.b16 %v1261
    %v3893 = vunpack.c.h.b16 %v1261
    %v3894 = vunpack.c.l.b16 %v1262
    %v3895 = vunpack.c.h.b16 %v1262
    %v3896 = vunpack.c.l.b16 %v1263
    %v3897 = vunpack.c.h.b16 %v1263
    %v3898 = vunpack.c.l.b16 %v1264
    %v3899 = vunpack.c.h.b16 %v1264
    %v3900 = vunpack.c.l.b16 %v1265
    %v3901 = vunpack.c.h.b16 %v1265
    %v3902 = vunpack.c.l.b16 %v1266
    %v3903 = vunpack.c.h.b16 %v1266
    %v3904 = vunpack.c.l.b16 %v1267
    %v3905 = vunpack.c.h.b16 %v1267
    %v3906 = vunpack.c.l.b16 %v1268
    %v3907 = vunpack.c.h.b16 %v1268
    %v3908 = vunpack.c.l.b16 %v1269
    %v3909 = vunpack.c.h.b16 %v1269
    %v3910 = vunpack.c.l.b16 %v1270
    %v3911 = vunpack.c.h.b16 %v1270
    %v3912 = vunpack.c.l.b16 %v1271
    %v3913 = vunpack.c.h.b16 %v1271
    %v3914 = vunpack.c.l.b16 %v1272
    %v3915 = vunpack.c.h.b16 %v1272
    %v3916 = vunpack.c.l.b16 %v1273
    %v3917 = vunpack.c.h.b16 %v1273
    %v3918 = vunpack.c.l.b16 %v1274
    %v3919 = vunpack.c.h.b16 %v1274
    %v3920 = vunpack.c.l.b16 %v1275
    %v3921 = vunpack.c.h.b16 %v1275
    %v3922 = vunpack.c.l.b16 %v1276
    %v3923 = vunpack.c.h.b16 %v1276
    %v3924 = vunpack.c.l.b16 %v1277
    %v3925 = vunpack.c.h.b16 %v1277
    %v3926 = vunpack.c.l.b16 %v1278
    %v3927 = vunpack.c.h.b16 %v1278
    %v3928 = vunpack.c.l.b16 %v1279
    %v3929 = vunpack.c.h.b16 %v1279
    %v3930 = vunpack.c.l.b16 %v1280
    %v3931 = vunpack.c.h.b16 %v1280
    %v3932 = vunpack.c.l.b16 %v1281
    %v3933 = vunpack.c.h.b16 %v1281
    %v3934 = vunpack.c.l.b16 %v1282
    %v3935 = vunpack.c.h.b16 %v1282
    %v3936 = vunpack.c.l.b16 %v1283
    %v3937 = vunpack.c.h.b16 %v1283
    %v3938 = vunpack.c.l.b16 %v1284
    %v3939 = vunpack.c.h.b16 %v1284
    %v3940 = vunpack.c.l.b16 %v1285
    %v3941 = vunpack.c.h.b16 %v1285
    %v3942 = vunpack.c.l.b16 %v1286
    %v3943 = vunpack.c.h.b16 %v1286
    %v3944 = vunpack.c.l.b16 %v1287
    %v3945 = vunpack.c.h.b16 %v1287
    %v3946 = vunpack.c.l.b16 %v1288
    %v3947 = vunpack.c.h.b16 %v1288
    %v3948 = vunpack.c.l.b16 %v1289
    %v3949 = vunpack.c.h.b16 %v1289
    %v3950 = vunpack.c.l.b16 %v1290
    %v3951 = vunpack.c.h.b16 %v1290
    %v3952 = vunpack.c.l.b16 %v1291
    %v3953 = vunpack.c.h.b16 %v1291
    %v3954 = vunpack.c.l.b16 %v1292
    %v3955 = vunpack.c.h.b16 %v1292
    %v3956 = vunpack.c.l.b16 %v1293
    %v3957 = vunpack.c.h.b16 %v1293
    %v3958 = vunpack.c.l.b16 %v1294
    %v3959 = vunpack.c.h.b16 %v1294
    %v3960 = vunpack.c.l.b16 %v1295
    %v3961 = vunpack.c.h.b16 %v1295
    %v3962 = vunpack.c.l.b16 %v1296
    %v3963 = vunpack.c.h.b16 %v1296
    %v3964 = vunpack.c.l.b16 %v1297
    %v3965 = vunpack.c.h.b16 %v1297
    %v3966 = vunpack.c.l.b16 %v1298
    %v3967 = vunpack.c.h.b16 %v1298
    %v3968 = vunpack.c.l.b16 %v1299
    %v3969 = vunpack.c.h.b16 %v1299
    %v3970 = vunpack.c.l.b16 %v1300
    %v3971 = vunpack.c.h.b16 %v1300
    %v3972 = vunpack.c.l.b16 %v1301
    %v3973 = vunpack.c.h.b16 %v1301
    %v3974 = vunpack.c.l.b16 %v1302
    %v3975 = vunpack.c.h.b16 %v1302
    %v3976 = vunpack.c.l.b16 %v1303
    %v3977 = vunpack.c.h.b16 %v1303
    %v3978 = vunpack.c.l.b16 %v1304
    %v3979 = vunpack.c.h.b16 %v1304
    %v3980 = vunpack.c.l.b16 %v1305
    %v3981 = vunpack.c.h.b16 %v1305
    %v3982 = vunpack.c.l.b16 %v1306
    %v3983 = vunpack.c.h.b16 %v1306
    %v3984 = vunpack.c.l.b16 %v1307
    %v3985 = vunpack.c.h.b16 %v1307
    %v3986 = vunpack.c.l.b16 %v1308
    %v3987 = vunpack.c.h.b16 %v1308
    %v3988 = vunpack.c.l.b16 %v1309
    %v3989 = vunpack.c.h.b16 %v1309
    %v3990 = vunpack.c.l.b16 %v1310
    %v3991 = vunpack.c.h.b16 %v1310
    %v3992 = vunpack.c.l.b16 %v1311
    %v3993 = vunpack.c.h.b16 %v1311
    %v3994 = vunpack.c.l.b16 %v1312
    %v3995 = vunpack.c.h.b16 %v1312
    %v3996 = vunpack.c.l.b16 %v1313
    %v3997 = vunpack.c.h.b16 %v1313
    %v3998 = vunpack.c.l.b16 %v1314
    %v3999 = vunpack.c.h.b16 %v1314
    %v4000 = vunpack.c.l.b16 %v1315
    %v4001 = vunpack.c.h.b16 %v1315
    %v4002 = vunpack.c.l.b16 %v1316
    %v4003 = vunpack.c.h.b16 %v1316
    %v4004 = vunpack.c.l.b16 %v1317
    %v4005 = vunpack.c.h.b16 %v1317
    %v4006 = vunpack.c.l.b16 %v1318
    %v4007 = vunpack.c.h.b16 %v1318
    %v4008 = vunpack.c.l.b16 %v1319
    %v4009 = vunpack.c.h.b16 %v1319
    %v4010 = vunpack.c.l.b16 %v1320
    %v4011 = vunpack.c.h.b16 %v1320
    %v4012 = vunpack.c.l.b16 %v1321
    %v4013 = vunpack.c.h.b16 %v1321
    %v4014 = vunpack.c.l.b16 %v1322
    %v4015 = vunpack.c.h.b16 %v1322
    %v4016 = vunpack.c.l.b16 %v1323
    %v4017 = vunpack.c.h.b16 %v1323
    %v4018 = vunpack.c.l.b16 %v1324
    %v4019 = vunpack.c.h.b16 %v1324
    %v4020 = vunpack.c.l.b16 %v1325
    %v4021 = vunpack.c.h.b16 %v1325
    %v4022 = vunpack.c.l.b16 %v1326
    %v4023 = vunpack.c.h.b16 %v1326
    %v4024 = vunpack.c.l.b16 %v1327
    %v4025 = vunpack.c.h.b16 %v1327
    %v4026 = vunpack.c.l.b16 %v1328
    %v4027 = vunpack.c.h.b16 %v1328
    %v4028 = vunpack.c.l.b16 %v1329
    %v4029 = vunpack.c.h.b16 %v1329
    %v4030 = vunpack.c.l.b16 %v1330
    %v4031 = vunpack.c.h.b16 %v1330
    %v4032 = vunpack.c.l.b16 %v1331
    %v4033 = vunpack.c.h.b16 %v1331
    %v4034 = vunpack.c.l.b16 %v1332
    %v4035 = vunpack.c.h.b16 %v1332
    %v4036 = vunpack.c.l.b16 %v1333
    %v4037 = vunpack.c.h.b16 %v1333
    %v4038 = vunpack.c.l.b16 %v1334
    %v4039 = vunpack.c.h.b16 %v1334
    %v4040 = vunpack.c.l.b16 %v1335
    %v4041 = vunpack.c.h.b16 %v1335
    %v4042 = vunpack.c.l.b16 %v1336
    %v4043 = vunpack.c.h.b16 %v1336
    %v4044 = vunpack.c.l.b16 %v1337
    %v4045 = vunpack.c.h.b16 %v1337
    %v4046 = vunpack.c.l.b16 %v1338
    %v4047 = vunpack.c.h.b16 %v1338
    %v4048 = vunpack.c.l.b16 %v1339
    %v4049 = vunpack.c.h.b16 %v1339
    %v4050 = vunpack.c.l.b16 %v1340
    %v4051 = vunpack.c.h.b16 %v1340
    %v4052 = vunpack.c.l.b16 %v1341
    %v4053 = vunpack.c.h.b16 %v1341
    %v4054 = vunpack.c.l.b16 %v1342
    %v4055 = vunpack.c.h.b16 %v1342
    %v4056 = vunpack.c.l.b16 %v1343
    %v4057 = vunpack.c.h.b16 %v1343
    %v4058 = vunpack.c.l.b16 %v1344
    %v4059 = vunpack.c.h.b16 %v1344
    %v4060 = vunpack.c.l.b16 %v1345
    %v4061 = vunpack.c.h.b16 %v1345
    %v4062 = vunpack.c.l.b16 %v1346
    %v4063 = vunpack.c.h.b16 %v1346
    %v4064 = vunpack.c.l.b16 %v1347
    %v4065 = vunpack.c.h.b16 %v1347
    %v4066 = vunpack.c.l.b16 %v1348
    %v4067 = vunpack.c.h.b16 %v1348
    %v4068 = vunpack.c.l.b16 %v1349
    %v4069 = vunpack.c.h.b16 %v1349
    %v4070 = vunpack.c.l.b16 %v1350
    %v4071 = vunpack.c.h.b16 %v1350
    %v4072 = vunpack.c.l.b16 %v1351
    %v4073 = vunpack.c.h.b16 %v1351
    %v4074 = vunpack.c.l.b16 %v1352
    %v4075 = vunpack.c.h.b16 %v1352
    %v4076 = vunpack.c.l.b16 %v1353
    %v4077 = vunpack.c.h.b16 %v1353
    %v4078 = vunpack.c.l.b16 %v1354
    %v4079 = vunpack.c.h.b16 %v1354
    %v4080 = vunpack.c.l.b16 %v1355
    %v4081 = vunpack.c.h.b16 %v1355
    %v4082 = vunpack.c.l.b16 %v1356
    %v4083 = vunpack.c.h.b16 %v1356
    %v4084 = vunpack.c.l.b16 %v1357
    %v4085 = vunpack.c.h.b16 %v1357
    %v4086 = vunpack.c.l.b16 %v1358
    %v4087 = vunpack.c.h.b16 %v1358
    %v4088 = vunpack.c.l.b16 %v1359
    %v4089 = vunpack.c.h.b16 %v1359
    %v4090 = vunpack.c.l.b16 %v1360
    %v4091 = vunpack.c.h.b16 %v1360
    %v4092 = vunpack.c.l.b16 %v1361
    %v4093 = vunpack.c.h.b16 %v1361
    %v4094 = vunpack.c.l.b16 %v1362
    %v4095 = vunpack.c.h.b16 %v1362
    %v4096 = vunpack.c.l.b16 %v1363
    %v4097 = vunpack.c.h.b16 %v1363
    %v4098 = vunpack.c.l.b16 %v1364
    %v4099 = vunpack.c.h.b16 %v1364
    %v4100 = vunpack.c.l.b16 %v1365
    %v4101 = vunpack.c.h.b16 %v1365
    %v4102 = vunpack.c.l.b16 %v1366
    %v4103 = vunpack.c.h.b16 %v1366
    %v4104 = vunpack.c.l.b16 %v1367
    %v4105 = vunpack.c.h.b16 %v1367
    %v4106 = vunpack.c.l.b16 %v1368
    %v4107 = vunpack.c.h.b16 %v1368
    %v4108 = vunpack.c.l.b16 %v1369
    %v4109 = vunpack.c.h.b16 %v1369
    %v4110 = vunpack.c.l.b16 %v1370
    %v4111 = vunpack.c.h.b16 %v1370
    %v4112 = vunpack.c.l.b16 %v1371
    %v4113 = vunpack.c.h.b16 %v1371
    %v4114 = vunpack.c.l.b16 %v1372
    %v4115 = vunpack.c.h.b16 %v1372
    %v4116 = vunpack.c.l.b16 %v1373
    %v4117 = vunpack.c.h.b16 %v1373
    %v4118 = vunpack.c.l.b16 %v1374
    %v4119 = vunpack.c.h.b16 %v1374
    %v4120 = vunpack.c.l.b16 %v1375
    %v4121 = vunpack.c.h.b16 %v1375
    %v4122 = vunpack.c.l.b16 %v1376
    %v4123 = vunpack.c.h.b16 %v1376
    %v4124 = vunpack.c.l.b16 %v1377
    %v4125 = vunpack.c.h.b16 %v1377
    %v4126 = vunpack.c.l.b16 %v1378
    %v4127 = vunpack.c.h.b16 %v1378
    %v4128 = vunpack.c.l.b16 %v1379
    %v4129 = vunpack.c.h.b16 %v1379
    %v4130 = vunpack.c.l.b16 %v1380
    %v4131 = vunpack.c.h.b16 %v1380
    %v4132 = vunpack.c.l.b16 %v1381
    %v4133 = vunpack.c.h.b16 %v1381
    %v4134 = vunpack.c.l.b16 %v1382
    %v4135 = vunpack.c.h.b16 %v1382
    %v4136 = vunpack.c.l.b16 %v1383
    %v4137 = vunpack.c.h.b16 %v1383
    %v4138 = vunpack.c.l.b16 %v1384
    %v4139 = vunpack.c.h.b16 %v1384
    %v4140 = vunpack.c.l.b16 %v1385
    %v4141 = vunpack.c.h.b16 %v1385
    %v4142 = vunpack.c.l.b16 %v1386
    %v4143 = vunpack.c.h.b16 %v1386
    %v4144 = vunpack.c.l.b16 %v1387
    %v4145 = vunpack.c.h.b16 %v1387
    %v4146 = vunpack.c.l.b16 %v1388
    %v4147 = vunpack.c.h.b16 %v1388
    %v4148 = vunpack.c.l.b16 %v1389
    %v4149 = vunpack.c.h.b16 %v1389
    %v4150 = vunpack.c.l.b16 %v1390
    %v4151 = vunpack.c.h.b16 %v1390
    %v4152 = vunpack.c.l.b16 %v1391
    %v4153 = vunpack.c.h.b16 %v1391
    %v4154 = vunpack.c.l.b16 %v1392
    %v4155 = vunpack.c.h.b16 %v1392
    %v4156 = vunpack.c.l.b16 %v1393
    %v4157 = vunpack.c.h.b16 %v1393
    %v4158 = vunpack.c.l.b16 %v1394
    %v4159 = vunpack.c.h.b16 %v1394
    %v4160 = vunpack.c.l.b16 %v1395
    %v4161 = vunpack.c.h.b16 %v1395
    %v4162 = vunpack.c.l.b16 %v1396
    %v4163 = vunpack.c.h.b16 %v1396
    %v4164 = vunpack.c.l.b16 %v1397
    %v4165 = vunpack.c.h.b16 %v1397
    %v4166 = vunpack.c.l.b16 %v1398
    %v4167 = vunpack.c.h.b16 %v1398
    %v4168 = vunpack.c.l.b16 %v1399
    %v4169 = vunpack.c.h.b16 %v1399
    %v4170 = vunpack.c.l.b16 %v1400
    %v4171 = vunpack.c.h.b16 %v1400
    %v4172 = vunpack.c.l.b16 %v1401
    %v4173 = vunpack.c.h.b16 %v1401
    %v4174 = vunpack.c.l.b16 %v1402
    %v4175 = vunpack.c.h.b16 %v1402
    %v4176 = vunpack.c.l.b16 %v1403
    %v4177 = vunpack.c.h.b16 %v1403
    %v4178 = vunpack.c.l.b16 %v1404
    %v4179 = vunpack.c.h.b16 %v1404
    %v4180 = vunpack.c.l.b16 %v1405
    %v4181 = vunpack.c.h.b16 %v1405
    %v4182 = vunpack.c.l.b16 %v1406
    %v4183 = vunpack.c.h.b16 %v1406
    %v4184 = vunpack.c.l.b16 %v1407
    %v4185 = vunpack.c.h.b16 %v1407
    %v4186 = vunpack.c.l.b16 %v1408
    %v4187 = vunpack.c.h.b16 %v1408
    %v4188 = vunpack.c.l.b16 %v1409
    %v4189 = vunpack.c.h.b16 %v1409
    %v4190 = vunpack.c.l.b16 %v1410
    %v4191 = vunpack.c.h.b16 %v1410
    %v4192 = vunpack.c.l.b16 %v1411
    %v4193 = vunpack.c.h.b16 %v1411
    %v4194 = vunpack.c.l.b16 %v1412
    %v4195 = vunpack.c.h.b16 %v1412
    %v4196 = vunpack.c.l.b16 %v1413
    %v4197 = vunpack.c.h.b16 %v1413
    %v4198 = vunpack.c.l.b16 %v1414
    %v4199 = vunpack.c.h.b16 %v1414
    %v4200 = vunpack.c.l.b16 %v1415
    %v4201 = vunpack.c.h.b16 %v1415
    %v4202 = vunpack.c.l.b16 %v1416
    %v4203 = vunpack.c.h.b16 %v1416
    %v4204 = vunpack.c.l.b16 %v1417
    %v4205 = vunpack.c.h.b16 %v1417
    %v4206 = vunpack.c.l.b16 %v1418
    %v4207 = vunpack.c.h.b16 %v1418
    %v4208 = vunpack.c.l.b16 %v1419
    %v4209 = vunpack.c.h.b16 %v1419
    %v4210 = vunpack.c.l.b16 %v1420
    %v4211 = vunpack.c.h.b16 %v1420
    %v4212 = vunpack.c.l.b16 %v1421
    %v4213 = vunpack.c.h.b16 %v1421
    %v4214 = vunpack.c.l.b16 %v1422
    %v4215 = vunpack.c.h.b16 %v1422
    %v4216 = vunpack.c.l.b16 %v1423
    %v4217 = vunpack.c.h.b16 %v1423
    %v4218 = vunpack.c.l.b16 %v1424
    %v4219 = vunpack.c.h.b16 %v1424
    %v4220 = vunpack.c.l.b16 %v1425
    %v4221 = vunpack.c.h.b16 %v1425
    %v4222 = vunpack.c.l.b16 %v1426
    %v4223 = vunpack.c.h.b16 %v1426
    %v4224 = vunpack.c.l.b16 %v1427
    %v4225 = vunpack.c.h.b16 %v1427
    %v4226 = vunpack.c.l.b16 %v1428
    %v4227 = vunpack.c.h.b16 %v1428
    %v4228 = vunpack.c.l.b16 %v1429
    %v4229 = vunpack.c.h.b16 %v1429
    %v4230 = vunpack.c.l.b16 %v1430
    %v4231 = vunpack.c.h.b16 %v1430
    %v4232 = vunpack.c.l.b16 %v1431
    %v4233 = vunpack.c.h.b16 %v1431
    %v4234 = vunpack.c.l.b16 %v1432
    %v4235 = vunpack.c.h.b16 %v1432
    %v4236 = vunpack.c.l.b16 %v1433
    %v4237 = vunpack.c.h.b16 %v1433
    %v4238 = vunpack.c.l.b16 %v1434
    %v4239 = vunpack.c.h.b16 %v1434
    %v4240 = vunpack.c.l.b16 %v1435
    %v4241 = vunpack.c.h.b16 %v1435
    %v4242 = vunpack.c.l.b16 %v1436
    %v4243 = vunpack.c.h.b16 %v1436
    %v4244 = vunpack.c.l.b16 %v1437
    %v4245 = vunpack.c.h.b16 %v1437
    %v4246 = vunpack.c.l.b16 %v1438
    %v4247 = vunpack.c.h.b16 %v1438
    %v4248 = vunpack.c.l.b16 %v1439
    %v4249 = vunpack.c.h.b16 %v1439
    %v4250 = vunpack.c.l.b16 %v1440
    %v4251 = vunpack.c.h.b16 %v1440
    %v4252 = vunpack.c.l.b16 %v1441
    %v4253 = vunpack.c.h.b16 %v1441
    %v4254 = vunpack.c.l.b16 %v1442
    %v4255 = vunpack.c.h.b16 %v1442
    %v4256 = vunpack.c.l.b16 %v1443
    %v4257 = vunpack.c.h.b16 %v1443
    %v4258 = vunpack.c.l.b16 %v1444
    %v4259 = vunpack.c.h.b16 %v1444
    %v4260 = vunpack.c.l.b16 %v1445
    %v4261 = vunpack.c.h.b16 %v1445
    %v4262 = vunpack.c.l.b16 %v1446
    %v4263 = vunpack.c.h.b16 %v1446
    %v4264 = vunpack.c.l.b16 %v1447
    %v4265 = vunpack.c.h.b16 %v1447
    %v4266 = vunpack.c.l.b16 %v1448
    %v4267 = vunpack.c.h.b16 %v1448
    %v4268 = vunpack.c.l.b16 %v1449
    %v4269 = vunpack.c.h.b16 %v1449
    %v4270 = vunpack.c.l.b16 %v1450
    %v4271 = vunpack.c.h.b16 %v1450
    %v4272 = vunpack.c.l.b16 %v1451
    %v4273 = vunpack.c.h.b16 %v1451
    %v4274 = vunpack.c.l.b16 %v1452
    %v4275 = vunpack.c.h.b16 %v1452
    %v4276 = vunpack.c.l.b16 %v1453
    %v4277 = vunpack.c.h.b16 %v1453
    %v4278 = vunpack.c.l.b16 %v1454
    %v4279 = vunpack.c.h.b16 %v1454
    %v4280 = vunpack.c.l.b16 %v1455
    %v4281 = vunpack.c.h.b16 %v1455
    %v4282 = vunpack.c.l.b16 %v1456
    %v4283 = vunpack.c.h.b16 %v1456
    %v4284 = vunpack.c.l.b16 %v1457
    %v4285 = vunpack.c.h.b16 %v1457
    %v4286 = vunpack.c.l.b16 %v1458
    %v4287 = vunpack.c.h.b16 %v1458
    %v4288 = vunpack.c.l.b16 %v1459
    %v4289 = vunpack.c.h.b16 %v1459
    %v4290 = vunpack.c.l.b16 %v1460
    %v4291 = vunpack.c.h.b16 %v1460
    %v4292 = vunpack.c.l.b16 %v1461
    %v4293 = vunpack.c.h.b16 %v1461
    %v4294 = vunpack.c.l.b16 %v1462
    %v4295 = vunpack.c.h.b16 %v1462
    %v4296 = vunpack.c.l.b16 %v1463
    %v4297 = vunpack.c.h.b16 %v1463
    %v4298 = vunpack.c.l.b16 %v1464
    %v4299 = vunpack.c.h.b16 %v1464
    %v4300 = vunpack.c.l.b16 %v1465
    %v4301 = vunpack.c.h.b16 %v1465
    %v4302 = vunpack.c.l.b16 %v1466
    %v4303 = vunpack.c.h.b16 %v1466
    %v4304 = vunpack.c.l.b16 %v1467
    %v4305 = vunpack.c.h.b16 %v1467
    %v4306 = vunpack.c.l.b16 %v1468
    %v4307 = vunpack.c.h.b16 %v1468
    %v4308 = vunpack.c.l.b16 %v1469
    %v4309 = vunpack.c.h.b16 %v1469
    %v4310 = vunpack.c.l.b16 %v1470
    %v4311 = vunpack.c.h.b16 %v1470
    %v4312 = vunpack.c.l.b16 %v1471
    %v4313 = vunpack.c.h.b16 %v1471
    %v4314 = vunpack.c.l.b16 %v1472
    %v4315 = vunpack.c.h.b16 %v1472
    %v4316 = vunpack.c.l.b16 %v1473
    %v4317 = vunpack.c.h.b16 %v1473
    %v4318 = vunpack.c.l.b16 %v1474
    %v4319 = vunpack.c.h.b16 %v1474
    %v4320 = vunpack.c.l.b16 %v1475
    %v4321 = vunpack.c.h.b16 %v1475
    %v4322 = vunpack.c.l.b16 %v1476
    %v4323 = vunpack.c.h.b16 %v1476
    %v4324 = vunpack.c.l.b16 %v1477
    %v4325 = vunpack.c.h.b16 %v1477
    %v4326 = vunpack.c.l.b16 %v1478
    %v4327 = vunpack.c.h.b16 %v1478
    %v4328 = vunpack.c.l.b16 %v1479
    %v4329 = vunpack.c.h.b16 %v1479
    %v4330 = vunpack.c.l.b16 %v1480
    %v4331 = vunpack.c.h.b16 %v1480
    %v4332 = vunpack.c.l.b16 %v1481
    %v4333 = vunpack.c.h.b16 %v1481
    %v4334 = vunpack.c.l.b16 %v1482
    %v4335 = vunpack.c.h.b16 %v1482
    %v4336 = vunpack.c.l.b16 %v1483
    %v4337 = vunpack.c.h.b16 %v1483
    %v4338 = vunpack.c.l.b16 %v1484
    %v4339 = vunpack.c.h.b16 %v1484
    %v4340 = vunpack.c.l.b16 %v1485
    %v4341 = vunpack.c.h.b16 %v1485
    %v4342 = vunpack.c.l.b16 %v1486
    %v4343 = vunpack.c.h.b16 %v1486
    %v4344 = vunpack.c.l.b16 %v1487
    %v4345 = vunpack.c.h.b16 %v1487
    %v4346 = vunpack.c.l.b16 %v1488
    %v4347 = vunpack.c.h.b16 %v1488
    %v4348 = vunpack.c.l.b16 %v1489
    %v4349 = vunpack.c.h.b16 %v1489
    %v4350 = vunpack.c.l.b16 %v1490
    %v4351 = vunpack.c.h.b16 %v1490
    %v4352 = vunpack.c.l.b16 %v1491
    %v4353 = vunpack.c.h.b16 %v1491
    %v4354 = vunpack.c.l.b16 %v1492
    %v4355 = vunpack.c.h.b16 %v1492
    %v4356 = vunpack.c.l.b16 %v1493
    %v4357 = vunpack.c.h.b16 %v1493
    %v4358 = vunpack.c.l.b16 %v1494
    %v4359 = vunpack.c.h.b16 %v1494
    %v4360 = vunpack.c.l.b16 %v1495
    %v4361 = vunpack.c.h.b16 %v1495
    %v4362 = vunpack.c.l.b16 %v1496
    %v4363 = vunpack.c.h.b16 %v1496
    %v4364 = vunpack.c.l.b16 %v1497
    %v4365 = vunpack.c.h.b16 %v1497
    %v4366 = vunpack.c.l.b16 %v1498
    %v4367 = vunpack.c.h.b16 %v1498
    %v4368 = vunpack.c.l.b16 %v1499
    %v4369 = vunpack.c.h.b16 %v1499
    %v4370 = vunpack.c.l.b16 %v1500
    %v4371 = vunpack.c.h.b16 %v1500
    %v4372 = vunpack.c.l.b16 %v1501
    %v4373 = vunpack.c.h.b16 %v1501
    %v4374 = vunpack.c.l.b16 %v1502
    %v4375 = vunpack.c.h.b16 %v1502
    %v4376 = vunpack.c.l.b16 %v1503
    %v4377 = vunpack.c.h.b16 %v1503
    %v4378 = vunpack.c.l.b16 %v1504
    %v4379 = vunpack.c.h.b16 %v1504
    %v4380 = vunpack.c.l.b16 %v1505
    %v4381 = vunpack.c.h.b16 %v1505
    %v4382 = vunpack.c.l.b16 %v1506
    %v4383 = vunpack.c.h.b16 %v1506
    %v4384 = vunpack.c.l.b16 %v1507
    %v4385 = vunpack.c.h.b16 %v1507
    %v4386 = vunpack.c.l.b16 %v1508
    %v4387 = vunpack.c.h.b16 %v1508
    %v4388 = vunpack.c.l.b16 %v1509
    %v4389 = vunpack.c.h.b16 %v1509
    %v4390 = vunpack.c.l.b16 %v1510
    %v4391 = vunpack.c.h.b16 %v1510
    %v4392 = vunpack.c.l.b16 %v1511
    %v4393 = vunpack.c.h.b16 %v1511
    %v4394 = vunpack.c.l.b16 %v1512
    %v4395 = vunpack.c.h.b16 %v1512
    %v4396 = vunpack.c.l.b16 %v1513
    %v4397 = vunpack.c.h.b16 %v1513
    %v4398 = vunpack.c.l.b16 %v1514
    %v4399 = vunpack.c.h.b16 %v1514
    %v4400 = vunpack.c.l.b16 %v1515
    %v4401 = vunpack.c.h.b16 %v1515
    %v4402 = vunpack.c.l.b16 %v1516
    %v4403 = vunpack.c.h.b16 %v1516
    %v4404 = vunpack.c.l.b16 %v1517
    %v4405 = vunpack.c.h.b16 %v1517
    %v4406 = vunpack.c.l.b16 %v1518
    %v4407 = vunpack.c.h.b16 %v1518
    %v4408 = vunpack.c.l.b16 %v1519
    %v4409 = vunpack.c.h.b16 %v1519
    %v4410 = vunpack.c.l.b16 %v1520
    %v4411 = vunpack.c.h.b16 %v1520
    %v4412 = vunpack.c.l.b16 %v1521
    %v4413 = vunpack.c.h.b16 %v1521
    %v4414 = vunpack.c.l.b16 %v1522
    %v4415 = vunpack.c.h.b16 %v1522
    %v4416 = vunpack.c.l.b16 %v1523
    %v4417 = vunpack.c.h.b16 %v1523
    %v4418 = vunpack.c.l.b16 %v1524
    %v4419 = vunpack.c.h.b16 %v1524
    %v4420 = vunpack.c.l.b16 %v1525
    %v4421 = vunpack.c.h.b16 %v1525
    %v4422 = vunpack.c.l.b16 %v1526
    %v4423 = vunpack.c.h.b16 %v1526
    %v4424 = vunpack.c.l.b16 %v1527
    %v4425 = vunpack.c.h.b16 %v1527
    %v4426 = vunpack.c.l.b16 %v1528
    %v4427 = vunpack.c.h.b16 %v1528
    %v4428 = vunpack.c.l.b16 %v1529
    %v4429 = vunpack.c.h.b16 %v1529
    %v4430 = vunpack.c.l.b16 %v1530
    %v4431 = vunpack.c.h.b16 %v1530
    %v4432 = vunpack.c.l.b16 %v1531
    %v4433 = vunpack.c.h.b16 %v1531
    %v4434 = vunpack.c.l.b16 %v1532
    %v4435 = vunpack.c.h.b16 %v1532
    %v4436 = vunpack.c.l.b16 %v1533
    %v4437 = vunpack.c.h.b16 %v1533
    %v4438 = vunpack.c.l.b16 %v1534
    %v4439 = vunpack.c.h.b16 %v1534
    %v4440 = vunpack.c.l.b16 %v1535
    %v4441 = vunpack.c.h.b16 %v1535
    %v4442 = vunpack.c.l.b16 %v1536
    %v4443 = vunpack.c.h.b16 %v1536
    %v4444 = vunpack.c.l.b16 %v1537
    %v4445 = vunpack.c.h.b16 %v1537
    %v4446 = vunpack.c.l.b16 %v1538
    %v4447 = vunpack.c.h.b16 %v1538
    %v4448 = vunpack.c.l.b16 %v1539
    %v4449 = vunpack.c.h.b16 %v1539
    %v4450 = vunpack.c.l.b16 %v1540
    %v4451 = vunpack.c.h.b16 %v1540
    %v4452 = vunpack.c.l.b16 %v1541
    %v4453 = vunpack.c.h.b16 %v1541
    %v4454 = vunpack.c.l.b16 %v1542
    %v4455 = vunpack.c.h.b16 %v1542
    %v4456 = vunpack.c.l.b16 %v1543
    %v4457 = vunpack.c.h.b16 %v1543
    %v4458 = vunpack.c.l.b16 %v1544
    %v4459 = vunpack.c.h.b16 %v1544
    %v4460 = vunpack.c.l.b16 %v1545
    %v4461 = vunpack.c.h.b16 %v1545
    %v4462 = vunpack.c.l.b16 %v1546
    %v4463 = vunpack.c.h.b16 %v1546
    %v4464 = vunpack.c.l.b16 %v1547
    %v4465 = vunpack.c.h.b16 %v1547
    %v4466 = vunpack.c.l.b16 %v1548
    %v4467 = vunpack.c.h.b16 %v1548
    %v4468 = vunpack.c.l.b16 %v1549
    %v4469 = vunpack.c.h.b16 %v1549
    %v4470 = vunpack.c.l.b16 %v1550
    %v4471 = vunpack.c.h.b16 %v1550
    %v4472 = vunpack.c.l.b16 %v1551
    %v4473 = vunpack.c.h.b16 %v1551
    %v4474 = vunpack.c.l.b16 %v1552
    %v4475 = vunpack.c.h.b16 %v1552
    %v4476 = vunpack.c.l.b16 %v1553
    %v4477 = vunpack.c.h.b16 %v1553
    %v4478 = vunpack.c.l.b16 %v1554
    %v4479 = vunpack.c.h.b16 %v1554
    %v4480 = vunpack.c.l.b16 %v1555
    %v4481 = vunpack.c.h.b16 %v1555
    %v4482 = vunpack.c.l.b16 %v1556
    %v4483 = vunpack.c.h.b16 %v1556
    %v4484 = vunpack.c.l.b16 %v1557
    %v4485 = vunpack.c.h.b16 %v1557
    %v4486 = vunpack.c.l.b16 %v1558
    %v4487 = vunpack.c.h.b16 %v1558
    %v4488 = vunpack.c.l.b16 %v1559
    %v4489 = vunpack.c.h.b16 %v1559
    %v4490 = vunpack.c.l.b16 %v1560
    %v4491 = vunpack.c.h.b16 %v1560
    %v4492 = vunpack.c.l.b16 %v1561
    %v4493 = vunpack.c.h.b16 %v1561
    %v4494 = vunpack.c.l.b16 %v1562
    %v4495 = vunpack.c.h.b16 %v1562
    %v4496 = vunpack.c.l.b16 %v1563
    %v4497 = vunpack.c.h.b16 %v1563
    %v4498 = vunpack.c.l.b16 %v1564
    %v4499 = vunpack.c.h.b16 %v1564
    %v4500 = vunpack.c.l.b16 %v1565
    %v4501 = vunpack.c.h.b16 %v1565
    %v4502 = vunpack.c.l.b16 %v1566
    %v4503 = vunpack.c.h.b16 %v1566
    %v4504 = vunpack.c.l.b16 %v1567
    %v4505 = vunpack.c.h.b16 %v1567
    %v4506 = vunpack.c.l.b16 %v1568
    %v4507 = vunpack.c.h.b16 %v1568
    %v4508 = vunpack.c.l.b16 %v1569
    %v4509 = vunpack.c.h.b16 %v1569
    %v4510 = vunpack.c.l.b16 %v1570
    %v4511 = vunpack.c.h.b16 %v1570
    %v4512 = vunpack.c.l.b16 %v1571
    %v4513 = vunpack.c.h.b16 %v1571
    %v4514 = vunpack.c.l.b16 %v1572
    %v4515 = vunpack.c.h.b16 %v1572
    %v4516 = vunpack.c.l.b16 %v1573
    %v4517 = vunpack.c.h.b16 %v1573
    %v4518 = vunpack.c.l.b16 %v1574
    %v4519 = vunpack.c.h.b16 %v1574
    %v4520 = vunpack.c.l.b16 %v1575
    %v4521 = vunpack.c.h.b16 %v1575
    %v4522 = vunpack.c.l.b16 %v1576
    %v4523 = vunpack.c.h.b16 %v1576
    %v4524 = vunpack.c.l.b16 %v1577
    %v4525 = vunpack.c.h.b16 %v1577
    %v4526 = vunpack.c.l.b16 %v1578
    %v4527 = vunpack.c.h.b16 %v1578
    %v4528 = vunpack.c.l.b16 %v1579
    %v4529 = vunpack.c.h.b16 %v1579
    %v4530 = vunpack.c.l.b16 %v1580
    %v4531 = vunpack.c.h.b16 %v1580
    %v4532 = vunpack.c.l.b16 %v1581
    %v4533 = vunpack.c.h.b16 %v1581
    %v4534 = vunpack.c.l.b16 %v1582
    %v4535 = vunpack.c.h.b16 %v1582
    %v4536 = vunpack.c.l.b16 %v1583
    %v4537 = vunpack.c.h.b16 %v1583
    %v4538 = vunpack.c.l.b16 %v1584
    %v4539 = vunpack.c.h.b16 %v1584
    %v4540 = vunpack.c.l.b16 %v1585
    %v4541 = vunpack.c.h.b16 %v1585
    %v4542 = vunpack.c.l.b16 %v1586
    %v4543 = vunpack.c.h.b16 %v1586
    %v4544 = vunpack.c.l.b16 %v1587
    %v4545 = vunpack.c.h.b16 %v1587
    %v4546 = vunpack.c.l.b16 %v1588
    %v4547 = vunpack.c.h.b16 %v1588
    %v4548 = vunpack.c.l.b16 %v1589
    %v4549 = vunpack.c.h.b16 %v1589
    %v4550 = vunpack.c.l.b16 %v1590
    %v4551 = vunpack.c.h.b16 %v1590
    %v4552 = vunpack.c.l.b16 %v1591
    %v4553 = vunpack.c.h.b16 %v1591
    %v4554 = vunpack.c.l.b16 %v1592
    %v4555 = vunpack.c.h.b16 %v1592
    %v4556 = vunpack.c.l.b16 %v1593
    %v4557 = vunpack.c.h.b16 %v1593
    %v4558 = vunpack.c.l.b16 %v1594
    %v4559 = vunpack.c.h.b16 %v1594
    %v4560 = vunpack.c.l.b16 %v1595
    %v4561 = vunpack.c.h.b16 %v1595
    %v4562 = vunpack.c.l.b16 %v1596
    %v4563 = vunpack.c.h.b16 %v1596
    %v4564 = vunpack.c.l.b16 %v1597
    %v4565 = vunpack.c.h.b16 %v1597
    %v4566 = vunpack.c.l.b16 %v1598
    %v4567 = vunpack.c.h.b16 %v1598
    %v4568 = vunpack.c.l.b16 %v1599
    %v4569 = vunpack.c.h.b16 %v1599
    %v4570 = vunpack.c.l.b16 %v1600
    %v4571 = vunpack.c.h.b16 %v1600
    %v4572 = vunpack.c.l.b16 %v1601
    %v4573 = vunpack.c.h.b16 %v1601
    %v4574 = vunpack.c.l.b16 %v1602
    %v4575 = vunpack.c.h.b16 %v1602
    %v4576 = vunpack.c.l.b16 %v1603
    %v4577 = vunpack.c.h.b16 %v1603
    %v4578 = vunpack.c.l.b16 %v1604
    %v4579 = vunpack.c.h.b16 %v1604
    %v4580 = vunpack.c.l.b16 %v1605
    %v4581 = vunpack.c.h.b16 %v1605
    %v4582 = vunpack.c.l.b16 %v1606
    %v4583 = vunpack.c.h.b16 %v1606
    %v4584 = vunpack.c.l.b16 %v1607
    %v4585 = vunpack.c.h.b16 %v1607
    %v4586 = vunpack.c.l.b16 %v1608
    %v4587 = vunpack.c.h.b16 %v1608
    %v4588 = vunpack.c.l.b16 %v1609
    %v4589 = vunpack.c.h.b16 %v1609
    %v4590 = vunpack.c.l.b16 %v1610
    %v4591 = vunpack.c.h.b16 %v1610
    %v4592 = vunpack.c.l.b16 %v1611
    %v4593 = vunpack.c.h.b16 %v1611
    %v4594 = vunpack.c.l.b16 %v1612
    %v4595 = vunpack.c.h.b16 %v1612
    %v4596 = vunpack.c.l.b16 %v1613
    %v4597 = vunpack.c.h.b16 %v1613
    %v4598 = vunpack.c.l.b16 %v1614
    %v4599 = vunpack.c.h.b16 %v1614
    %v4600 = vunpack.c.l.b16 %v1615
    %v4601 = vunpack.c.h.b16 %v1615
    %v4602 = vunpack.c.l.b16 %v1616
    %v4603 = vunpack.c.h.b16 %v1616
    %v4604 = vunpack.c.l.b16 %v1617
    %v4605 = vunpack.c.h.b16 %v1617
    %v4606 = vunpack.c.l.b16 %v1618
    %v4607 = vunpack.c.h.b16 %v1618
    %v4608 = vunpack.c.l.b16 %v1619
    %v4609 = vunpack.c.h.b16 %v1619
    %v4610 = vunpack.c.l.b16 %v1620
    %v4611 = vunpack.c.h.b16 %v1620
    %v4612 = vunpack.c.l.b16 %v1621
    %v4613 = vunpack.c.h.b16 %v1621
    %v4614 = vunpack.c.l.b16 %v1622
    %v4615 = vunpack.c.h.b16 %v1622
    %v4616 = vunpack.c.l.b16 %v1623
    %v4617 = vunpack.c.h.b16 %v1623
    %v4618 = vunpack.c.l.b16 %v1624
    %v4619 = vunpack.c.h.b16 %v1624
    %v4620 = vunpack.c.l.b16 %v1625
    %v4621 = vunpack.c.h.b16 %v1625
    %v4622 = vunpack.c.l.b16 %v1626
    %v4623 = vunpack.c.h.b16 %v1626
    %v4624 = vunpack.c.l.b16 %v1627
    %v4625 = vunpack.c.h.b16 %v1627
    %v4626 = vunpack.c.l.b16 %v1628
    %v4627 = vunpack.c.h.b16 %v1628
    %v4628 = vunpack.c.l.b16 %v1629
    %v4629 = vunpack.c.h.b16 %v1629
    %v4630 = vunpack.c.l.b16 %v1630
    %v4631 = vunpack.c.h.b16 %v1630
    %v4632 = vunpack.c.l.b16 %v1631
    %v4633 = vunpack.c.h.b16 %v1631
    %v4634 = vunpack.c.l.b16 %v1632
    %v4635 = vunpack.c.h.b16 %v1632
    %v4636 = vunpack.c.l.b16 %v1633
    %v4637 = vunpack.c.h.b16 %v1633
    %v4638 = vunpack.c.l.b16 %v1634
    %v4639 = vunpack.c.h.b16 %v1634
    %v4640 = vunpack.c.l.b16 %v1635
    %v4641 = vunpack.c.h.b16 %v1635
    %v4642 = vunpack.c.l.b16 %v1636
    %v4643 = vunpack.c.h.b16 %v1636
    %v4644 = vunpack.c.l.b16 %v1637
    %v4645 = vunpack.c.h.b16 %v1637
    %v4646 = vunpack.c.l.b16 %v1638
    %v4647 = vunpack.c.h.b16 %v1638
    %v4648 = vunpack.c.l.b16 %v1639
    %v4649 = vunpack.c.h.b16 %v1639
    %v4650 = vunpack.c.l.b16 %v1640
    %v4651 = vunpack.c.h.b16 %v1640
    %v4652 = vunpack.c.l.b16 %v1641
    %v4653 = vunpack.c.h.b16 %v1641
    %v4654 = vunpack.c.l.b16 %v1642
    %v4655 = vunpack.c.h.b16 %v1642
    %v4656 = vunpack.c.l.b16 %v1643
    %v4657 = vunpack.c.h.b16 %v1643
    %v4658 = vunpack.c.l.b16 %v1644
    %v4659 = vunpack.c.h.b16 %v1644
    %v4660 = vunpack.c.l.b16 %v1645
    %v4661 = vunpack.c.h.b16 %v1645
    %v4662 = vunpack.c.l.b16 %v1646
    %v4663 = vunpack.c.h.b16 %v1646
    %v4664 = vunpack.c.l.b16 %v1647
    %v4665 = vunpack.c.h.b16 %v1647
    %v4666 = vunpack.c.l.b16 %v1648
    %v4667 = vunpack.c.h.b16 %v1648
    %v4668 = vunpack.c.l.b16 %v1649
    %v4669 = vunpack.c.h.b16 %v1649
    %v4670 = vunpack.c.l.b16 %v1650
    %v4671 = vunpack.c.h.b16 %v1650
    %v4672 = vunpack.c.l.b16 %v1651
    %v4673 = vunpack.c.h.b16 %v1651
    %v4674 = vunpack.c.l.b16 %v1652
    %v4675 = vunpack.c.h.b16 %v1652
    %v4676 = vunpack.c.l.b16 %v1653
    %v4677 = vunpack.c.h.b16 %v1653
    %v4678 = vunpack.c.l.b16 %v1654
    %v4679 = vunpack.c.h.b16 %v1654
    %v4680 = vunpack.c.l.b16 %v1655
    %v4681 = vunpack.c.h.b16 %v1655
    %v4682 = vunpack.c.l.b16 %v1656
    %v4683 = vunpack.c.h.b16 %v1656
    %v4684 = vunpack.c.l.b16 %v1657
    %v4685 = vunpack.c.h.b16 %v1657
    %v4686 = vunpack.c.l.b16 %v1658
    %v4687 = vunpack.c.h.b16 %v1658
    %v4688 = vunpack.c.l.b16 %v1659
    %v4689 = vunpack.c.h.b16 %v1659
    %v4690 = vunpack.c.l.b16 %v1660
    %v4691 = vunpack.c.h.b16 %v1660
    %v4692 = vunpack.c.l.b16 %v1661
    %v4693 = vunpack.c.h.b16 %v1661
    %v4694 = vunpack.c.l.b16 %v1662
    %v4695 = vunpack.c.h.b16 %v1662
    %v4696 = vunpack.c.l.b16 %v1663
    %v4697 = vunpack.c.h.b16 %v1663
    %v4698 = vunpack.c.l.b16 %v1664
    %v4699 = vunpack.c.h.b16 %v1664
    %v4700 = vunpack.c.l.b16 %v1665
    %v4701 = vunpack.c.h.b16 %v1665
    %v4702 = vunpack.c.l.b16 %v1666
    %v4703 = vunpack.c.h.b16 %v1666
    %v4704 = vunpack.c.l.b16 %v1667
    %v4705 = vunpack.c.h.b16 %v1667
    %v4706 = vunpack.c.l.b16 %v1668
    %v4707 = vunpack.c.h.b16 %v1668
    %v4708 = vunpack.c.l.b16 %v1669
    %v4709 = vunpack.c.h.b16 %v1669
    %v4710 = vunpack.c.l.b16 %v1670
    %v4711 = vunpack.c.h.b16 %v1670
    %v4712 = vunpack.c.l.b16 %v1671
    %v4713 = vunpack.c.h.b16 %v1671
    %v4714 = vunpack.c.l.b16 %v1672
    %v4715 = vunpack.c.h.b16 %v1672
    %v4716 = vunpack.c.l.b16 %v1673
    %v4717 = vunpack.c.h.b16 %v1673
    %v4718 = vunpack.c.l.b16 %v1674
    %v4719 = vunpack.c.h.b16 %v1674
    %v4720 = vunpack.c.l.b16 %v1675
    %v4721 = vunpack.c.h.b16 %v1675
    %v4722 = vunpack.c.l.b16 %v1676
    %v4723 = vunpack.c.h.b16 %v1676
    %v4724 = vunpack.c.l.b16 %v1677
    %v4725 = vunpack.c.h.b16 %v1677
    %v4726 = vunpack.c.l.b16 %v1678
    %v4727 = vunpack.c.h.b16 %v1678
    %v4728 = vunpack.c.l.b16 %v1679
    %v4729 = vunpack.c.h.b16 %v1679
    %v4730 = vunpack.c.l.b16 %v1680
    %v4731 = vunpack.c.h.b16 %v1680
    %v4732 = vunpack.c.l.b16 %v1681
    %v4733 = vunpack.c.h.b16 %v1681
    %v4734 = vunpack.c.l.b16 %v1682
    %v4735 = vunpack.c.h.b16 %v1682
    %v4736 = vunpack.c.l.b16 %v1683
    %v4737 = vunpack.c.h.b16 %v1683
    %v4738 = vunpack.c.l.b16 %v1684
    %v4739 = vunpack.c.h.b16 %v1684
    %v4740 = vunpack.c.l.b16 %v1685
    %v4741 = vunpack.c.h.b16 %v1685
    %v4742 = vunpack.c.l.b16 %v1686
    %v4743 = vunpack.c.h.b16 %v1686
    %v4744 = vunpack.c.l.b16 %v1687
    %v4745 = vunpack.c.h.b16 %v1687
    %v4746 = vunpack.c.l.b16 %v1688
    %v4747 = vunpack.c.h.b16 %v1688
    %v4748 = vunpack.c.l.b16 %v1689
    %v4749 = vunpack.c.h.b16 %v1689
    %v4750 = vunpack.c.l.b16 %v1690
    %v4751 = vunpack.c.h.b16 %v1690
    %v4752 = vunpack.c.l.b16 %v1691
    %v4753 = vunpack.c.h.b16 %v1691
    %v4754 = vunpack.c.l.b16 %v1692
    %v4755 = vunpack.c.h.b16 %v1692
    %v4756 = vunpack.c.l.b16 %v1693
    %v4757 = vunpack.c.h.b16 %v1693
    %v4758 = vunpack.c.l.b16 %v1694
    %v4759 = vunpack.c.h.b16 %v1694
    %v4760 = vunpack.c.l.b16 %v1695
    %v4761 = vunpack.c.h.b16 %v1695
    %v4762 = vunpack.c.l.b16 %v1696
    %v4763 = vunpack.c.h.b16 %v1696
    %v4764 = vunpack.c.l.b16 %v1697
    %v4765 = vunpack.c.h.b16 %v1697
    %v4766 = vunpack.c.l.b16 %v1698
    %v4767 = vunpack.c.h.b16 %v1698
    %v4768 = vunpack.c.l.b16 %v1699
    %v4769 = vunpack.c.h.b16 %v1699
    %v4770 = vunpack.c.l.b16 %v1700
    %v4771 = vunpack.c.h.b16 %v1700
    %v4772 = vunpack.c.l.b16 %v1701
    %v4773 = vunpack.c.h.b16 %v1701
    %v4774 = vunpack.c.l.b16 %v1702
    %v4775 = vunpack.c.h.b16 %v1702
    %v4776 = vunpack.c.l.b16 %v1703
    %v4777 = vunpack.c.h.b16 %v1703
    %v4778 = vunpack.c.l.b16 %v1704
    %v4779 = vunpack.c.h.b16 %v1704
    %v4780 = vunpack.c.l.b16 %v1705
    %v4781 = vunpack.c.h.b16 %v1705
    %v4782 = vunpack.c.l.b16 %v1706
    %v4783 = vunpack.c.h.b16 %v1706
    %v4784 = vunpack.c.l.b16 %v1707
    %v4785 = vunpack.c.h.b16 %v1707
    %v4786 = vunpack.c.l.b16 %v1708
    %v4787 = vunpack.c.h.b16 %v1708
    %v4788 = vunpack.c.l.b16 %v1709
    %v4789 = vunpack.c.h.b16 %v1709
    %v4790 = vunpack.c.l.b16 %v1710
    %v4791 = vunpack.c.h.b16 %v1710
    %v4792 = vunpack.c.l.b16 %v1711
    %v4793 = vunpack.c.h.b16 %v1711
    %v4794 = vunpack.c.l.b16 %v1712
    %v4795 = vunpack.c.h.b16 %v1712
    %v4796 = vunpack.c.l.b16 %v1713
    %v4797 = vunpack.c.h.b16 %v1713
    %v4798 = vunpack.c.l.b16 %v1714
    %v4799 = vunpack.c.h.b16 %v1714
    %v4800 = vunpack.c.l.b16 %v1715
    %v4801 = vunpack.c.h.b16 %v1715
    %v4802 = vunpack.c.l.b16 %v1716
    %v4803 = vunpack.c.h.b16 %v1716
    %v4804 = vunpack.c.l.b16 %v1717
    %v4805 = vunpack.c.h.b16 %v1717
    %v4806 = vunpack.c.l.b16 %v1718
    %v4807 = vunpack.c.h.b16 %v1718
    %v4808 = vunpack.c.l.b16 %v1719
    %v4809 = vunpack.c.h.b16 %v1719
    %v4810 = vunpack.c.l.b16 %v1720
    %v4811 = vunpack.c.h.b16 %v1720
    %v4812 = vunpack.c.l.b16 %v1721
    %v4813 = vunpack.c.h.b16 %v1721
    %v4814 = vunpack.c.l.b16 %v1722
    %v4815 = vunpack.c.h.b16 %v1722
    %v4816 = vunpack.c.l.b16 %v1723
    %v4817 = vunpack.c.h.b16 %v1723
    %v4818 = vunpack.c.l.b16 %v1724
    %v4819 = vunpack.c.h.b16 %v1724
    %v4820 = vunpack.c.l.b16 %v1725
    %v4821 = vunpack.c.h.b16 %v1725
    %v4822 = vunpack.c.l.b16 %v1726
    %v4823 = vunpack.c.h.b16 %v1726
    %v4824 = vunpack.c.l.b16 %v1727
    %v4825 = vunpack.c.h.b16 %v1727
    %v4826 = vunpack.c.l.b16 %v1728
    %v4827 = vunpack.c.h.b16 %v1728
    %v4828 = vunpack.c.l.b16 %v1729
    %v4829 = vunpack.c.h.b16 %v1729
    %v4830 = vunpack.c.l.b16 %v1730
    %v4831 = vunpack.c.h.b16 %v1730
    %v4832 = vunpack.c.l.b16 %v1731
    %v4833 = vunpack.c.h.b16 %v1731
    %v4834 = vunpack.c.l.b16 %v1732
    %v4835 = vunpack.c.h.b16 %v1732
    %v4836 = vunpack.c.l.b16 %v1733
    %v4837 = vunpack.c.h.b16 %v1733
    %v4838 = vunpack.c.l.b16 %v1734
    %v4839 = vunpack.c.h.b16 %v1734
    %v4840 = vunpack.c.l.b16 %v1735
    %v4841 = vunpack.c.h.b16 %v1735
    %v4842 = vunpack.c.l.b16 %v1736
    %v4843 = vunpack.c.h.b16 %v1736
    %v4844 = vunpack.c.l.b16 %v1737
    %v4845 = vunpack.c.h.b16 %v1737
    %v4846 = vunpack.c.l.b16 %v1738
    %v4847 = vunpack.c.h.b16 %v1738
    %v4848 = vunpack.c.l.b16 %v1739
    %v4849 = vunpack.c.h.b16 %v1739
    %v4850 = vunpack.c.l.b16 %v1740
    %v4851 = vunpack.c.h.b16 %v1740
    %v4852 = vunpack.c.l.b16 %v1741
    %v4853 = vunpack.c.h.b16 %v1741
    %v4854 = vunpack.c.l.b16 %v1742
    %v4855 = vunpack.c.h.b16 %v1742
    %v4856 = vunpack.c.l.b16 %v1743
    %v4857 = vunpack.c.h.b16 %v1743
    %v4858 = vpack.c.b16 %v2818, %v2810
    %v4859 = vpack.c.b16 %v2819, %v2811
    %v4860 = vpack.c.b16 %v2820, %v2812
    %v4861 = vpack.c.b16 %v2821, %v2813
    %v4862 = vpack.c.b16 %v2822, %v2814
    %v4863 = vpack.c.b16 %v2823, %v2815
    %v4864 = vpack.c.b16 %v2824, %v2816
    %v4865 = vpack.c.b16 %v2825, %v2817
    %v4866 = vpack.c.b16 %v2834, %v2826
    %v4867 = vpack.c.b16 %v2835, %v2827
    %v4868 = vpack.c.b16 %v2836, %v2828
    %v4869 = vpack.c.b16 %v2837, %v2829
    %v4870 = vpack.c.b16 %v2838, %v2830
    %v4871 = vpack.c.b16 %v2839, %v2831
    %v4872 = vpack.c.b16 %v2840, %v2832
    %v4873 = vpack.c.b16 %v2841, %v2833
    %v4874 = vpack.c.b16 %v2850, %v2842
    %v4875 = vpack.c.b16 %v2851, %v2843
    %v4876 = vpack.c.b16 %v2852, %v2844
    %v4877 = vpack.c.b16 %v2853, %v2845
    %v4878 = vpack.c.b16 %v2854, %v2846
    %v4879 = vpack.c.b16 %v2855, %v2847
    %v4880 = vpack.c.b16 %v2856, %v2848
    %v4881 = vpack.c.b16 %v2857, %v2849
    %v4882 = vpack.c.b16 %v2866, %v2858
    %v4883 = vpack.c.b16 %v2867, %v2859
    %v4884 = vpack.c.b16 %v2868, %v2860
    %v4885 = vpack.c.b16 %v2869, %v2861
    %v4886 = vpack.c.b16 %v2870, %v2862
    %v4887 = vpack.c.b16 %v2871, %v2863
    %v4888 = vpack.c.b16 %v2872, %v2864
    %v4889 = vpack.c.b16 %v2873, %v2865
    %v4890 = vpack.c.b16 %v2882, %v2874
    %v4891 = vpack.c.b16 %v2883, %v2875
    %v4892 = vpack.c.b16 %v2884, %v2876
    %v4893 = vpack.c.b16 %v2885, %v2877
    %v4894 = vpack.c.b16 %v2886, %v2878
    %v4895 = vpack.c.b16 %v2887, %v2879
    %v4896 = vpack.c.b16 %v2888, %v2880
    %v4897 = vpack.c.b16 %v2889, %v2881
    %v4898 = vpack.c.b16 %v2898, %v2890
    %v4899 = vpack.c.b16 %v2899, %v2891
    %v4900 = vpack.c.b16 %v2900, %v2892
    %v4901 = vpack.c.b16 %v2901, %v2893
    %v4902 = vpack.c.b16 %v2902, %v2894
    %v4903 = vpack.c.b16 %v2903, %v2895
    %v4904 = vpack.c.b16 %v2904, %v2896
    %v4905 = vpack.c.b16 %v2905, %v2897
    %v4906 = vpack.c.b16 %v2914, %v2906
    %v4907 = vpack.c.b16 %v2915, %v2907
    %v4908 = vpack.c.b16 %v2916, %v2908
    %v4909 = vpack.c.b16 %v2917, %v2909
    %v4910 = vpack.c.b16 %v2918, %v2910
    %v4911 = vpack.c.b16 %v2919, %v2911
    %v4912 = vpack.c.b16 %v2920, %v2912
    %v4913 = vpack.c.b16 %v2921, %v2913
    %v4914 = vpack.c.b16 %v2930, %v2922
    %v4915 = vpack.c.b16 %v2931, %v2923
    %v4916 = vpack.c.b16 %v2932, %v2924
    %v4917 = vpack.c.b16 %v2933, %v2925
    %v4918 = vpack.c.b16 %v2934, %v2926
    %v4919 = vpack.c.b16 %v2935, %v2927
    %v4920 = vpack.c.b16 %v2936, %v2928
    %v4921 = vpack.c.b16 %v2937, %v2929
    %v4922 = vpack.c.b16 %v2946, %v2938
    %v4923 = vpack.c.b16 %v2947, %v2939
    %v4924 = vpack.c.b16 %v2948, %v2940
    %v4925 = vpack.c.b16 %v2949, %v2941
    %v4926 = vpack.c.b16 %v2950, %v2942
    %v4927 = vpack.c.b16 %v2951, %v2943
    %v4928 = vpack.c.b16 %v2952, %v2944
    %v4929 = vpack.c.b16 %v2953, %v2945
    %v4930 = vpack.c.b16 %v2962, %v2954
    %v4931 = vpack.c.b16 %v2963, %v2955
    %v4932 = vpack.c.b16 %v2964, %v2956
    %v4933 = vpack.c.b16 %v2965, %v2957
    %v4934 = vpack.c.b16 %v2966, %v2958
    %v4935 = vpack.c.b16 %v2967, %v2959
    %v4936 = vpack.c.b16 %v2968, %v2960
    %v4937 = vpack.c.b16 %v2969, %v2961
    %v4938 = vpack.c.b16 %v2978, %v2970
    %v4939 = vpack.c.b16 %v2979, %v2971
    %v4940 = vpack.c.b16 %v2980, %v2972
    %v4941 = vpack.c.b16 %v2981, %v2973
    %v4942 = vpack.c.b16 %v2982, %v2974
    %v4943 = vpack.c.b16 %v2983, %v2975
    %v4944 = vpack.c.b16 %v2984, %v2976
    %v4945 = vpack.c.b16 %v2985, %v2977
    %v4946 = vpack.c.b16 %v2994, %v2986
    %v4947 = vpack.c.b16 %v2995, %v2987
    %v4948 = vpack.c.b16 %v2996, %v2988
    %v4949 = vpack.c.b16 %v2997, %v2989
    %v4950 = vpack.c.b16 %v2998, %v2990
    %v4951 = vpack.c.b16 %v2999, %v2991
    %v4952 = vpack.c.b16 %v3000, %v2992
    %v4953 = vpack.c.b16 %v3001, %v2993
    %v4954 = vpack.c.b16 %v3010, %v3002
    %v4955 = vpack.c.b16 %v3011, %v3003
    %v4956 = vpack.c.b16 %v3012, %v3004
    %v4957 = vpack.c.b16 %v3013, %v3005
    %v4958 = vpack.c.b16 %v3014, %v3006
    %v4959 = vpack.c.b16 %v3015, %v3007
    %v4960 = vpack.c.b16 %v3016, %v3008
    %v4961 = vpack.c.b16 %v3017, %v3009
    %v4962 = vpack.c.b16 %v3026, %v3018
    %v4963 = vpack.c.b16 %v3027, %v3019
    %v4964 = vpack.c.b16 %v3028, %v3020
    %v4965 = vpack.c.b16 %v3029, %v3021
    %v4966 = vpack.c.b16 %v3030, %v3022
    %v4967 = vpack.c.b16 %v3031, %v3023
    %v4968 = vpack.c.b16 %v3032, %v3024
    %v4969 = vpack.c.b16 %v3033, %v3025
    %v4970 = vpack.c.b16 %v3042, %v3034
    %v4971 = vpack.c.b16 %v3043, %v3035
    %v4972 = vpack.c.b16 %v3044, %v3036
    %v4973 = vpack.c.b16 %v3045, %v3037
    %v4974 = vpack.c.b16 %v3046, %v3038
    %v4975 = vpack.c.b16 %v3047, %v3039
    %v4976 = vpack.c.b16 %v3048, %v3040
    %v4977 = vpack.c.b16 %v3049, %v3041
    %v4978 = vpack.c.b16 %v3058, %v3050
    %v4979 = vpack.c.b16 %v3059, %v3051
    %v4980 = vpack.c.b16 %v3060, %v3052
    %v4981 = vpack.c.b16 %v3061, %v3053
    %v4982 = vpack.c.b16 %v3062, %v3054
    %v4983 = vpack.c.b16 %v3063, %v3055
    %v4984 = vpack.c.b16 %v3064, %v3056
    %v4985 = vpack.c.b16 %v3065, %v3057
    %v4986 = vpack.c.b16 %v3074, %v3066
    %v4987 = vpack.c.b16 %v3075, %v3067
    %v4988 = vpack.c.b16 %v3076, %v3068
    %v4989 = vpack.c.b16 %v3077, %v3069
    %v4990 = vpack.c.b16 %v3078, %v3070
    %v4991 = vpack.c.b16 %v3079, %v3071
    %v4992 = vpack.c.b16 %v3080, %v3072
    %v4993 = vpack.c.b16 %v3081, %v3073
    %v4994 = vpack.c.b16 %v3090, %v3082
    %v4995 = vpack.c.b16 %v3091, %v3083
    %v4996 = vpack.c.b16 %v3092, %v3084
    %v4997 = vpack.c.b16 %v3093, %v3085
    %v4998 = vpack.c.b16 %v3094, %v3086
    %v4999 = vpack.c.b16 %v3095, %v3087
    %v5000 = vpack.c.b16 %v3096, %v3088
    %v5001 = vpack.c.b16 %v3097, %v3089
    %v5002 = vpack.c.b16 %v3106, %v3098
    %v5003 = vpack.c.b16 %v3107, %v3099
    %v5004 = vpack.c.b16 %v3108, %v3100
    %v5005 = vpack.c.b16 %v3109, %v3101
    %v5006 = vpack.c.b16 %v3110, %v3102
    %v5007 = vpack.c.b16 %v3111, %v3103
    %v5008 = vpack.c.b16 %v3112, %v3104
    %v5009 = vpack.c.b16 %v3113, %v3105
    %v5010 = vpack.c.b16 %v3122, %v3114
    %v5011 = vpack.c.b16 %v3123, %v3115
    %v5012 = vpack.c.b16 %v3124, %v3116
    %v5013 = vpack.c.b16 %v3125, %v3117
    %v5014 = vpack.c.b16 %v3126, %v3118
    %v5015 = vpack.c.b16 %v3127, %v3119
    %v5016 = vpack.c.b16 %v3128, %v3120
    %v5017 = vpack.c.b16 %v3129, %v3121
    %v5018 = vpack.c.b16 %v3138, %v3130
    %v5019 = vpack.c.b16 %v3139, %v3131
    %v5020 = vpack.c.b16 %v3140, %v3132
    %v5021 = vpack.c.b16 %v3141, %v3133
    %v5022 = vpack.c.b16 %v3142, %v3134
    %v5023 = vpack.c.b16 %v3143, %v3135
    %v5024 = vpack.c.b16 %v3144, %v3136
    %v5025 = vpack.c.b16 %v3145, %v3137
    %v5026 = vpack.c.b16 %v3154, %v3146
    %v5027 = vpack.c.b16 %v3155, %v3147
    %v5028 = vpack.c.b16 %v3156, %v3148
    %v5029 = vpack.c.b16 %v3157, %v3149
    %v5030 = vpack.c.b16 %v3158, %v3150
    %v5031 = vpack.c.b16 %v3159, %v3151
    %v5032 = vpack.c.b16 %v3160, %v3152
    %v5033 = vpack.c.b16 %v3161, %v3153
    %v5034 = vpack.c.b16 %v3170, %v3162
    %v5035 = vpack.c.b16 %v3171, %v3163
    %v5036 = vpack.c.b16 %v3172, %v3164
    %v5037 = vpack.c.b16 %v3173, %v3165
    %v5038 = vpack.c.b16 %v3174, %v3166
    %v5039 = vpack.c.b16 %v3175, %v3167
    %v5040 = vpack.c.b16 %v3176, %v3168
    %v5041 = vpack.c.b16 %v3177, %v3169
    %v5042 = vpack.c.b16 %v3186, %v3178
    %v5043 = vpack.c.b16 %v3187, %v3179
    %v5044 = vpack.c.b16 %v3188, %v3180
    %v5045 = vpack.c.b16 %v3189, %v3181
    %v5046 = vpack.c.b16 %v3190, %v3182
    %v5047 = vpack.c.b16 %v3191, %v3183
    %v5048 = vpack.c.b16 %v3192, %v3184
    %v5049 = vpack.c.b16 %v3193, %v3185
    %v5050 = vpack.c.b16 %v3202, %v3194
    %v5051 = vpack.c.b16 %v3203, %v3195
    %v5052 = vpack.c.b16 %v3204, %v3196
    %v5053 = vpack.c.b16 %v3205, %v3197
    %v5054 = vpack.c.b16 %v3206, %v3198
    %v5055 = vpack.c.b16 %v3207, %v3199
    %v5056 = vpack.c.b16 %v3208, %v3200
    %v5057 = vpack.c.b16 %v3209, %v3201
    %v5058 = vpack.c.b16 %v3218, %v3210
    %v5059 = vpack.c.b16 %v3219, %v3211
    %v5060 = vpack.c.b16 %v3220, %v3212
    %v5061 = vpack.c.b16 %v3221, %v3213
    %v5062 = vpack.c.b16 %v3222, %v3214
    %v5063 = vpack.c.b16 %v3223, %v3215
    %v5064 = vpack.c.b16 %v3224, %v3216
    %v5065 = vpack.c.b16 %v3225, %v3217
    %v5066 = vpack.c.b16 %v3234, %v3226
    %v5067 = vpack.c.b16 %v3235, %v3227
    %v5068 = vpack.c.b16 %v3236, %v3228
    %v5069 = vpack.c.b16 %v3237, %v3229
    %v5070 = vpack.c.b16 %v3238, %v3230
    %v5071 = vpack.c.b16 %v3239, %v3231
    %v5072 = vpack.c.b16 %v3240, %v3232
    %v5073 = vpack.c.b16 %v3241, %v3233
    %v5074 = vpack.c.b16 %v3250, %v3242
    %v5075 = vpack.c.b16 %v3251, %v3243
    %v5076 = vpack.c.b16 %v3252, %v3244
    %v5077 = vpack.c.b16 %v3253, %v3245
    %v5078 = vpack.c.b16 %v3254, %v3246
    %v5079 = vpack.c.b16 %v3255, %v3247
    %v5080 = vpack.c.b16 %v3256, %v3248
    %v5081 = vpack.c.b16 %v3257, %v3249
    %v5082 = vpack.c.b16 %v3266, %v3258
    %v5083 = vpack.c.b16 %v3267, %v3259
    %v5084 = vpack.c.b16 %v3268, %v3260
    %v5085 = vpack.c.b16 %v3269, %v3261
    %v5086 = vpack.c.b16 %v3270, %v3262
    %v5087 = vpack.c.b16 %v3271, %v3263
    %v5088 = vpack.c.b16 %v3272, %v3264
    %v5089 = vpack.c.b16 %v3273, %v3265
    %v5090 = vpack.c.b16 %v3282, %v3274
    %v5091 = vpack.c.b16 %v3283, %v3275
    %v5092 = vpack.c.b16 %v3284, %v3276
    %v5093 = vpack.c.b16 %v3285, %v3277
    %v5094 = vpack.c.b16 %v3286, %v3278
    %v5095 = vpack.c.b16 %v3287, %v3279
    %v5096 = vpack.c.b16 %v3288, %v3280
    %v5097 = vpack.c.b16 %v3289, %v3281
    %v5098 = vpack.c.b16 %v3298, %v3290
    %v5099 = vpack.c.b16 %v3299, %v3291
    %v5100 = vpack.c.b16 %v3300, %v3292
    %v5101 = vpack.c.b16 %v3301, %v3293
    %v5102 = vpack.c.b16 %v3302, %v3294
    %v5103 = vpack.c.b16 %v3303, %v3295
    %v5104 = vpack.c.b16 %v3304, %v3296
    %v5105 = vpack.c.b16 %v3305, %v3297
    %v5106 = vpack.c.b16 %v3314, %v3306
    %v5107 = vpack.c.b16 %v3315, %v3307
    %v5108 = vpack.c.b16 %v3316, %v3308
    %v5109 = vpack.c.b16 %v3317, %v3309
    %v5110 = vpack.c.b16 %v3318, %v3310
    %v5111 = vpack.c.b16 %v3319, %v3311
    %v5112 = vpack.c.b16 %v3320, %v3312
    %v5113 = vpack.c.b16 %v3321, %v3313
    %v5114 = vpack.c.b16 %v3330, %v3322
    %v5115 = vpack.c.b16 %v3331, %v3323
    %v5116 = vpack.c.b16 %v3332, %v3324
    %v5117 = vpack.c.b16 %v3333, %v3325
    %v5118 = vpack.c.b16 %v3334, %v3326
    %v5119 = vpack.c.b16 %v3335, %v3327
    %v5120 = vpack.c.b16 %v3336, %v3328
    %v5121 = vpack.c.b16 %v3337, %v3329
    %v5122 = vpack.c.b16 %v3346, %v3338
    %v5123 = vpack.c.b16 %v3347, %v3339
    %v5124 = vpack.c.b16 %v3348, %v3340
    %v5125 = vpack.c.b16 %v3349, %v3341
    %v5126 = vpack.c.b16 %v3350, %v3342
    %v5127 = vpack.c.b16 %v3351, %v3343
    %v5128 = vpack.c.b16 %v3352, %v3344
    %v5129 = vpack.c.b16 %v3353, %v3345
    %v5130 = vpack.c.b16 %v3362, %v3354
    %v5131 = vpack.c.b16 %v3363, %v3355
    %v5132 = vpack.c.b16 %v3364, %v3356
    %v5133 = vpack.c.b16 %v3365, %v3357
    %v5134 = vpack.c.b16 %v3366, %v3358
    %v5135 = vpack.c.b16 %v3367, %v3359
    %v5136 = vpack.c.b16 %v3368, %v3360
    %v5137 = vpack.c.b16 %v3369, %v3361
    %v5138 = vpack.c.b16 %v3378, %v3370
    %v5139 = vpack.c.b16 %v3379, %v3371
    %v5140 = vpack.c.b16 %v3380, %v3372
    %v5141 = vpack.c.b16 %v3381, %v3373
    %v5142 = vpack.c.b16 %v3382, %v3374
    %v5143 = vpack.c.b16 %v3383, %v3375
    %v5144 = vpack.c.b16 %v3384, %v3376
    %v5145 = vpack.c.b16 %v3385, %v3377
    %v5146 = vpack.c.b16 %v3394, %v3386
    %v5147 = vpack.c.b16 %v3395, %v3387
    %v5148 = vpack.c.b16 %v3396, %v3388
    %v5149 = vpack.c.b16 %v3397, %v3389
    %v5150 = vpack.c.b16 %v3398, %v3390
    %v5151 = vpack.c.b16 %v3399, %v3391
    %v5152 = vpack.c.b16 %v3400, %v3392
    %v5153 = vpack.c.b16 %v3401, %v3393
    %v5154 = vpack.c.b16 %v3410, %v3402
    %v5155 = vpack.c.b16 %v3411, %v3403
    %v5156 = vpack.c.b16 %v3412, %v3404
    %v5157 = vpack.c.b16 %v3413, %v3405
    %v5158 = vpack.c.b16 %v3414, %v3406
    %v5159 = vpack.c.b16 %v3415, %v3407
    %v5160 = vpack.c.b16 %v3416, %v3408
    %v5161 = vpack.c.b16 %v3417, %v3409
    %v5162 = vpack.c.b16 %v3426, %v3418
    %v5163 = vpack.c.b16 %v3427, %v3419
    %v5164 = vpack.c.b16 %v3428, %v3420
    %v5165 = vpack.c.b16 %v3429, %v3421
    %v5166 = vpack.c.b16 %v3430, %v3422
    %v5167 = vpack.c.b16 %v3431, %v3423
    %v5168 = vpack.c.b16 %v3432, %v3424
    %v5169 = vpack.c.b16 %v3433, %v3425
    %v5170 = vpack.c.b16 %v3442, %v3434
    %v5171 = vpack.c.b16 %v3443, %v3435
    %v5172 = vpack.c.b16 %v3444, %v3436
    %v5173 = vpack.c.b16 %v3445, %v3437
    %v5174 = vpack.c.b16 %v3446, %v3438
    %v5175 = vpack.c.b16 %v3447, %v3439
    %v5176 = vpack.c.b16 %v3448, %v3440
    %v5177 = vpack.c.b16 %v3449, %v3441
    %v5178 = vpack.c.b16 %v3458, %v3450
    %v5179 = vpack.c.b16 %v3459, %v3451
    %v5180 = vpack.c.b16 %v3460, %v3452
    %v5181 = vpack.c.b16 %v3461, %v3453
    %v5182 = vpack.c.b16 %v3462, %v3454
    %v5183 = vpack.c.b16 %v3463, %v3455
    %v5184 = vpack.c.b16 %v3464, %v3456
    %v5185 = vpack.c.b16 %v3465, %v3457
    %v5186 = vpack.c.b16 %v3474, %v3466
    %v5187 = vpack.c.b16 %v3475, %v3467
    %v5188 = vpack.c.b16 %v3476, %v3468
    %v5189 = vpack.c.b16 %v3477, %v3469
    %v5190 = vpack.c.b16 %v3478, %v3470
    %v5191 = vpack.c.b16 %v3479, %v3471
    %v5192 = vpack.c.b16 %v3480, %v3472
    %v5193 = vpack.c.b16 %v3481, %v3473
    %v5194 = vpack.c.b16 %v3490, %v3482
    %v5195 = vpack.c.b16 %v3491, %v3483
    %v5196 = vpack.c.b16 %v3492, %v3484
    %v5197 = vpack.c.b16 %v3493, %v3485
    %v5198 = vpack.c.b16 %v3494, %v3486
    %v5199 = vpack.c.b16 %v3495, %v3487
    %v5200 = vpack.c.b16 %v3496, %v3488
    %v5201 = vpack.c.b16 %v3497, %v3489
    %v5202 = vpack.c.b16 %v3506, %v3498
    %v5203 = vpack.c.b16 %v3507, %v3499
    %v5204 = vpack.c.b16 %v3508, %v3500
    %v5205 = vpack.c.b16 %v3509, %v3501
    %v5206 = vpack.c.b16 %v3510, %v3502
    %v5207 = vpack.c.b16 %v3511, %v3503
    %v5208 = vpack.c.b16 %v3512, %v3504
    %v5209 = vpack.c.b16 %v3513, %v3505
    %v5210 = vpack.c.b16 %v3522, %v3514
    %v5211 = vpack.c.b16 %v3523, %v3515
    %v5212 = vpack.c.b16 %v3524, %v3516
    %v5213 = vpack.c.b16 %v3525, %v3517
    %v5214 = vpack.c.b16 %v3526, %v3518
    %v5215 = vpack.c.b16 %v3527, %v3519
    %v5216 = vpack.c.b16 %v3528, %v3520
    %v5217 = vpack.c.b16 %v3529, %v3521
    %v5218 = vpack.c.b16 %v3538, %v3530
    %v5219 = vpack.c.b16 %v3539, %v3531
    %v5220 = vpack.c.b16 %v3540, %v3532
    %v5221 = vpack.c.b16 %v3541, %v3533
    %v5222 = vpack.c.b16 %v3542, %v3534
    %v5223 = vpack.c.b16 %v3543, %v3535
    %v5224 = vpack.c.b16 %v3544, %v3536
    %v5225 = vpack.c.b16 %v3545, %v3537
    %v5226 = vpack.c.b16 %v3554, %v3546
    %v5227 = vpack.c.b16 %v3555, %v3547
    %v5228 = vpack.c.b16 %v3556, %v3548
    %v5229 = vpack.c.b16 %v3557, %v3549
    %v5230 = vpack.c.b16 %v3558, %v3550
    %v5231 = vpack.c.b16 %v3559, %v3551
    %v5232 = vpack.c.b16 %v3560, %v3552
    %v5233 = vpack.c.b16 %v3561, %v3553
    %v5234 = vpack.c.b16 %v3570, %v3562
    %v5235 = vpack.c.b16 %v3571, %v3563
    %v5236 = vpack.c.b16 %v3572, %v3564
    %v5237 = vpack.c.b16 %v3573, %v3565
    %v5238 = vpack.c.b16 %v3574, %v3566
    %v5239 = vpack.c.b16 %v3575, %v3567
    %v5240 = vpack.c.b16 %v3576, %v3568
    %v5241 = vpack.c.b16 %v3577, %v3569
    %v5242 = vpack.c.b16 %v3586, %v3578
    %v5243 = vpack.c.b16 %v3587, %v3579
    %v5244 = vpack.c.b16 %v3588, %v3580
    %v5245 = vpack.c.b16 %v3589, %v3581
    %v5246 = vpack.c.b16 %v3590, %v3582
    %v5247 = vpack.c.b16 %v3591, %v3583
    %v5248 = vpack.c.b16 %v3592, %v3584
    %v5249 = vpack.c.b16 %v3593, %v3585
    %v5250 = vpack.c.b16 %v3602, %v3594
    %v5251 = vpack.c.b16 %v3603, %v3595
    %v5252 = vpack.c.b16 %v3604, %v3596
    %v5253 = vpack.c.b16 %v3605, %v3597
    %v5254 = vpack.c.b16 %v3606, %v3598
    %v5255 = vpack.c.b16 %v3607, %v3599
    %v5256 = vpack.c.b16 %v3608, %v3600
    %v5257 = vpack.c.b16 %v3609, %v3601
    %v5258 = vpack.c.b16 %v3618, %v3610
    %v5259 = vpack.c.b16 %v3619, %v3611
    %v5260 = vpack.c.b16 %v3620, %v3612
    %v5261 = vpack.c.b16 %v3621, %v3613
    %v5262 = vpack.c.b16 %v3622, %v3614
    %v5263 = vpack.c.b16 %v3623, %v3615
    %v5264 = vpack.c.b16 %v3624, %v3616
    %v5265 = vpack.c.b16 %v3625, %v3617
    %v5266 = vpack.c.b16 %v3634, %v3626
    %v5267 = vpack.c.b16 %v3635, %v3627
    %v5268 = vpack.c.b16 %v3636, %v3628
    %v5269 = vpack.c.b16 %v3637, %v3629
    %v5270 = vpack.c.b16 %v3638, %v3630
    %v5271 = vpack.c.b16 %v3639, %v3631
    %v5272 = vpack.c.b16 %v3640, %v3632
    %v5273 = vpack.c.b16 %v3641, %v3633
    %v5274 = vpack.c.b16 %v3650, %v3642
    %v5275 = vpack.c.b16 %v3651, %v3643
    %v5276 = vpack.c.b16 %v3652, %v3644
    %v5277 = vpack.c.b16 %v3653, %v3645
    %v5278 = vpack.c.b16 %v3654, %v3646
    %v5279 = vpack.c.b16 %v3655, %v3647
    %v5280 = vpack.c.b16 %v3656, %v3648
    %v5281 = vpack.c.b16 %v3657, %v3649
    %v5282 = vpack.c.b16 %v3666, %v3658
    %v5283 = vpack.c.b16 %v3667, %v3659
    %v5284 = vpack.c.b16 %v3668, %v3660
    %v5285 = vpack.c.b16 %v3669, %v3661
    %v5286 = vpack.c.b16 %v3670, %v3662
    %v5287 = vpack.c.b16 %v3671, %v3663
    %v5288 = vpack.c.b16 %v3672, %v3664
    %v5289 = vpack.c.b16 %v3673, %v3665
    %v5290 = vpack.c.b16 %v3682, %v3674
    %v5291 = vpack.c.b16 %v3683, %v3675
    %v5292 = vpack.c.b16 %v3684, %v3676
    %v5293 = vpack.c.b16 %v3685, %v3677
    %v5294 = vpack.c.b16 %v3686, %v3678
    %v5295 = vpack.c.b16 %v3687, %v3679
    %v5296 = vpack.c.b16 %v3688, %v3680
    %v5297 = vpack.c.b16 %v3689, %v3681
    %v5298 = vpack.c.b16 %v3698, %v3690
    %v5299 = vpack.c.b16 %v3699, %v3691
    %v5300 = vpack.c.b16 %v3700, %v3692
    %v5301 = vpack.c.b16 %v3701, %v3693
    %v5302 = vpack.c.b16 %v3702, %v3694
    %v5303 = vpack.c.b16 %v3703, %v3695
    %v5304 = vpack.c.b16 %v3704, %v3696
    %v5305 = vpack.c.b16 %v3705, %v3697
    %v5306 = vpack.c.b16 %v3714, %v3706
    %v5307 = vpack.c.b16 %v3715, %v3707
    %v5308 = vpack.c.b16 %v3716, %v3708
    %v5309 = vpack.c.b16 %v3717, %v3709
    %v5310 = vpack.c.b16 %v3718, %v3710
    %v5311 = vpack.c.b16 %v3719, %v3711
    %v5312 = vpack.c.b16 %v3720, %v3712
    %v5313 = vpack.c.b16 %v3721, %v3713
    %v5314 = vpack.c.b16 %v3730, %v3722
    %v5315 = vpack.c.b16 %v3731, %v3723
    %v5316 = vpack.c.b16 %v3732, %v3724
    %v5317 = vpack.c.b16 %v3733, %v3725
    %v5318 = vpack.c.b16 %v3734, %v3726
    %v5319 = vpack.c.b16 %v3735, %v3727
    %v5320 = vpack.c.b16 %v3736, %v3728
    %v5321 = vpack.c.b16 %v3737, %v3729
    %v5322 = vpack.c.b16 %v3746, %v3738
    %v5323 = vpack.c.b16 %v3747, %v3739
    %v5324 = vpack.c.b16 %v3748, %v3740
    %v5325 = vpack.c.b16 %v3749, %v3741
    %v5326 = vpack.c.b16 %v3750, %v3742
    %v5327 = vpack.c.b16 %v3751, %v3743
    %v5328 = vpack.c.b16 %v3752, %v3744
    %v5329 = vpack.c.b16 %v3753, %v3745
    %v5330 = vpack.c.b16 %v3762, %v3754
    %v5331 = vpack.c.b16 %v3763, %v3755
    %v5332 = vpack.c.b16 %v3764, %v3756
    %v5333 = vpack.c.b16 %v3765, %v3757
    %v5334 = vpack.c.b16 %v3766, %v3758
    %v5335 = vpack.c.b16 %v3767, %v3759
    %v5336 = vpack.c.b16 %v3768, %v3760
    %v5337 = vpack.c.b16 %v3769, %v3761
    %v5338 = vpack.c.b16 %v3778, %v3770
    %v5339 = vpack.c.b16 %v3779, %v3771
    %v5340 = vpack.c.b16 %v3780, %v3772
    %v5341 = vpack.c.b16 %v3781, %v3773
    %v5342 = vpack.c.b16 %v3782, %v3774
    %v5343 = vpack.c.b16 %v3783, %v3775
    %v5344 = vpack.c.b16 %v3784, %v3776
    %v5345 = vpack.c.b16 %v3785, %v3777
    %v5346 = vpack.c.b16 %v3794, %v3786
    %v5347 = vpack.c.b16 %v3795, %v3787
    %v5348 = vpack.c.b16 %v3796, %v3788
    %v5349 = vpack.c.b16 %v3797, %v3789
    %v5350 = vpack.c.b16 %v3798, %v3790
    %v5351 = vpack.c.b16 %v3799, %v3791
    %v5352 = vpack.c.b16 %v3800, %v3792
    %v5353 = vpack.c.b16 %v3801, %v3793
    %v5354 = vpack.c.b16 %v3810, %v3802
    %v5355 = vpack.c.b16 %v3811, %v3803
    %v5356 = vpack.c.b16 %v3812, %v3804
    %v5357 = vpack.c.b16 %v3813, %v3805
    %v5358 = vpack.c.b16 %v3814, %v3806
    %v5359 = vpack.c.b16 %v3815, %v3807
    %v5360 = vpack.c.b16 %v3816, %v3808
    %v5361 = vpack.c.b16 %v3817, %v3809
    %v5362 = vpack.c.b16 %v3826, %v3818
    %v5363 = vpack.c.b16 %v3827, %v3819
    %v5364 = vpack.c.b16 %v3828, %v3820
    %v5365 = vpack.c.b16 %v3829, %v3821
    %v5366 = vpack.c.b16 %v3830, %v3822
    %v5367 = vpack.c.b16 %v3831, %v3823
    %v5368 = vpack.c.b16 %v3832, %v3824
    %v5369 = vpack.c.b16 %v3833, %v3825
    %v5370 = vpack.c.b16 %v3842, %v3834
    %v5371 = vpack.c.b16 %v3843, %v3835
    %v5372 = vpack.c.b16 %v3844, %v3836
    %v5373 = vpack.c.b16 %v3845, %v3837
    %v5374 = vpack.c.b16 %v3846, %v3838
    %v5375 = vpack.c.b16 %v3847, %v3839
    %v5376 = vpack.c.b16 %v3848, %v3840
    %v5377 = vpack.c.b16 %v3849, %v3841
    %v5378 = vpack.c.b16 %v3858, %v3850
    %v5379 = vpack.c.b16 %v3859, %v3851
    %v5380 = vpack.c.b16 %v3860, %v3852
    %v5381 = vpack.c.b16 %v3861, %v3853
    %v5382 = vpack.c.b16 %v3862, %v3854
    %v5383 = vpack.c.b16 %v3863, %v3855
    %v5384 = vpack.c.b16 %v3864, %v3856
    %v5385 = vpack.c.b16 %v3865, %v3857
    %v5386 = vpack.c.b16 %v3874, %v3866
    %v5387 = vpack.c.b16 %v3875, %v3867
    %v5388 = vpack.c.b16 %v3876, %v3868
    %v5389 = vpack.c.b16 %v3877, %v3869
    %v5390 = vpack.c.b16 %v3878, %v3870
    %v5391 = vpack.c.b16 %v3879, %v3871
    %v5392 = vpack.c.b16 %v3880, %v3872
    %v5393 = vpack.c.b16 %v3881, %v3873
    %v5394 = vpack.c.b16 %v3890, %v3882
    %v5395 = vpack.c.b16 %v3891, %v3883
    %v5396 = vpack.c.b16 %v3892, %v3884
    %v5397 = vpack.c.b16 %v3893, %v3885
    %v5398 = vpack.c.b16 %v3894, %v3886
    %v5399 = vpack.c.b16 %v3895, %v3887
    %v5400 = vpack.c.b16 %v3896, %v3888
    %v5401 = vpack.c.b16 %v3897, %v3889
    %v5402 = vpack.c.b16 %v3906, %v3898
    %v5403 = vpack.c.b16 %v3907, %v3899
    %v5404 = vpack.c.b16 %v3908, %v3900
    %v5405 = vpack.c.b16 %v3909, %v3901
    %v5406 = vpack.c.b16 %v3910, %v3902
    %v5407 = vpack.c.b16 %v3911, %v3903
    %v5408 = vpack.c.b16 %v3912, %v3904
    %v5409 = vpack.c.b16 %v3913, %v3905
    %v5410 = vpack.c.b16 %v3922, %v3914
    %v5411 = vpack.c.b16 %v3923, %v3915
    %v5412 = vpack.c.b16 %v3924, %v3916
    %v5413 = vpack.c.b16 %v3925, %v3917
    %v5414 = vpack.c.b16 %v3926, %v3918
    %v5415 = vpack.c.b16 %v3927, %v3919
    %v5416 = vpack.c.b16 %v3928, %v3920
    %v5417 = vpack.c.b16 %v3929, %v3921
    %v5418 = vpack.c.b16 %v3938, %v3930
    %v5419 = vpack.c.b16 %v3939, %v3931
    %v5420 = vpack.c.b16 %v3940, %v3932
    %v5421 = vpack.c.b16 %v3941, %v3933
    %v5422 = vpack.c.b16 %v3942, %v3934
    %v5423 = vpack.c.b16 %v3943, %v3935
    %v5424 = vpack.c.b16 %v3944, %v3936
    %v5425 = vpack.c.b16 %v3945, %v3937
    %v5426 = vpack.c.b16 %v3954, %v3946
    %v5427 = vpack.c.b16 %v3955, %v3947
    %v5428 = vpack.c.b16 %v3956, %v3948
    %v5429 = vpack.c.b16 %v3957, %v3949
    %v5430 = vpack.c.b16 %v3958, %v3950
    %v5431 = vpack.c.b16 %v3959, %v3951
    %v5432 = vpack.c.b16 %v3960, %v3952
    %v5433 = vpack.c.b16 %v3961, %v3953
    %v5434 = vpack.c.b16 %v3970, %v3962
    %v5435 = vpack.c.b16 %v3971, %v3963
    %v5436 = vpack.c.b16 %v3972, %v3964
    %v5437 = vpack.c.b16 %v3973, %v3965
    %v5438 = vpack.c.b16 %v3974, %v3966
    %v5439 = vpack.c.b16 %v3975, %v3967
    %v5440 = vpack.c.b16 %v3976, %v3968
    %v5441 = vpack.c.b16 %v3977, %v3969
    %v5442 = vpack.c.b16 %v3986, %v3978
    %v5443 = vpack.c.b16 %v3987, %v3979
    %v5444 = vpack.c.b16 %v3988, %v3980
    %v5445 = vpack.c.b16 %v3989, %v3981
    %v5446 = vpack.c.b16 %v3990, %v3982
    %v5447 = vpack.c.b16 %v3991, %v3983
    %v5448 = vpack.c.b16 %v3992, %v3984
    %v5449 = vpack.c.b16 %v3993, %v3985
    %v5450 = vpack.c.b16 %v4002, %v3994
    %v5451 = vpack.c.b16 %v4003, %v3995
    %v5452 = vpack.c.b16 %v4004, %v3996
    %v5453 = vpack.c.b16 %v4005, %v3997
    %v5454 = vpack.c.b16 %v4006, %v3998
    %v5455 = vpack.c.b16 %v4007, %v3999
    %v5456 = vpack.c.b16 %v4008, %v4000
    %v5457 = vpack.c.b16 %v4009, %v4001
    %v5458 = vpack.c.b16 %v4018, %v4010
    %v5459 = vpack.c.b16 %v4019, %v4011
    %v5460 = vpack.c.b16 %v4020, %v4012
    %v5461 = vpack.c.b16 %v4021, %v4013
    %v5462 = vpack.c.b16 %v4022, %v4014
    %v5463 = vpack.c.b16 %v4023, %v4015
    %v5464 = vpack.c.b16 %v4024, %v4016
    %v5465 = vpack.c.b16 %v4025, %v4017
    %v5466 = vpack.c.b16 %v4034, %v4026
    %v5467 = vpack.c.b16 %v4035, %v4027
    %v5468 = vpack.c.b16 %v4036, %v4028
    %v5469 = vpack.c.b16 %v4037, %v4029
    %v5470 = vpack.c.b16 %v4038, %v4030
    %v5471 = vpack.c.b16 %v4039, %v4031
    %v5472 = vpack.c.b16 %v4040, %v4032
    %v5473 = vpack.c.b16 %v4041, %v4033
    %v5474 = vpack.c.b16 %v4050, %v4042
    %v5475 = vpack.c.b16 %v4051, %v4043
    %v5476 = vpack.c.b16 %v4052, %v4044
    %v5477 = vpack.c.b16 %v4053, %v4045
    %v5478 = vpack.c.b16 %v4054, %v4046
    %v5479 = vpack.c.b16 %v4055, %v4047
    %v5480 = vpack.c.b16 %v4056, %v4048
    %v5481 = vpack.c.b16 %v4057, %v4049
    %v5482 = vpack.c.b16 %v4066, %v4058
    %v5483 = vpack.c.b16 %v4067, %v4059
    %v5484 = vpack.c.b16 %v4068, %v4060
    %v5485 = vpack.c.b16 %v4069, %v4061
    %v5486 = vpack.c.b16 %v4070, %v4062
    %v5487 = vpack.c.b16 %v4071, %v4063
    %v5488 = vpack.c.b16 %v4072, %v4064
    %v5489 = vpack.c.b16 %v4073, %v4065
    %v5490 = vpack.c.b16 %v4082, %v4074
    %v5491 = vpack.c.b16 %v4083, %v4075
    %v5492 = vpack.c.b16 %v4084, %v4076
    %v5493 = vpack.c.b16 %v4085, %v4077
    %v5494 = vpack.c.b16 %v4086, %v4078
    %v5495 = vpack.c.b16 %v4087, %v4079
    %v5496 = vpack.c.b16 %v4088, %v4080
    %v5497 = vpack.c.b16 %v4089, %v4081
    %v5498 = vpack.c.b16 %v4098, %v4090
    %v5499 = vpack.c.b16 %v4099, %v4091
    %v5500 = vpack.c.b16 %v4100, %v4092
    %v5501 = vpack.c.b16 %v4101, %v4093
    %v5502 = vpack.c.b16 %v4102, %v4094
    %v5503 = vpack.c.b16 %v4103, %v4095
    %v5504 = vpack.c.b16 %v4104, %v4096
    %v5505 = vpack.c.b16 %v4105, %v4097
    %v5506 = vpack.c.b16 %v4114, %v4106
    %v5507 = vpack.c.b16 %v4115, %v4107
    %v5508 = vpack.c.b16 %v4116, %v4108
    %v5509 = vpack.c.b16 %v4117, %v4109
    %v5510 = vpack.c.b16 %v4118, %v4110
    %v5511 = vpack.c.b16 %v4119, %v4111
    %v5512 = vpack.c.b16 %v4120, %v4112
    %v5513 = vpack.c.b16 %v4121, %v4113
    %v5514 = vpack.c.b16 %v4130, %v4122
    %v5515 = vpack.c.b16 %v4131, %v4123
    %v5516 = vpack.c.b16 %v4132, %v4124
    %v5517 = vpack.c.b16 %v4133, %v4125
    %v5518 = vpack.c.b16 %v4134, %v4126
    %v5519 = vpack.c.b16 %v4135, %v4127
    %v5520 = vpack.c.b16 %v4136, %v4128
    %v5521 = vpack.c.b16 %v4137, %v4129
    %v5522 = vpack.c.b16 %v4146, %v4138
    %v5523 = vpack.c.b16 %v4147, %v4139
    %v5524 = vpack.c.b16 %v4148, %v4140
    %v5525 = vpack.c.b16 %v4149, %v4141
    %v5526 = vpack.c.b16 %v4150, %v4142
    %v5527 = vpack.c.b16 %v4151, %v4143
    %v5528 = vpack.c.b16 %v4152, %v4144
    %v5529 = vpack.c.b16 %v4153, %v4145
    %v5530 = vpack.c.b16 %v4162, %v4154
    %v5531 = vpack.c.b16 %v4163, %v4155
    %v5532 = vpack.c.b16 %v4164, %v4156
    %v5533 = vpack.c.b16 %v4165, %v4157
    %v5534 = vpack.c.b16 %v4166, %v4158
    %v5535 = vpack.c.b16 %v4167, %v4159
    %v5536 = vpack.c.b16 %v4168, %v4160
    %v5537 = vpack.c.b16 %v4169, %v4161
    %v5538 = vpack.c.b16 %v4178, %v4170
    %v5539 = vpack.c.b16 %v4179, %v4171
    %v5540 = vpack.c.b16 %v4180, %v4172
    %v5541 = vpack.c.b16 %v4181, %v4173
    %v5542 = vpack.c.b16 %v4182, %v4174
    %v5543 = vpack.c.b16 %v4183, %v4175
    %v5544 = vpack.c.b16 %v4184, %v4176
    %v5545 = vpack.c.b16 %v4185, %v4177
    %v5546 = vpack.c.b16 %v4194, %v4186
    %v5547 = vpack.c.b16 %v4195, %v4187
    %v5548 = vpack.c.b16 %v4196, %v4188
    %v5549 = vpack.c.b16 %v4197, %v4189
    %v5550 = vpack.c.b16 %v4198, %v4190
    %v5551 = vpack.c.b16 %v4199, %v4191
    %v5552 = vpack.c.b16 %v4200, %v4192
    %v5553 = vpack.c.b16 %v4201, %v4193
    %v5554 = vpack.c.b16 %v4210, %v4202
    %v5555 = vpack.c.b16 %v4211, %v4203
    %v5556 = vpack.c.b16 %v4212, %v4204
    %v5557 = vpack.c.b16 %v4213, %v4205
    %v5558 = vpack.c.b16 %v4214, %v4206
    %v5559 = vpack.c.b16 %v4215, %v4207
    %v5560 = vpack.c.b16 %v4216, %v4208
    %v5561 = vpack.c.b16 %v4217, %v4209
    %v5562 = vpack.c.b16 %v4226, %v4218
    %v5563 = vpack.c.b16 %v4227, %v4219
    %v5564 = vpack.c.b16 %v4228, %v4220
    %v5565 = vpack.c.b16 %v4229, %v4221
    %v5566 = vpack.c.b16 %v4230, %v4222
    %v5567 = vpack.c.b16 %v4231, %v4223
    %v5568 = vpack.c.b16 %v4232, %v4224
    %v5569 = vpack.c.b16 %v4233, %v4225
    %v5570 = vpack.c.b16 %v4242, %v4234
    %v5571 = vpack.c.b16 %v4243, %v4235
    %v5572 = vpack.c.b16 %v4244, %v4236
    %v5573 = vpack.c.b16 %v4245, %v4237
    %v5574 = vpack.c.b16 %v4246, %v4238
    %v5575 = vpack.c.b16 %v4247, %v4239
    %v5576 = vpack.c.b16 %v4248, %v4240
    %v5577 = vpack.c.b16 %v4249, %v4241
    %v5578 = vpack.c.b16 %v4258, %v4250
    %v5579 = vpack.c.b16 %v4259, %v4251
    %v5580 = vpack.c.b16 %v4260, %v4252
    %v5581 = vpack.c.b16 %v4261, %v4253
    %v5582 = vpack.c.b16 %v4262, %v4254
    %v5583 = vpack.c.b16 %v4263, %v4255
    %v5584 = vpack.c.b16 %v4264, %v4256
    %v5585 = vpack.c.b16 %v4265, %v4257
    %v5586 = vpack.c.b16 %v4274, %v4266
    %v5587 = vpack.c.b16 %v4275, %v4267
    %v5588 = vpack.c.b16 %v4276, %v4268
    %v5589 = vpack.c.b16 %v4277, %v4269
    %v5590 = vpack.c.b16 %v4278, %v4270
    %v5591 = vpack.c.b16 %v4279, %v4271
    %v5592 = vpack.c.b16 %v4280, %v4272
    %v5593 = vpack.c.b16 %v4281, %v4273
    %v5594 = vpack.c.b16 %v4290, %v4282
    %v5595 = vpack.c.b16 %v4291, %v4283
    %v5596 = vpack.c.b16 %v4292, %v4284
    %v5597 = vpack.c.b16 %v4293, %v4285
    %v5598 = vpack.c.b16 %v4294, %v4286
    %v5599 = vpack.c.b16 %v4295, %v4287
    %v5600 = vpack.c.b16 %v4296, %v4288
    %v5601 = vpack.c.b16 %v4297, %v4289
    %v5602 = vpack.c.b16 %v4306, %v4298
    %v5603 = vpack.c.b16 %v4307, %v4299
    %v5604 = vpack.c.b16 %v4308, %v4300
    %v5605 = vpack.c.b16 %v4309, %v4301
    %v5606 = vpack.c.b16 %v4310, %v4302
    %v5607 = vpack.c.b16 %v4311, %v4303
    %v5608 = vpack.c.b16 %v4312, %v4304
    %v5609 = vpack.c.b16 %v4313, %v4305
    %v5610 = vpack.c.b16 %v4322, %v4314
    %v5611 = vpack.c.b16 %v4323, %v4315
    %v5612 = vpack.c.b16 %v4324, %v4316
    %v5613 = vpack.c.b16 %v4325, %v4317
    %v5614 = vpack.c.b16 %v4326, %v4318
    %v5615 = vpack.c.b16 %v4327, %v4319
    %v5616 = vpack.c.b16 %v4328, %v4320
    %v5617 = vpack.c.b16 %v4329, %v4321
    %v5618 = vpack.c.b16 %v4338, %v4330
    %v5619 = vpack.c.b16 %v4339, %v4331
    %v5620 = vpack.c.b16 %v4340, %v4332
    %v5621 = vpack.c.b16 %v4341, %v4333
    %v5622 = vpack.c.b16 %v4342, %v4334
    %v5623 = vpack.c.b16 %v4343, %v4335
    %v5624 = vpack.c.b16 %v4344, %v4336
    %v5625 = vpack.c.b16 %v4345, %v4337
    %v5626 = vpack.c.b16 %v4354, %v4346
    %v5627 = vpack.c.b16 %v4355, %v4347
    %v5628 = vpack.c.b16 %v4356, %v4348
    %v5629 = vpack.c.b16 %v4357, %v4349
    %v5630 = vpack.c.b16 %v4358, %v4350
    %v5631 = vpack.c.b16 %v4359, %v4351
    %v5632 = vpack.c.b16 %v4360, %v4352
    %v5633 = vpack.c.b16 %v4361, %v4353
    %v5634 = vpack.c.b16 %v4370, %v4362
    %v5635 = vpack.c.b16 %v4371, %v4363
    %v5636 = vpack.c.b16 %v4372, %v4364
    %v5637 = vpack.c.b16 %v4373, %v4365
    %v5638 = vpack.c.b16 %v4374, %v4366
    %v5639 = vpack.c.b16 %v4375, %v4367
    %v5640 = vpack.c.b16 %v4376, %v4368
    %v5641 = vpack.c.b16 %v4377, %v4369
    %v5642 = vpack.c.b16 %v4386, %v4378
    %v5643 = vpack.c.b16 %v4387, %v4379
    %v5644 = vpack.c.b16 %v4388, %v4380
    %v5645 = vpack.c.b16 %v4389, %v4381
    %v5646 = vpack.c.b16 %v4390, %v4382
    %v5647 = vpack.c.b16 %v4391, %v4383
    %v5648 = vpack.c.b16 %v4392, %v4384
    %v5649 = vpack.c.b16 %v4393, %v4385
    %v5650 = vpack.c.b16 %v4402, %v4394
    %v5651 = vpack.c.b16 %v4403, %v4395
    %v5652 = vpack.c.b16 %v4404, %v4396
    %v5653 = vpack.c.b16 %v4405, %v4397
    %v5654 = vpack.c.b16 %v4406, %v4398
    %v5655 = vpack.c.b16 %v4407, %v4399
    %v5656 = vpack.c.b16 %v4408, %v4400
    %v5657 = vpack.c.b16 %v4409, %v4401
    %v5658 = vpack.c.b16 %v4418, %v4410
    %v5659 = vpack.c.b16 %v4419, %v4411
    %v5660 = vpack.c.b16 %v4420, %v4412
    %v5661 = vpack.c.b16 %v4421, %v4413
    %v5662 = vpack.c.b16 %v4422, %v4414
    %v5663 = vpack.c.b16 %v4423, %v4415
    %v5664 = vpack.c.b16 %v4424, %v4416
    %v5665 = vpack.c.b16 %v4425, %v4417
    %v5666 = vpack.c.b16 %v4434, %v4426
    %v5667 = vpack.c.b16 %v4435, %v4427
    %v5668 = vpack.c.b16 %v4436, %v4428
    %v5669 = vpack.c.b16 %v4437, %v4429
    %v5670 = vpack.c.b16 %v4438, %v4430
    %v5671 = vpack.c.b16 %v4439, %v4431
    %v5672 = vpack.c.b16 %v4440, %v4432
    %v5673 = vpack.c.b16 %v4441, %v4433
    %v5674 = vpack.c.b16 %v4450, %v4442
    %v5675 = vpack.c.b16 %v4451, %v4443
    %v5676 = vpack.c.b16 %v4452, %v4444
    %v5677 = vpack.c.b16 %v4453, %v4445
    %v5678 = vpack.c.b16 %v4454, %v4446
    %v5679 = vpack.c.b16 %v4455, %v4447
    %v5680 = vpack.c.b16 %v4456, %v4448
    %v5681 = vpack.c.b16 %v4457, %v4449
    %v5682 = vpack.c.b16 %v4466, %v4458
    %v5683 = vpack.c.b16 %v4467, %v4459
    %v5684 = vpack.c.b16 %v4468, %v4460
    %v5685 = vpack.c.b16 %v4469, %v4461
    %v5686 = vpack.c.b16 %v4470, %v4462
    %v5687 = vpack.c.b16 %v4471, %v4463
    %v5688 = vpack.c.b16 %v4472, %v4464
    %v5689 = vpack.c.b16 %v4473, %v4465
    %v5690 = vpack.c.b16 %v4482, %v4474
    %v5691 = vpack.c.b16 %v4483, %v4475
    %v5692 = vpack.c.b16 %v4484, %v4476
    %v5693 = vpack.c.b16 %v4485, %v4477
    %v5694 = vpack.c.b16 %v4486, %v4478
    %v5695 = vpack.c.b16 %v4487, %v4479
    %v5696 = vpack.c.b16 %v4488, %v4480
    %v5697 = vpack.c.b16 %v4489, %v4481
    %v5698 = vpack.c.b16 %v4498, %v4490
    %v5699 = vpack.c.b16 %v4499, %v4491
    %v5700 = vpack.c.b16 %v4500, %v4492
    %v5701 = vpack.c.b16 %v4501, %v4493
    %v5702 = vpack.c.b16 %v4502, %v4494
    %v5703 = vpack.c.b16 %v4503, %v4495
    %v5704 = vpack.c.b16 %v4504, %v4496
    %v5705 = vpack.c.b16 %v4505, %v4497
    %v5706 = vpack.c.b16 %v4514, %v4506
    %v5707 = vpack.c.b16 %v4515, %v4507
    %v5708 = vpack.c.b16 %v4516, %v4508
    %v5709 = vpack.c.b16 %v4517, %v4509
    %v5710 = vpack.c.b16 %v4518, %v4510
    %v5711 = vpack.c.b16 %v4519, %v4511
    %v5712 = vpack.c.b16 %v4520, %v4512
    %v5713 = vpack.c.b16 %v4521, %v4513
    %v5714 = vpack.c.b16 %v4530, %v4522
    %v5715 = vpack.c.b16 %v4531, %v4523
    %v5716 = vpack.c.b16 %v4532, %v4524
    %v5717 = vpack.c.b16 %v4533, %v4525
    %v5718 = vpack.c.b16 %v4534, %v4526
    %v5719 = vpack.c.b16 %v4535, %v4527
    %v5720 = vpack.c.b16 %v4536, %v4528
    %v5721 = vpack.c.b16 %v4537, %v4529
    %v5722 = vpack.c.b16 %v4546, %v4538
    %v5723 = vpack.c.b16 %v4547, %v4539
    %v5724 = vpack.c.b16 %v4548, %v4540
    %v5725 = vpack.c.b16 %v4549, %v4541
    %v5726 = vpack.c.b16 %v4550, %v4542
    %v5727 = vpack.c.b16 %v4551, %v4543
    %v5728 = vpack.c.b16 %v4552, %v4544
    %v5729 = vpack.c.b16 %v4553, %v4545
    %v5730 = vpack.c.b16 %v4562, %v4554
    %v5731 = vpack.c.b16 %v4563, %v4555
    %v5732 = vpack.c.b16 %v4564, %v4556
    %v5733 = vpack.c.b16 %v4565, %v4557
    %v5734 = vpack.c.b16 %v4566, %v4558
    %v5735 = vpack.c.b16 %v4567, %v4559
    %v5736 = vpack.c.b16 %v4568, %v4560
    %v5737 = vpack.c.b16 %v4569, %v4561
    %v5738 = vpack.c.b16 %v4578, %v4570
    %v5739 = vpack.c.b16 %v4579, %v4571
    %v5740 = vpack.c.b16 %v4580, %v4572
    %v5741 = vpack.c.b16 %v4581, %v4573
    %v5742 = vpack.c.b16 %v4582, %v4574
    %v5743 = vpack.c.b16 %v4583, %v4575
    %v5744 = vpack.c.b16 %v4584, %v4576
    %v5745 = vpack.c.b16 %v4585, %v4577
    %v5746 = vpack.c.b16 %v4594, %v4586
    %v5747 = vpack.c.b16 %v4595, %v4587
    %v5748 = vpack.c.b16 %v4596, %v4588
    %v5749 = vpack.c.b16 %v4597, %v4589
    %v5750 = vpack.c.b16 %v4598, %v4590
    %v5751 = vpack.c.b16 %v4599, %v4591
    %v5752 = vpack.c.b16 %v4600, %v4592
    %v5753 = vpack.c.b16 %v4601, %v4593
    %v5754 = vpack.c.b16 %v4610, %v4602
    %v5755 = vpack.c.b16 %v4611, %v4603
    %v5756 = vpack.c.b16 %v4612, %v4604
    %v5757 = vpack.c.b16 %v4613, %v4605
    %v5758 = vpack.c.b16 %v4614, %v4606
    %v5759 = vpack.c.b16 %v4615, %v4607
    %v5760 = vpack.c.b16 %v4616, %v4608
    %v5761 = vpack.c.b16 %v4617, %v4609
    %v5762 = vpack.c.b16 %v4626, %v4618
    %v5763 = vpack.c.b16 %v4627, %v4619
    %v5764 = vpack.c.b16 %v4628, %v4620
    %v5765 = vpack.c.b16 %v4629, %v4621
    %v5766 = vpack.c.b16 %v4630, %v4622
    %v5767 = vpack.c.b16 %v4631, %v4623
    %v5768 = vpack.c.b16 %v4632, %v4624
    %v5769 = vpack.c.b16 %v4633, %v4625
    %v5770 = vpack.c.b16 %v4642, %v4634
    %v5771 = vpack.c.b16 %v4643, %v4635
    %v5772 = vpack.c.b16 %v4644, %v4636
    %v5773 = vpack.c.b16 %v4645, %v4637
    %v5774 = vpack.c.b16 %v4646, %v4638
    %v5775 = vpack.c.b16 %v4647, %v4639
    %v5776 = vpack.c.b16 %v4648, %v4640
    %v5777 = vpack.c.b16 %v4649, %v4641
    %v5778 = vpack.c.b16 %v4658, %v4650
    %v5779 = vpack.c.b16 %v4659, %v4651
    %v5780 = vpack.c.b16 %v4660, %v4652
    %v5781 = vpack.c.b16 %v4661, %v4653
    %v5782 = vpack.c.b16 %v4662, %v4654
    %v5783 = vpack.c.b16 %v4663, %v4655
    %v5784 = vpack.c.b16 %v4664, %v4656
    %v5785 = vpack.c.b16 %v4665, %v4657
    %v5786 = vpack.c.b16 %v4674, %v4666
    %v5787 = vpack.c.b16 %v4675, %v4667
    %v5788 = vpack.c.b16 %v4676, %v4668
    %v5789 = vpack.c.b16 %v4677, %v4669
    %v5790 = vpack.c.b16 %v4678, %v4670
    %v5791 = vpack.c.b16 %v4679, %v4671
    %v5792 = vpack.c.b16 %v4680, %v4672
    %v5793 = vpack.c.b16 %v4681, %v4673
    %v5794 = vpack.c.b16 %v4690, %v4682
    %v5795 = vpack.c.b16 %v4691, %v4683
    %v5796 = vpack.c.b16 %v4692, %v4684
    %v5797 = vpack.c.b16 %v4693, %v4685
    %v5798 = vpack.c.b16 %v4694, %v4686
    %v5799 = vpack.c.b16 %v4695, %v4687
    %v5800 = vpack.c.b16 %v4696, %v4688
    %v5801 = vpack.c.b16 %v4697, %v4689
    %v5802 = vpack.c.b16 %v4706, %v4698
    %v5803 = vpack.c.b16 %v4707, %v4699
    %v5804 = vpack.c.b16 %v4708, %v4700
    %v5805 = vpack.c.b16 %v4709, %v4701
    %v5806 = vpack.c.b16 %v4710, %v4702
    %v5807 = vpack.c.b16 %v4711, %v4703
    %v5808 = vpack.c.b16 %v4712, %v4704
    %v5809 = vpack.c.b16 %v4713, %v4705
    %v5810 = vpack.c.b16 %v4722, %v4714
    %v5811 = vpack.c.b16 %v4723, %v4715
    %v5812 = vpack.c.b16 %v4724, %v4716
    %v5813 = vpack.c.b16 %v4725, %v4717
    %v5814 = vpack.c.b16 %v4726, %v4718
    %v5815 = vpack.c.b16 %v4727, %v4719
    %v5816 = vpack.c.b16 %v4728, %v4720
    %v5817 = vpack.c.b16 %v4729, %v4721
    %v5818 = vpack.c.b16 %v4738, %v4730
    %v5819 = vpack.c.b16 %v4739, %v4731
    %v5820 = vpack.c.b16 %v4740, %v4732
    %v5821 = vpack.c.b16 %v4741, %v4733
    %v5822 = vpack.c.b16 %v4742, %v4734
    %v5823 = vpack.c.b16 %v4743, %v4735
    %v5824 = vpack.c.b16 %v4744, %v4736
    %v5825 = vpack.c.b16 %v4745, %v4737
    %v5826 = vpack.c.b16 %v4754, %v4746
    %v5827 = vpack.c.b16 %v4755, %v4747
    %v5828 = vpack.c.b16 %v4756, %v4748
    %v5829 = vpack.c.b16 %v4757, %v4749
    %v5830 = vpack.c.b16 %v4758, %v4750
    %v5831 = vpack.c.b16 %v4759, %v4751
    %v5832 = vpack.c.b16 %v4760, %v4752
    %v5833 = vpack.c.b16 %v4761, %v4753
    %v5834 = vpack.c.b16 %v4770, %v4762
    %v5835 = vpack.c.b16 %v4771, %v4763
    %v5836 = vpack.c.b16 %v4772, %v4764
    %v5837 = vpack.c.b16 %v4773, %v4765
    %v5838 = vpack.c.b16 %v4774, %v4766
    %v5839 = vpack.c.b16 %v4775, %v4767
    %v5840 = vpack.c.b16 %v4776, %v4768
    %v5841 = vpack.c.b16 %v4777, %v4769
    %v5842 = vpack.c.b16 %v4786, %v4778
    %v5843 = vpack.c.b16 %v4787, %v4779
    %v5844 = vpack.c.b16 %v4788, %v4780
    %v5845 = vpack.c.b16 %v4789, %v4781
    %v5846 = vpack.c.b16 %v4790, %v4782
    %v5847 = vpack.c.b16 %v4791, %v4783
    %v5848 = vpack.c.b16 %v4792, %v4784
    %v5849 = vpack.c.b16 %v4793, %v4785
    %v5850 = vpack.c.b16 %v4802, %v4794
    %v5851 = vpack.c.b16 %v4803, %v4795
    %v5852 = vpack.c.b16 %v4804, %v4796
    %v5853 = vpack.c.b16 %v4805, %v4797
    %v5854 = vpack.c.b16 %v4806, %v4798
    %v5855 = vpack.c.b16 %v4807, %v4799
    %v5856 = vpack.c.b16 %v4808, %v4800
    %v5857 = vpack.c.b16 %v4809, %v4801
    %v5858 = vpack.c.b16 %v4818, %v4810
    %v5859 = vpack.c.b16 %v4819, %v4811
    %v5860 = vpack.c.b16 %v4820, %v4812
    %v5861 = vpack.c.b16 %v4821, %v4813
    %v5862 = vpack.c.b16 %v4822, %v4814
    %v5863 = vpack.c.b16 %v4823, %v4815
    %v5864 = vpack.c.b16 %v4824, %v4816
    %v5865 = vpack.c.b16 %v4825, %v4817
    %v5866 = vpack.c.b16 %v4834, %v4826
    %v5867 = vpack.c.b16 %v4835, %v4827
    %v5868 = vpack.c.b16 %v4836, %v4828
    %v5869 = vpack.c.b16 %v4837, %v4829
    %v5870 = vpack.c.b16 %v4838, %v4830
    %v5871 = vpack.c.b16 %v4839, %v4831
    %v5872 = vpack.c.b16 %v4840, %v4832
    %v5873 = vpack.c.b16 %v4841, %v4833
    %v5874 = vpack.c.b16 %v4850, %v4842
    %v5875 = vpack.c.b16 %v4851, %v4843
    %v5876 = vpack.c.b16 %v4852, %v4844
    %v5877 = vpack.c.b16 %v4853, %v4845
    %v5878 = vpack.c.b16 %v4854, %v4846
    %v5879 = vpack.c.b16 %v4855, %v4847
    %v5880 = vpack.c.b16 %v4856, %v4848
    %v5881 = vpack.c.b16 %v4857, %v4849
    %6906 = vmatprep.subr.bf16.mxu0 %v4859
    %6907 = vmatpush1.bf16.msra.mxu0 %v4858
    %6908 = vmatprep.subr.bf16.mxu0 %v4867
    %6909 = vmatpush1.bf16.msra.mxu0 %v4866
    %6910 = vmatprep.subr.bf16.mxu0 %v4875
    %6911 = vmatpush1.bf16.msra.mxu0 %v4874
    %6912 = vmatprep.subr.bf16.mxu0 %v4883
    %6913 = vmatpush1.bf16.msra.mxu0 %v4882
    %6914 = vmatprep.subr.bf16.mxu0 %v4891
    %6915 = vmatpush1.bf16.msra.mxu0 %v4890
    %6916 = vmatprep.subr.bf16.mxu0 %v4899
    %6917 = vmatpush1.bf16.msra.mxu0 %v4898
    %6918 = vmatprep.subr.bf16.mxu0 %v4907
    %6919 = vmatpush1.bf16.msra.mxu0 %v4906
    %6920 = vmatprep.subr.bf16.mxu0 %v4915
    %6921 = vmatpush1.bf16.msra.mxu0 %v4914
    %6922 = vmatprep.subr.bf16.mxu0 %v4923
    %6923 = vmatpush1.bf16.msra.mxu0 %v4922
    %6924 = vmatprep.subr.bf16.mxu0 %v4931
    %6925 = vmatpush1.bf16.msra.mxu0 %v4930
    %6926 = vmatprep.subr.bf16.mxu0 %v4939
    %6927 = vmatpush1.bf16.msra.mxu0 %v4938
    %6928 = vmatprep.subr.bf16.mxu0 %v4947
    %6929 = vmatpush1.bf16.msra.mxu0 %v4946
    %6930 = vmatprep.subr.bf16.mxu0 %v4955
    %6931 = vmatpush1.bf16.msra.mxu0 %v4954
    %6932 = vmatprep.subr.bf16.mxu0 %v4963
    %6933 = vmatpush1.bf16.msra.mxu0 %v4962
    %6934 = vmatprep.subr.bf16.mxu0 %v4971
    %6935 = vmatpush1.bf16.msra.mxu0 %v4970
    %6936 = vmatprep.subr.bf16.mxu0 %v4979
    %6937 = vmatpush1.bf16.msra.mxu0 %v4978
    %6938 = vmatprep.mubr.bf16.mxu0 %v705
    %6939 = vmatmul.mubr.bf16.gmra.mrb[0].mxu0 %v704
    %v6940 = vpop.f32.mrb[0].mxu0
    %v6941 = vadd.f32 %v1749, %v6940
    %v6942 = vpop.f32.mrb[0].mxu0
    %v6943 = vadd.f32 %v1753, %v6942
    %v6944 = vpop.f32.mrb[0].mxu0
    %v6945 = vpop.f32.mrb[0].mxu0
    %6946 = vdwg.mxu0
    %6947 = vmatprep.subr.bf16.mxu0 %v4987
    %6948 = vmatpush1.bf16.msra.mxu0 %v4986
    %6949 = vmatprep.subr.bf16.mxu0 %v4995
    %6950 = vmatpush1.bf16.msra.mxu0 %v4994
    %6951 = vmatprep.subr.bf16.mxu0 %v5003
    %6952 = vmatpush1.bf16.msra.mxu0 %v5002
    %6953 = vmatprep.subr.bf16.mxu0 %v5011
    %6954 = vmatpush1.bf16.msra.mxu0 %v5010
    %6955 = vmatprep.subr.bf16.mxu0 %v5019
    %6956 = vmatpush1.bf16.msra.mxu0 %v5018
    %6957 = vmatprep.subr.bf16.mxu0 %v5027
    %6958 = vmatpush1.bf16.msra.mxu0 %v5026
    %6959 = vmatprep.subr.bf16.mxu0 %v5035
    %6960 = vmatpush1.bf16.msra.mxu0 %v5034
    %6961 = vmatprep.subr.bf16.mxu0 %v5043
    %6962 = vmatpush1.bf16.msra.mxu0 %v5042
    %6963 = vmatprep.subr.bf16.mxu0 %v5051
    %6964 = vmatpush1.bf16.msra.mxu0 %v5050
    %6965 = vmatprep.subr.bf16.mxu0 %v5059
    %6966 = vmatpush1.bf16.msra.mxu0 %v5058
    %6967 = vmatprep.subr.bf16.mxu0 %v5067
    %6968 = vmatpush1.bf16.msra.mxu0 %v5066
    %6969 = vmatprep.subr.bf16.mxu0 %v5075
    %6970 = vmatpush1.bf16.msra.mxu0 %v5074
    %6971 = vmatprep.subr.bf16.mxu0 %v5083
    %6972 = vmatpush1.bf16.msra.mxu0 %v5082
    %6973 = vmatprep.subr.bf16.mxu0 %v5091
    %6974 = vmatpush1.bf16.msra.mxu0 %v5090
    %6975 = vmatprep.subr.bf16.mxu0 %v5099
    %6976 = vmatpush1.bf16.msra.mxu0 %v5098
    %6977 = vmatprep.subr.bf16.mxu0 %v5107
    %6978 = vmatpush1.bf16.msra.mxu0 %v5106
    %6979 = vmatprep.mubr.bf16.mxu0 %v707
    %6980 = vmatmul.mubr.bf16.gmra.mrb[0].mxu0 %v706
    %v6981 = vpop.f32.mrb[0].mxu0
    %v6982 = vadd.f32 %v6941, %v6981
    %v6983 = vpop.f32.mrb[0].mxu0
    %v6984 = vadd.f32 %v6943, %v6983
    %v6985 = vpop.f32.mrb[0].mxu0
    %v6986 = vpop.f32.mrb[0].mxu0
    %6987 = vdwg.mxu0
    %6988 = vmatprep.subr.bf16.mxu0 %v5115
    %6989 = vmatpush1.bf16.msra.mxu0 %v5114
    %6990 = vmatprep.subr.bf16.mxu0 %v5123
    %6991 = vmatpush1.bf16.msra.mxu0 %v5122
    %6992 = vmatprep.subr.bf16.mxu0 %v5131
    %6993 = vmatpush1.bf16.msra.mxu0 %v5130
    %6994 = vmatprep.subr.bf16.mxu0 %v5139
    %6995 = vmatpush1.bf16.msra.mxu0 %v5138
    %6996 = vmatprep.subr.bf16.mxu0 %v5147
    %6997 = vmatpush1.bf16.msra.mxu0 %v5146
    %6998 = vmatprep.subr.bf16.mxu0 %v5155
    %6999 = vmatpush1.bf16.msra.mxu0 %v5154
    %7000 = vmatprep.subr.bf16.mxu0 %v5163
    %7001 = vmatpush1.bf16.msra.mxu0 %v5162
    %7002 = vmatprep.subr.bf16.mxu0 %v5171
    %7003 = vmatpush1.bf16.msra.mxu0 %v5170
    %7004 = vmatprep.subr.bf16.mxu0 %v5179
    %7005 = vmatpush1.bf16.msra.mxu0 %v5178
    %7006 = vmatprep.subr.bf16.mxu0 %v5187
    %7007 = vmatpush1.bf16.msra.mxu0 %v5186
    %7008 = vmatprep.subr.bf16.mxu0 %v5195
    %7009 = vmatpush1.bf16.msra.mxu0 %v5194
    %7010 = vmatprep.subr.bf16.mxu0 %v5203
    %7011 = vmatpush1.bf16.msra.mxu0 %v5202
    %7012 = vmatprep.subr.bf16.mxu0 %v5211
    %7013 = vmatpush1.bf16.msra.mxu0 %v5210
    %7014 = vmatprep.subr.bf16.mxu0 %v5219
    %7015 = vmatpush1.bf16.msra.mxu0 %v5218
    %7016 = vmatprep.subr.bf16.mxu0 %v5227
    %7017 = vmatpush1.bf16.msra.mxu0 %v5226
    %7018 = vmatprep.subr.bf16.mxu0 %v5235
    %7019 = vmatpush1.bf16.msra.mxu0 %v5234
    %7020 = vmatprep.mubr.bf16.mxu0 %v709
    %7021 = vmatmul.mubr.bf16.gmra.mrb[0].mxu0 %v708
    %v7022 = vpop.f32.mrb[0].mxu0
    %v7023 = vadd.f32 %v6982, %v7022
    %v7024 = vpop.f32.mrb[0].mxu0
    %v7025 = vadd.f32 %v6984, %v7024
    %v7026 = vpop.f32.mrb[0].mxu0
    %v7027 = vpop.f32.mrb[0].mxu0
    %7028 = vdwg.mxu0
    %7029 = vmatprep.subr.bf16.mxu0 %v5243
    %7030 = vmatpush1.bf16.msra.mxu0 %v5242
    %7031 = vmatprep.subr.bf16.mxu0 %v5251
    %7032 = vmatpush1.bf16.msra.mxu0 %v5250
    %7033 = vmatprep.subr.bf16.mxu0 %v5259
    %7034 = vmatpush1.bf16.msra.mxu0 %v5258
    %7035 = vmatprep.subr.bf16.mxu0 %v5267
    %7036 = vmatpush1.bf16.msra.mxu0 %v5266
    %7037 = vmatprep.subr.bf16.mxu0 %v5275
    %7038 = vmatpush1.bf16.msra.mxu0 %v5274
    %7039 = vmatprep.subr.bf16.mxu0 %v5283
    %7040 = vmatpush1.bf16.msra.mxu0 %v5282
    %7041 = vmatprep.subr.bf16.mxu0 %v5291
    %7042 = vmatpush1.bf16.msra.mxu0 %v5290
    %7043 = vmatprep.subr.bf16.mxu0 %v5299
    %7044 = vmatpush1.bf16.msra.mxu0 %v5298
    %7045 = vmatprep.subr.bf16.mxu0 %v5307
    %7046 = vmatpush1.bf16.msra.mxu0 %v5306
    %7047 = vmatprep.subr.bf16.mxu0 %v5315
    %7048 = vmatpush1.bf16.msra.mxu0 %v5314
    %7049 = vmatprep.subr.bf16.mxu0 %v5323
    %7050 = vmatpush1.bf16.msra.mxu0 %v5322
    %7051 = vmatprep.subr.bf16.mxu0 %v5331
    %7052 = vmatpush1.bf16.msra.mxu0 %v5330
    %7053 = vmatprep.subr.bf16.mxu0 %v5339
    %7054 = vmatpush1.bf16.msra.mxu0 %v5338
    %7055 = vmatprep.subr.bf16.mxu0 %v5347
    %7056 = vmatpush1.bf16.msra.mxu0 %v5346
    %7057 = vmatprep.subr.bf16.mxu0 %v5355
    %7058 = vmatpush1.bf16.msra.mxu0 %v5354
    %7059 = vmatprep.subr.bf16.mxu0 %v5363
    %7060 = vmatpush1.bf16.msra.mxu0 %v5362
    %7061 = vmatprep.mubr.bf16.mxu0 %v711
    %7062 = vmatmul.mubr.bf16.gmra.mrb[0].mxu0 %v710
    %v7063 = vpop.f32.mrb[0].mxu0
    %v7064 = vadd.f32 %v7023, %v7063
    %v7065 = vpop.f32.mrb[0].mxu0
    %v7066 = vadd.f32 %v7025, %v7065
    %v7067 = vpop.f32.mrb[0].mxu0
    %v7068 = vpop.f32.mrb[0].mxu0
    %7069 = vdwg.mxu0
    %7070 = vmatprep.subr.bf16.mxu0 %v5371
    %7071 = vmatpush1.bf16.msra.mxu0 %v5370
    %7072 = vmatprep.subr.bf16.mxu0 %v5379
    %7073 = vmatpush1.bf16.msra.mxu0 %v5378
    %7074 = vmatprep.subr.bf16.mxu0 %v5387
    %7075 = vmatpush1.bf16.msra.mxu0 %v5386
    %7076 = vmatprep.subr.bf16.mxu0 %v5395
    %7077 = vmatpush1.bf16.msra.mxu0 %v5394
    %7078 = vmatprep.subr.bf16.mxu0 %v5403
    %7079 = vmatpush1.bf16.msra.mxu0 %v5402
    %7080 = vmatprep.subr.bf16.mxu0 %v5411
    %7081 = vmatpush1.bf16.msra.mxu0 %v5410
    %7082 = vmatprep.subr.bf16.mxu0 %v5419
    %7083 = vmatpush1.bf16.msra.mxu0 %v5418
    %7084 = vmatprep.subr.bf16.mxu0 %v5427
    %7085 = vmatpush1.bf16.msra.mxu0 %v5426
    %7086 = vmatprep.subr.bf16.mxu0 %v5435
    %7087 = vmatpush1.bf16.msra.mxu0 %v5434
    %7088 = vmatprep.subr.bf16.mxu0 %v5443
    %7089 = vmatpush1.bf16.msra.mxu0 %v5442
    %7090 = vmatprep.subr.bf16.mxu0 %v5451
    %7091 = vmatpush1.bf16.msra.mxu0 %v5450
    %7092 = vmatprep.subr.bf16.mxu0 %v5459
    %7093 = vmatpush1.bf16.msra.mxu0 %v5458
    %7094 = vmatprep.subr.bf16.mxu0 %v5467
    %7095 = vmatpush1.bf16.msra.mxu0 %v5466
    %7096 = vmatprep.subr.bf16.mxu0 %v5475
    %7097 = vmatpush1.bf16.msra.mxu0 %v5474
    %7098 = vmatprep.subr.bf16.mxu0 %v5483
    %7099 = vmatpush1.bf16.msra.mxu0 %v5482
    %7100 = vmatprep.subr.bf16.mxu0 %v5491
    %7101 = vmatpush1.bf16.msra.mxu0 %v5490
    %7102 = vmatprep.mubr.bf16.mxu0 %v713
    %7103 = vmatmul.mubr.bf16.gmra.mrb[0].mxu0 %v712
    %v7104 = vpop.f32.mrb[0].mxu0
    %v7105 = vadd.f32 %v7064, %v7104
    %v7106 = vpop.f32.mrb[0].mxu0
    %v7107 = vadd.f32 %v7066, %v7106
    %v7108 = vpop.f32.mrb[0].mxu0
    %v7109 = vpop.f32.mrb[0].mxu0
    %7110 = vdwg.mxu0
    %7111 = vmatprep.subr.bf16.mxu0 %v5499
    %7112 = vmatpush1.bf16.msra.mxu0 %v5498
    %7113 = vmatprep.subr.bf16.mxu0 %v5507
    %7114 = vmatpush1.bf16.msra.mxu0 %v5506
    %7115 = vmatprep.subr.bf16.mxu0 %v5515
    %7116 = vmatpush1.bf16.msra.mxu0 %v5514
    %7117 = vmatprep.subr.bf16.mxu0 %v5523
    %7118 = vmatpush1.bf16.msra.mxu0 %v5522
    %7119 = vmatprep.subr.bf16.mxu0 %v5531
    %7120 = vmatpush1.bf16.msra.mxu0 %v5530
    %7121 = vmatprep.subr.bf16.mxu0 %v5539
    %7122 = vmatpush1.bf16.msra.mxu0 %v5538
    %7123 = vmatprep.subr.bf16.mxu0 %v5547
    %7124 = vmatpush1.bf16.msra.mxu0 %v5546
    %7125 = vmatprep.subr.bf16.mxu0 %v5555
    %7126 = vmatpush1.bf16.msra.mxu0 %v5554
    %7127 = vmatprep.subr.bf16.mxu0 %v5563
    %7128 = vmatpush1.bf16.msra.mxu0 %v5562
    %7129 = vmatprep.subr.bf16.mxu0 %v5571
    %7130 = vmatpush1.bf16.msra.mxu0 %v5570
    %7131 = vmatprep.subr.bf16.mxu0 %v5579
    %7132 = vmatpush1.bf16.msra.mxu0 %v5578
    %7133 = vmatprep.subr.bf16.mxu0 %v5587
    %7134 = vmatpush1.bf16.msra.mxu0 %v5586
    %7135 = vmatprep.subr.bf16.mxu0 %v5595
    %7136 = vmatpush1.bf16.msra.mxu0 %v5594
    %7137 = vmatprep.subr.bf16.mxu0 %v5603
    %7138 = vmatpush1.bf16.msra.mxu0 %v5602
    %7139 = vmatprep.subr.bf16.mxu0 %v5611
    %7140 = vmatpush1.bf16.msra.mxu0 %v5610
    %7141 = vmatprep.subr.bf16.mxu0 %v5619
    %7142 = vmatpush1.bf16.msra.mxu0 %v5618
    %7143 = vmatprep.mubr.bf16.mxu0 %v715
    %7144 = vmatmul.mubr.bf16.gmra.mrb[0].mxu0 %v714
    %v7145 = vpop.f32.mrb[0].mxu0
    %v7146 = vadd.f32 %v7105, %v7145
    %v7147 = vpop.f32.mrb[0].mxu0
    %v7148 = vadd.f32 %v7107, %v7147
    %v7149 = vpop.f32.mrb[0].mxu0
    %v7150 = vpop.f32.mrb[0].mxu0
    %7151 = vdwg.mxu0
    %7152 = vmatprep.subr.bf16.mxu0 %v5627
    %7153 = vmatpush1.bf16.msra.mxu0 %v5626
    %7154 = vmatprep.subr.bf16.mxu0 %v5635
    %7155 = vmatpush1.bf16.msra.mxu0 %v5634
    %7156 = vmatprep.subr.bf16.mxu0 %v5643
    %7157 = vmatpush1.bf16.msra.mxu0 %v5642
    %7158 = vmatprep.subr.bf16.mxu0 %v5651
    %7159 = vmatpush1.bf16.msra.mxu0 %v5650
    %7160 = vmatprep.subr.bf16.mxu0 %v5659
    %7161 = vmatpush1.bf16.msra.mxu0 %v5658
    %7162 = vmatprep.subr.bf16.mxu0 %v5667
    %7163 = vmatpush1.bf16.msra.mxu0 %v5666
    %7164 = vmatprep.subr.bf16.mxu0 %v5675
    %7165 = vmatpush1.bf16.msra.mxu0 %v5674
    %7166 = vmatprep.subr.bf16.mxu0 %v5683
    %7167 = vmatpush1.bf16.msra.mxu0 %v5682
    %7168 = vmatprep.subr.bf16.mxu0 %v5691
    %7169 = vmatpush1.bf16.msra.mxu0 %v5690
    %7170 = vmatprep.subr.bf16.mxu0 %v5699
    %7171 = vmatpush1.bf16.msra.mxu0 %v5698
    %7172 = vmatprep.subr.bf16.mxu0 %v5707
    %7173 = vmatpush1.bf16.msra.mxu0 %v5706
    %7174 = vmatprep.subr.bf16.mxu0 %v5715
    %7175 = vmatpush1.bf16.msra.mxu0 %v5714
    %7176 = vmatprep.subr.bf16.mxu0 %v5723
    %7177 = vmatpush1.bf16.msra.mxu0 %v5722
    %7178 = vmatprep.subr.bf16.mxu0 %v5731
    %7179 = vmatpush1.bf16.msra.mxu0 %v5730
    %7180 = vmatprep.subr.bf16.mxu0 %v5739
    %7181 = vmatpush1.bf16.msra.mxu0 %v5738
    %7182 = vmatprep.subr.bf16.mxu0 %v5747
    %7183 = vmatpush1.bf16.msra.mxu0 %v5746
    %7184 = vmatprep.mubr.bf16.mxu0 %v717
    %7185 = vmatmul.mubr.bf16.gmra.mrb[0].mxu0 %v716
    %v7186 = vpop.f32.mrb[0].mxu0
    %v7187 = vadd.f32 %v7146, %v7186
    %v7188 = vpop.f32.mrb[0].mxu0
    %v7189 = vadd.f32 %v7148, %v7188
    %v7190 = vpop.f32.mrb[0].mxu0
    %v7191 = vpop.f32.mrb[0].mxu0
    %7192 = vdwg.mxu0
    %7193 = vmatprep.subr.bf16.mxu0 %v5755
    %7194 = vmatpush1.bf16.msra.mxu0 %v5754
    %7195 = vmatprep.subr.bf16.mxu0 %v5763
    %7196 = vmatpush1.bf16.msra.mxu0 %v5762
    %7197 = vmatprep.subr.bf16.mxu0 %v5771
    %7198 = vmatpush1.bf16.msra.mxu0 %v5770
    %7199 = vmatprep.subr.bf16.mxu0 %v5779
    %7200 = vmatpush1.bf16.msra.mxu0 %v5778
    %7201 = vmatprep.subr.bf16.mxu0 %v5787
    %7202 = vmatpush1.bf16.msra.mxu0 %v5786
    %7203 = vmatprep.subr.bf16.mxu0 %v5795
    %7204 = vmatpush1.bf16.msra.mxu0 %v5794
    %7205 = vmatprep.subr.bf16.mxu0 %v5803
    %7206 = vmatpush1.bf16.msra.mxu0 %v5802
    %7207 = vmatprep.subr.bf16.mxu0 %v5811
    %7208 = vmatpush1.bf16.msra.mxu0 %v5810
    %7209 = vmatprep.subr.bf16.mxu0 %v5819
    %7210 = vmatpush1.bf16.msra.mxu0 %v5818
    %7211 = vmatprep.subr.bf16.mxu0 %v5827
    %7212 = vmatpush1.bf16.msra.mxu0 %v5826
    %7213 = vmatprep.subr.bf16.mxu0 %v5835
    %7214 = vmatpush1.bf16.msra.mxu0 %v5834
    %7215 = vmatprep.subr.bf16.mxu0 %v5843
    %7216 = vmatpush1.bf16.msra.mxu0 %v5842
    %7217 = vmatprep.subr.bf16.mxu0 %v5851
    %7218 = vmatpush1.bf16.msra.mxu0 %v5850
    %7219 = vmatprep.subr.bf16.mxu0 %v5859
    %7220 = vmatpush1.bf16.msra.mxu0 %v5858
    %7221 = vmatprep.subr.bf16.mxu0 %v5867
    %7222 = vmatpush1.bf16.msra.mxu0 %v5866
    %7223 = vmatprep.subr.bf16.mxu0 %v5875
    %7224 = vmatpush1.bf16.msra.mxu0 %v5874
    %7225 = vmatprep.mubr.bf16.mxu0 %v719
    %7226 = vmatmul.mubr.bf16.gmra.mrb[0].mxu0 %v718
    %v7227 = vpop.f32.mrb[0].mxu0
    %v7228 = vadd.f32 %v7187, %v7227
    %v7229 = vpop.f32.mrb[0].mxu0
    %v7230 = vadd.f32 %v7189, %v7229
    %v7231 = vpop.f32.mrb[0].mxu0
    %v7232 = vpop.f32.mrb[0].mxu0
    %7233 = vdwg.mxu0
    %7234 = vmatprep.subr.bf16.mxu0 %v4861
    %7235 = vmatpush1.bf16.msra.mxu0 %v4860
    %7236 = vmatprep.subr.bf16.mxu0 %v4869
    %7237 = vmatpush1.bf16.msra.mxu0 %v4868
    %7238 = vmatprep.subr.bf16.mxu0 %v4877
    %7239 = vmatpush1.bf16.msra.mxu0 %v4876
    %7240 = vmatprep.subr.bf16.mxu0 %v4885
    %7241 = vmatpush1.bf16.msra.mxu0 %v4884
    %7242 = vmatprep.subr.bf16.mxu0 %v4893
    %7243 = vmatpush1.bf16.msra.mxu0 %v4892
    %7244 = vmatprep.subr.bf16.mxu0 %v4901
    %7245 = vmatpush1.bf16.msra.mxu0 %v4900
    %7246 = vmatprep.subr.bf16.mxu0 %v4909
    %7247 = vmatpush1.bf16.msra.mxu0 %v4908
    %7248 = vmatprep.subr.bf16.mxu0 %v4917
    %7249 = vmatpush1.bf16.msra.mxu0 %v4916
    %7250 = vmatprep.subr.bf16.mxu0 %v4925
    %7251 = vmatpush1.bf16.msra.mxu0 %v4924
    %7252 = vmatprep.subr.bf16.mxu0 %v4933
    %7253 = vmatpush1.bf16.msra.mxu0 %v4932
    %7254 = vmatprep.subr.bf16.mxu0 %v4941
    %7255 = vmatpush1.bf16.msra.mxu0 %v4940
    %7256 = vmatprep.subr.bf16.mxu0 %v4949
    %7257 = vmatpush1.bf16.msra.mxu0 %v4948
    %7258 = vmatprep.subr.bf16.mxu0 %v4957
    %7259 = vmatpush1.bf16.msra.mxu0 %v4956
    %7260 = vmatprep.subr.bf16.mxu0 %v4965
    %7261 = vmatpush1.bf16.msra.mxu0 %v4964
    %7262 = vmatprep.subr.bf16.mxu0 %v4973
    %7263 = vmatpush1.bf16.msra.mxu0 %v4972
    %7264 = vmatprep.subr.bf16.mxu0 %v4981
    %7265 = vmatpush1.bf16.msra.mxu0 %v4980
    %7266 = vmatprep.mubr.bf16.mxu0 %v705
    %7267 = vmatmul.mubr.bf16.gmra.mrb[0].mxu0 %v704
    %v7268 = vpop.f32.mrb[0].mxu0
    %v7269 = vadd.f32 %v1757, %v7268
    %v7270 = vpop.f32.mrb[0].mxu0
    %v7271 = vadd.f32 %v1761, %v7270
    %v7272 = vpop.f32.mrb[0].mxu0
    %v7273 = vpop.f32.mrb[0].mxu0
    %7274 = vdwg.mxu0
    %7275 = vmatprep.subr.bf16.mxu0 %v4989
    %7276 = vmatpush1.bf16.msra.mxu0 %v4988
    %7277 = vmatprep.subr.bf16.mxu0 %v4997
    %7278 = vmatpush1.bf16.msra.mxu0 %v4996
    %7279 = vmatprep.subr.bf16.mxu0 %v5005
    %7280 = vmatpush1.bf16.msra.mxu0 %v5004
    %7281 = vmatprep.subr.bf16.mxu0 %v5013
    %7282 = vmatpush1.bf16.msra.mxu0 %v5012
    %7283 = vmatprep.subr.bf16.mxu0 %v5021
    %7284 = vmatpush1.bf16.msra.mxu0 %v5020
    %7285 = vmatprep.subr.bf16.mxu0 %v5029
    %7286 = vmatpush1.bf16.msra.mxu0 %v5028
    %7287 = vmatprep.subr.bf16.mxu0 %v5037
    %7288 = vmatpush1.bf16.msra.mxu0 %v5036
    %7289 = vmatprep.subr.bf16.mxu0 %v5045
    %7290 = vmatpush1.bf16.msra.mxu0 %v5044
    %7291 = vmatprep.subr.bf16.mxu0 %v5053
    %7292 = vmatpush1.bf16.msra.mxu0 %v5052
    %7293 = vmatprep.subr.bf16.mxu0 %v5061
    %7294 = vmatpush1.bf16.msra.mxu0 %v5060
    %7295 = vmatprep.subr.bf16.mxu0 %v5069
    %7296 = vmatpush1.bf16.msra.mxu0 %v5068
    %7297 = vmatprep.subr.bf16.mxu0 %v5077
    %7298 = vmatpush1.bf16.msra.mxu0 %v5076
    %7299 = vmatprep.subr.bf16.mxu0 %v5085
    %7300 = vmatpush1.bf16.msra.mxu0 %v5084
    %7301 = vmatprep.subr.bf16.mxu0 %v5093
    %7302 = vmatpush1.bf16.msra.mxu0 %v5092
    %7303 = vmatprep.subr.bf16.mxu0 %v5101
    %7304 = vmatpush1.bf16.msra.mxu0 %v5100
    %7305 = vmatprep.subr.bf16.mxu0 %v5109
    %7306 = vmatpush1.bf16.msra.mxu0 %v5108
    %7307 = vmatprep.mubr.bf16.mxu0 %v707
    %7308 = vmatmul.mubr.bf16.gmra.mrb[0].mxu0 %v706
    %v7309 = vpop.f32.mrb[0].mxu0
    %v7310 = vadd.f32 %v7269, %v7309
    %v7311 = vpop.f32.mrb[0].mxu0
    %v7312 = vadd.f32 %v7271, %v7311
    %v7313 = vpop.f32.mrb[0].mxu0
    %v7314 = vpop.f32.mrb[0].mxu0
    %7315 = vdwg.mxu0
    %7316 = vmatprep.subr.bf16.mxu0 %v5117
    %7317 = vmatpush1.bf16.msra.mxu0 %v5116
    %7318 = vmatprep.subr.bf16.mxu0 %v5125
    %7319 = vmatpush1.bf16.msra.mxu0 %v5124
    %7320 = vmatprep.subr.bf16.mxu0 %v5133
    %7321 = vmatpush1.bf16.msra.mxu0 %v5132
    %7322 = vmatprep.subr.bf16.mxu0 %v5141
    %7323 = vmatpush1.bf16.msra.mxu0 %v5140
    %7324 = vmatprep.subr.bf16.mxu0 %v5149
    %7325 = vmatpush1.bf16.msra.mxu0 %v5148
    %7326 = vmatprep.subr.bf16.mxu0 %v5157
    %7327 = vmatpush1.bf16.msra.mxu0 %v5156
    %7328 = vmatprep.subr.bf16.mxu0 %v5165
    %7329 = vmatpush1.bf16.msra.mxu0 %v5164
    %7330 = vmatprep.subr.bf16.mxu0 %v5173
    %7331 = vmatpush1.bf16.msra.mxu0 %v5172
    %7332 = vmatprep.subr.bf16.mxu0 %v5181
    %7333 = vmatpush1.bf16.msra.mxu0 %v5180
    %7334 = vmatprep.subr.bf16.mxu0 %v5189
    %7335 = vmatpush1.bf16.msra.mxu0 %v5188
    %7336 = vmatprep.subr.bf16.mxu0 %v5197
    %7337 = vmatpush1.bf16.msra.mxu0 %v5196
    %7338 = vmatprep.subr.bf16.mxu0 %v5205
    %7339 = vmatpush1.bf16.msra.mxu0 %v5204
    %7340 = vmatprep.subr.bf16.mxu0 %v5213
    %7341 = vmatpush1.bf16.msra.mxu0 %v5212
    %7342 = vmatprep.subr.bf16.mxu0 %v5221
    %7343 = vmatpush1.bf16.msra.mxu0 %v5220
    %7344 = vmatprep.subr.bf16.mxu0 %v5229
    %7345 = vmatpush1.bf16.msra.mxu0 %v5228
    %7346 = vmatprep.subr.bf16.mxu0 %v5237
    %7347 = vmatpush1.bf16.msra.mxu0 %v5236
    %7348 = vmatprep.mubr.bf16.mxu0 %v709
    %7349 = vmatmul.mubr.bf16.gmra.mrb[0].mxu0 %v708
    %v7350 = vpop.f32.mrb[0].mxu0
    %v7351 = vadd.f32 %v7310, %v7350
    %v7352 = vpop.f32.mrb[0].mxu0
    %v7353 = vadd.f32 %v7312, %v7352
    %v7354 = vpop.f32.mrb[0].mxu0
    %v7355 = vpop.f32.mrb[0].mxu0
    %7356 = vdwg.mxu0
    %7357 = vmatprep.subr.bf16.mxu0 %v5245
    %7358 = vmatpush1.bf16.msra.mxu0 %v5244
    %7359 = vmatprep.subr.bf16.mxu0 %v5253
    %7360 = vmatpush1.bf16.msra.mxu0 %v5252
    %7361 = vmatprep.subr.bf16.mxu0 %v5261
    %7362 = vmatpush1.bf16.msra.mxu0 %v5260
    %7363 = vmatprep.subr.bf16.mxu0 %v5269
    %7364 = vmatpush1.bf16.msra.mxu0 %v5268
    %7365 = vmatprep.subr.bf16.mxu0 %v5277
    %7366 = vmatpush1.bf16.msra.mxu0 %v5276
    %7367 = vmatprep.subr.bf16.mxu0 %v5285
    %7368 = vmatpush1.bf16.msra.mxu0 %v5284
    %7369 = vmatprep.subr.bf16.mxu0 %v5293
    %7370 = vmatpush1.bf16.msra.mxu0 %v5292
    %7371 = vmatprep.subr.bf16.mxu0 %v5301
    %7372 = vmatpush1.bf16.msra.mxu0 %v5300
    %7373 = vmatprep.subr.bf16.mxu0 %v5309
    %7374 = vmatpush1.bf16.msra.mxu0 %v5308
    %7375 = vmatprep.subr.bf16.mxu0 %v5317
    %7376 = vmatpush1.bf16.msra.mxu0 %v5316
    %7377 = vmatprep.subr.bf16.mxu0 %v5325
    %7378 = vmatpush1.bf16.msra.mxu0 %v5324
    %7379 = vmatprep.subr.bf16.mxu0 %v5333
    %7380 = vmatpush1.bf16.msra.mxu0 %v5332
    %7381 = vmatprep.subr.bf16.mxu0 %v5341
    %7382 = vmatpush1.bf16.msra.mxu0 %v5340
    %7383 = vmatprep.subr.bf16.mxu0 %v5349
    %7384 = vmatpush1.bf16.msra.mxu0 %v5348
    %7385 = vmatprep.subr.bf16.mxu0 %v5357
    %7386 = vmatpush1.bf16.msra.mxu0 %v5356
    %7387 = vmatprep.subr.bf16.mxu0 %v5365
    %7388 = vmatpush1.bf16.msra.mxu0 %v5364
    %7389 = vmatprep.mubr.bf16.mxu0 %v711
    %7390 = vmatmul.mubr.bf16.gmra.mrb[0].mxu0 %v710
    %v7391 = vpop.f32.mrb[0].mxu0
    %v7392 = vadd.f32 %v7351, %v7391
    %v7393 = vpop.f32.mrb[0].mxu0
    %v7394 = vadd.f32 %v7353, %v7393
    %v7395 = vpop.f32.mrb[0].mxu0
    %v7396 = vpop.f32.mrb[0].mxu0
    %7397 = vdwg.mxu0
    %7398 = vmatprep.subr.bf16.mxu0 %v5373
    %7399 = vmatpush1.bf16.msra.mxu0 %v5372
    %7400 = vmatprep.subr.bf16.mxu0 %v5381
    %7401 = vmatpush1.bf16.msra.mxu0 %v5380
    %7402 = vmatprep.subr.bf16.mxu0 %v5389
    %7403 = vmatpush1.bf16.msra.mxu0 %v5388
    %7404 = vmatprep.subr.bf16.mxu0 %v5397
    %7405 = vmatpush1.bf16.msra.mxu0 %v5396
    %7406 = vmatprep.subr.bf16.mxu0 %v5405
    %7407 = vmatpush1.bf16.msra.mxu0 %v5404
    %7408 = vmatprep.subr.bf16.mxu0 %v5413
    %7409 = vmatpush1.bf16.msra.mxu0 %v5412
    %7410 = vmatprep.subr.bf16.mxu0 %v5421
    %7411 = vmatpush1.bf16.msra.mxu0 %v5420
    %7412 = vmatprep.subr.bf16.mxu0 %v5429
    %7413 = vmatpush1.bf16.msra.mxu0 %v5428
    %7414 = vmatprep.subr.bf16.mxu0 %v5437
    %7415 = vmatpush1.bf16.msra.mxu0 %v5436
    %7416 = vmatprep.subr.bf16.mxu0 %v5445
    %7417 = vmatpush1.bf16.msra.mxu0 %v5444
    %7418 = vmatprep.subr.bf16.mxu0 %v5453
    %7419 = vmatpush1.bf16.msra.mxu0 %v5452
    %7420 = vmatprep.subr.bf16.mxu0 %v5461
    %7421 = vmatpush1.bf16.msra.mxu0 %v5460
    %7422 = vmatprep.subr.bf16.mxu0 %v5469
    %7423 = vmatpush1.bf16.msra.mxu0 %v5468
    %7424 = vmatprep.subr.bf16.mxu0 %v5477
    %7425 = vmatpush1.bf16.msra.mxu0 %v5476
    %7426 = vmatprep.subr.bf16.mxu0 %v5485
    %7427 = vmatpush1.bf16.msra.mxu0 %v5484
    %7428 = vmatprep.subr.bf16.mxu0 %v5493
    %7429 = vmatpush1.bf16.msra.mxu0 %v5492
    %7430 = vmatprep.mubr.bf16.mxu0 %v713
    %7431 = vmatmul.mubr.bf16.gmra.mrb[0].mxu0 %v712
    %v7432 = vpop.f32.mrb[0].mxu0
    %v7433 = vadd.f32 %v7392, %v7432
    %v7434 = vpop.f32.mrb[0].mxu0
    %v7435 = vadd.f32 %v7394, %v7434
    %v7436 = vpop.f32.mrb[0].mxu0
    %v7437 = vpop.f32.mrb[0].mxu0
    %7438 = vdwg.mxu0
    %7439 = vmatprep.subr.bf16.mxu0 %v5501
    %7440 = vmatpush1.bf16.msra.mxu0 %v5500
    %7441 = vmatprep.subr.bf16.mxu0 %v5509
    %7442 = vmatpush1.bf16.msra.mxu0 %v5508
    %7443 = vmatprep.subr.bf16.mxu0 %v5517
    %7444 = vmatpush1.bf16.msra.mxu0 %v5516
    %7445 = vmatprep.subr.bf16.mxu0 %v5525
    %7446 = vmatpush1.bf16.msra.mxu0 %v5524
    %7447 = vmatprep.subr.bf16.mxu0 %v5533
    %7448 = vmatpush1.bf16.msra.mxu0 %v5532
    %7449 = vmatprep.subr.bf16.mxu0 %v5541
    %7450 = vmatpush1.bf16.msra.mxu0 %v5540
    %7451 = vmatprep.subr.bf16.mxu0 %v5549
    %7452 = vmatpush1.bf16.msra.mxu0 %v5548
    %7453 = vmatprep.subr.bf16.mxu0 %v5557
    %7454 = vmatpush1.bf16.msra.mxu0 %v5556
    %7455 = vmatprep.subr.bf16.mxu0 %v5565
    %7456 = vmatpush1.bf16.msra.mxu0 %v5564
    %7457 = vmatprep.subr.bf16.mxu0 %v5573
    %7458 = vmatpush1.bf16.msra.mxu0 %v5572
    %7459 = vmatprep.subr.bf16.mxu0 %v5581
    %7460 = vmatpush1.bf16.msra.mxu0 %v5580
    %7461 = vmatprep.subr.bf16.mxu0 %v5589
    %7462 = vmatpush1.bf16.msra.mxu0 %v5588
    %7463 = vmatprep.subr.bf16.mxu0 %v5597
    %7464 = vmatpush1.bf16.msra.mxu0 %v5596
    %7465 = vmatprep.subr.bf16.mxu0 %v5605
    %7466 = vmatpush1.bf16.msra.mxu0 %v5604
    %7467 = vmatprep.subr.bf16.mxu0 %v5613
    %7468 = vmatpush1.bf16.msra.mxu0 %v5612
    %7469 = vmatprep.subr.bf16.mxu0 %v5621
    %7470 = vmatpush1.bf16.msra.mxu0 %v5620
    %7471 = vmatprep.mubr.bf16.mxu0 %v715
    %7472 = vmatmul.mubr.bf16.gmra.mrb[0].mxu0 %v714
    %v7473 = vpop.f32.mrb[0].mxu0
    %v7474 = vadd.f32 %v7433, %v7473
    %v7475 = vpop.f32.mrb[0].mxu0
    %v7476 = vadd.f32 %v7435, %v7475
    %v7477 = vpop.f32.mrb[0].mxu0
    %v7478 = vpop.f32.mrb[0].mxu0
    %7479 = vdwg.mxu0
    %7480 = vmatprep.subr.bf16.mxu0 %v5629
    %7481 = vmatpush1.bf16.msra.mxu0 %v5628
    %7482 = vmatprep.subr.bf16.mxu0 %v5637
    %7483 = vmatpush1.bf16.msra.mxu0 %v5636
    %7484 = vmatprep.subr.bf16.mxu0 %v5645
    %7485 = vmatpush1.bf16.msra.mxu0 %v5644
    %7486 = vmatprep.subr.bf16.mxu0 %v5653
    %7487 = vmatpush1.bf16.msra.mxu0 %v5652
    %7488 = vmatprep.subr.bf16.mxu0 %v5661
    %7489 = vmatpush1.bf16.msra.mxu0 %v5660
    %7490 = vmatprep.subr.bf16.mxu0 %v5669
    %7491 = vmatpush1.bf16.msra.mxu0 %v5668
    %7492 = vmatprep.subr.bf16.mxu0 %v5677
    %7493 = vmatpush1.bf16.msra.mxu0 %v5676
    %7494 = vmatprep.subr.bf16.mxu0 %v5685
    %7495 = vmatpush1.bf16.msra.mxu0 %v5684
    %7496 = vmatprep.subr.bf16.mxu0 %v5693
    %7497 = vmatpush1.bf16.msra.mxu0 %v5692
    %7498 = vmatprep.subr.bf16.mxu0 %v5701
    %7499 = vmatpush1.bf16.msra.mxu0 %v5700
    %7500 = vmatprep.subr.bf16.mxu0 %v5709
    %7501 = vmatpush1.bf16.msra.mxu0 %v5708
    %7502 = vmatprep.subr.bf16.mxu0 %v5717
    %7503 = vmatpush1.bf16.msra.mxu0 %v5716
    %7504 = vmatprep.subr.bf16.mxu0 %v5725
    %7505 = vmatpush1.bf16.msra.mxu0 %v5724
    %7506 = vmatprep.subr.bf16.mxu0 %v5733
    %7507 = vmatpush1.bf16.msra.mxu0 %v5732
    %7508 = vmatprep.subr.bf16.mxu0 %v5741
    %7509 = vmatpush1.bf16.msra.mxu0 %v5740
    %7510 = vmatprep.subr.bf16.mxu0 %v5749
    %7511 = vmatpush1.bf16.msra.mxu0 %v5748
    %7512 = vmatprep.mubr.bf16.mxu0 %v717
    %7513 = vmatmul.mubr.bf16.gmra.mrb[0].mxu0 %v716
    %v7514 = vpop.f32.mrb[0].mxu0
    %v7515 = vadd.f32 %v7474, %v7514
    %v7516 = vpop.f32.mrb[0].mxu0
    %v7517 = vadd.f32 %v7476, %v7516
    %v7518 = vpop.f32.mrb[0].mxu0
    %v7519 = vpop.f32.mrb[0].mxu0
    %7520 = vdwg.mxu0
    %7521 = vmatprep.subr.bf16.mxu0 %v5757
    %7522 = vmatpush1.bf16.msra.mxu0 %v5756
    %7523 = vmatprep.subr.bf16.mxu0 %v5765
    %7524 = vmatpush1.bf16.msra.mxu0 %v5764
    %7525 = vmatprep.subr.bf16.mxu0 %v5773
    %7526 = vmatpush1.bf16.msra.mxu0 %v5772
    %7527 = vmatprep.subr.bf16.mxu0 %v5781
    %7528 = vmatpush1.bf16.msra.mxu0 %v5780
    %7529 = vmatprep.subr.bf16.mxu0 %v5789
    %7530 = vmatpush1.bf16.msra.mxu0 %v5788
    %7531 = vmatprep.subr.bf16.mxu0 %v5797
    %7532 = vmatpush1.bf16.msra.mxu0 %v5796
    %7533 = vmatprep.subr.bf16.mxu0 %v5805
    %7534 = vmatpush1.bf16.msra.mxu0 %v5804
    %7535 = vmatprep.subr.bf16.mxu0 %v5813
    %7536 = vmatpush1.bf16.msra.mxu0 %v5812
    %7537 = vmatprep.subr.bf16.mxu0 %v5821
    %7538 = vmatpush1.bf16.msra.mxu0 %v5820
    %7539 = vmatprep.subr.bf16.mxu0 %v5829
    %7540 = vmatpush1.bf16.msra.mxu0 %v5828
    %7541 = vmatprep.subr.bf16.mxu0 %v5837
    %7542 = vmatpush1.bf16.msra.mxu0 %v5836
    %7543 = vmatprep.subr.bf16.mxu0 %v5845
    %7544 = vmatpush1.bf16.msra.mxu0 %v5844
    %7545 = vmatprep.subr.bf16.mxu0 %v5853
    %7546 = vmatpush1.bf16.msra.mxu0 %v5852
    %7547 = vmatprep.subr.bf16.mxu0 %v5861
    %7548 = vmatpush1.bf16.msra.mxu0 %v5860
    %7549 = vmatprep.subr.bf16.mxu0 %v5869
    %7550 = vmatpush1.bf16.msra.mxu0 %v5868
    %7551 = vmatprep.subr.bf16.mxu0 %v5877
    %7552 = vmatpush1.bf16.msra.mxu0 %v5876
    %7553 = vmatprep.mubr.bf16.mxu0 %v719
    %7554 = vmatmul.mubr.bf16.gmra.mrb[0].mxu0 %v718
    %v7555 = vpop.f32.mrb[0].mxu0
    %v7556 = vadd.f32 %v7515, %v7555
    %v7557 = vpop.f32.mrb[0].mxu0
    %v7558 = vadd.f32 %v7517, %v7557
    %v7559 = vpop.f32.mrb[0].mxu0
    %v7560 = vpop.f32.mrb[0].mxu0
    %7561 = vdwg.mxu0
    %7562 = vmatprep.subr.bf16.mxu0 %v4863
    %7563 = vmatpush1.bf16.msra.mxu0 %v4862
    %7564 = vmatprep.subr.bf16.mxu0 %v4871
    %7565 = vmatpush1.bf16.msra.mxu0 %v4870
    %7566 = vmatprep.subr.bf16.mxu0 %v4879
    %7567 = vmatpush1.bf16.msra.mxu0 %v4878
    %7568 = vmatprep.subr.bf16.mxu0 %v4887
    %7569 = vmatpush1.bf16.msra.mxu0 %v4886
    %7570 = vmatprep.subr.bf16.mxu0 %v4895
    %7571 = vmatpush1.bf16.msra.mxu0 %v4894
    %7572 = vmatprep.subr.bf16.mxu0 %v4903
    %7573 = vmatpush1.bf16.msra.mxu0 %v4902
    %7574 = vmatprep.subr.bf16.mxu0 %v4911
    %7575 = vmatpush1.bf16.msra.mxu0 %v4910
    %7576 = vmatprep.subr.bf16.mxu0 %v4919
    %7577 = vmatpush1.bf16.msra.mxu0 %v4918
    %7578 = vmatprep.subr.bf16.mxu0 %v4927
    %7579 = vmatpush1.bf16.msra.mxu0 %v4926
    %7580 = vmatprep.subr.bf16.mxu0 %v4935
    %7581 = vmatpush1.bf16.msra.mxu0 %v4934
    %7582 = vmatprep.subr.bf16.mxu0 %v4943
    %7583 = vmatpush1.bf16.msra.mxu0 %v4942
    %7584 = vmatprep.subr.bf16.mxu0 %v4951
    %7585 = vmatpush1.bf16.msra.mxu0 %v4950
    %7586 = vmatprep.subr.bf16.mxu0 %v4959
    %7587 = vmatpush1.bf16.msra.mxu0 %v4958
    %7588 = vmatprep.subr.bf16.mxu0 %v4967
    %7589 = vmatpush1.bf16.msra.mxu0 %v4966
    %7590 = vmatprep.subr.bf16.mxu0 %v4975
    %7591 = vmatpush1.bf16.msra.mxu0 %v4974
    %7592 = vmatprep.subr.bf16.mxu0 %v4983
    %7593 = vmatpush1.bf16.msra.mxu0 %v4982
    %7594 = vmatprep.mubr.bf16.mxu0 %v705
    %7595 = vmatmul.mubr.bf16.gmra.mrb[0].mxu0 %v704
    %v7596 = vpop.f32.mrb[0].mxu0
    %v7597 = vadd.f32 %v1765, %v7596
    %v7598 = vpop.f32.mrb[0].mxu0
    %v7599 = vadd.f32 %v1769, %v7598
    %v7600 = vpop.f32.mrb[0].mxu0
    %v7601 = vpop.f32.mrb[0].mxu0
    %7602 = vdwg.mxu0
    %7603 = vmatprep.subr.bf16.mxu0 %v4991
    %7604 = vmatpush1.bf16.msra.mxu0 %v4990
    %7605 = vmatprep.subr.bf16.mxu0 %v4999
    %7606 = vmatpush1.bf16.msra.mxu0 %v4998
    %7607 = vmatprep.subr.bf16.mxu0 %v5007
    %7608 = vmatpush1.bf16.msra.mxu0 %v5006
    %7609 = vmatprep.subr.bf16.mxu0 %v5015
    %7610 = vmatpush1.bf16.msra.mxu0 %v5014
    %7611 = vmatprep.subr.bf16.mxu0 %v5023
    %7612 = vmatpush1.bf16.msra.mxu0 %v5022
    %7613 = vmatprep.subr.bf16.mxu0 %v5031
    %7614 = vmatpush1.bf16.msra.mxu0 %v5030
    %7615 = vmatprep.subr.bf16.mxu0 %v5039
    %7616 = vmatpush1.bf16.msra.mxu0 %v5038
    %7617 = vmatprep.subr.bf16.mxu0 %v5047
    %7618 = vmatpush1.bf16.msra.mxu0 %v5046
    %7619 = vmatprep.subr.bf16.mxu0 %v5055
    %7620 = vmatpush1.bf16.msra.mxu0 %v5054
    %7621 = vmatprep.subr.bf16.mxu0 %v5063
    %7622 = vmatpush1.bf16.msra.mxu0 %v5062
    %7623 = vmatprep.subr.bf16.mxu0 %v5071
    %7624 = vmatpush1.bf16.msra.mxu0 %v5070
    %7625 = vmatprep.subr.bf16.mxu0 %v5079
    %7626 = vmatpush1.bf16.msra.mxu0 %v5078
    %7627 = vmatprep.subr.bf16.mxu0 %v5087
    %7628 = vmatpush1.bf16.msra.mxu0 %v5086
    %7629 = vmatprep.subr.bf16.mxu0 %v5095
    %7630 = vmatpush1.bf16.msra.mxu0 %v5094
    %7631 = vmatprep.subr.bf16.mxu0 %v5103
    %7632 = vmatpush1.bf16.msra.mxu0 %v5102
    %7633 = vmatprep.subr.bf16.mxu0 %v5111
    %7634 = vmatpush1.bf16.msra.mxu0 %v5110
    %7635 = vmatprep.mubr.bf16.mxu0 %v707
    %7636 = vmatmul.mubr.bf16.gmra.mrb[0].mxu0 %v706
    %v7637 = vpop.f32.mrb[0].mxu0
    %v7638 = vadd.f32 %v7597, %v7637
    %v7639 = vpop.f32.mrb[0].mxu0
    %v7640 = vadd.f32 %v7599, %v7639
    %v7641 = vpop.f32.mrb[0].mxu0
    %v7642 = vpop.f32.mrb[0].mxu0
    %7643 = vdwg.mxu0
    %7644 = vmatprep.subr.bf16.mxu0 %v5119
    %7645 = vmatpush1.bf16.msra.mxu0 %v5118
    %7646 = vmatprep.subr.bf16.mxu0 %v5127
    %7647 = vmatpush1.bf16.msra.mxu0 %v5126
    %7648 = vmatprep.subr.bf16.mxu0 %v5135
    %7649 = vmatpush1.bf16.msra.mxu0 %v5134
    %7650 = vmatprep.subr.bf16.mxu0 %v5143
    %7651 = vmatpush1.bf16.msra.mxu0 %v5142
    %7652 = vmatprep.subr.bf16.mxu0 %v5151
    %7653 = vmatpush1.bf16.msra.mxu0 %v5150
    %7654 = vmatprep.subr.bf16.mxu0 %v5159
    %7655 = vmatpush1.bf16.msra.mxu0 %v5158
    %7656 = vmatprep.subr.bf16.mxu0 %v5167
    %7657 = vmatpush1.bf16.msra.mxu0 %v5166
    %7658 = vmatprep.subr.bf16.mxu0 %v5175
    %7659 = vmatpush1.bf16.msra.mxu0 %v5174
    %7660 = vmatprep.subr.bf16.mxu0 %v5183
    %7661 = vmatpush1.bf16.msra.mxu0 %v5182
    %7662 = vmatprep.subr.bf16.mxu0 %v5191
    %7663 = vmatpush1.bf16.msra.mxu0 %v5190
    %7664 = vmatprep.subr.bf16.mxu0 %v5199
    %7665 = vmatpush1.bf16.msra.mxu0 %v5198
    %7666 = vmatprep.subr.bf16.mxu0 %v5207
    %7667 = vmatpush1.bf16.msra.mxu0 %v5206
    %7668 = vmatprep.subr.bf16.mxu0 %v5215
    %7669 = vmatpush1.bf16.msra.mxu0 %v5214
    %7670 = vmatprep.subr.bf16.mxu0 %v5223
    %7671 = vmatpush1.bf16.msra.mxu0 %v5222
    %7672 = vmatprep.subr.bf16.mxu0 %v5231
    %7673 = vmatpush1.bf16.msra.mxu0 %v5230
    %7674 = vmatprep.subr.bf16.mxu0 %v5239
    %7675 = vmatpush1.bf16.msra.mxu0 %v5238
    %7676 = vmatprep.mubr.bf16.mxu0 %v709
    %7677 = vmatmul.mubr.bf16.gmra.mrb[0].mxu0 %v708
    %v7678 = vpop.f32.mrb[0].mxu0
    %v7679 = vadd.f32 %v7638, %v7678
    %v7680 = vpop.f32.mrb[0].mxu0
    %v7681 = vadd.f32 %v7640, %v7680
    %v7682 = vpop.f32.mrb[0].mxu0
    %v7683 = vpop.f32.mrb[0].mxu0
    %7684 = vdwg.mxu0
    %7685 = vmatprep.subr.bf16.mxu0 %v5247
    %7686 = vmatpush1.bf16.msra.mxu0 %v5246
    %7687 = vmatprep.subr.bf16.mxu0 %v5255
    %7688 = vmatpush1.bf16.msra.mxu0 %v5254
    %7689 = vmatprep.subr.bf16.mxu0 %v5263
    %7690 = vmatpush1.bf16.msra.mxu0 %v5262
    %7691 = vmatprep.subr.bf16.mxu0 %v5271
    %7692 = vmatpush1.bf16.msra.mxu0 %v5270
    %7693 = vmatprep.subr.bf16.mxu0 %v5279
    %7694 = vmatpush1.bf16.msra.mxu0 %v5278
    %7695 = vmatprep.subr.bf16.mxu0 %v5287
    %7696 = vmatpush1.bf16.msra.mxu0 %v5286
    %7697 = vmatprep.subr.bf16.mxu0 %v5295
    %7698 = vmatpush1.bf16.msra.mxu0 %v5294
    %7699 = vmatprep.subr.bf16.mxu0 %v5303
    %7700 = vmatpush1.bf16.msra.mxu0 %v5302
    %7701 = vmatprep.subr.bf16.mxu0 %v5311
    %7702 = vmatpush1.bf16.msra.mxu0 %v5310
    %7703 = vmatprep.subr.bf16.mxu0 %v5319
    %7704 = vmatpush1.bf16.msra.mxu0 %v5318
    %7705 = vmatprep.subr.bf16.mxu0 %v5327
    %7706 = vmatpush1.bf16.msra.mxu0 %v5326
    %7707 = vmatprep.subr.bf16.mxu0 %v5335
    %7708 = vmatpush1.bf16.msra.mxu0 %v5334
    %7709 = vmatprep.subr.bf16.mxu0 %v5343
    %7710 = vmatpush1.bf16.msra.mxu0 %v5342
    %7711 = vmatprep.subr.bf16.mxu0 %v5351
    %7712 = vmatpush1.bf16.msra.mxu0 %v5350
    %7713 = vmatprep.subr.bf16.mxu0 %v5359
    %7714 = vmatpush1.bf16.msra.mxu0 %v5358
    %7715 = vmatprep.subr.bf16.mxu0 %v5367
    %7716 = vmatpush1.bf16.msra.mxu0 %v5366
    %7717 = vmatprep.mubr.bf16.mxu0 %v711
    %7718 = vmatmul.mubr.bf16.gmra.mrb[0].mxu0 %v710
    %v7719 = vpop.f32.mrb[0].mxu0
    %v7720 = vadd.f32 %v7679, %v7719
    %v7721 = vpop.f32.mrb[0].mxu0
    %v7722 = vadd.f32 %v7681, %v7721
    %v7723 = vpop.f32.mrb[0].mxu0
    %v7724 = vpop.f32.mrb[0].mxu0
    %7725 = vdwg.mxu0
    %7726 = vmatprep.subr.bf16.mxu0 %v5375
    %7727 = vmatpush1.bf16.msra.mxu0 %v5374
    %7728 = vmatprep.subr.bf16.mxu0 %v5383
    %7729 = vmatpush1.bf16.msra.mxu0 %v5382
    %7730 = vmatprep.subr.bf16.mxu0 %v5391
    %7731 = vmatpush1.bf16.msra.mxu0 %v5390
    %7732 = vmatprep.subr.bf16.mxu0 %v5399
    %7733 = vmatpush1.bf16.msra.mxu0 %v5398
    %7734 = vmatprep.subr.bf16.mxu0 %v5407
    %7735 = vmatpush1.bf16.msra.mxu0 %v5406
    %7736 = vmatprep.subr.bf16.mxu0 %v5415
    %7737 = vmatpush1.bf16.msra.mxu0 %v5414
    %7738 = vmatprep.subr.bf16.mxu0 %v5423
    %7739 = vmatpush1.bf16.msra.mxu0 %v5422
    %7740 = vmatprep.subr.bf16.mxu0 %v5431
    %7741 = vmatpush1.bf16.msra.mxu0 %v5430
    %7742 = vmatprep.subr.bf16.mxu0 %v5439
    %7743 = vmatpush1.bf16.msra.mxu0 %v5438
    %7744 = vmatprep.subr.bf16.mxu0 %v5447
    %7745 = vmatpush1.bf16.msra.mxu0 %v5446
    %7746 = vmatprep.subr.bf16.mxu0 %v5455
    %7747 = vmatpush1.bf16.msra.mxu0 %v5454
    %7748 = vmatprep.subr.bf16.mxu0 %v5463
    %7749 = vmatpush1.bf16.msra.mxu0 %v5462
    %7750 = vmatprep.subr.bf16.mxu0 %v5471
    %7751 = vmatpush1.bf16.msra.mxu0 %v5470
    %7752 = vmatprep.subr.bf16.mxu0 %v5479
    %7753 = vmatpush1.bf16.msra.mxu0 %v5478
    %7754 = vmatprep.subr.bf16.mxu0 %v5487
    %7755 = vmatpush1.bf16.msra.mxu0 %v5486
    %7756 = vmatprep.subr.bf16.mxu0 %v5495
    %7757 = vmatpush1.bf16.msra.mxu0 %v5494
    %7758 = vmatprep.mubr.bf16.mxu0 %v713
    %7759 = vmatmul.mubr.bf16.gmra.mrb[0].mxu0 %v712
    %v7760 = vpop.f32.mrb[0].mxu0
    %v7761 = vadd.f32 %v7720, %v7760
    %v7762 = vpop.f32.mrb[0].mxu0
    %v7763 = vadd.f32 %v7722, %v7762
    %v7764 = vpop.f32.mrb[0].mxu0
    %v7765 = vpop.f32.mrb[0].mxu0
    %7766 = vdwg.mxu0
    %7767 = vmatprep.subr.bf16.mxu0 %v5503
    %7768 = vmatpush1.bf16.msra.mxu0 %v5502
    %7769 = vmatprep.subr.bf16.mxu0 %v5511
    %7770 = vmatpush1.bf16.msra.mxu0 %v5510
    %7771 = vmatprep.subr.bf16.mxu0 %v5519
    %7772 = vmatpush1.bf16.msra.mxu0 %v5518
    %7773 = vmatprep.subr.bf16.mxu0 %v5527
    %7774 = vmatpush1.bf16.msra.mxu0 %v5526
    %7775 = vmatprep.subr.bf16.mxu0 %v5535
    %7776 = vmatpush1.bf16.msra.mxu0 %v5534
    %7777 = vmatprep.subr.bf16.mxu0 %v5543
    %7778 = vmatpush1.bf16.msra.mxu0 %v5542
    %7779 = vmatprep.subr.bf16.mxu0 %v5551
    %7780 = vmatpush1.bf16.msra.mxu0 %v5550
    %7781 = vmatprep.subr.bf16.mxu0 %v5559
    %7782 = vmatpush1.bf16.msra.mxu0 %v5558
    %7783 = vmatprep.subr.bf16.mxu0 %v5567
    %7784 = vmatpush1.bf16.msra.mxu0 %v5566
    %7785 = vmatprep.subr.bf16.mxu0 %v5575
    %7786 = vmatpush1.bf16.msra.mxu0 %v5574
    %7787 = vmatprep.subr.bf16.mxu0 %v5583
    %7788 = vmatpush1.bf16.msra.mxu0 %v5582
    %7789 = vmatprep.subr.bf16.mxu0 %v5591
    %7790 = vmatpush1.bf16.msra.mxu0 %v5590
    %7791 = vmatprep.subr.bf16.mxu0 %v5599
    %7792 = vmatpush1.bf16.msra.mxu0 %v5598
    %7793 = vmatprep.subr.bf16.mxu0 %v5607
    %7794 = vmatpush1.bf16.msra.mxu0 %v5606
    %7795 = vmatprep.subr.bf16.mxu0 %v5615
    %7796 = vmatpush1.bf16.msra.mxu0 %v5614
    %7797 = vmatprep.subr.bf16.mxu0 %v5623
    %7798 = vmatpush1.bf16.msra.mxu0 %v5622
    %7799 = vmatprep.mubr.bf16.mxu0 %v715
    %7800 = vmatmul.mubr.bf16.gmra.mrb[0].mxu0 %v714
    %v7801 = vpop.f32.mrb[0].mxu0
    %v7802 = vadd.f32 %v7761, %v7801
    %v7803 = vpop.f32.mrb[0].mxu0
    %v7804 = vadd.f32 %v7763, %v7803
    %v7805 = vpop.f32.mrb[0].mxu0
    %v7806 = vpop.f32.mrb[0].mxu0
    %7807 = vdwg.mxu0
    %7808 = vmatprep.subr.bf16.mxu0 %v5631
    %7809 = vmatpush1.bf16.msra.mxu0 %v5630
    %7810 = vmatprep.subr.bf16.mxu0 %v5639
    %7811 = vmatpush1.bf16.msra.mxu0 %v5638
    %7812 = vmatprep.subr.bf16.mxu0 %v5647
    %7813 = vmatpush1.bf16.msra.mxu0 %v5646
    %7814 = vmatprep.subr.bf16.mxu0 %v5655
    %7815 = vmatpush1.bf16.msra.mxu0 %v5654
    %7816 = vmatprep.subr.bf16.mxu0 %v5663
    %7817 = vmatpush1.bf16.msra.mxu0 %v5662
    %7818 = vmatprep.subr.bf16.mxu0 %v5671
    %7819 = vmatpush1.bf16.msra.mxu0 %v5670
    %7820 = vmatprep.subr.bf16.mxu0 %v5679
    %7821 = vmatpush1.bf16.msra.mxu0 %v5678
    %7822 = vmatprep.subr.bf16.mxu0 %v5687
    %7823 = vmatpush1.bf16.msra.mxu0 %v5686
    %7824 = vmatprep.subr.bf16.mxu0 %v5695
    %7825 = vmatpush1.bf16.msra.mxu0 %v5694
    %7826 = vmatprep.subr.bf16.mxu0 %v5703
    %7827 = vmatpush1.bf16.msra.mxu0 %v5702
    %7828 = vmatprep.subr.bf16.mxu0 %v5711
    %7829 = vmatpush1.bf16.msra.mxu0 %v5710
    %7830 = vmatprep.subr.bf16.mxu0 %v5719
    %7831 = vmatpush1.bf16.msra.mxu0 %v5718
    %7832 = vmatprep.subr.bf16.mxu0 %v5727
    %7833 = vmatpush1.bf16.msra.mxu0 %v5726
    %7834 = vmatprep.subr.bf16.mxu0 %v5735
    %7835 = vmatpush1.bf16.msra.mxu0 %v5734
    %7836 = vmatprep.subr.bf16.mxu0 %v5743
    %7837 = vmatpush1.bf16.msra.mxu0 %v5742
    %7838 = vmatprep.subr.bf16.mxu0 %v5751
    %7839 = vmatpush1.bf16.msra.mxu0 %v5750
    %7840 = vmatprep.mubr.bf16.mxu0 %v717
    %7841 = vmatmul.mubr.bf16.gmra.mrb[0].mxu0 %v716
    %v7842 = vpop.f32.mrb[0].mxu0
    %v7843 = vadd.f32 %v7802, %v7842
    %v7844 = vpop.f32.mrb[0].mxu0
    %v7845 = vadd.f32 %v7804, %v7844
    %v7846 = vpop.f32.mrb[0].mxu0
    %v7847 = vpop.f32.mrb[0].mxu0
    %7848 = vdwg.mxu0
    %7849 = vmatprep.subr.bf16.mxu0 %v5759
    %7850 = vmatpush1.bf16.msra.mxu0 %v5758
    %7851 = vmatprep.subr.bf16.mxu0 %v5767
    %7852 = vmatpush1.bf16.msra.mxu0 %v5766
    %7853 = vmatprep.subr.bf16.mxu0 %v5775
    %7854 = vmatpush1.bf16.msra.mxu0 %v5774
    %7855 = vmatprep.subr.bf16.mxu0 %v5783
    %7856 = vmatpush1.bf16.msra.mxu0 %v5782
    %7857 = vmatprep.subr.bf16.mxu0 %v5791
    %7858 = vmatpush1.bf16.msra.mxu0 %v5790
    %7859 = vmatprep.subr.bf16.mxu0 %v5799
    %7860 = vmatpush1.bf16.msra.mxu0 %v5798
    %7861 = vmatprep.subr.bf16.mxu0 %v5807
    %7862 = vmatpush1.bf16.msra.mxu0 %v5806
    %7863 = vmatprep.subr.bf16.mxu0 %v5815
    %7864 = vmatpush1.bf16.msra.mxu0 %v5814
    %7865 = vmatprep.subr.bf16.mxu0 %v5823
    %7866 = vmatpush1.bf16.msra.mxu0 %v5822
    %7867 = vmatprep.subr.bf16.mxu0 %v5831
    %7868 = vmatpush1.bf16.msra.mxu0 %v5830
    %7869 = vmatprep.subr.bf16.mxu0 %v5839
    %7870 = vmatpush1.bf16.msra.mxu0 %v5838
    %7871 = vmatprep.subr.bf16.mxu0 %v5847
    %7872 = vmatpush1.bf16.msra.mxu0 %v5846
    %7873 = vmatprep.subr.bf16.mxu0 %v5855
    %7874 = vmatpush1.bf16.msra.mxu0 %v5854
    %7875 = vmatprep.subr.bf16.mxu0 %v5863
    %7876 = vmatpush1.bf16.msra.mxu0 %v5862
    %7877 = vmatprep.subr.bf16.mxu0 %v5871
    %7878 = vmatpush1.bf16.msra.mxu0 %v5870
    %7879 = vmatprep.subr.bf16.mxu0 %v5879
    %7880 = vmatpush1.bf16.msra.mxu0 %v5878
    %7881 = vmatprep.mubr.bf16.mxu0 %v719
    %7882 = vmatmul.mubr.bf16.gmra.mrb[0].mxu0 %v718
    %v7883 = vpop.f32.mrb[0].mxu0
    %v7884 = vadd.f32 %v7843, %v7883
    %v7885 = vpop.f32.mrb[0].mxu0
    %v7886 = vadd.f32 %v7845, %v7885
    %v7887 = vpop.f32.mrb[0].mxu0
    %v7888 = vpop.f32.mrb[0].mxu0
    %7889 = vdwg.mxu0
    %7890 = vmatprep.subr.bf16.mxu0 %v4865
    %7891 = vmatpush1.bf16.msra.mxu0 %v4864
    %7892 = vmatprep.subr.bf16.mxu0 %v4873
    %7893 = vmatpush1.bf16.msra.mxu0 %v4872
    %7894 = vmatprep.subr.bf16.mxu0 %v4881
    %7895 = vmatpush1.bf16.msra.mxu0 %v4880
    %7896 = vmatprep.subr.bf16.mxu0 %v4889
    %7897 = vmatpush1.bf16.msra.mxu0 %v4888
    %7898 = vmatprep.subr.bf16.mxu0 %v4897
    %7899 = vmatpush1.bf16.msra.mxu0 %v4896
    %7900 = vmatprep.subr.bf16.mxu0 %v4905
    %7901 = vmatpush1.bf16.msra.mxu0 %v4904
    %7902 = vmatprep.subr.bf16.mxu0 %v4913
    %7903 = vmatpush1.bf16.msra.mxu0 %v4912
    %7904 = vmatprep.subr.bf16.mxu0 %v4921
    %7905 = vmatpush1.bf16.msra.mxu0 %v4920
    %7906 = vmatprep.subr.bf16.mxu0 %v4929
    %7907 = vmatpush1.bf16.msra.mxu0 %v4928
    %7908 = vmatprep.subr.bf16.mxu0 %v4937
    %7909 = vmatpush1.bf16.msra.mxu0 %v4936
    %7910 = vmatprep.subr.bf16.mxu0 %v4945
    %7911 = vmatpush1.bf16.msra.mxu0 %v4944
    %7912 = vmatprep.subr.bf16.mxu0 %v4953
    %7913 = vmatpush1.bf16.msra.mxu0 %v4952
    %7914 = vmatprep.subr.bf16.mxu0 %v4961
    %7915 = vmatpush1.bf16.msra.mxu0 %v4960
    %7916 = vmatprep.subr.bf16.mxu0 %v4969
    %7917 = vmatpush1.bf16.msra.mxu0 %v4968
    %7918 = vmatprep.subr.bf16.mxu0 %v4977
    %7919 = vmatpush1.bf16.msra.mxu0 %v4976
    %7920 = vmatprep.subr.bf16.mxu0 %v4985
    %7921 = vmatpush1.bf16.msra.mxu0 %v4984
    %7922 = vmatprep.mubr.bf16.mxu0 %v705
    %7923 = vmatmul.mubr.bf16.gmra.mrb[0].mxu0 %v704
    %v7924 = vpop.f32.mrb[0].mxu0
    %v7925 = vadd.f32 %v1773, %v7924
    %v7926 = vpop.f32.mrb[0].mxu0
    %v7927 = vadd.f32 %v1777, %v7926
    %v7928 = vpop.f32.mrb[0].mxu0
    %v7929 = vpop.f32.mrb[0].mxu0
    %7930 = vdwg.mxu0
    %7931 = vmatprep.subr.bf16.mxu0 %v4993
    %7932 = vmatpush1.bf16.msra.mxu0 %v4992
    %7933 = vmatprep.subr.bf16.mxu0 %v5001
    %7934 = vmatpush1.bf16.msra.mxu0 %v5000
    %7935 = vmatprep.subr.bf16.mxu0 %v5009
    %7936 = vmatpush1.bf16.msra.mxu0 %v5008
    %7937 = vmatprep.subr.bf16.mxu0 %v5017
    %7938 = vmatpush1.bf16.msra.mxu0 %v5016
    %7939 = vmatprep.subr.bf16.mxu0 %v5025
    %7940 = vmatpush1.bf16.msra.mxu0 %v5024
    %7941 = vmatprep.subr.bf16.mxu0 %v5033
    %7942 = vmatpush1.bf16.msra.mxu0 %v5032
    %7943 = vmatprep.subr.bf16.mxu0 %v5041
    %7944 = vmatpush1.bf16.msra.mxu0 %v5040
    %7945 = vmatprep.subr.bf16.mxu0 %v5049
    %7946 = vmatpush1.bf16.msra.mxu0 %v5048
    %7947 = vmatprep.subr.bf16.mxu0 %v5057
    %7948 = vmatpush1.bf16.msra.mxu0 %v5056
    %7949 = vmatprep.subr.bf16.mxu0 %v5065
    %7950 = vmatpush1.bf16.msra.mxu0 %v5064
    %7951 = vmatprep.subr.bf16.mxu0 %v5073
    %7952 = vmatpush1.bf16.msra.mxu0 %v5072
    %7953 = vmatprep.subr.bf16.mxu0 %v5081
    %7954 = vmatpush1.bf16.msra.mxu0 %v5080
    %7955 = vmatprep.subr.bf16.mxu0 %v5089
    %7956 = vmatpush1.bf16.msra.mxu0 %v5088
    %7957 = vmatprep.subr.bf16.mxu0 %v5097
    %7958 = vmatpush1.bf16.msra.mxu0 %v5096
    %7959 = vmatprep.subr.bf16.mxu0 %v5105
    %7960 = vmatpush1.bf16.msra.mxu0 %v5104
    %7961 = vmatprep.subr.bf16.mxu0 %v5113
    %7962 = vmatpush1.bf16.msra.mxu0 %v5112
    %7963 = vmatprep.mubr.bf16.mxu0 %v707
    %7964 = vmatmul.mubr.bf16.gmra.mrb[0].mxu0 %v706
    %v7965 = vpop.f32.mrb[0].mxu0
    %v7966 = vadd.f32 %v7925, %v7965
    %v7967 = vpop.f32.mrb[0].mxu0
    %v7968 = vadd.f32 %v7927, %v7967
    %v7969 = vpop.f32.mrb[0].mxu0
    %v7970 = vpop.f32.mrb[0].mxu0
    %7971 = vdwg.mxu0
    %7972 = vmatprep.subr.bf16.mxu0 %v5121
    %7973 = vmatpush1.bf16.msra.mxu0 %v5120
    %7974 = vmatprep.subr.bf16.mxu0 %v5129
    %7975 = vmatpush1.bf16.msra.mxu0 %v5128
    %7976 = vmatprep.subr.bf16.mxu0 %v5137
    %7977 = vmatpush1.bf16.msra.mxu0 %v5136
    %7978 = vmatprep.subr.bf16.mxu0 %v5145
    %7979 = vmatpush1.bf16.msra.mxu0 %v5144
    %7980 = vmatprep.subr.bf16.mxu0 %v5153
    %7981 = vmatpush1.bf16.msra.mxu0 %v5152
    %7982 = vmatprep.subr.bf16.mxu0 %v5161
    %7983 = vmatpush1.bf16.msra.mxu0 %v5160
    %7984 = vmatprep.subr.bf16.mxu0 %v5169
    %7985 = vmatpush1.bf16.msra.mxu0 %v5168
    %7986 = vmatprep.subr.bf16.mxu0 %v5177
    %7987 = vmatpush1.bf16.msra.mxu0 %v5176
    %7988 = vmatprep.subr.bf16.mxu0 %v5185
    %7989 = vmatpush1.bf16.msra.mxu0 %v5184
    %7990 = vmatprep.subr.bf16.mxu0 %v5193
    %7991 = vmatpush1.bf16.msra.mxu0 %v5192
    %7992 = vmatprep.subr.bf16.mxu0 %v5201
    %7993 = vmatpush1.bf16.msra.mxu0 %v5200
    %7994 = vmatprep.subr.bf16.mxu0 %v5209
    %7995 = vmatpush1.bf16.msra.mxu0 %v5208
    %7996 = vmatprep.subr.bf16.mxu0 %v5217
    %7997 = vmatpush1.bf16.msra.mxu0 %v5216
    %7998 = vmatprep.subr.bf16.mxu0 %v5225
    %7999 = vmatpush1.bf16.msra.mxu0 %v5224
    %8000 = vmatprep.subr.bf16.mxu0 %v5233
    %8001 = vmatpush1.bf16.msra.mxu0 %v5232
    %8002 = vmatprep.subr.bf16.mxu0 %v5241
    %8003 = vmatpush1.bf16.msra.mxu0 %v5240
    %8004 = vmatprep.mubr.bf16.mxu0 %v709
    %8005 = vmatmul.mubr.bf16.gmra.mrb[0].mxu0 %v708
    %v8006 = vpop.f32.mrb[0].mxu0
    %v8007 = vadd.f32 %v7966, %v8006
    %v8008 = vpop.f32.mrb[0].mxu0
    %v8009 = vadd.f32 %v7968, %v8008
    %v8010 = vpop.f32.mrb[0].mxu0
    %v8011 = vpop.f32.mrb[0].mxu0
    %8012 = vdwg.mxu0
    %8013 = vmatprep.subr.bf16.mxu0 %v5249
    %8014 = vmatpush1.bf16.msra.mxu0 %v5248
    %8015 = vmatprep.subr.bf16.mxu0 %v5257
    %8016 = vmatpush1.bf16.msra.mxu0 %v5256
    %8017 = vmatprep.subr.bf16.mxu0 %v5265
    %8018 = vmatpush1.bf16.msra.mxu0 %v5264
    %8019 = vmatprep.subr.bf16.mxu0 %v5273
    %8020 = vmatpush1.bf16.msra.mxu0 %v5272
    %8021 = vmatprep.subr.bf16.mxu0 %v5281
    %8022 = vmatpush1.bf16.msra.mxu0 %v5280
    %8023 = vmatprep.subr.bf16.mxu0 %v5289
    %8024 = vmatpush1.bf16.msra.mxu0 %v5288
    %8025 = vmatprep.subr.bf16.mxu0 %v5297
    %8026 = vmatpush1.bf16.msra.mxu0 %v5296
    %8027 = vmatprep.subr.bf16.mxu0 %v5305
    %8028 = vmatpush1.bf16.msra.mxu0 %v5304
    %8029 = vmatprep.subr.bf16.mxu0 %v5313
    %8030 = vmatpush1.bf16.msra.mxu0 %v5312
    %8031 = vmatprep.subr.bf16.mxu0 %v5321
    %8032 = vmatpush1.bf16.msra.mxu0 %v5320
    %8033 = vmatprep.subr.bf16.mxu0 %v5329
    %8034 = vmatpush1.bf16.msra.mxu0 %v5328
    %8035 = vmatprep.subr.bf16.mxu0 %v5337
    %8036 = vmatpush1.bf16.msra.mxu0 %v5336
    %8037 = vmatprep.subr.bf16.mxu0 %v5345
    %8038 = vmatpush1.bf16.msra.mxu0 %v5344
    %8039 = vmatprep.subr.bf16.mxu0 %v5353
    %8040 = vmatpush1.bf16.msra.mxu0 %v5352
    %8041 = vmatprep.subr.bf16.mxu0 %v5361
    %8042 = vmatpush1.bf16.msra.mxu0 %v5360
    %8043 = vmatprep.subr.bf16.mxu0 %v5369
    %8044 = vmatpush1.bf16.msra.mxu0 %v5368
    %8045 = vmatprep.mubr.bf16.mxu0 %v711
    %8046 = vmatmul.mubr.bf16.gmra.mrb[0].mxu0 %v710
    %v8047 = vpop.f32.mrb[0].mxu0
    %v8048 = vadd.f32 %v8007, %v8047
    %v8049 = vpop.f32.mrb[0].mxu0
    %v8050 = vadd.f32 %v8009, %v8049
    %v8051 = vpop.f32.mrb[0].mxu0
    %v8052 = vpop.f32.mrb[0].mxu0
    %8053 = vdwg.mxu0
    %8054 = vmatprep.subr.bf16.mxu0 %v5377
    %8055 = vmatpush1.bf16.msra.mxu0 %v5376
    %8056 = vmatprep.subr.bf16.mxu0 %v5385
    %8057 = vmatpush1.bf16.msra.mxu0 %v5384
    %8058 = vmatprep.subr.bf16.mxu0 %v5393
    %8059 = vmatpush1.bf16.msra.mxu0 %v5392
    %8060 = vmatprep.subr.bf16.mxu0 %v5401
    %8061 = vmatpush1.bf16.msra.mxu0 %v5400
    %8062 = vmatprep.subr.bf16.mxu0 %v5409
    %8063 = vmatpush1.bf16.msra.mxu0 %v5408
    %8064 = vmatprep.subr.bf16.mxu0 %v5417
    %8065 = vmatpush1.bf16.msra.mxu0 %v5416
    %8066 = vmatprep.subr.bf16.mxu0 %v5425
    %8067 = vmatpush1.bf16.msra.mxu0 %v5424
    %8068 = vmatprep.subr.bf16.mxu0 %v5433
    %8069 = vmatpush1.bf16.msra.mxu0 %v5432
    %8070 = vmatprep.subr.bf16.mxu0 %v5441
    %8071 = vmatpush1.bf16.msra.mxu0 %v5440
    %8072 = vmatprep.subr.bf16.mxu0 %v5449
    %8073 = vmatpush1.bf16.msra.mxu0 %v5448
    %8074 = vmatprep.subr.bf16.mxu0 %v5457
    %8075 = vmatpush1.bf16.msra.mxu0 %v5456
    %8076 = vmatprep.subr.bf16.mxu0 %v5465
    %8077 = vmatpush1.bf16.msra.mxu0 %v5464
    %8078 = vmatprep.subr.bf16.mxu0 %v5473
    %8079 = vmatpush1.bf16.msra.mxu0 %v5472
    %8080 = vmatprep.subr.bf16.mxu0 %v5481
    %8081 = vmatpush1.bf16.msra.mxu0 %v5480
    %8082 = vmatprep.subr.bf16.mxu0 %v5489
    %8083 = vmatpush1.bf16.msra.mxu0 %v5488
    %8084 = vmatprep.subr.bf16.mxu0 %v5497
    %8085 = vmatpush1.bf16.msra.mxu0 %v5496
    %8086 = vmatprep.mubr.bf16.mxu0 %v713
    %8087 = vmatmul.mubr.bf16.gmra.mrb[0].mxu0 %v712
    %v8088 = vpop.f32.mrb[0].mxu0
    %v8089 = vadd.f32 %v8048, %v8088
    %v8090 = vpop.f32.mrb[0].mxu0
    %v8091 = vadd.f32 %v8050, %v8090
    %v8092 = vpop.f32.mrb[0].mxu0
    %v8093 = vpop.f32.mrb[0].mxu0
    %8094 = vdwg.mxu0
    %8095 = vmatprep.subr.bf16.mxu0 %v5505
    %8096 = vmatpush1.bf16.msra.mxu0 %v5504
    %8097 = vmatprep.subr.bf16.mxu0 %v5513
    %8098 = vmatpush1.bf16.msra.mxu0 %v5512
    %8099 = vmatprep.subr.bf16.mxu0 %v5521
    %8100 = vmatpush1.bf16.msra.mxu0 %v5520
    %8101 = vmatprep.subr.bf16.mxu0 %v5529
    %8102 = vmatpush1.bf16.msra.mxu0 %v5528
    %8103 = vmatprep.subr.bf16.mxu0 %v5537
    %8104 = vmatpush1.bf16.msra.mxu0 %v5536
    %8105 = vmatprep.subr.bf16.mxu0 %v5545
    %8106 = vmatpush1.bf16.msra.mxu0 %v5544
    %8107 = vmatprep.subr.bf16.mxu0 %v5553
    %8108 = vmatpush1.bf16.msra.mxu0 %v5552
    %8109 = vmatprep.subr.bf16.mxu0 %v5561
    %8110 = vmatpush1.bf16.msra.mxu0 %v5560
    %8111 = vmatprep.subr.bf16.mxu0 %v5569
    %8112 = vmatpush1.bf16.msra.mxu0 %v5568
    %8113 = vmatprep.subr.bf16.mxu0 %v5577
    %8114 = vmatpush1.bf16.msra.mxu0 %v5576
    %8115 = vmatprep.subr.bf16.mxu0 %v5585
    %8116 = vmatpush1.bf16.msra.mxu0 %v5584
    %8117 = vmatprep.subr.bf16.mxu0 %v5593
    %8118 = vmatpush1.bf16.msra.mxu0 %v5592
    %8119 = vmatprep.subr.bf16.mxu0 %v5601
    %8120 = vmatpush1.bf16.msra.mxu0 %v5600
    %8121 = vmatprep.subr.bf16.mxu0 %v5609
    %8122 = vmatpush1.bf16.msra.mxu0 %v5608
    %8123 = vmatprep.subr.bf16.mxu0 %v5617
    %8124 = vmatpush1.bf16.msra.mxu0 %v5616
    %8125 = vmatprep.subr.bf16.mxu0 %v5625
    %8126 = vmatpush1.bf16.msra.mxu0 %v5624
    %8127 = vmatprep.mubr.bf16.mxu0 %v715
    %8128 = vmatmul.mubr.bf16.gmra.mrb[0].mxu0 %v714
    %v8129 = vpop.f32.mrb[0].mxu0
    %v8130 = vadd.f32 %v8089, %v8129
    %v8131 = vpop.f32.mrb[0].mxu0
    %v8132 = vadd.f32 %v8091, %v8131
    %v8133 = vpop.f32.mrb[0].mxu0
    %v8134 = vpop.f32.mrb[0].mxu0
    %8135 = vdwg.mxu0
    %8136 = vmatprep.subr.bf16.mxu0 %v5633
    %8137 = vmatpush1.bf16.msra.mxu0 %v5632
    %8138 = vmatprep.subr.bf16.mxu0 %v5641
    %8139 = vmatpush1.bf16.msra.mxu0 %v5640
    %8140 = vmatprep.subr.bf16.mxu0 %v5649
    %8141 = vmatpush1.bf16.msra.mxu0 %v5648
    %8142 = vmatprep.subr.bf16.mxu0 %v5657
    %8143 = vmatpush1.bf16.msra.mxu0 %v5656
    %8144 = vmatprep.subr.bf16.mxu0 %v5665
    %8145 = vmatpush1.bf16.msra.mxu0 %v5664
    %8146 = vmatprep.subr.bf16.mxu0 %v5673
    %8147 = vmatpush1.bf16.msra.mxu0 %v5672
    %8148 = vmatprep.subr.bf16.mxu0 %v5681
    %8149 = vmatpush1.bf16.msra.mxu0 %v5680
    %8150 = vmatprep.subr.bf16.mxu0 %v5689
    %8151 = vmatpush1.bf16.msra.mxu0 %v5688
    %8152 = vmatprep.subr.bf16.mxu0 %v5697
    %8153 = vmatpush1.bf16.msra.mxu0 %v5696
    %8154 = vmatprep.subr.bf16.mxu0 %v5705
    %8155 = vmatpush1.bf16.msra.mxu0 %v5704
    %8156 = vmatprep.subr.bf16.mxu0 %v5713
    %8157 = vmatpush1.bf16.msra.mxu0 %v5712
    %8158 = vmatprep.subr.bf16.mxu0 %v5721
    %8159 = vmatpush1.bf16.msra.mxu0 %v5720
    %8160 = vmatprep.subr.bf16.mxu0 %v5729
    %8161 = vmatpush1.bf16.msra.mxu0 %v5728
    %8162 = vmatprep.subr.bf16.mxu0 %v5737
    %8163 = vmatpush1.bf16.msra.mxu0 %v5736
    %8164 = vmatprep.subr.bf16.mxu0 %v5745
    %8165 = vmatpush1.bf16.msra.mxu0 %v5744
    %8166 = vmatprep.subr.bf16.mxu0 %v5753
    %8167 = vmatpush1.bf16.msra.mxu0 %v5752
    %8168 = vmatprep.mubr.bf16.mxu0 %v717
    %8169 = vmatmul.mubr.bf16.gmra.mrb[0].mxu0 %v716
    %v8170 = vpop.f32.mrb[0].mxu0
    %v8171 = vadd.f32 %v8130, %v8170
    %v8172 = vpop.f32.mrb[0].mxu0
    %v8173 = vadd.f32 %v8132, %v8172
    %v8174 = vpop.f32.mrb[0].mxu0
    %v8175 = vpop.f32.mrb[0].mxu0
    %8176 = vdwg.mxu0
    %8177 = vmatprep.subr.bf16.mxu0 %v5761
    %8178 = vmatpush1.bf16.msra.mxu0 %v5760
    %8179 = vmatprep.subr.bf16.mxu0 %v5769
    %8180 = vmatpush1.bf16.msra.mxu0 %v5768
    %8181 = vmatprep.subr.bf16.mxu0 %v5777
    %8182 = vmatpush1.bf16.msra.mxu0 %v5776
    %8183 = vmatprep.subr.bf16.mxu0 %v5785
    %8184 = vmatpush1.bf16.msra.mxu0 %v5784
    %8185 = vmatprep.subr.bf16.mxu0 %v5793
    %8186 = vmatpush1.bf16.msra.mxu0 %v5792
    %8187 = vmatprep.subr.bf16.mxu0 %v5801
    %8188 = vmatpush1.bf16.msra.mxu0 %v5800
    %8189 = vmatprep.subr.bf16.mxu0 %v5809
    %8190 = vmatpush1.bf16.msra.mxu0 %v5808
    %8191 = vmatprep.subr.bf16.mxu0 %v5817
    %8192 = vmatpush1.bf16.msra.mxu0 %v5816
    %8193 = vmatprep.subr.bf16.mxu0 %v5825
    %8194 = vmatpush1.bf16.msra.mxu0 %v5824
    %8195 = vmatprep.subr.bf16.mxu0 %v5833
    %8196 = vmatpush1.bf16.msra.mxu0 %v5832
    %8197 = vmatprep.subr.bf16.mxu0 %v5841
    %8198 = vmatpush1.bf16.msra.mxu0 %v5840
    %8199 = vmatprep.subr.bf16.mxu0 %v5849
    %8200 = vmatpush1.bf16.msra.mxu0 %v5848
    %8201 = vmatprep.subr.bf16.mxu0 %v5857
    %8202 = vmatpush1.bf16.msra.mxu0 %v5856
    %8203 = vmatprep.subr.bf16.mxu0 %v5865
    %8204 = vmatpush1.bf16.msra.mxu0 %v5864
    %8205 = vmatprep.subr.bf16.mxu0 %v5873
    %8206 = vmatpush1.bf16.msra.mxu0 %v5872
    %8207 = vmatprep.subr.bf16.mxu0 %v5881
    %8208 = vmatpush1.bf16.msra.mxu0 %v5880
    %8209 = vmatprep.mubr.bf16.mxu0 %v719
    %8210 = vmatmul.mubr.bf16.gmra.mrb[0].mxu0 %v718
    %v8211 = vpop.f32.mrb[0].mxu0
    %v8212 = vadd.f32 %v8171, %v8211
    %v8213 = vpop.f32.mrb[0].mxu0
    %v8214 = vadd.f32 %v8173, %v8213
    %v8215 = vpop.f32.mrb[0].mxu0
    %v8216 = vpop.f32.mrb[0].mxu0
    %8217 = vdwg.mxu0
    %v8218 = vmax.f32 %v7228, 0.0
    %v8219 = vmax.f32 %v7230, 0.0
    %v8220 = vmax.f32 %v7556, 0.0
    %v8221 = vmax.f32 %v7558, 0.0
    %v8222 = vmax.f32 %v7884, 0.0
    %v8223 = vmax.f32 %v7886, 0.0
    %v8224 = vmax.f32 %v8212, 0.0
    %v8225 = vmax.f32 %v8214, 0.0
    %v8226 = vpack.c.bf16 %v8218, %v8218
    %v8227 = vpack.c.bf16 %v8219, %v8219
    %v8228 = vpack.c.bf16 %v8220, %v8220
    %v8229 = vpack.c.bf16 %v8221, %v8221
    %v8230 = vpack.c.bf16 %v8222, %v8222
    %v8231 = vpack.c.bf16 %v8223, %v8223
    %v8232 = vpack.c.bf16 %v8224, %v8224
    %v8233 = vpack.c.bf16 %v8225, %v8225
    %v8234 = vld [vmem:[%s5] sm:$0xf]
    %v8235 = vld [vmem:[%s5 + $0x4] sm:$0xf]
    %v8236 = vld [vmem:[%s5 + $0x8] sm:$0xf]
    %v8237 = vld [vmem:[%s5 + $0xc] sm:$0xf]
    %v8238 = vld [vmem:[%s5 + $0x10] sm:$0xf]
    %v8239 = vld [vmem:[%s5 + $0x14] sm:$0xf]
    %v8240 = vld [vmem:[%s5 + $0x18] sm:$0xf]
    %v8241 = vld [vmem:[%s5 + $0x1c] sm:$0xf]
    %v8242 = vld [vmem:[%s5 + $0x20] sm:$0xf]
    %v8243 = vld [vmem:[%s5 + $0x24] sm:$0xf]
    %v8244 = vld [vmem:[%s5 + $0x28] sm:$0xf]
    %v8245 = vld [vmem:[%s5 + $0x2c] sm:$0xf]
    %v8246 = vld [vmem:[%s5 + $0x30] sm:$0xf]
    %v8247 = vld [vmem:[%s5 + $0x34] sm:$0xf]
    %v8248 = vld [vmem:[%s5 + $0x38] sm:$0xf]
    %v8249 = vld [vmem:[%s5 + $0x3c] sm:$0xf]
    %v8250 = vld [vmem:[%s5 + $0x40] sm:$0xf]
    %v8251 = vld [vmem:[%s5 + $0x44] sm:$0xf]
    %v8252 = vld [vmem:[%s5 + $0x48] sm:$0xf]
    %v8253 = vld [vmem:[%s5 + $0x4c] sm:$0xf]
    %v8254 = vld [vmem:[%s5 + $0x50] sm:$0xf]
    %v8255 = vld [vmem:[%s5 + $0x54] sm:$0xf]
    %v8256 = vld [vmem:[%s5 + $0x58] sm:$0xf]
    %v8257 = vld [vmem:[%s5 + $0x5c] sm:$0xf]
    %v8258 = vld [vmem:[%s5 + $0x60] sm:$0xf]
    %v8259 = vld [vmem:[%s5 + $0x64] sm:$0xf]
    %v8260 = vld [vmem:[%s5 + $0x68] sm:$0xf]
    %v8261 = vld [vmem:[%s5 + $0x6c] sm:$0xf]
    %v8262 = vld [vmem:[%s5 + $0x70] sm:$0xf]
    %v8263 = vld [vmem:[%s5 + $0x74] sm:$0xf]
    %v8264 = vld [vmem:[%s5 + $0x78] sm:$0xf]
    %v8265 = vld [vmem:[%s5 + $0x7c] sm:$0xf]
    %v8266 = vld [vmem:[%s5 + $0x80] sm:$0xf]
    %v8267 = vld [vmem:[%s5 + $0x84] sm:$0xf]
    %v8268 = vld [vmem:[%s5 + $0x88] sm:$0xf]
    %v8269 = vld [vmem:[%s5 + $0x8c] sm:$0xf]
    %v8270 = vld [vmem:[%s5 + $0x90] sm:$0xf]
    %v8271 = vld [vmem:[%s5 + $0x94] sm:$0xf]
    %v8272 = vld [vmem:[%s5 + $0x98] sm:$0xf]
    %v8273 = vld [vmem:[%s5 + $0x9c] sm:$0xf]
    %v8274 = vld [vmem:[%s5 + $0xa0] sm:$0xf]
    %v8275 = vld [vmem:[%s5 + $0xa4] sm:$0xf]
    %v8276 = vld [vmem:[%s5 + $0xa8] sm:$0xf]
    %v8277 = vld [vmem:[%s5 + $0xac] sm:$0xf]
    %v8278 = vld [vmem:[%s5 + $0xb0] sm:$0xf]
    %v8279 = vld [vmem:[%s5 + $0xb4] sm:$0xf]
    %v8280 = vld [vmem:[%s5 + $0xb8] sm:$0xf]
    %v8281 = vld [vmem:[%s5 + $0xbc] sm:$0xf]
    %v8282 = vld [vmem:[%s5 + $0xc0] sm:$0xf]
    %v8283 = vld [vmem:[%s5 + $0xc4] sm:$0xf]
    %v8284 = vld [vmem:[%s5 + $0xc8] sm:$0xf]
    %v8285 = vld [vmem:[%s5 + $0xcc] sm:$0xf]
    %v8286 = vld [vmem:[%s5 + $0xd0] sm:$0xf]
    %v8287 = vld [vmem:[%s5 + $0xd4] sm:$0xf]
    %v8288 = vld [vmem:[%s5 + $0xd8] sm:$0xf]
    %v8289 = vld [vmem:[%s5 + $0xdc] sm:$0xf]
    %v8290 = vld [vmem:[%s5 + $0xe0] sm:$0xf]
    %v8291 = vld [vmem:[%s5 + $0xe4] sm:$0xf]
    %v8292 = vld [vmem:[%s5 + $0xe8] sm:$0xf]
    %v8293 = vld [vmem:[%s5 + $0xec] sm:$0xf]
    %v8294 = vld [vmem:[%s5 + $0xf0] sm:$0xf]
    %v8295 = vld [vmem:[%s5 + $0xf4] sm:$0xf]
    %v8296 = vld [vmem:[%s5 + $0xf8] sm:$0xf]
    %v8297 = vld [vmem:[%s5 + $0xfc] sm:$0xf]
    %v8298 = vld [vmem:[%s5 + $0x100] sm:$0xf]
    %v8299 = vld [vmem:[%s5 + $0x104] sm:$0xf]
    %v8300 = vld [vmem:[%s5 + $0x108] sm:$0xf]
    %v8301 = vld [vmem:[%s5 + $0x10c] sm:$0xf]
    %v8302 = vld [vmem:[%s5 + $0x110] sm:$0xf]
    %v8303 = vld [vmem:[%s5 + $0x114] sm:$0xf]
    %v8304 = vld [vmem:[%s5 + $0x118] sm:$0xf]
    %v8305 = vld [vmem:[%s5 + $0x11c] sm:$0xf]
    %v8306 = vld [vmem:[%s5 + $0x120] sm:$0xf]
    %v8307 = vld [vmem:[%s5 + $0x124] sm:$0xf]
    %v8308 = vld [vmem:[%s5 + $0x128] sm:$0xf]
    %v8309 = vld [vmem:[%s5 + $0x12c] sm:$0xf]
    %v8310 = vld [vmem:[%s5 + $0x130] sm:$0xf]
    %v8311 = vld [vmem:[%s5 + $0x134] sm:$0xf]
    %v8312 = vld [vmem:[%s5 + $0x138] sm:$0xf]
    %v8313 = vld [vmem:[%s5 + $0x13c] sm:$0xf]
    %v8314 = vld [vmem:[%s5 + $0x140] sm:$0xf]
    %v8315 = vld [vmem:[%s5 + $0x144] sm:$0xf]
    %v8316 = vld [vmem:[%s5 + $0x148] sm:$0xf]
    %v8317 = vld [vmem:[%s5 + $0x14c] sm:$0xf]
    %v8318 = vld [vmem:[%s5 + $0x150] sm:$0xf]
    %v8319 = vld [vmem:[%s5 + $0x154] sm:$0xf]
    %v8320 = vld [vmem:[%s5 + $0x158] sm:$0xf]
    %v8321 = vld [vmem:[%s5 + $0x15c] sm:$0xf]
    %v8322 = vld [vmem:[%s5 + $0x160] sm:$0xf]
    %v8323 = vld [vmem:[%s5 + $0x164] sm:$0xf]
    %v8324 = vld [vmem:[%s5 + $0x168] sm:$0xf]
    %v8325 = vld [vmem:[%s5 + $0x16c] sm:$0xf]
    %v8326 = vld [vmem:[%s5 + $0x170] sm:$0xf]
    %v8327 = vld [vmem:[%s5 + $0x174] sm:$0xf]
    %v8328 = vld [vmem:[%s5 + $0x178] sm:$0xf]
    %v8329 = vld [vmem:[%s5 + $0x17c] sm:$0xf]
    %v8330 = vld [vmem:[%s5 + $0x180] sm:$0xf]
    %v8331 = vld [vmem:[%s5 + $0x184] sm:$0xf]
    %v8332 = vld [vmem:[%s5 + $0x188] sm:$0xf]
    %v8333 = vld [vmem:[%s5 + $0x18c] sm:$0xf]
    %v8334 = vld [vmem:[%s5 + $0x190] sm:$0xf]
    %v8335 = vld [vmem:[%s5 + $0x194] sm:$0xf]
    %v8336 = vld [vmem:[%s5 + $0x198] sm:$0xf]
    %v8337 = vld [vmem:[%s5 + $0x19c] sm:$0xf]
    %v8338 = vld [vmem:[%s5 + $0x1a0] sm:$0xf]
    %v8339 = vld [vmem:[%s5 + $0x1a4] sm:$0xf]
    %v8340 = vld [vmem:[%s5 + $0x1a8] sm:$0xf]
    %v8341 = vld [vmem:[%s5 + $0x1ac] sm:$0xf]
    %v8342 = vld [vmem:[%s5 + $0x1b0] sm:$0xf]
    %v8343 = vld [vmem:[%s5 + $0x1b4] sm:$0xf]
    %v8344 = vld [vmem:[%s5 + $0x1b8] sm:$0xf]
    %v8345 = vld [vmem:[%s5 + $0x1bc] sm:$0xf]
    %v8346 = vld [vmem:[%s5 + $0x1c0] sm:$0xf]
    %v8347 = vld [vmem:[%s5 + $0x1c4] sm:$0xf]
    %v8348 = vld [vmem:[%s5 + $0x1c8] sm:$0xf]
    %v8349 = vld [vmem:[%s5 + $0x1cc] sm:$0xf]
    %v8350 = vld [vmem:[%s5 + $0x1d0] sm:$0xf]
    %v8351 = vld [vmem:[%s5 + $0x1d4] sm:$0xf]
    %v8352 = vld [vmem:[%s5 + $0x1d8] sm:$0xf]
    %v8353 = vld [vmem:[%s5 + $0x1dc] sm:$0xf]
    %v8354 = vld [vmem:[%s5 + $0x1e0] sm:$0xf]
    %v8355 = vld [vmem:[%s5 + $0x1e4] sm:$0xf]
    %v8356 = vld [vmem:[%s5 + $0x1e8] sm:$0xf]
    %v8357 = vld [vmem:[%s5 + $0x1ec] sm:$0xf]
    %v8358 = vld [vmem:[%s5 + $0x1f0] sm:$0xf]
    %v8359 = vld [vmem:[%s5 + $0x1f4] sm:$0xf]
    %v8360 = vld [vmem:[%s5 + $0x1f8] sm:$0xf]
    %v8361 = vld [vmem:[%s5 + $0x1fc] sm:$0xf]
    %v8362 = vld [vmem:[%s6] sm:$0x1]
    %v8364 = vlaneseq
    %v8365 = vshrl.u32 %v8364, 7
    %v8366 = vsub.s32 0, %v8365
    %v8367 = vrot.slane %v8362, %v8366
    %v8497 = vunpack.c.l.b16 %v8234
    %v8498 = vunpack.c.l.b16 %v8235
    %v8499 = vunpack.c.l.b16 %v8236
    %v8500 = vunpack.c.l.b16 %v8237
    %v8501 = vunpack.c.l.b16 %v8238
    %v8502 = vunpack.c.l.b16 %v8239
    %v8503 = vunpack.c.l.b16 %v8240
    %v8504 = vunpack.c.l.b16 %v8241
    %v8505 = vunpack.c.l.b16 %v8242
    %v8506 = vunpack.c.l.b16 %v8243
    %v8507 = vunpack.c.l.b16 %v8244
    %v8508 = vunpack.c.l.b16 %v8245
    %v8509 = vunpack.c.l.b16 %v8246
    %v8510 = vunpack.c.l.b16 %v8247
    %v8511 = vunpack.c.l.b16 %v8248
    %v8512 = vunpack.c.l.b16 %v8249
    %v8513 = vunpack.c.l.b16 %v8250
    %v8514 = vunpack.c.l.b16 %v8251
    %v8515 = vunpack.c.l.b16 %v8252
    %v8516 = vunpack.c.l.b16 %v8253
    %v8517 = vunpack.c.l.b16 %v8254
    %v8518 = vunpack.c.l.b16 %v8255
    %v8519 = vunpack.c.l.b16 %v8256
    %v8520 = vunpack.c.l.b16 %v8257
    %v8521 = vunpack.c.l.b16 %v8258
    %v8522 = vunpack.c.l.b16 %v8259
    %v8523 = vunpack.c.l.b16 %v8260
    %v8524 = vunpack.c.l.b16 %v8261
    %v8525 = vunpack.c.l.b16 %v8262
    %v8526 = vunpack.c.l.b16 %v8263
    %v8527 = vunpack.c.l.b16 %v8264
    %v8528 = vunpack.c.l.b16 %v8265
    %v8529 = vunpack.c.l.b16 %v8266
    %v8530 = vunpack.c.l.b16 %v8267
    %v8531 = vunpack.c.l.b16 %v8268
    %v8532 = vunpack.c.l.b16 %v8269
    %v8533 = vunpack.c.l.b16 %v8270
    %v8534 = vunpack.c.l.b16 %v8271
    %v8535 = vunpack.c.l.b16 %v8272
    %v8536 = vunpack.c.l.b16 %v8273
    %v8537 = vunpack.c.l.b16 %v8274
    %v8538 = vunpack.c.l.b16 %v8275
    %v8539 = vunpack.c.l.b16 %v8276
    %v8540 = vunpack.c.l.b16 %v8277
    %v8541 = vunpack.c.l.b16 %v8278
    %v8542 = vunpack.c.l.b16 %v8279
    %v8543 = vunpack.c.l.b16 %v8280
    %v8544 = vunpack.c.l.b16 %v8281
    %v8545 = vunpack.c.l.b16 %v8282
    %v8546 = vunpack.c.l.b16 %v8283
    %v8547 = vunpack.c.l.b16 %v8284
    %v8548 = vunpack.c.l.b16 %v8285
    %v8549 = vunpack.c.l.b16 %v8286
    %v8550 = vunpack.c.l.b16 %v8287
    %v8551 = vunpack.c.l.b16 %v8288
    %v8552 = vunpack.c.l.b16 %v8289
    %v8553 = vunpack.c.l.b16 %v8290
    %v8554 = vunpack.c.l.b16 %v8291
    %v8555 = vunpack.c.l.b16 %v8292
    %v8556 = vunpack.c.l.b16 %v8293
    %v8557 = vunpack.c.l.b16 %v8294
    %v8558 = vunpack.c.l.b16 %v8295
    %v8559 = vunpack.c.l.b16 %v8296
    %v8560 = vunpack.c.l.b16 %v8297
    %v8561 = vunpack.c.l.b16 %v8298
    %v8562 = vunpack.c.l.b16 %v8299
    %v8563 = vunpack.c.l.b16 %v8300
    %v8564 = vunpack.c.l.b16 %v8301
    %v8565 = vunpack.c.l.b16 %v8302
    %v8566 = vunpack.c.l.b16 %v8303
    %v8567 = vunpack.c.l.b16 %v8304
    %v8568 = vunpack.c.l.b16 %v8305
    %v8569 = vunpack.c.l.b16 %v8306
    %v8570 = vunpack.c.l.b16 %v8307
    %v8571 = vunpack.c.l.b16 %v8308
    %v8572 = vunpack.c.l.b16 %v8309
    %v8573 = vunpack.c.l.b16 %v8310
    %v8574 = vunpack.c.l.b16 %v8311
    %v8575 = vunpack.c.l.b16 %v8312
    %v8576 = vunpack.c.l.b16 %v8313
    %v8577 = vunpack.c.l.b16 %v8314
    %v8578 = vunpack.c.l.b16 %v8315
    %v8579 = vunpack.c.l.b16 %v8316
    %v8580 = vunpack.c.l.b16 %v8317
    %v8581 = vunpack.c.l.b16 %v8318
    %v8582 = vunpack.c.l.b16 %v8319
    %v8583 = vunpack.c.l.b16 %v8320
    %v8584 = vunpack.c.l.b16 %v8321
    %v8585 = vunpack.c.l.b16 %v8322
    %v8586 = vunpack.c.l.b16 %v8323
    %v8587 = vunpack.c.l.b16 %v8324
    %v8588 = vunpack.c.l.b16 %v8325
    %v8589 = vunpack.c.l.b16 %v8326
    %v8590 = vunpack.c.l.b16 %v8327
    %v8591 = vunpack.c.l.b16 %v8328
    %v8592 = vunpack.c.l.b16 %v8329
    %v8593 = vunpack.c.l.b16 %v8330
    %v8594 = vunpack.c.l.b16 %v8331
    %v8595 = vunpack.c.l.b16 %v8332
    %v8596 = vunpack.c.l.b16 %v8333
    %v8597 = vunpack.c.l.b16 %v8334
    %v8598 = vunpack.c.l.b16 %v8335
    %v8599 = vunpack.c.l.b16 %v8336
    %v8600 = vunpack.c.l.b16 %v8337
    %v8601 = vunpack.c.l.b16 %v8338
    %v8602 = vunpack.c.l.b16 %v8339
    %v8603 = vunpack.c.l.b16 %v8340
    %v8604 = vunpack.c.l.b16 %v8341
    %v8605 = vunpack.c.l.b16 %v8342
    %v8606 = vunpack.c.l.b16 %v8343
    %v8607 = vunpack.c.l.b16 %v8344
    %v8608 = vunpack.c.l.b16 %v8345
    %v8609 = vunpack.c.l.b16 %v8346
    %v8610 = vunpack.c.l.b16 %v8347
    %v8611 = vunpack.c.l.b16 %v8348
    %v8612 = vunpack.c.l.b16 %v8349
    %v8613 = vunpack.c.l.b16 %v8350
    %v8614 = vunpack.c.l.b16 %v8351
    %v8615 = vunpack.c.l.b16 %v8352
    %v8616 = vunpack.c.l.b16 %v8353
    %v8617 = vunpack.c.l.b16 %v8354
    %v8618 = vunpack.c.l.b16 %v8355
    %v8619 = vunpack.c.l.b16 %v8356
    %v8620 = vunpack.c.l.b16 %v8357
    %v8621 = vunpack.c.l.b16 %v8358
    %v8622 = vunpack.c.l.b16 %v8359
    %v8623 = vunpack.c.l.b16 %v8360
    %v8624 = vunpack.c.l.b16 %v8361
    %v8625 = vpack.c.b16 %v8498, %v8497
    %v8626 = vpack.c.b16 %v8500, %v8499
    %v8627 = vpack.c.b16 %v8502, %v8501
    %v8628 = vpack.c.b16 %v8504, %v8503
    %v8629 = vpack.c.b16 %v8506, %v8505
    %v8630 = vpack.c.b16 %v8508, %v8507
    %v8631 = vpack.c.b16 %v8510, %v8509
    %v8632 = vpack.c.b16 %v8512, %v8511
    %v8633 = vpack.c.b16 %v8514, %v8513
    %v8634 = vpack.c.b16 %v8516, %v8515
    %v8635 = vpack.c.b16 %v8518, %v8517
    %v8636 = vpack.c.b16 %v8520, %v8519
    %v8637 = vpack.c.b16 %v8522, %v8521
    %v8638 = vpack.c.b16 %v8524, %v8523
    %v8639 = vpack.c.b16 %v8526, %v8525
    %v8640 = vpack.c.b16 %v8528, %v8527
    %v8641 = vpack.c.b16 %v8530, %v8529
    %v8642 = vpack.c.b16 %v8532, %v8531
    %v8643 = vpack.c.b16 %v8534, %v8533
    %v8644 = vpack.c.b16 %v8536, %v8535
    %v8645 = vpack.c.b16 %v8538, %v8537
    %v8646 = vpack.c.b16 %v8540, %v8539
    %v8647 = vpack.c.b16 %v8542, %v8541
    %v8648 = vpack.c.b16 %v8544, %v8543
    %v8649 = vpack.c.b16 %v8546, %v8545
    %v8650 = vpack.c.b16 %v8548, %v8547
    %v8651 = vpack.c.b16 %v8550, %v8549
    %v8652 = vpack.c.b16 %v8552, %v8551
    %v8653 = vpack.c.b16 %v8554, %v8553
    %v8654 = vpack.c.b16 %v8556, %v8555
    %v8655 = vpack.c.b16 %v8558, %v8557
    %v8656 = vpack.c.b16 %v8560, %v8559
    %v8657 = vpack.c.b16 %v8562, %v8561
    %v8658 = vpack.c.b16 %v8564, %v8563
    %v8659 = vpack.c.b16 %v8566, %v8565
    %v8660 = vpack.c.b16 %v8568, %v8567
    %v8661 = vpack.c.b16 %v8570, %v8569
    %v8662 = vpack.c.b16 %v8572, %v8571
    %v8663 = vpack.c.b16 %v8574, %v8573
    %v8664 = vpack.c.b16 %v8576, %v8575
    %v8665 = vpack.c.b16 %v8578, %v8577
    %v8666 = vpack.c.b16 %v8580, %v8579
    %v8667 = vpack.c.b16 %v8582, %v8581
    %v8668 = vpack.c.b16 %v8584, %v8583
    %v8669 = vpack.c.b16 %v8586, %v8585
    %v8670 = vpack.c.b16 %v8588, %v8587
    %v8671 = vpack.c.b16 %v8590, %v8589
    %v8672 = vpack.c.b16 %v8592, %v8591
    %v8673 = vpack.c.b16 %v8594, %v8593
    %v8674 = vpack.c.b16 %v8596, %v8595
    %v8675 = vpack.c.b16 %v8598, %v8597
    %v8676 = vpack.c.b16 %v8600, %v8599
    %v8677 = vpack.c.b16 %v8602, %v8601
    %v8678 = vpack.c.b16 %v8604, %v8603
    %v8679 = vpack.c.b16 %v8606, %v8605
    %v8680 = vpack.c.b16 %v8608, %v8607
    %v8681 = vpack.c.b16 %v8610, %v8609
    %v8682 = vpack.c.b16 %v8612, %v8611
    %v8683 = vpack.c.b16 %v8614, %v8613
    %v8684 = vpack.c.b16 %v8616, %v8615
    %v8685 = vpack.c.b16 %v8618, %v8617
    %v8686 = vpack.c.b16 %v8620, %v8619
    %v8687 = vpack.c.b16 %v8622, %v8621
    %v8688 = vpack.c.b16 %v8624, %v8623
    %8753 = vmatprep.subr.bf16.mxu0 0
    %8754 = vmatpush1.bf16.msra.mxu0 %v8625
    %8755 = vmatprep.subr.bf16.mxu0 0
    %8756 = vmatpush1.bf16.msra.mxu0 %v8626
    %8757 = vmatprep.subr.bf16.mxu0 0
    %8758 = vmatpush1.bf16.msra.mxu0 %v8627
    %8759 = vmatprep.subr.bf16.mxu0 0
    %8760 = vmatpush1.bf16.msra.mxu0 %v8628
    %8761 = vmatprep.subr.bf16.mxu0 0
    %8762 = vmatpush1.bf16.msra.mxu0 %v8629
    %8763 = vmatprep.subr.bf16.mxu0 0
    %8764 = vmatpush1.bf16.msra.mxu0 %v8630
    %8765 = vmatprep.subr.bf16.mxu0 0
    %8766 = vmatpush1.bf16.msra.mxu0 %v8631
    %8767 = vmatprep.subr.bf16.mxu0 0
    %8768 = vmatpush1.bf16.msra.mxu0 %v8632
    %8769 = vmatprep.subr.bf16.mxu0 0
    %8770 = vmatpush1.bf16.msra.mxu0 %v8633
    %8771 = vmatprep.subr.bf16.mxu0 0
    %8772 = vmatpush1.bf16.msra.mxu0 %v8634
    %8773 = vmatprep.subr.bf16.mxu0 0
    %8774 = vmatpush1.bf16.msra.mxu0 %v8635
    %8775 = vmatprep.subr.bf16.mxu0 0
    %8776 = vmatpush1.bf16.msra.mxu0 %v8636
    %8777 = vmatprep.subr.bf16.mxu0 0
    %8778 = vmatpush1.bf16.msra.mxu0 %v8637
    %8779 = vmatprep.subr.bf16.mxu0 0
    %8780 = vmatpush1.bf16.msra.mxu0 %v8638
    %8781 = vmatprep.subr.bf16.mxu0 0
    %8782 = vmatpush1.bf16.msra.mxu0 %v8639
    %8783 = vmatprep.subr.bf16.mxu0 0
    %8784 = vmatpush1.bf16.msra.mxu0 %v8640
    %8785 = vmatprep.mubr.bf16.mxu0 %v8227
    %8786 = vmatmul.mubr.bf16.gmra.mrb[0].mxu0 %v8226
    %v8787 = vpop.f32.mrb[0].mxu0
    %v8788 = vadd.f32 %v8367, %v8787
    %v8789 = vpop.f32.mrb[0].mxu0
    %v8790 = vpop.f32.mrb[0].mxu0
    %v8791 = vpop.f32.mrb[0].mxu0
    %8792 = vdwg.mxu0
    %8793 = vmatprep.subr.bf16.mxu0 0
    %8794 = vmatpush1.bf16.msra.mxu0 %v8641
    %8795 = vmatprep.subr.bf16.mxu0 0
    %8796 = vmatpush1.bf16.msra.mxu0 %v8642
    %8797 = vmatprep.subr.bf16.mxu0 0
    %8798 = vmatpush1.bf16.msra.mxu0 %v8643
    %8799 = vmatprep.subr.bf16.mxu0 0
    %8800 = vmatpush1.bf16.msra.mxu0 %v8644
    %8801 = vmatprep.subr.bf16.mxu0 0
    %8802 = vmatpush1.bf16.msra.mxu0 %v8645
    %8803 = vmatprep.subr.bf16.mxu0 0
    %8804 = vmatpush1.bf16.msra.mxu0 %v8646
    %8805 = vmatprep.subr.bf16.mxu0 0
    %8806 = vmatpush1.bf16.msra.mxu0 %v8647
    %8807 = vmatprep.subr.bf16.mxu0 0
    %8808 = vmatpush1.bf16.msra.mxu0 %v8648
    %8809 = vmatprep.subr.bf16.mxu0 0
    %8810 = vmatpush1.bf16.msra.mxu0 %v8649
    %8811 = vmatprep.subr.bf16.mxu0 0
    %8812 = vmatpush1.bf16.msra.mxu0 %v8650
    %8813 = vmatprep.subr.bf16.mxu0 0
    %8814 = vmatpush1.bf16.msra.mxu0 %v8651
    %8815 = vmatprep.subr.bf16.mxu0 0
    %8816 = vmatpush1.bf16.msra.mxu0 %v8652
    %8817 = vmatprep.subr.bf16.mxu0 0
    %8818 = vmatpush1.bf16.msra.mxu0 %v8653
    %8819 = vmatprep.subr.bf16.mxu0 0
    %8820 = vmatpush1.bf16.msra.mxu0 %v8654
    %8821 = vmatprep.subr.bf16.mxu0 0
    %8822 = vmatpush1.bf16.msra.mxu0 %v8655
    %8823 = vmatprep.subr.bf16.mxu0 0
    %8824 = vmatpush1.bf16.msra.mxu0 %v8656
    %8825 = vmatprep.mubr.bf16.mxu0 %v8229
    %8826 = vmatmul.mubr.bf16.gmra.mrb[0].mxu0 %v8228
    %v8827 = vpop.f32.mrb[0].mxu0
    %v8828 = vadd.f32 %v8788, %v8827
    %v8829 = vpop.f32.mrb[0].mxu0
    %v8830 = vpop.f32.mrb[0].mxu0
    %v8831 = vpop.f32.mrb[0].mxu0
    %8832 = vdwg.mxu0
    %8833 = vmatprep.subr.bf16.mxu0 0
    %8834 = vmatpush1.bf16.msra.mxu0 %v8657
    %8835 = vmatprep.subr.bf16.mxu0 0
    %8836 = vmatpush1.bf16.msra.mxu0 %v8658
    %8837 = vmatprep.subr.bf16.mxu0 0
    %8838 = vmatpush1.bf16.msra.mxu0 %v8659
    %8839 = vmatprep.subr.bf16.mxu0 0
    %8840 = vmatpush1.bf16.msra.mxu0 %v8660
    %8841 = vmatprep.subr.bf16.mxu0 0
    %8842 = vmatpush1.bf16.msra.mxu0 %v8661
    %8843 = vmatprep.subr.bf16.mxu0 0
    %8844 = vmatpush1.bf16.msra.mxu0 %v8662
    %8845 = vmatprep.subr.bf16.mxu0 0
    %8846 = vmatpush1.bf16.msra.mxu0 %v8663
    %8847 = vmatprep.subr.bf16.mxu0 0
    %8848 = vmatpush1.bf16.msra.mxu0 %v8664
    %8849 = vmatprep.subr.bf16.mxu0 0
    %8850 = vmatpush1.bf16.msra.mxu0 %v8665
    %8851 = vmatprep.subr.bf16.mxu0 0
    %8852 = vmatpush1.bf16.msra.mxu0 %v8666
    %8853 = vmatprep.subr.bf16.mxu0 0
    %8854 = vmatpush1.bf16.msra.mxu0 %v8667
    %8855 = vmatprep.subr.bf16.mxu0 0
    %8856 = vmatpush1.bf16.msra.mxu0 %v8668
    %8857 = vmatprep.subr.bf16.mxu0 0
    %8858 = vmatpush1.bf16.msra.mxu0 %v8669
    %8859 = vmatprep.subr.bf16.mxu0 0
    %8860 = vmatpush1.bf16.msra.mxu0 %v8670
    %8861 = vmatprep.subr.bf16.mxu0 0
    %8862 = vmatpush1.bf16.msra.mxu0 %v8671
    %8863 = vmatprep.subr.bf16.mxu0 0
    %8864 = vmatpush1.bf16.msra.mxu0 %v8672
    %8865 = vmatprep.mubr.bf16.mxu0 %v8231
    %8866 = vmatmul.mubr.bf16.gmra.mrb[0].mxu0 %v8230
    %v8867 = vpop.f32.mrb[0].mxu0
    %v8868 = vadd.f32 %v8828, %v8867
    %v8869 = vpop.f32.mrb[0].mxu0
    %v8870 = vpop.f32.mrb[0].mxu0
    %v8871 = vpop.f32.mrb[0].mxu0
    %8872 = vdwg.mxu0
    %8873 = vmatprep.subr.bf16.mxu0 0
    %8874 = vmatpush1.bf16.msra.mxu0 %v8673
    %8875 = vmatprep.subr.bf16.mxu0 0
    %8876 = vmatpush1.bf16.msra.mxu0 %v8674
    %8877 = vmatprep.subr.bf16.mxu0 0
    %8878 = vmatpush1.bf16.msra.mxu0 %v8675
    %8879 = vmatprep.subr.bf16.mxu0 0
    %8880 = vmatpush1.bf16.msra.mxu0 %v8676
    %8881 = vmatprep.subr.bf16.mxu0 0
    %8882 = vmatpush1.bf16.msra.mxu0 %v8677
    %8883 = vmatprep.subr.bf16.mxu0 0
    %8884 = vmatpush1.bf16.msra.mxu0 %v8678
    %8885 = vmatprep.subr.bf16.mxu0 0
    %8886 = vmatpush1.bf16.msra.mxu0 %v8679
    %8887 = vmatprep.subr.bf16.mxu0 0
    %8888 = vmatpush1.bf16.msra.mxu0 %v8680
    %8889 = vmatprep.subr.bf16.mxu0 0
    %8890 = vmatpush1.bf16.msra.mxu0 %v8681
    %8891 = vmatprep.subr.bf16.mxu0 0
    %8892 = vmatpush1.bf16.msra.mxu0 %v8682
    %8893 = vmatprep.subr.bf16.mxu0 0
    %8894 = vmatpush1.bf16.msra.mxu0 %v8683
    %8895 = vmatprep.subr.bf16.mxu0 0
    %8896 = vmatpush1.bf16.msra.mxu0 %v8684
    %8897 = vmatprep.subr.bf16.mxu0 0
    %8898 = vmatpush1.bf16.msra.mxu0 %v8685
    %8899 = vmatprep.subr.bf16.mxu0 0
    %8900 = vmatpush1.bf16.msra.mxu0 %v8686
    %8901 = vmatprep.subr.bf16.mxu0 0
    %8902 = vmatpush1.bf16.msra.mxu0 %v8687
    %8903 = vmatprep.subr.bf16.mxu0 0
    %8904 = vmatpush1.bf16.msra.mxu0 %v8688
    %8905 = vmatprep.mubr.bf16.mxu0 %v8233
    %8906 = vmatmul.mubr.bf16.gmra.mrb[0].mxu0 %v8232
    %v8907 = vpop.f32.mrb[0].mxu0
    %v8908 = vadd.f32 %v8868, %v8907
    %v8909 = vpop.f32.mrb[0].mxu0
    %v8910 = vpop.f32.mrb[0].mxu0
    %v8911 = vpop.f32.mrb[0].mxu0
    %8912 = vdwg.mxu0
    %8913 = vmax.xlane.f32.xlu0 %v8908
    %v8914 = vpop.xlane.xlu0 %8913
    %v8915 = vsub.f32 %v8908, %v8914
    %v8916 = vmul.f32 %v8915, 1.442695
    %v8917 = vpow.pop %v8916
    %8918 = vadd.xlane.f32.xlu0 %v8917
    %v8919 = vpop.xlane.xlu0 %8918
    %v8920 = vrcp.pop %v8919
    %v8921 = vmul.f32 %v8917, %v8920
    %8922 = vst [vmem:[%s7] sm:$0xff] %v8921
    // Predicated region
    $region46: #{classification_head.1} parent=1 // pred_check
      _
    $region47: #{classification_head.1} parent=1 // pred_check_branch
      %8924 = sbr.rel (0) target = $region49
    $region48: #{classification_head.1} parent=1 // pred_region
      _
    $region49: #{classification_head.1} parent=1 // pred_fallthru
      _
    // Predicated region
    $region50: #{classification_head.1} parent=1 // pred_check
      _
    $region51: #{classification_head.1} parent=1 // pred_check_branch
      %8926 = sbr.rel (0) target = $region53
    $region52: #{classification_head.1} parent=1 // pred_region
      _
    $region53: #{classification_head.1} parent=1 // pred_fallthru
      _
    %8927 = vsyncpa [#allocation3], 1
    %8928 = vsyncpa [#allocation5], 1
    %8929 = vsyncpa [#allocation8], 1

</llo_original>
